<compile_context>
chip_gen: v7x
topology: tpu7x:2x2x1
jax: 0.10.0
libtpu: 0.0.40
codegen_flags: <defaults>
</compile_context>

<pallas_src>
import functools

import jax
import jax.numpy as jnp
from jax import lax
from jax.experimental import pallas as pl
from jax.experimental.pallas import tpu as pltpu


def _round_up(x, m):
    return (x + m - 1) // m * m


def _toeplitz_weight(w_hwio, tr, r_pad):
    """W_big[co*tr + t, (kw*Cin + ci)*r_pad + r] = w[r - t, kw, ci, co] (0 outside [0,KH))."""
    KH, KW, Cin, Cout = w_hwio.shape
    w_t = jnp.transpose(w_hwio, (3, 0, 1, 2))                    # (Cout, KH, KW, Cin)
    kh = jnp.arange(r_pad)[None, :] - jnp.arange(tr)[:, None]    # (tr, r_pad)
    valid = (kh >= 0) & (kh < KH)
    a = w_t[:, jnp.clip(kh, 0, KH - 1), :, :]                    # (Cout, tr, r_pad, KW, Cin)
    a = jnp.where(valid[None, :, :, None, None], a, 0.0)
    a = jnp.transpose(a, (0, 1, 3, 4, 2))                        # (Cout, tr, KW, Cin, r_pad)
    return a.reshape(Cout * tr, KW * Cin * r_pad)


def _conv_rows_kernel(x_ref, w_ref, b_ref, *o_refs, KW, Wo, TR, R_pad, couts):
    """One grid step: TR output rows of a valid stride-1 conv + bias + ReLU.

    x_ref: (1, Cin, H_pad, W)        whole (row-padded) input image, VMEM-resident
    w_ref: (sum(couts)*TR, Kbig)     block-Toeplitz weights, bf16
    b_ref: (sum(couts)*TR, 1)        bias repeated per row, f32
    o_refs[i]: (1, couts[i], TR, Wo) NCHW output row tiles
    """
    r = pl.program_id(1)
    row0 = pl.multiple_of(r * TR, TR)
    Cin = x_ref.shape[1]

    # Raw input rows for this tile (TR rows + halo, padded to a multiple of 8).
    xt = x_ref[0, :, pl.ds(row0, R_pad), :]                       # (Cin, R_pad, W)

    # Patch matrix: KW*Cin lane-shifted 2-D slices, tile-aligned sublane concat.
    pieces = [xt[ci, :, kw:kw + Wo] for kw in range(KW) for ci in range(Cin)]
    p = jnp.concatenate(pieces, axis=0).astype(jnp.bfloat16)      # (Kbig, Wo)

    # Single MXU launch: all TR rows of all fused output channels at once.
    acc = jnp.dot(w_ref[...], p, preferred_element_type=jnp.float32)   # (M, Wo)
    acc = jnp.maximum(acc + b_ref[...], 0.0)

    off = 0
    for o_ref, c in zip(o_refs, couts):
        rows = c * TR
        # (c*TR, Wo) -> (c, TR, Wo): sublane split, layout-preserving (TR % 8 == 0).
        o_ref[0] = acc[off:off + rows, :].reshape(c, TR, Wo).astype(o_ref.dtype)
        off += rows


def conv2d_relu_pallas(x_nchw, w_hwio, b, out_splits, *, tr=16):
    """Valid-padding, stride-1 conv + ReLU, output channels split into `out_splits`."""
    N, Cin, H, W = x_nchw.shape
    KH, KW, wc_in, Cout = w_hwio.shape
    assert wc_in == Cin
    assert sum(out_splits) == Cout
    assert all(c % 8 == 0 for c in out_splits)   # dense sublane tiles, no channel padding
    TR = tr
    assert TR % 8 == 0

    Ho, Wo = H - KH + 1, W - KW + 1
    n_tiles = pl.cdiv(Ho, TR)
    R_pad = _round_up(TR + KH - 1, 8)            # rows loaded per tile (halo, 8-aligned)
    H_need = (n_tiles - 1) * TR + R_pad          # >= H always
    x_p = jnp.pad(x_nchw, ((0, 0), (0, 0), (0, H_need - H), (0, 0)))

    Kbig = KW * Cin * R_pad
    M = Cout * TR
    w_big = _toeplitz_weight(w_hwio, TR, R_pad).astype(jnp.bfloat16)    # (M, Kbig)
    b2 = jnp.repeat(b, TR).reshape(M, 1).astype(jnp.float32)            # (M, 1)

    kernel = functools.partial(_conv_rows_kernel, KW=KW, Wo=Wo, TR=TR,
                               R_pad=R_pad, couts=tuple(out_splits))

    out_shapes = tuple(jax.ShapeDtypeStruct((N, c, Ho, Wo), x_nchw.dtype)
                       for c in out_splits)
    out_specs = tuple(pl.BlockSpec((1, c, TR, Wo), lambda n, r: (n, 0, r, 0))
                      for c in out_splits)

    flops = 2 * N * n_tiles * M * Kbig * Wo
    bytes_accessed = (4 * x_p.size + 2 * w_big.size + 4 * b2.size
                      + sum(4 * N * c * Ho * Wo for c in out_splits))

    outs = pl.pallas_call(
        kernel,
        out_shape=out_shapes,
        grid=(N, n_tiles),
        in_specs=[
            # Raw input stays resident across the row-tile axis (same block idx).
            pl.BlockSpec((1, Cin, H_need, W), lambda n, r: (n, 0, 0, 0)),
            pl.BlockSpec((M, Kbig), lambda n, r: (0, 0)),
            pl.BlockSpec((M, 1), lambda n, r: (0, 0)),
        ],
        out_specs=out_specs,
        compiler_params=pltpu.CompilerParams(
            dimension_semantics=("parallel", "parallel"),
            vmem_limit_bytes=32 * 1024 * 1024),
        cost_estimate=pl.CostEstimate(flops=flops, transcendentals=0,
                                      bytes_accessed=bytes_accessed),
    )(x_p, w_big, b2)
    return outs


def conv2d_relu_ref(x_nchw, w_hwio, b):
    # Reference uses the same bf16-rounded operands the kernel feeds to the MXU
    # (f32 accumulation), so the comparison is tight.
    xb = x_nchw.astype(jnp.bfloat16).astype(jnp.float32)
    wb = w_hwio.astype(jnp.bfloat16).astype(jnp.float32)
    y = lax.conv_general_dilated(
        xb, wb, window_strides=(1, 1), padding="VALID",
        dimension_numbers=("NCHW", "HWIO", "NCHW"),
        precision=lax.Precision.HIGHEST)
    return jnp.maximum(y + b.reshape(1, -1, 1, 1), 0.0)


def init_conv(key, kh, kw, cin, cout):
    """Deterministic init mimicking PyTorch Conv2d default (uniform +/- 1/sqrt(fan_in))."""
    kw_key, kb_key = jax.random.split(key)
    bound = 1.0 / float(cin * kh * kw) ** 0.5
    w = jax.random.uniform(kw_key, (kh, kw, cin, cout), jnp.float32, -bound, bound)
    b = jax.random.uniform(kb_key, (cout,), jnp.float32, -bound, bound)
    return w, b


def model_forward(x_nchw, params):
    (w1, b1), (w2, b2), (w3, b3) = params
    # conv1 + conv2 share the same 6x6 window and the same input: fuse their
    # output channels into one GEMM (32 + 48 -> 80) with two separate outputs,
    # so no post-kernel channel-split copy is needed.
    w12 = jnp.concatenate([w1, w2], axis=-1)
    b12 = jnp.concatenate([b1, b2], axis=-1)
    v4, v5 = conv2d_relu_pallas(x_nchw, w12, b12, (w1.shape[-1], w2.shape[-1]))
    (v6,) = conv2d_relu_pallas(x_nchw, w3, b3, (w3.shape[-1],))
    return v4, v5, v6


if __name__ == "__main__":
    key = jax.random.PRNGKey(0)
    k_x, k1, k2, k3 = jax.random.split(key, 4)

    # small shapes consistent with the module (original input was (1, 3, 300, 400))
    N, Cin, H, W = 2, 3, 16, 16
    x = jax.random.normal(k_x, (N, Cin, H, W), jnp.float32)

    params = [
        init_conv(k1, 6, 6, Cin, 32),   # conv1
        init_conv(k2, 6, 6, Cin, 48),   # conv2 (in_channels fixed to 3, see TODO)
        init_conv(k3, 4, 4, Cin, 64),   # conv3 (in_channels fixed to 3, see TODO)
    ]

    fwd = jax.jit(model_forward)
    v4, v5, v6 = fwd(x, params)
    jax.block_until_ready((v4, v5, v6))

    # sanity check against XLA's conv (bf16-rounded operands, f32 accumulate)
    for (w, b), got in zip(params, (v4, v5, v6)):
        ref = conv2d_relu_ref(x, w, b)
        assert got.shape == ref.shape, (got.shape, ref.shape)
        err = float(jnp.max(jnp.abs(got - ref)))
        assert jnp.allclose(got, ref, atol=2e-3, rtol=2e-3), err

    assert v4.shape == (N, 32, H - 5, W - 5)
    assert v5.shape == (N, 48, H - 5, W - 5)
    assert v6.shape == (N, 64, H - 3, W - 3)
    print("KERNEL_OK")
</pallas_src>

<mosaic_0001>
module attributes {stable_mosaic.version = 11 : i64} {
  func.func @_conv_rows_kernel(%arg0: i32, %arg1: i32, %arg2: memref<1x3x24x16xf32, #tpu.memory_space<vmem>>, %arg3: memref<1280x432xbf16, #tpu.memory_space<vmem>>, %arg4: memref<1280x1xf32, #tpu.memory_space<vmem>>, %arg5: memref<1x32x16x11xf32, #tpu.memory_space<vmem>>, %arg6: memref<1x48x16x11xf32, #tpu.memory_space<vmem>>) attributes {dimension_semantics = [#tpu.dimension_semantics<parallel>, #tpu.dimension_semantics<parallel>], iteration_bounds = array<i64: 2, 1>, scalar_prefetch = 0 : i64, scratch_operands = 0 : i64, tpu.core_type = #tpu.core_type<tc>, window_params = [{transform_indices = @transform_0, window_bounds = array<i64: 1, 3, 24, 16>}, {pipeline_mode = #tpu.pipeline_mode<synchronous>, transform_indices = @transform_1, window_bounds = array<i64: 1280, 432>}, {pipeline_mode = #tpu.pipeline_mode<synchronous>, transform_indices = @transform_2, window_bounds = array<i64: 1280, 1>}, {transform_indices = @transform_3, window_bounds = array<i64: 1, 32, 16, 11>}, {transform_indices = @transform_4, window_bounds = array<i64: 1, 48, 16, 11>}]} {
    %c16_i32 = arith.constant 16 : i32
    %0 = arith.muli %arg1, %c16_i32 : i32
    %1 = tpu.assume_multiple %0, 16 : i32
    %c0 = arith.constant 0 : index
    %c0_0 = arith.constant 0 : index
    %2 = arith.index_cast %1 : i32 to index
    %c0_1 = arith.constant 0 : index
    %3 = vector.load %arg2[%c0, %c0_0, %2, %c0_1] : memref<1x3x24x16xf32, #tpu.memory_space<vmem>>, vector<1x3x24x16xf32>
    %4 = vector.shape_cast %3 : vector<1x3x24x16xf32> to vector<3x24x16xf32>
    %5 = vector.extract_strided_slice %4 {offsets = [0, 0, 0], sizes = [1, 24, 11], strides = [1, 1, 1]} : vector<3x24x16xf32> to vector<1x24x11xf32>
    %6 = vector.shape_cast %5 : vector<1x24x11xf32> to vector<24x11xf32>
    %7 = vector.extract_strided_slice %4 {offsets = [1, 0, 0], sizes = [1, 24, 11], strides = [1, 1, 1]} : vector<3x24x16xf32> to vector<1x24x11xf32>
    %8 = vector.shape_cast %7 : vector<1x24x11xf32> to vector<24x11xf32>
    %9 = vector.extract_strided_slice %4 {offsets = [2, 0, 0], sizes = [1, 24, 11], strides = [1, 1, 1]} : vector<3x24x16xf32> to vector<1x24x11xf32>
    %10 = vector.shape_cast %9 : vector<1x24x11xf32> to vector<24x11xf32>
    %11 = vector.extract_strided_slice %4 {offsets = [0, 0, 1], sizes = [1, 24, 11], strides = [1, 1, 1]} : vector<3x24x16xf32> to vector<1x24x11xf32>
    %12 = vector.shape_cast %11 : vector<1x24x11xf32> to vector<24x11xf32>
    %13 = vector.extract_strided_slice %4 {offsets = [1, 0, 1], sizes = [1, 24, 11], strides = [1, 1, 1]} : vector<3x24x16xf32> to vector<1x24x11xf32>
    %14 = vector.shape_cast %13 : vector<1x24x11xf32> to vector<24x11xf32>
    %15 = vector.extract_strided_slice %4 {offsets = [2, 0, 1], sizes = [1, 24, 11], strides = [1, 1, 1]} : vector<3x24x16xf32> to vector<1x24x11xf32>
    %16 = vector.shape_cast %15 : vector<1x24x11xf32> to vector<24x11xf32>
    %17 = vector.extract_strided_slice %4 {offsets = [0, 0, 2], sizes = [1, 24, 11], strides = [1, 1, 1]} : vector<3x24x16xf32> to vector<1x24x11xf32>
    %18 = vector.shape_cast %17 : vector<1x24x11xf32> to vector<24x11xf32>
    %19 = vector.extract_strided_slice %4 {offsets = [1, 0, 2], sizes = [1, 24, 11], strides = [1, 1, 1]} : vector<3x24x16xf32> to vector<1x24x11xf32>
    %20 = vector.shape_cast %19 : vector<1x24x11xf32> to vector<24x11xf32>
    %21 = vector.extract_strided_slice %4 {offsets = [2, 0, 2], sizes = [1, 24, 11], strides = [1, 1, 1]} : vector<3x24x16xf32> to vector<1x24x11xf32>
    %22 = vector.shape_cast %21 : vector<1x24x11xf32> to vector<24x11xf32>
    %23 = vector.extract_strided_slice %4 {offsets = [0, 0, 3], sizes = [1, 24, 11], strides = [1, 1, 1]} : vector<3x24x16xf32> to vector<1x24x11xf32>
    %24 = vector.shape_cast %23 : vector<1x24x11xf32> to vector<24x11xf32>
    %25 = vector.extract_strided_slice %4 {offsets = [1, 0, 3], sizes = [1, 24, 11], strides = [1, 1, 1]} : vector<3x24x16xf32> to vector<1x24x11xf32>
    %26 = vector.shape_cast %25 : vector<1x24x11xf32> to vector<24x11xf32>
    %27 = vector.extract_strided_slice %4 {offsets = [2, 0, 3], sizes = [1, 24, 11], strides = [1, 1, 1]} : vector<3x24x16xf32> to vector<1x24x11xf32>
    %28 = vector.shape_cast %27 : vector<1x24x11xf32> to vector<24x11xf32>
    %29 = vector.extract_strided_slice %4 {offsets = [0, 0, 4], sizes = [1, 24, 11], strides = [1, 1, 1]} : vector<3x24x16xf32> to vector<1x24x11xf32>
    %30 = vector.shape_cast %29 : vector<1x24x11xf32> to vector<24x11xf32>
    %31 = vector.extract_strided_slice %4 {offsets = [1, 0, 4], sizes = [1, 24, 11], strides = [1, 1, 1]} : vector<3x24x16xf32> to vector<1x24x11xf32>
    %32 = vector.shape_cast %31 : vector<1x24x11xf32> to vector<24x11xf32>
    %33 = vector.extract_strided_slice %4 {offsets = [2, 0, 4], sizes = [1, 24, 11], strides = [1, 1, 1]} : vector<3x24x16xf32> to vector<1x24x11xf32>
    %34 = vector.shape_cast %33 : vector<1x24x11xf32> to vector<24x11xf32>
    %35 = vector.extract_strided_slice %4 {offsets = [0, 0, 5], sizes = [1, 24, 11], strides = [1, 1, 1]} : vector<3x24x16xf32> to vector<1x24x11xf32>
    %36 = vector.shape_cast %35 : vector<1x24x11xf32> to vector<24x11xf32>
    %37 = vector.extract_strided_slice %4 {offsets = [1, 0, 5], sizes = [1, 24, 11], strides = [1, 1, 1]} : vector<3x24x16xf32> to vector<1x24x11xf32>
    %38 = vector.shape_cast %37 : vector<1x24x11xf32> to vector<24x11xf32>
    %39 = vector.extract_strided_slice %4 {offsets = [2, 0, 5], sizes = [1, 24, 11], strides = [1, 1, 1]} : vector<3x24x16xf32> to vector<1x24x11xf32>
    %40 = vector.shape_cast %39 : vector<1x24x11xf32> to vector<24x11xf32>
    %41 = tpu.concatenate %6, %8, %10, %12, %14, %16, %18, %20, %22, %24, %26, %28, %30, %32, %34, %36 in 0 : vector<24x11xf32>, vector<24x11xf32>, vector<24x11xf32>, vector<24x11xf32>, vector<24x11xf32>, vector<24x11xf32>, vector<24x11xf32>, vector<24x11xf32>, vector<24x11xf32>, vector<24x11xf32>, vector<24x11xf32>, vector<24x11xf32>, vector<24x11xf32>, vector<24x11xf32>, vector<24x11xf32>, vector<24x11xf32> -> vector<384x11xf32>
    %42 = tpu.concatenate %38, %40 in 0 : vector<24x11xf32>, vector<24x11xf32> -> vector<48x11xf32>
    %43 = tpu.concatenate %41, %42 in 0 : vector<384x11xf32>, vector<48x11xf32> -> vector<432x11xf32>
    %44 = arith.truncf %43 : vector<432x11xf32> to vector<432x11xbf16>
    %c0_2 = arith.constant 0 : index
    %c0_3 = arith.constant 0 : index
    %45 = vector.load %arg3[%c0_2, %c0_3] : memref<1280x432xbf16, #tpu.memory_space<vmem>>, vector<1280x432xbf16>
    %cst = arith.constant dense<0.000000e+00> : vector<1280x11xf32>
    %46 = tpu.matmul %45, %44, %cst {dimension_numbers = #tpu.dot_dimension_numbers<[1], [0], [0], [1], [0, 0, 1, 1], [], []>} : vector<1280x432xbf16>, vector<432x11xbf16>, vector<1280x11xf32> -> vector<1280x11xf32>
    %c0_4 = arith.constant 0 : index
    %c0_5 = arith.constant 0 : index
    %47 = vector.load %arg4[%c0_4, %c0_5] : memref<1280x1xf32, #tpu.memory_space<vmem>>, vector<1280x1xf32>
    %48 = vector.broadcast %47 : vector<1280x1xf32> to vector<1280x11xf32>
    %49 = arith.addf %46, %48 : vector<1280x11xf32>
    %cst_6 = arith.constant 0.000000e+00 : f32
    %50 = vector.broadcast %cst_6 : f32 to vector<1280x11xf32>
    %51 = arith.maximumf %49, %50 : vector<1280x11xf32>
    %52 = vector.extract_strided_slice %51 {offsets = [0, 0], sizes = [512, 11], strides = [1, 1]} : vector<1280x11xf32> to vector<512x11xf32>
    %53 = vector.shape_cast %52 : vector<512x11xf32> to vector<32x16x11xf32>
    %c0_7 = arith.constant 0 : index
    %c0_8 = arith.constant 0 : index
    %c0_9 = arith.constant 0 : index
    %c0_10 = arith.constant 0 : index
    %54 = vector.load %arg5[%c0_7, %c0_8, %c0_9, %c0_10] : memref<1x32x16x11xf32, #tpu.memory_space<vmem>>, vector<1x32x16x11xf32>
    %55 = vector.shape_cast %54 : vector<1x32x16x11xf32> to vector<32x16x11xf32>
    %56 = vector.shape_cast %53 : vector<32x16x11xf32> to vector<1x32x16x11xf32>
    tpu.vector_store %arg5[%c0_7, %c0_8, %c0_9, %c0_10], %56 {strides = array<i32>} : memref<1x32x16x11xf32, #tpu.memory_space<vmem>>, vector<1x32x16x11xf32>,
    %57 = vector.extract_strided_slice %51 {offsets = [512, 0], sizes = [768, 11], strides = [1, 1]} : vector<1280x11xf32> to vector<768x11xf32>
    %58 = vector.shape_cast %57 : vector<768x11xf32> to vector<48x16x11xf32>
    %c0_11 = arith.constant 0 : index
    %c0_12 = arith.constant 0 : index
    %c0_13 = arith.constant 0 : index
    %c0_14 = arith.constant 0 : index
    %59 = vector.load %arg6[%c0_11, %c0_12, %c0_13, %c0_14] : memref<1x48x16x11xf32, #tpu.memory_space<vmem>>, vector<1x48x16x11xf32>
    %60 = vector.shape_cast %59 : vector<1x48x16x11xf32> to vector<48x16x11xf32>
    %61 = vector.shape_cast %58 : vector<48x16x11xf32> to vector<1x48x16x11xf32>
    tpu.vector_store %arg6[%c0_11, %c0_12, %c0_13, %c0_14], %61 {strides = array<i32>} : memref<1x48x16x11xf32, #tpu.memory_space<vmem>>, vector<1x48x16x11xf32>,
    return
  }
  func.func @transform_0(%arg0: i32, %arg1: i32) -> (i32, i32, i32, i32) {
    %c0_i32 = arith.constant 0 : i32
    %c0_i32_0 = arith.constant 0 : i32
    %c0_i32_1 = arith.constant 0 : i32
    %c0_i32_2 = arith.constant 0 : i32
    return %arg0, %c0_i32, %c0_i32_0, %c0_i32_1 : i32, i32, i32, i32
  }
  func.func @transform_1(%arg0: i32, %arg1: i32) -> (i32, i32) {
    %c0_i32 = arith.constant 0 : i32
    %c0_i32_0 = arith.constant 0 : i32
    %c0_i32_1 = arith.constant 0 : i32
    return %c0_i32, %c0_i32_0 : i32, i32
  }
  func.func @transform_2(%arg0: i32, %arg1: i32) -> (i32, i32) {
    %c0_i32 = arith.constant 0 : i32
    %c0_i32_0 = arith.constant 0 : i32
    %c0_i32_1 = arith.constant 0 : i32
    return %c0_i32, %c0_i32_0 : i32, i32
  }
  func.func @transform_3(%arg0: i32, %arg1: i32) -> (i32, i32, i32, i32) {
    %c0_i32 = arith.constant 0 : i32
    %c0_i32_0 = arith.constant 0 : i32
    %c0_i32_1 = arith.constant 0 : i32
    return %arg0, %c0_i32, %arg1, %c0_i32_0 : i32, i32, i32, i32
  }
  func.func @transform_4(%arg0: i32, %arg1: i32) -> (i32, i32, i32, i32) {
    %c0_i32 = arith.constant 0 : i32
    %c0_i32_0 = arith.constant 0 : i32
    %c0_i32_1 = arith.constant 0 : i32
    return %arg0, %c0_i32, %arg1, %c0_i32_0 : i32, i32, i32, i32
  }
}

module attributes {stable_mosaic.version = 11 : i64} {
  func.func @_conv_rows_kernel(%arg0: i32, %arg1: i32, %arg2: memref<1x3x24x16xf32, #tpu.memory_space<vmem>>, %arg3: memref<1024x288xbf16, #tpu.memory_space<vmem>>, %arg4: memref<1024x1xf32, #tpu.memory_space<vmem>>, %arg5: memref<1x64x16x13xf32, #tpu.memory_space<vmem>>) attributes {dimension_semantics = [#tpu.dimension_semantics<parallel>, #tpu.dimension_semantics<parallel>], iteration_bounds = array<i64: 2, 1>, scalar_prefetch = 0 : i64, scratch_operands = 0 : i64, tpu.core_type = #tpu.core_type<tc>, window_params = [{transform_indices = @transform_0, window_bounds = array<i64: 1, 3, 24, 16>}, {pipeline_mode = #tpu.pipeline_mode<synchronous>, transform_indices = @transform_1, window_bounds = array<i64: 1024, 288>}, {pipeline_mode = #tpu.pipeline_mode<synchronous>, transform_indices = @transform_2, window_bounds = array<i64: 1024, 1>}, {transform_indices = @transform_3, window_bounds = array<i64: 1, 64, 16, 13>}]} {
    %c16_i32 = arith.constant 16 : i32
    %0 = arith.muli %arg1, %c16_i32 : i32
    %1 = tpu.assume_multiple %0, 16 : i32
    %c0 = arith.constant 0 : index
    %c0_0 = arith.constant 0 : index
    %2 = arith.index_cast %1 : i32 to index
    %c0_1 = arith.constant 0 : index
    %3 = vector.load %arg2[%c0, %c0_0, %2, %c0_1] : memref<1x3x24x16xf32, #tpu.memory_space<vmem>>, vector<1x3x24x16xf32>
    %4 = vector.shape_cast %3 : vector<1x3x24x16xf32> to vector<3x24x16xf32>
    %5 = vector.extract_strided_slice %4 {offsets = [0, 0, 0], sizes = [1, 24, 13], strides = [1, 1, 1]} : vector<3x24x16xf32> to vector<1x24x13xf32>
    %6 = vector.shape_cast %5 : vector<1x24x13xf32> to vector<24x13xf32>
    %7 = vector.extract_strided_slice %4 {offsets = [1, 0, 0], sizes = [1, 24, 13], strides = [1, 1, 1]} : vector<3x24x16xf32> to vector<1x24x13xf32>
    %8 = vector.shape_cast %7 : vector<1x24x13xf32> to vector<24x13xf32>
    %9 = vector.extract_strided_slice %4 {offsets = [2, 0, 0], sizes = [1, 24, 13], strides = [1, 1, 1]} : vector<3x24x16xf32> to vector<1x24x13xf32>
    %10 = vector.shape_cast %9 : vector<1x24x13xf32> to vector<24x13xf32>
    %11 = vector.extract_strided_slice %4 {offsets = [0, 0, 1], sizes = [1, 24, 13], strides = [1, 1, 1]} : vector<3x24x16xf32> to vector<1x24x13xf32>
    %12 = vector.shape_cast %11 : vector<1x24x13xf32> to vector<24x13xf32>
    %13 = vector.extract_strided_slice %4 {offsets = [1, 0, 1], sizes = [1, 24, 13], strides = [1, 1, 1]} : vector<3x24x16xf32> to vector<1x24x13xf32>
    %14 = vector.shape_cast %13 : vector<1x24x13xf32> to vector<24x13xf32>
    %15 = vector.extract_strided_slice %4 {offsets = [2, 0, 1], sizes = [1, 24, 13], strides = [1, 1, 1]} : vector<3x24x16xf32> to vector<1x24x13xf32>
    %16 = vector.shape_cast %15 : vector<1x24x13xf32> to vector<24x13xf32>
    %17 = vector.extract_strided_slice %4 {offsets = [0, 0, 2], sizes = [1, 24, 13], strides = [1, 1, 1]} : vector<3x24x16xf32> to vector<1x24x13xf32>
    %18 = vector.shape_cast %17 : vector<1x24x13xf32> to vector<24x13xf32>
    %19 = vector.extract_strided_slice %4 {offsets = [1, 0, 2], sizes = [1, 24, 13], strides = [1, 1, 1]} : vector<3x24x16xf32> to vector<1x24x13xf32>
    %20 = vector.shape_cast %19 : vector<1x24x13xf32> to vector<24x13xf32>
    %21 = vector.extract_strided_slice %4 {offsets = [2, 0, 2], sizes = [1, 24, 13], strides = [1, 1, 1]} : vector<3x24x16xf32> to vector<1x24x13xf32>
    %22 = vector.shape_cast %21 : vector<1x24x13xf32> to vector<24x13xf32>
    %23 = vector.extract_strided_slice %4 {offsets = [0, 0, 3], sizes = [1, 24, 13], strides = [1, 1, 1]} : vector<3x24x16xf32> to vector<1x24x13xf32>
    %24 = vector.shape_cast %23 : vector<1x24x13xf32> to vector<24x13xf32>
    %25 = vector.extract_strided_slice %4 {offsets = [1, 0, 3], sizes = [1, 24, 13], strides = [1, 1, 1]} : vector<3x24x16xf32> to vector<1x24x13xf32>
    %26 = vector.shape_cast %25 : vector<1x24x13xf32> to vector<24x13xf32>
    %27 = vector.extract_strided_slice %4 {offsets = [2, 0, 3], sizes = [1, 24, 13], strides = [1, 1, 1]} : vector<3x24x16xf32> to vector<1x24x13xf32>
    %28 = vector.shape_cast %27 : vector<1x24x13xf32> to vector<24x13xf32>
    %29 = tpu.concatenate %6, %8, %10, %12, %14, %16, %18, %20, %22, %24, %26, %28 in 0 : vector<24x13xf32>, vector<24x13xf32>, vector<24x13xf32>, vector<24x13xf32>, vector<24x13xf32>, vector<24x13xf32>, vector<24x13xf32>, vector<24x13xf32>, vector<24x13xf32>, vector<24x13xf32>, vector<24x13xf32>, vector<24x13xf32> -> vector<288x13xf32>
    %30 = arith.truncf %29 : vector<288x13xf32> to vector<288x13xbf16>
    %c0_2 = arith.constant 0 : index
    %c0_3 = arith.constant 0 : index
    %31 = vector.load %arg3[%c0_2, %c0_3] : memref<1024x288xbf16, #tpu.memory_space<vmem>>, vector<1024x288xbf16>
    %cst = arith.constant dense<0.000000e+00> : vector<1024x13xf32>
    %32 = tpu.matmul %31, %30, %cst {dimension_numbers = #tpu.dot_dimension_numbers<[1], [0], [0], [1], [0, 0, 1, 1], [], []>} : vector<1024x288xbf16>, vector<288x13xbf16>, vector<1024x13xf32> -> vector<1024x13xf32>
    %c0_4 = arith.constant 0 : index
    %c0_5 = arith.constant 0 : index
    %33 = vector.load %arg4[%c0_4, %c0_5] : memref<1024x1xf32, #tpu.memory_space<vmem>>, vector<1024x1xf32>
    %34 = vector.broadcast %33 : vector<1024x1xf32> to vector<1024x13xf32>
    %35 = arith.addf %32, %34 : vector<1024x13xf32>
    %cst_6 = arith.constant 0.000000e+00 : f32
    %36 = vector.broadcast %cst_6 : f32 to vector<1024x13xf32>
    %37 = arith.maximumf %35, %36 : vector<1024x13xf32>
    %38 = vector.shape_cast %37 : vector<1024x13xf32> to vector<64x16x13xf32>
    %c0_7 = arith.constant 0 : index
    %c0_8 = arith.constant 0 : index
    %c0_9 = arith.constant 0 : index
    %c0_10 = arith.constant 0 : index
    %39 = vector.load %arg5[%c0_7, %c0_8, %c0_9, %c0_10] : memref<1x64x16x13xf32, #tpu.memory_space<vmem>>, vector<1x64x16x13xf32>
    %40 = vector.shape_cast %39 : vector<1x64x16x13xf32> to vector<64x16x13xf32>
    %41 = vector.shape_cast %38 : vector<64x16x13xf32> to vector<1x64x16x13xf32>
    tpu.vector_store %arg5[%c0_7, %c0_8, %c0_9, %c0_10], %41 {strides = array<i32>} : memref<1x64x16x13xf32, #tpu.memory_space<vmem>>, vector<1x64x16x13xf32>,
    return
  }
  func.func @transform_0(%arg0: i32, %arg1: i32) -> (i32, i32, i32, i32) {
    %c0_i32 = arith.constant 0 : i32
    %c0_i32_0 = arith.constant 0 : i32
    %c0_i32_1 = arith.constant 0 : i32
    %c0_i32_2 = arith.constant 0 : i32
    return %arg0, %c0_i32, %c0_i32_0, %c0_i32_1 : i32, i32, i32, i32
  }
  func.func @transform_1(%arg0: i32, %arg1: i32) -> (i32, i32) {
    %c0_i32 = arith.constant 0 : i32
    %c0_i32_0 = arith.constant 0 : i32
    %c0_i32_1 = arith.constant 0 : i32
    return %c0_i32, %c0_i32_0 : i32, i32
  }
  func.func @transform_2(%arg0: i32, %arg1: i32) -> (i32, i32) {
    %c0_i32 = arith.constant 0 : i32
    %c0_i32_0 = arith.constant 0 : i32
    %c0_i32_1 = arith.constant 0 : i32
    return %c0_i32, %c0_i32_0 : i32, i32
  }
  func.func @transform_3(%arg0: i32, %arg1: i32) -> (i32, i32, i32, i32) {
    %c0_i32 = arith.constant 0 : i32
    %c0_i32_0 = arith.constant 0 : i32
    %c0_i32_1 = arith.constant 0 : i32
    return %arg0, %c0_i32, %arg1, %c0_i32_0 : i32, i32, i32, i32
  }
}

</mosaic_0001>

<llo_original>
// kernel: model_forward.2
$region0: #{model_forward.2}
  #allocation0 [shape = 'u32[]', space=smem, size = 0x4, offset = 0x4, fixed_abs, tag = 'smem constant byte address 0x4 - core index']
  #allocation1 [shape = 'u32[144,128]{1,0:T(1,128)}', space=vmem, size = 0x12000, scoped, tag = 'internal scratch']
  %s0 = inlined_call_operand.vmem [shape: f32[2,3,24,16], index: 0, kind: input, shape index: {}]
  %s1 = inlined_call_operand.vmem [shape: bf16[1280,432], index: 1, kind: input, shape index: {}]
  %s2 = inlined_call_operand.vmem [shape: f32[1280,1], index: 2, kind: input, shape index: {}]
  %s3 = inlined_call_operand.vmem [shape: f32[2,32,11,11], index: 3, kind: output, shape index: {0}]
  %s4 = inlined_call_operand.vmem [shape: f32[2,48,11,11], index: 4, kind: output, shape index: {1}]
  %5 = xla_tuple %s3, %s4
  %s6 = sld [smem:[#allocation0]]
  $region53: #{model_forward.2} parent=0
    _
  %s8 = ssub.s32 1, %s6
  %s9 = scalar_select 0, %s8, %s6
  loop: start=0, step=1, limit=4
  $region2: #{model_forward.2} parent=0 // loop_pre_header
    _
  $region3: #{model_forward.2} parent=0 // loop_header
    %s11 = sphi 0, %s15
    %p12 = scmp.ge.s32.totalorder %s11, 4
    %s18 = sphi 0, %s30
    %s19 = sphi 0, %s26
    %s20 = sphi 0, %s18
    %s21 = sphi 0, %s19
    %s22 = sphi 0, %s20
    %s23 = sphi 0, %s21
    %s33 = sphi 0, %s35
    %s36 = sphi 0, %s33
    %s37 = sphi 0, %s36
    %s53 = sphi 0, %s37
    %s57 = sphi 0, %s57
    %s59 = sphi 0, %s57
    %s60 = sphi 0, %s59
    %s74 = sphi 0, %s60
    %s78 = sphi 0, %s78
    %s80 = sphi 0, %s78
    %s81 = sphi 0, %s80
    %s95 = sphi 0, %s81
    %s103 = sphi 0, %s105
    %s106 = sphi 0, %s103
    %s107 = sphi 0, %s106
    %s123 = sphi 0, %s107
    %s131 = sphi 0, %s133
    %s134 = sphi 0, %s131
    %s135 = sphi 0, %s134
    %s151 = sphi 0, %s135
  $region4: #{model_forward.2} parent=0 // loop_header_branch
    %14 = sbr.rel (%p12) target = $region8
  $region5: #{model_forward.2} parent=0 // loop_body
    %s16 = ssub.s32 %s11, 1
    %s17 = ssub.s32 %s11, 2
    %s24 = sadd.s32 1, %s19
    %p25 = scmp.ge.s32.totalorder %s24, 1
    %s26 = scalar_select %p25, 0, %s24
    %s27 = sadd.s32 1, %s18
    %s28 = scalar_select %p25, %s27, %s18
    %p29 = scmp.ge.s32.totalorder %s28, 2
    %s30 = scalar_select %p29, 0, %s28
    %s31 = ssub.s32 %s18, %s30
    %p32 = scmp.eq.s32.totalorder %s31, 0
    %s34 = sadd.s32 %s33, 1
    %s35 = scalar_select %p32, %s33, %s34
    %p38 = pneg %p32
    %p39 = scmp.eq.s32.totalorder %s11, 1
    %p40 = por %p38, %p39
    %p41 = scmp.ne.s32.totalorder %s33, %s36
    %p42 = scmp.eq.s32.totalorder %s11, 0
    %p43 = por %p41, %p42
    %p44 = scmp.ne.s32.totalorder %s33, %s36
    %p45 = scmp.eq.s32.totalorder %s16, 1
    %p46 = por %p44, %p45
    %p47 = scmp.ne.s32.totalorder %s36, %s37
    %p48 = scmp.eq.s32.totalorder %s16, 0
    %p49 = por %p47, %p48
    %p50 = scmp.ne.s32.totalorder %s36, %s37
    %p51 = scmp.eq.s32.totalorder %s17, 1
    %p52 = por %p50, %p51
    %p54 = scmp.ne.s32.totalorder %s37, %s53
    %p55 = scmp.eq.s32.totalorder %s17, 0
    %p56 = por %p54, %p55
    %s58 = sadd.s32 %s57, 1
    %p61 = scmp.eq.s32.totalorder %s11, 1
    %p62 = scmp.ne.s32.totalorder %s57, %s59
    %p63 = scmp.eq.s32.totalorder %s11, 0
    %p64 = por %p62, %p63
    %p65 = scmp.ne.s32.totalorder %s57, %s59
    %p66 = scmp.eq.s32.totalorder %s16, 1
    %p67 = por %p65, %p66
    %p68 = scmp.ne.s32.totalorder %s59, %s60
    %p69 = scmp.eq.s32.totalorder %s16, 0
    %p70 = por %p68, %p69
    %p71 = scmp.ne.s32.totalorder %s59, %s60
    %p72 = scmp.eq.s32.totalorder %s17, 1
    %p73 = por %p71, %p72
    %p75 = scmp.ne.s32.totalorder %s60, %s74
    %p76 = scmp.eq.s32.totalorder %s17, 0
    %p77 = por %p75, %p76
    %s79 = sadd.s32 %s78, 1
    %p82 = scmp.eq.s32.totalorder %s11, 1
    %p83 = scmp.ne.s32.totalorder %s78, %s80
    %p84 = scmp.eq.s32.totalorder %s11, 0
    %p85 = por %p83, %p84
    %p86 = scmp.ne.s32.totalorder %s78, %s80
    %p87 = scmp.eq.s32.totalorder %s16, 1
    %p88 = por %p86, %p87
    %p89 = scmp.ne.s32.totalorder %s80, %s81
    %p90 = scmp.eq.s32.totalorder %s16, 0
    %p91 = por %p89, %p90
    %p92 = scmp.ne.s32.totalorder %s80, %s81
    %p93 = scmp.eq.s32.totalorder %s17, 1
    %p94 = por %p92, %p93
    %p96 = scmp.ne.s32.totalorder %s81, %s95
    %p97 = scmp.eq.s32.totalorder %s17, 0
    %p98 = por %p96, %p97
    %s99 = ssub.s32 %s18, %s30
    %s100 = ssub.s32 %s19, %s26
    %s101 = sor.u32 %s99, %s100
    %p102 = scmp.eq.s32.totalorder %s101, 0
    %s104 = sadd.s32 %s103, 1
    %s105 = scalar_select %p102, %s103, %s104
    %p108 = pneg %p102
    %p109 = scmp.eq.s32.totalorder %s11, 1
    %p110 = por %p108, %p109
    %p111 = scmp.ne.s32.totalorder %s103, %s106
    %p112 = scmp.eq.s32.totalorder %s11, 0
    %p113 = por %p111, %p112
    %p114 = scmp.ne.s32.totalorder %s103, %s106
    %p115 = scmp.eq.s32.totalorder %s16, 1
    %p116 = por %p114, %p115
    %p117 = scmp.ne.s32.totalorder %s106, %s107
    %p118 = scmp.eq.s32.totalorder %s16, 0
    %p119 = por %p117, %p118
    %p120 = scmp.ne.s32.totalorder %s106, %s107
    %p121 = scmp.eq.s32.totalorder %s17, 1
    %p122 = por %p120, %p121
    %p124 = scmp.ne.s32.totalorder %s107, %s123
    %p125 = scmp.eq.s32.totalorder %s17, 0
    %p126 = por %p124, %p125
    %s127 = ssub.s32 %s18, %s30
    %s128 = ssub.s32 %s19, %s26
    %s129 = sor.u32 %s127, %s128
    %p130 = scmp.eq.s32.totalorder %s129, 0
    %s132 = sadd.s32 %s131, 1
    %s133 = scalar_select %p130, %s131, %s132
    %p136 = pneg %p130
    %p137 = scmp.eq.s32.totalorder %s11, 1
    %p138 = por %p136, %p137
    %p139 = scmp.ne.s32.totalorder %s131, %s134
    %p140 = scmp.eq.s32.totalorder %s11, 0
    %p141 = por %p139, %p140
    %p142 = scmp.ne.s32.totalorder %s131, %s134
    %p143 = scmp.eq.s32.totalorder %s16, 1
    %p144 = por %p142, %p143
    %p145 = scmp.ne.s32.totalorder %s134, %s135
    %p146 = scmp.eq.s32.totalorder %s16, 0
    %p147 = por %p145, %p146
    %p148 = scmp.ne.s32.totalorder %s134, %s135
    %p149 = scmp.eq.s32.totalorder %s17, 1
    %p150 = por %p148, %p149
    %p152 = scmp.ne.s32.totalorder %s135, %s151
    %p153 = scmp.eq.s32.totalorder %s17, 0
    %p154 = por %p152, %p153
    %p155 = scmp.le.s32.totalorder 1, %s11
    %p156 = scmp.lt.s32.totalorder %s11, 3
    %p157 = pnand %p155, %p156
    %p158 = pneg %p157
    // Predicated region
    $region9: #{model_forward.2} parent=5 // pred_check
      _
    $region10: #{model_forward.2} parent=5 // pred_check_branch
      %160 = sbr.rel (%p157) target = $region12
    $region11: #{model_forward.2} parent=5 // pred_region
      %s161 = ssub.s32 %s11, 1
      // Predicated region
      $region13: #{model_forward.2} parent=11 // pred_check
        %p162 = pneg %p70
      $region14: #{model_forward.2} parent=11 // pred_check_branch
        %164 = sbr.rel (%p162) target = $region16
      $region15: #{model_forward.2} parent=11 // pred_region
        _
      $region16: #{model_forward.2} parent=11 // pred_fallthru
        _
      // Predicated region
      $region17: #{model_forward.2} parent=11 // pred_check
        %p165 = pneg %p91
      $region18: #{model_forward.2} parent=11 // pred_check_branch
        %167 = sbr.rel (%p165) target = $region20
      $region19: #{model_forward.2} parent=11 // pred_region
        _
      $region20: #{model_forward.2} parent=11 // pred_fallthru
        _
    $region12: #{model_forward.2} parent=5 // pred_fallthru
      _
    %p168 = scmp.lt.s32.totalorder %s11, 2
    // Predicated region
    $region21: #{model_forward.2} parent=5 // pred_check
      %p169 = pneg %p168
    $region22: #{model_forward.2} parent=5 // pred_check_branch
      %171 = sbr.rel (%p169) target = $region24
    $region23: #{model_forward.2} parent=5 // pred_region
      // Predicated region
      $region25: #{model_forward.2} parent=23 // pred_check
        %p172 = pneg %p43
      $region26: #{model_forward.2} parent=23 // pred_check_branch
        %174 = sbr.rel (%p172) target = $region28
      $region27: #{model_forward.2} parent=23 // pred_region
        %p175 = scmp.lt.s32.totalorder %s18, 1
        %s176 = scalar_select %p175, %s18, 1
        %s177 = smul.addr %s176, 9
        %s178 = smul.addr %s177, 8
        %s179 = scalar_lea.vmem %s0, %s178
      $region28: #{model_forward.2} parent=23 // pred_fallthru
        _
    $region24: #{model_forward.2} parent=5 // pred_fallthru
      _
    %p180 = scmp.le.s32.totalorder 1, %s11
    %p181 = scmp.lt.s32.totalorder %s11, 3
    %p182 = pnand %p180, %p181
    %p183 = pneg %p182
    // Predicated region
    $region29: #{model_forward.2} parent=5 // pred_check
      _
    $region30: #{model_forward.2} parent=5 // pred_check_branch
      %185 = sbr.rel (%p182) target = $region32
    $region31: #{model_forward.2} parent=5 // pred_region
      %s186 = ssub.s32 %s11, 1
      %p187 = scmp.lt.s32.totalorder %s20, 1
      %s188 = scalar_select %p187, %s20, 1
      %s189 = smul.addr %s188, 9
      %s190 = smul.addr %s189, 8
      %s191 = scalar_lea.vmem %s0, %s190
      %p192 = pneg %p49
      %p193 = pneg %p46
      %p194 = pneg %p70
      %p195 = pneg %p67
      %p196 = pneg %p91
      %p197 = pneg %p88
      %p198 = pneg %p119
      %p199 = pneg %p116
      %s200 = smul.u32 2, %s21
      %p201 = scmp.lt.s32.totalorder %s20, 1
      %s202 = scalar_select %p201, %s20, 1
      %p203 = scmp.lt.s32.totalorder %s200, 1
      %s204 = scalar_select %p203, %s200, 1
      %s205 = smul.addr %s202, 64
      %s206 = sadd.s32 %s204, %s205
      %s207 = smul.addr %s206, 8
      %s208 = scalar_lea.vmem %s3, %s207
      %p209 = pneg %p147
      %p210 = pneg %p144
      %s211 = smul.u32 2, %s21
      %p212 = scmp.lt.s32.totalorder %s20, 1
      %s213 = scalar_select %p212, %s20, 1
      %p214 = scmp.lt.s32.totalorder %s211, 1
      %s215 = scalar_select %p214, %s211, 1
      %s216 = smul.addr %s213, 96
      %s217 = sadd.s32 %s215, %s216
      %s218 = smul.addr %s217, 8
      %s219 = scalar_lea.vmem %s4, %s218
      %p220 = scmp.lt.s32.totalorder %s20, 1
      %s221 = scalar_select %p220, %s20, 1
      %s222 = smul.addr %s221, 9
      %s223 = smul.addr %s222, 8
      %s224 = scalar_lea.vmem %s0, %s223
      %s225 = smul.u32 2, %s21
      %p226 = scmp.lt.s32.totalorder %s20, 1
      %s227 = scalar_select %p226, %s20, 1
      %p228 = scmp.lt.s32.totalorder %s225, 1
      %s229 = scalar_select %p228, %s225, 1
      %s230 = smul.addr %s227, 64
      %s231 = sadd.s32 %s229, %s230
      %s232 = smul.addr %s231, 8
      %s233 = scalar_lea.vmem %s3, %s232
      %s234 = smul.u32 2, %s21
      %s235 = smul.u32 2, %s21
      %p236 = scmp.lt.s32.totalorder %s20, 1
      %s237 = scalar_select %p236, %s20, 1
      %p238 = scmp.lt.s32.totalorder %s235, 1
      %s239 = scalar_select %p238, %s235, 1
      %s240 = smul.addr %s237, 96
      %s241 = sadd.s32 %s239, %s240
      %s242 = smul.addr %s241, 8
      %s243 = scalar_lea.vmem %s4, %s242
      %s244 = smul.u32 2, %s21
      %s246 = smul.u32 %s21, 16
      %s247 = scalar_lea.vmem %s224, %s246
      %v248 = vld [vmem:[%s247] sm:$0xff]
      %v249 = vld [vmem:[%s247 + $0x8] sm:$0xff]
      %v250 = vld [vmem:[%s247 + $0x10] sm:$0xff]
      %v251 = vld [vmem:[%s247 + $0x18] sm:$0xff]
      %v252 = vld [vmem:[%s247 + $0x20] sm:$0xff]
      %v253 = vld [vmem:[%s247 + $0x28] sm:$0xff]
      %v254 = vld [vmem:[%s247 + $0x30] sm:$0xff]
      %v255 = vld [vmem:[%s247 + $0x38] sm:$0xff]
      %v256 = vld [vmem:[%s247 + $0x40] sm:$0xff]
      %260 = vrot.lane.b32.xlu0 %v248, 127
      %v261 = vpop.permute.xlu0 %260
      %262 = vrot.lane.b32.xlu0 %v249, 127
      %v263 = vpop.permute.xlu0 %262
      %264 = vrot.lane.b32.xlu0 %v250, 127
      %v265 = vpop.permute.xlu0 %264
      %272 = vrot.lane.b32.xlu0 %v251, 127
      %v273 = vpop.permute.xlu0 %272
      %274 = vrot.lane.b32.xlu0 %v252, 127
      %v275 = vpop.permute.xlu0 %274
      %276 = vrot.lane.b32.xlu0 %v253, 127
      %v277 = vpop.permute.xlu0 %276
      %284 = vrot.lane.b32.xlu0 %v254, 127
      %v285 = vpop.permute.xlu0 %284
      %286 = vrot.lane.b32.xlu0 %v255, 127
      %v287 = vpop.permute.xlu0 %286
      %288 = vrot.lane.b32.xlu0 %v256, 127
      %v289 = vpop.permute.xlu0 %288
      %293 = vrot.lane.b32.xlu0 %v248, 126
      %v294 = vpop.permute.xlu0 %293
      %295 = vrot.lane.b32.xlu0 %v249, 126
      %v296 = vpop.permute.xlu0 %295
      %297 = vrot.lane.b32.xlu0 %v250, 126
      %v298 = vpop.permute.xlu0 %297
      %302 = vrot.lane.b32.xlu0 %v251, 126
      %v303 = vpop.permute.xlu0 %302
      %304 = vrot.lane.b32.xlu0 %v252, 126
      %v305 = vpop.permute.xlu0 %304
      %306 = vrot.lane.b32.xlu0 %v253, 126
      %v307 = vpop.permute.xlu0 %306
      %311 = vrot.lane.b32.xlu0 %v254, 126
      %v312 = vpop.permute.xlu0 %311
      %313 = vrot.lane.b32.xlu0 %v255, 126
      %v314 = vpop.permute.xlu0 %313
      %315 = vrot.lane.b32.xlu0 %v256, 126
      %v316 = vpop.permute.xlu0 %315
      %320 = vrot.lane.b32.xlu0 %v248, 125
      %v321 = vpop.permute.xlu0 %320
      %322 = vrot.lane.b32.xlu0 %v249, 125
      %v323 = vpop.permute.xlu0 %322
      %324 = vrot.lane.b32.xlu0 %v250, 125
      %v325 = vpop.permute.xlu0 %324
      %329 = vrot.lane.b32.xlu0 %v251, 125
      %v330 = vpop.permute.xlu0 %329
      %331 = vrot.lane.b32.xlu0 %v252, 125
      %v332 = vpop.permute.xlu0 %331
      %333 = vrot.lane.b32.xlu0 %v253, 125
      %v334 = vpop.permute.xlu0 %333
      %338 = vrot.lane.b32.xlu0 %v254, 125
      %v339 = vpop.permute.xlu0 %338
      %340 = vrot.lane.b32.xlu0 %v255, 125
      %v341 = vpop.permute.xlu0 %340
      %342 = vrot.lane.b32.xlu0 %v256, 125
      %v343 = vpop.permute.xlu0 %342
      %347 = vrot.lane.b32.xlu0 %v248, 124
      %v348 = vpop.permute.xlu0 %347
      %349 = vrot.lane.b32.xlu0 %v249, 124
      %v350 = vpop.permute.xlu0 %349
      %351 = vrot.lane.b32.xlu0 %v250, 124
      %v352 = vpop.permute.xlu0 %351
      %356 = vrot.lane.b32.xlu0 %v251, 124
      %v357 = vpop.permute.xlu0 %356
      %358 = vrot.lane.b32.xlu0 %v252, 124
      %v359 = vpop.permute.xlu0 %358
      %360 = vrot.lane.b32.xlu0 %v253, 124
      %v361 = vpop.permute.xlu0 %360
      %365 = vrot.lane.b32.xlu0 %v254, 124
      %v366 = vpop.permute.xlu0 %365
      %367 = vrot.lane.b32.xlu0 %v255, 124
      %v368 = vpop.permute.xlu0 %367
      %369 = vrot.lane.b32.xlu0 %v256, 124
      %v370 = vpop.permute.xlu0 %369
      %374 = vrot.lane.b32.xlu0 %v248, 123
      %v375 = vpop.permute.xlu0 %374
      %376 = vrot.lane.b32.xlu0 %v249, 123
      %v377 = vpop.permute.xlu0 %376
      %378 = vrot.lane.b32.xlu0 %v250, 123
      %v379 = vpop.permute.xlu0 %378
      %383 = vrot.lane.b32.xlu0 %v251, 123
      %v384 = vpop.permute.xlu0 %383
      %385 = vrot.lane.b32.xlu0 %v252, 123
      %v386 = vpop.permute.xlu0 %385
      %387 = vrot.lane.b32.xlu0 %v253, 123
      %v388 = vpop.permute.xlu0 %387
      %389 = vrot.lane.b32.xlu0 %v254, 123
      %v390 = vpop.permute.xlu0 %389
      %391 = vrot.lane.b32.xlu0 %v255, 123
      %v392 = vpop.permute.xlu0 %391
      %393 = vrot.lane.b32.xlu0 %v256, 123
      %v394 = vpop.permute.xlu0 %393
      %v401 = vpack.c.bf16 %v249, %v248
      %v402 = vpack.c.bf16 %v251, %v250
      %v403 = vpack.c.bf16 %v253, %v252
      %v404 = vpack.c.bf16 %v255, %v254
      %v405 = vpack.c.bf16 %v261, %v256
      %v406 = vpack.c.bf16 %v265, %v263
      %v407 = vpack.c.bf16 %v275, %v273
      %v408 = vpack.c.bf16 %v285, %v277
      %v409 = vpack.c.bf16 %v289, %v287
      %v410 = vpack.c.bf16 %v296, %v294
      %v411 = vpack.c.bf16 %v303, %v298
      %v412 = vpack.c.bf16 %v307, %v305
      %v413 = vpack.c.bf16 %v314, %v312
      %v414 = vpack.c.bf16 %v321, %v316
      %v415 = vpack.c.bf16 %v325, %v323
      %v416 = vpack.c.bf16 %v332, %v330
      %v417 = vpack.c.bf16 %v339, %v334
      %v418 = vpack.c.bf16 %v343, %v341
      %v419 = vpack.c.bf16 %v350, %v348
      %v420 = vpack.c.bf16 %v357, %v352
      %v421 = vpack.c.bf16 %v361, %v359
      %v422 = vpack.c.bf16 %v368, %v366
      %v423 = vpack.c.bf16 %v375, %v370
      %v424 = vpack.c.bf16 %v379, %v377
      %v425 = vpack.c.bf16 %v386, %v384
      %v426 = vpack.c.bf16 %v390, %v388
      %v427 = vpack.c.bf16 %v394, %v392
      %v428 = vld [vmem:[%s1] sm:$0xff]
      %v429 = vld [vmem:[%s1 + $0x8] sm:$0xff]
      %v430 = vld [vmem:[%s1 + $0x10] sm:$0xff]
      %v431 = vld [vmem:[%s1 + $0x18] sm:$0xff]
      %v432 = vld [vmem:[%s1 + $0x20] sm:$0xff]
      %v433 = vld [vmem:[%s1 + $0x28] sm:$0xff]
      %v434 = vld [vmem:[%s1 + $0x30] sm:$0xff]
      %v435 = vld [vmem:[%s1 + $0x38] sm:$0xff]
      %v436 = vld [vmem:[%s1 + $0x40] sm:$0xff]
      %v437 = vld [vmem:[%s1 + $0x48] sm:$0xff]
      %v438 = vld [vmem:[%s1 + $0x50] sm:$0xff]
      %v439 = vld [vmem:[%s1 + $0x58] sm:$0xff]
      %v440 = vld [vmem:[%s1 + $0x60] sm:$0xff]
      %v441 = vld [vmem:[%s1 + $0x68] sm:$0xff]
      %v442 = vld [vmem:[%s1 + $0x70] sm:$0xff]
      %v443 = vld [vmem:[%s1 + $0x78] sm:$0xff]
      %v444 = vld [vmem:[%s1 + $0x80] sm:$0xff]
      %v445 = vld [vmem:[%s1 + $0x88] sm:$0xff]
      %v446 = vld [vmem:[%s1 + $0x90] sm:$0xff]
      %v447 = vld [vmem:[%s1 + $0x98] sm:$0xff]
      %v448 = vld [vmem:[%s1 + $0xa0] sm:$0xff]
      %v449 = vld [vmem:[%s1 + $0xa8] sm:$0xff]
      %v450 = vld [vmem:[%s1 + $0xb0] sm:$0xff]
      %v451 = vld [vmem:[%s1 + $0xb8] sm:$0xff]
      %v452 = vld [vmem:[%s1 + $0xc0] sm:$0xff]
      %v453 = vld [vmem:[%s1 + $0xc8] sm:$0xff]
      %v454 = vld [vmem:[%s1 + $0xd0] sm:$0xff]
      %v455 = vld [vmem:[%s1 + $0xd8] sm:$0xff]
      %v456 = vld [vmem:[%s1 + $0xe0] sm:$0xff]
      %v457 = vld [vmem:[%s1 + $0xe8] sm:$0xff]
      %v458 = vld [vmem:[%s1 + $0xf0] sm:$0xff]
      %v459 = vld [vmem:[%s1 + $0xf8] sm:$0xff]
      %v460 = vld [vmem:[%s1 + $0x100] sm:$0xff]
      %v461 = vld [vmem:[%s1 + $0x108] sm:$0xff]
      %v462 = vld [vmem:[%s1 + $0x110] sm:$0xff]
      %v463 = vld [vmem:[%s1 + $0x118] sm:$0xff]
      %v464 = vld [vmem:[%s1 + $0x120] sm:$0xff]
      %v465 = vld [vmem:[%s1 + $0x128] sm:$0xff]
      %v466 = vld [vmem:[%s1 + $0x130] sm:$0xff]
      %v467 = vld [vmem:[%s1 + $0x138] sm:$0xff]
      %v468 = vld [vmem:[%s1 + $0x140] sm:$0xff]
      %v469 = vld [vmem:[%s1 + $0x148] sm:$0xff]
      %v470 = vld [vmem:[%s1 + $0x150] sm:$0xff]
      %v471 = vld [vmem:[%s1 + $0x158] sm:$0xff]
      %v472 = vld [vmem:[%s1 + $0x160] sm:$0xff]
      %v473 = vld [vmem:[%s1 + $0x168] sm:$0xff]
      %v474 = vld [vmem:[%s1 + $0x170] sm:$0xff]
      %v475 = vld [vmem:[%s1 + $0x178] sm:$0xff]
      %v476 = vld [vmem:[%s1 + $0x180] sm:$0xff]
      %v477 = vld [vmem:[%s1 + $0x188] sm:$0xff]
      %v478 = vld [vmem:[%s1 + $0x190] sm:$0xff]
      %v479 = vld [vmem:[%s1 + $0x198] sm:$0xff]
      %v480 = vld [vmem:[%s1 + $0x1a0] sm:$0xff]
      %v481 = vld [vmem:[%s1 + $0x1a8] sm:$0xff]
      %v482 = vld [vmem:[%s1 + $0x1b0] sm:$0xff]
      %v483 = vld [vmem:[%s1 + $0x1b8] sm:$0xff]
      %v484 = vld [vmem:[%s1 + $0x1c0] sm:$0xff]
      %v485 = vld [vmem:[%s1 + $0x1c8] sm:$0xff]
      %v486 = vld [vmem:[%s1 + $0x1d0] sm:$0xff]
      %v487 = vld [vmem:[%s1 + $0x1d8] sm:$0xff]
      %v488 = vld [vmem:[%s1 + $0x1e0] sm:$0xff]
      %v489 = vld [vmem:[%s1 + $0x1e8] sm:$0xff]
      %v490 = vld [vmem:[%s1 + $0x1f0] sm:$0xff]
      %v491 = vld [vmem:[%s1 + $0x1f8] sm:$0xff]
      %v492 = vld [vmem:[%s1 + $0x200] sm:$0xff]
      %v493 = vld [vmem:[%s1 + $0x208] sm:$0xff]
      %v494 = vld [vmem:[%s1 + $0x210] sm:$0xff]
      %v495 = vld [vmem:[%s1 + $0x218] sm:$0xff]
      %v496 = vld [vmem:[%s1 + $0x220] sm:$0xff]
      %v497 = vld [vmem:[%s1 + $0x228] sm:$0xff]
      %v498 = vld [vmem:[%s1 + $0x230] sm:$0xff]
      %v499 = vld [vmem:[%s1 + $0x238] sm:$0xff]
      %v500 = vld [vmem:[%s1 + $0x240] sm:$0xff]
      %v501 = vld [vmem:[%s1 + $0x248] sm:$0xff]
      %v502 = vld [vmem:[%s1 + $0x250] sm:$0xff]
      %v503 = vld [vmem:[%s1 + $0x258] sm:$0xff]
      %v504 = vld [vmem:[%s1 + $0x260] sm:$0xff]
      %v505 = vld [vmem:[%s1 + $0x268] sm:$0xff]
      %v506 = vld [vmem:[%s1 + $0x270] sm:$0xff]
      %v507 = vld [vmem:[%s1 + $0x278] sm:$0xff]
      %v508 = vld [vmem:[%s1 + $0x280] sm:$0xff]
      %v509 = vld [vmem:[%s1 + $0x288] sm:$0xff]
      %v510 = vld [vmem:[%s1 + $0x290] sm:$0xff]
      %v511 = vld [vmem:[%s1 + $0x298] sm:$0xff]
      %v512 = vld [vmem:[%s1 + $0x2a0] sm:$0xff]
      %v513 = vld [vmem:[%s1 + $0x2a8] sm:$0xff]
      %v514 = vld [vmem:[%s1 + $0x2b0] sm:$0xff]
      %v515 = vld [vmem:[%s1 + $0x2b8] sm:$0xff]
      %v516 = vld [vmem:[%s1 + $0x2c0] sm:$0xff]
      %v517 = vld [vmem:[%s1 + $0x2c8] sm:$0xff]
      %v518 = vld [vmem:[%s1 + $0x2d0] sm:$0xff]
      %v519 = vld [vmem:[%s1 + $0x2d8] sm:$0xff]
      %v520 = vld [vmem:[%s1 + $0x2e0] sm:$0xff]
      %v521 = vld [vmem:[%s1 + $0x2e8] sm:$0xff]
      %v522 = vld [vmem:[%s1 + $0x2f0] sm:$0xff]
      %v523 = vld [vmem:[%s1 + $0x2f8] sm:$0xff]
      %v524 = vld [vmem:[%s1 + $0x300] sm:$0xff]
      %v525 = vld [vmem:[%s1 + $0x308] sm:$0xff]
      %v526 = vld [vmem:[%s1 + $0x310] sm:$0xff]
      %v527 = vld [vmem:[%s1 + $0x318] sm:$0xff]
      %v528 = vld [vmem:[%s1 + $0x320] sm:$0xff]
      %v529 = vld [vmem:[%s1 + $0x328] sm:$0xff]
      %v530 = vld [vmem:[%s1 + $0x330] sm:$0xff]
      %v531 = vld [vmem:[%s1 + $0x338] sm:$0xff]
      %v532 = vld [vmem:[%s1 + $0x340] sm:$0xff]
      %v533 = vld [vmem:[%s1 + $0x348] sm:$0xff]
      %v534 = vld [vmem:[%s1 + $0x350] sm:$0xff]
      %v535 = vld [vmem:[%s1 + $0x358] sm:$0xff]
      %v536 = vld [vmem:[%s1 + $0x360] sm:$0xff]
      %v537 = vld [vmem:[%s1 + $0x368] sm:$0xff]
      %v538 = vld [vmem:[%s1 + $0x370] sm:$0xff]
      %v539 = vld [vmem:[%s1 + $0x378] sm:$0xff]
      %v540 = vld [vmem:[%s1 + $0x380] sm:$0xff]
      %v541 = vld [vmem:[%s1 + $0x388] sm:$0xff]
      %v542 = vld [vmem:[%s1 + $0x390] sm:$0xff]
      %v543 = vld [vmem:[%s1 + $0x398] sm:$0xff]
      %v544 = vld [vmem:[%s1 + $0x3a0] sm:$0xff]
      %v545 = vld [vmem:[%s1 + $0x3a8] sm:$0xff]
      %v546 = vld [vmem:[%s1 + $0x3b0] sm:$0xff]
      %v547 = vld [vmem:[%s1 + $0x3b8] sm:$0xff]
      %v548 = vld [vmem:[%s1 + $0x3c0] sm:$0xff]
      %v549 = vld [vmem:[%s1 + $0x3c8] sm:$0xff]
      %v550 = vld [vmem:[%s1 + $0x3d0] sm:$0xff]
      %v551 = vld [vmem:[%s1 + $0x3d8] sm:$0xff]
      %v552 = vld [vmem:[%s1 + $0x3e0] sm:$0xff]
      %v553 = vld [vmem:[%s1 + $0x3e8] sm:$0xff]
      %v554 = vld [vmem:[%s1 + $0x3f0] sm:$0xff]
      %v555 = vld [vmem:[%s1 + $0x3f8] sm:$0xff]
      %v556 = vld [vmem:[%s1 + $0x400] sm:$0xff]
      %v557 = vld [vmem:[%s1 + $0x408] sm:$0xff]
      %v558 = vld [vmem:[%s1 + $0x410] sm:$0xff]
      %v559 = vld [vmem:[%s1 + $0x418] sm:$0xff]
      %v560 = vld [vmem:[%s1 + $0x420] sm:$0xff]
      %v561 = vld [vmem:[%s1 + $0x428] sm:$0xff]
      %v562 = vld [vmem:[%s1 + $0x430] sm:$0xff]
      %v563 = vld [vmem:[%s1 + $0x438] sm:$0xff]
      %v564 = vld [vmem:[%s1 + $0x440] sm:$0xff]
      %v565 = vld [vmem:[%s1 + $0x448] sm:$0xff]
      %v566 = vld [vmem:[%s1 + $0x450] sm:$0xff]
      %v567 = vld [vmem:[%s1 + $0x458] sm:$0xff]
      %v568 = vld [vmem:[%s1 + $0x460] sm:$0xff]
      %v569 = vld [vmem:[%s1 + $0x468] sm:$0xff]
      %v570 = vld [vmem:[%s1 + $0x470] sm:$0xff]
      %v571 = vld [vmem:[%s1 + $0x478] sm:$0xff]
      %v572 = vld [vmem:[%s1 + $0x480] sm:$0xff]
      %v573 = vld [vmem:[%s1 + $0x488] sm:$0xff]
      %v574 = vld [vmem:[%s1 + $0x490] sm:$0xff]
      %v575 = vld [vmem:[%s1 + $0x498] sm:$0xff]
      %v576 = vld [vmem:[%s1 + $0x4a0] sm:$0xff]
      %v577 = vld [vmem:[%s1 + $0x4a8] sm:$0xff]
      %v578 = vld [vmem:[%s1 + $0x4b0] sm:$0xff]
      %v579 = vld [vmem:[%s1 + $0x4b8] sm:$0xff]
      %v580 = vld [vmem:[%s1 + $0x4c0] sm:$0xff]
      %v581 = vld [vmem:[%s1 + $0x4c8] sm:$0xff]
      %v582 = vld [vmem:[%s1 + $0x4d0] sm:$0xff]
      %v583 = vld [vmem:[%s1 + $0x4d8] sm:$0xff]
      %v584 = vld [vmem:[%s1 + $0x4e0] sm:$0xff]
      %v585 = vld [vmem:[%s1 + $0x4e8] sm:$0xff]
      %v586 = vld [vmem:[%s1 + $0x4f0] sm:$0xff]
      %v587 = vld [vmem:[%s1 + $0x4f8] sm:$0xff]
      %v588 = vld [vmem:[%s1 + $0x500] sm:$0xff]
      %v589 = vld [vmem:[%s1 + $0x508] sm:$0xff]
      %v590 = vld [vmem:[%s1 + $0x510] sm:$0xff]
      %v591 = vld [vmem:[%s1 + $0x518] sm:$0xff]
      %v592 = vld [vmem:[%s1 + $0x520] sm:$0xff]
      %v593 = vld [vmem:[%s1 + $0x528] sm:$0xff]
      %v594 = vld [vmem:[%s1 + $0x530] sm:$0xff]
      %v595 = vld [vmem:[%s1 + $0x538] sm:$0xff]
      %v596 = vld [vmem:[%s1 + $0x540] sm:$0xff]
      %v597 = vld [vmem:[%s1 + $0x548] sm:$0xff]
      %v598 = vld [vmem:[%s1 + $0x550] sm:$0xff]
      %v599 = vld [vmem:[%s1 + $0x558] sm:$0xff]
      %v600 = vld [vmem:[%s1 + $0x560] sm:$0xff]
      %v601 = vld [vmem:[%s1 + $0x568] sm:$0xff]
      %v602 = vld [vmem:[%s1 + $0x570] sm:$0xff]
      %v603 = vld [vmem:[%s1 + $0x578] sm:$0xff]
      %v604 = vld [vmem:[%s1 + $0x580] sm:$0xff]
      %v605 = vld [vmem:[%s1 + $0x588] sm:$0xff]
      %v606 = vld [vmem:[%s1 + $0x590] sm:$0xff]
      %v607 = vld [vmem:[%s1 + $0x598] sm:$0xff]
      %v608 = vld [vmem:[%s1 + $0x5a0] sm:$0xff]
      %v609 = vld [vmem:[%s1 + $0x5a8] sm:$0xff]
      %v610 = vld [vmem:[%s1 + $0x5b0] sm:$0xff]
      %v611 = vld [vmem:[%s1 + $0x5b8] sm:$0xff]
      %v612 = vld [vmem:[%s1 + $0x5c0] sm:$0xff]
      %v613 = vld [vmem:[%s1 + $0x5c8] sm:$0xff]
      %v614 = vld [vmem:[%s1 + $0x5d0] sm:$0xff]
      %v615 = vld [vmem:[%s1 + $0x5d8] sm:$0xff]
      %v616 = vld [vmem:[%s1 + $0x5e0] sm:$0xff]
      %v617 = vld [vmem:[%s1 + $0x5e8] sm:$0xff]
      %v618 = vld [vmem:[%s1 + $0x5f0] sm:$0xff]
      %v619 = vld [vmem:[%s1 + $0x5f8] sm:$0xff]
      %v620 = vld [vmem:[%s1 + $0x600] sm:$0xff]
      %v621 = vld [vmem:[%s1 + $0x608] sm:$0xff]
      %v622 = vld [vmem:[%s1 + $0x610] sm:$0xff]
      %v623 = vld [vmem:[%s1 + $0x618] sm:$0xff]
      %v624 = vld [vmem:[%s1 + $0x620] sm:$0xff]
      %v625 = vld [vmem:[%s1 + $0x628] sm:$0xff]
      %v626 = vld [vmem:[%s1 + $0x630] sm:$0xff]
      %v627 = vld [vmem:[%s1 + $0x638] sm:$0xff]
      %v628 = vld [vmem:[%s1 + $0x640] sm:$0xff]
      %v629 = vld [vmem:[%s1 + $0x648] sm:$0xff]
      %v630 = vld [vmem:[%s1 + $0x650] sm:$0xff]
      %v631 = vld [vmem:[%s1 + $0x658] sm:$0xff]
      %v632 = vld [vmem:[%s1 + $0x660] sm:$0xff]
      %v633 = vld [vmem:[%s1 + $0x668] sm:$0xff]
      %v634 = vld [vmem:[%s1 + $0x670] sm:$0xff]
      %v635 = vld [vmem:[%s1 + $0x678] sm:$0xff]
      %v636 = vld [vmem:[%s1 + $0x680] sm:$0xff]
      %v637 = vld [vmem:[%s1 + $0x688] sm:$0xff]
      %v638 = vld [vmem:[%s1 + $0x690] sm:$0xff]
      %v639 = vld [vmem:[%s1 + $0x698] sm:$0xff]
      %v640 = vld [vmem:[%s1 + $0x6a0] sm:$0xff]
      %v641 = vld [vmem:[%s1 + $0x6a8] sm:$0xff]
      %v642 = vld [vmem:[%s1 + $0x6b0] sm:$0xff]
      %v643 = vld [vmem:[%s1 + $0x6b8] sm:$0xff]
      %v644 = vld [vmem:[%s1 + $0x6c0] sm:$0xff]
      %v645 = vld [vmem:[%s1 + $0x6c8] sm:$0xff]
      %v646 = vld [vmem:[%s1 + $0x6d0] sm:$0xff]
      %v647 = vld [vmem:[%s1 + $0x6d8] sm:$0xff]
      %v648 = vld [vmem:[%s1 + $0x6e0] sm:$0xff]
      %v649 = vld [vmem:[%s1 + $0x6e8] sm:$0xff]
      %v650 = vld [vmem:[%s1 + $0x6f0] sm:$0xff]
      %v651 = vld [vmem:[%s1 + $0x6f8] sm:$0xff]
      %v652 = vld [vmem:[%s1 + $0x700] sm:$0xff]
      %v653 = vld [vmem:[%s1 + $0x708] sm:$0xff]
      %v654 = vld [vmem:[%s1 + $0x710] sm:$0xff]
      %v655 = vld [vmem:[%s1 + $0x718] sm:$0xff]
      %v656 = vld [vmem:[%s1 + $0x720] sm:$0xff]
      %v657 = vld [vmem:[%s1 + $0x728] sm:$0xff]
      %v658 = vld [vmem:[%s1 + $0x730] sm:$0xff]
      %v659 = vld [vmem:[%s1 + $0x738] sm:$0xff]
      %v660 = vld [vmem:[%s1 + $0x740] sm:$0xff]
      %v661 = vld [vmem:[%s1 + $0x748] sm:$0xff]
      %v662 = vld [vmem:[%s1 + $0x750] sm:$0xff]
      %v663 = vld [vmem:[%s1 + $0x758] sm:$0xff]
      %v664 = vld [vmem:[%s1 + $0x760] sm:$0xff]
      %v665 = vld [vmem:[%s1 + $0x768] sm:$0xff]
      %v666 = vld [vmem:[%s1 + $0x770] sm:$0xff]
      %v667 = vld [vmem:[%s1 + $0x778] sm:$0xff]
      %v668 = vld [vmem:[%s1 + $0x780] sm:$0xff]
      %v669 = vld [vmem:[%s1 + $0x788] sm:$0xff]
      %v670 = vld [vmem:[%s1 + $0x790] sm:$0xff]
      %v671 = vld [vmem:[%s1 + $0x798] sm:$0xff]
      %v672 = vld [vmem:[%s1 + $0x7a0] sm:$0xff]
      %v673 = vld [vmem:[%s1 + $0x7a8] sm:$0xff]
      %v674 = vld [vmem:[%s1 + $0x7b0] sm:$0xff]
      %v675 = vld [vmem:[%s1 + $0x7b8] sm:$0xff]
      %v676 = vld [vmem:[%s1 + $0x7c0] sm:$0xff]
      %v677 = vld [vmem:[%s1 + $0x7c8] sm:$0xff]
      %v678 = vld [vmem:[%s1 + $0x7d0] sm:$0xff]
      %v679 = vld [vmem:[%s1 + $0x7d8] sm:$0xff]
      %v680 = vld [vmem:[%s1 + $0x7e0] sm:$0xff]
      %v681 = vld [vmem:[%s1 + $0x7e8] sm:$0xff]
      %v682 = vld [vmem:[%s1 + $0x7f0] sm:$0xff]
      %v683 = vld [vmem:[%s1 + $0x7f8] sm:$0xff]
      %v684 = vld [vmem:[%s1 + $0x800] sm:$0xff]
      %v685 = vld [vmem:[%s1 + $0x808] sm:$0xff]
      %v686 = vld [vmem:[%s1 + $0x810] sm:$0xff]
      %v687 = vld [vmem:[%s1 + $0x818] sm:$0xff]
      %v688 = vld [vmem:[%s1 + $0x820] sm:$0xff]
      %v689 = vld [vmem:[%s1 + $0x828] sm:$0xff]
      %v690 = vld [vmem:[%s1 + $0x830] sm:$0xff]
      %v691 = vld [vmem:[%s1 + $0x838] sm:$0xff]
      %v692 = vld [vmem:[%s1 + $0x840] sm:$0xff]
      %v693 = vld [vmem:[%s1 + $0x848] sm:$0xff]
      %v694 = vld [vmem:[%s1 + $0x850] sm:$0xff]
      %v695 = vld [vmem:[%s1 + $0x858] sm:$0xff]
      %v696 = vld [vmem:[%s1 + $0x860] sm:$0xff]
      %v697 = vld [vmem:[%s1 + $0x868] sm:$0xff]
      %v698 = vld [vmem:[%s1 + $0x870] sm:$0xff]
      %v699 = vld [vmem:[%s1 + $0x878] sm:$0xff]
      %v700 = vld [vmem:[%s1 + $0x880] sm:$0xff]
      %v701 = vld [vmem:[%s1 + $0x888] sm:$0xff]
      %v702 = vld [vmem:[%s1 + $0x890] sm:$0xff]
      %v703 = vld [vmem:[%s1 + $0x898] sm:$0xff]
      %v704 = vld [vmem:[%s1 + $0x8a0] sm:$0xff]
      %v705 = vld [vmem:[%s1 + $0x8a8] sm:$0xff]
      %v706 = vld [vmem:[%s1 + $0x8b0] sm:$0xff]
      %v707 = vld [vmem:[%s1 + $0x8b8] sm:$0xff]
      %v708 = vld [vmem:[%s1 + $0x8c0] sm:$0xff]
      %v709 = vld [vmem:[%s1 + $0x8c8] sm:$0xff]
      %v710 = vld [vmem:[%s1 + $0x8d0] sm:$0xff]
      %v711 = vld [vmem:[%s1 + $0x8d8] sm:$0xff]
      %v712 = vld [vmem:[%s1 + $0x8e0] sm:$0xff]
      %v713 = vld [vmem:[%s1 + $0x8e8] sm:$0xff]
      %v714 = vld [vmem:[%s1 + $0x8f0] sm:$0xff]
      %v715 = vld [vmem:[%s1 + $0x8f8] sm:$0xff]
      %v716 = vld [vmem:[%s1 + $0x900] sm:$0xff]
      %v717 = vld [vmem:[%s1 + $0x908] sm:$0xff]
      %v718 = vld [vmem:[%s1 + $0x910] sm:$0xff]
      %v719 = vld [vmem:[%s1 + $0x918] sm:$0xff]
      %v720 = vld [vmem:[%s1 + $0x920] sm:$0xff]
      %v721 = vld [vmem:[%s1 + $0x928] sm:$0xff]
      %v722 = vld [vmem:[%s1 + $0x930] sm:$0xff]
      %v723 = vld [vmem:[%s1 + $0x938] sm:$0xff]
      %v724 = vld [vmem:[%s1 + $0x940] sm:$0xff]
      %v725 = vld [vmem:[%s1 + $0x948] sm:$0xff]
      %v726 = vld [vmem:[%s1 + $0x950] sm:$0xff]
      %v727 = vld [vmem:[%s1 + $0x958] sm:$0xff]
      %v728 = vld [vmem:[%s1 + $0x960] sm:$0xff]
      %v729 = vld [vmem:[%s1 + $0x968] sm:$0xff]
      %v730 = vld [vmem:[%s1 + $0x970] sm:$0xff]
      %v731 = vld [vmem:[%s1 + $0x978] sm:$0xff]
      %v732 = vld [vmem:[%s1 + $0x980] sm:$0xff]
      %v733 = vld [vmem:[%s1 + $0x988] sm:$0xff]
      %v734 = vld [vmem:[%s1 + $0x990] sm:$0xff]
      %v735 = vld [vmem:[%s1 + $0x998] sm:$0xff]
      %v736 = vld [vmem:[%s1 + $0x9a0] sm:$0xff]
      %v737 = vld [vmem:[%s1 + $0x9a8] sm:$0xff]
      %v738 = vld [vmem:[%s1 + $0x9b0] sm:$0xff]
      %v739 = vld [vmem:[%s1 + $0x9b8] sm:$0xff]
      %v740 = vld [vmem:[%s1 + $0x9c0] sm:$0xff]
      %v741 = vld [vmem:[%s1 + $0x9c8] sm:$0xff]
      %v742 = vld [vmem:[%s1 + $0x9d0] sm:$0xff]
      %v743 = vld [vmem:[%s1 + $0x9d8] sm:$0xff]
      %v744 = vld [vmem:[%s1 + $0x9e0] sm:$0xff]
      %v745 = vld [vmem:[%s1 + $0x9e8] sm:$0xff]
      %v746 = vld [vmem:[%s1 + $0x9f0] sm:$0xff]
      %v747 = vld [vmem:[%s1 + $0x9f8] sm:$0xff]
      %v748 = vld [vmem:[%s2] sm:$0xff]
      %v749 = vld [vmem:[%s2 + $0x8] sm:$0xff]
      %v750 = vld [vmem:[%s2 + $0x10] sm:$0xff]
      %v751 = vld [vmem:[%s2 + $0x18] sm:$0xff]
      %v752 = vld [vmem:[%s2 + $0x20] sm:$0xff]
      %v753 = vld [vmem:[%s2 + $0x28] sm:$0xff]
      %v754 = vld [vmem:[%s2 + $0x30] sm:$0xff]
      %v755 = vld [vmem:[%s2 + $0x38] sm:$0xff]
      %v756 = vld [vmem:[%s2 + $0x40] sm:$0xff]
      %v757 = vld [vmem:[%s2 + $0x48] sm:$0xff]
      %v758 = vld [vmem:[%s2 + $0x50] sm:$0xff]
      %v759 = vld [vmem:[%s2 + $0x58] sm:$0xff]
      %v760 = vld [vmem:[%s2 + $0x60] sm:$0xff]
      %v761 = vld [vmem:[%s2 + $0x68] sm:$0xff]
      %v762 = vld [vmem:[%s2 + $0x70] sm:$0xff]
      %v763 = vld [vmem:[%s2 + $0x78] sm:$0xff]
      %v764 = vld [vmem:[%s2 + $0x80] sm:$0xff]
      %v765 = vld [vmem:[%s2 + $0x88] sm:$0xff]
      %v766 = vld [vmem:[%s2 + $0x90] sm:$0xff]
      %v767 = vld [vmem:[%s2 + $0x98] sm:$0xff]
      %v768 = vld [vmem:[%s2 + $0xa0] sm:$0xff]
      %v769 = vld [vmem:[%s2 + $0xa8] sm:$0xff]
      %v770 = vld [vmem:[%s2 + $0xb0] sm:$0xff]
      %v771 = vld [vmem:[%s2 + $0xb8] sm:$0xff]
      %v772 = vld [vmem:[%s2 + $0xc0] sm:$0xff]
      %v773 = vld [vmem:[%s2 + $0xc8] sm:$0xff]
      %v774 = vld [vmem:[%s2 + $0xd0] sm:$0xff]
      %v775 = vld [vmem:[%s2 + $0xd8] sm:$0xff]
      %v776 = vld [vmem:[%s2 + $0xe0] sm:$0xff]
      %v777 = vld [vmem:[%s2 + $0xe8] sm:$0xff]
      %v778 = vld [vmem:[%s2 + $0xf0] sm:$0xff]
      %v779 = vld [vmem:[%s2 + $0xf8] sm:$0xff]
      %v780 = vld [vmem:[%s2 + $0x100] sm:$0xff]
      %v781 = vld [vmem:[%s2 + $0x108] sm:$0xff]
      %v782 = vld [vmem:[%s2 + $0x110] sm:$0xff]
      %v783 = vld [vmem:[%s2 + $0x118] sm:$0xff]
      %v784 = vld [vmem:[%s2 + $0x120] sm:$0xff]
      %v785 = vld [vmem:[%s2 + $0x128] sm:$0xff]
      %v786 = vld [vmem:[%s2 + $0x130] sm:$0xff]
      %v787 = vld [vmem:[%s2 + $0x138] sm:$0xff]
      %v788 = vld [vmem:[%s2 + $0x140] sm:$0xff]
      %v789 = vld [vmem:[%s2 + $0x148] sm:$0xff]
      %v790 = vld [vmem:[%s2 + $0x150] sm:$0xff]
      %v791 = vld [vmem:[%s2 + $0x158] sm:$0xff]
      %v792 = vld [vmem:[%s2 + $0x160] sm:$0xff]
      %v793 = vld [vmem:[%s2 + $0x168] sm:$0xff]
      %v794 = vld [vmem:[%s2 + $0x170] sm:$0xff]
      %v795 = vld [vmem:[%s2 + $0x178] sm:$0xff]
      %v796 = vld [vmem:[%s2 + $0x180] sm:$0xff]
      %v797 = vld [vmem:[%s2 + $0x188] sm:$0xff]
      %v798 = vld [vmem:[%s2 + $0x190] sm:$0xff]
      %v799 = vld [vmem:[%s2 + $0x198] sm:$0xff]
      %v800 = vld [vmem:[%s2 + $0x1a0] sm:$0xff]
      %v801 = vld [vmem:[%s2 + $0x1a8] sm:$0xff]
      %v802 = vld [vmem:[%s2 + $0x1b0] sm:$0xff]
      %v803 = vld [vmem:[%s2 + $0x1b8] sm:$0xff]
      %v804 = vld [vmem:[%s2 + $0x1c0] sm:$0xff]
      %v805 = vld [vmem:[%s2 + $0x1c8] sm:$0xff]
      %v806 = vld [vmem:[%s2 + $0x1d0] sm:$0xff]
      %v807 = vld [vmem:[%s2 + $0x1d8] sm:$0xff]
      %v808 = vld [vmem:[%s2 + $0x1e0] sm:$0xff]
      %v809 = vld [vmem:[%s2 + $0x1e8] sm:$0xff]
      %v810 = vld [vmem:[%s2 + $0x1f0] sm:$0xff]
      %v811 = vld [vmem:[%s2 + $0x1f8] sm:$0xff]
      %v812 = vld [vmem:[%s2 + $0x200] sm:$0xff]
      %v813 = vld [vmem:[%s2 + $0x208] sm:$0xff]
      %v814 = vld [vmem:[%s2 + $0x210] sm:$0xff]
      %v815 = vld [vmem:[%s2 + $0x218] sm:$0xff]
      %v816 = vld [vmem:[%s2 + $0x220] sm:$0xff]
      %v817 = vld [vmem:[%s2 + $0x228] sm:$0xff]
      %v818 = vld [vmem:[%s2 + $0x230] sm:$0xff]
      %v819 = vld [vmem:[%s2 + $0x238] sm:$0xff]
      %v820 = vld [vmem:[%s2 + $0x240] sm:$0xff]
      %v821 = vld [vmem:[%s2 + $0x248] sm:$0xff]
      %v822 = vld [vmem:[%s2 + $0x250] sm:$0xff]
      %v823 = vld [vmem:[%s2 + $0x258] sm:$0xff]
      %v824 = vld [vmem:[%s2 + $0x260] sm:$0xff]
      %v825 = vld [vmem:[%s2 + $0x268] sm:$0xff]
      %v826 = vld [vmem:[%s2 + $0x270] sm:$0xff]
      %v827 = vld [vmem:[%s2 + $0x278] sm:$0xff]
      %v828 = vld [vmem:[%s2 + $0x280] sm:$0xff]
      %v829 = vld [vmem:[%s2 + $0x288] sm:$0xff]
      %v830 = vld [vmem:[%s2 + $0x290] sm:$0xff]
      %v831 = vld [vmem:[%s2 + $0x298] sm:$0xff]
      %v832 = vld [vmem:[%s2 + $0x2a0] sm:$0xff]
      %v833 = vld [vmem:[%s2 + $0x2a8] sm:$0xff]
      %v834 = vld [vmem:[%s2 + $0x2b0] sm:$0xff]
      %v835 = vld [vmem:[%s2 + $0x2b8] sm:$0xff]
      %v836 = vld [vmem:[%s2 + $0x2c0] sm:$0xff]
      %v837 = vld [vmem:[%s2 + $0x2c8] sm:$0xff]
      %v838 = vld [vmem:[%s2 + $0x2d0] sm:$0xff]
      %v839 = vld [vmem:[%s2 + $0x2d8] sm:$0xff]
      %v840 = vld [vmem:[%s2 + $0x2e0] sm:$0xff]
      %v841 = vld [vmem:[%s2 + $0x2e8] sm:$0xff]
      %v842 = vld [vmem:[%s2 + $0x2f0] sm:$0xff]
      %v843 = vld [vmem:[%s2 + $0x2f8] sm:$0xff]
      %v844 = vld [vmem:[%s2 + $0x300] sm:$0xff]
      %v845 = vld [vmem:[%s2 + $0x308] sm:$0xff]
      %v846 = vld [vmem:[%s2 + $0x310] sm:$0xff]
      %v847 = vld [vmem:[%s2 + $0x318] sm:$0xff]
      %v848 = vld [vmem:[%s2 + $0x320] sm:$0xff]
      %v849 = vld [vmem:[%s2 + $0x328] sm:$0xff]
      %v850 = vld [vmem:[%s2 + $0x330] sm:$0xff]
      %v851 = vld [vmem:[%s2 + $0x338] sm:$0xff]
      %v852 = vld [vmem:[%s2 + $0x340] sm:$0xff]
      %v853 = vld [vmem:[%s2 + $0x348] sm:$0xff]
      %v854 = vld [vmem:[%s2 + $0x350] sm:$0xff]
      %v855 = vld [vmem:[%s2 + $0x358] sm:$0xff]
      %v856 = vld [vmem:[%s2 + $0x360] sm:$0xff]
      %v857 = vld [vmem:[%s2 + $0x368] sm:$0xff]
      %v858 = vld [vmem:[%s2 + $0x370] sm:$0xff]
      %v859 = vld [vmem:[%s2 + $0x378] sm:$0xff]
      %v860 = vld [vmem:[%s2 + $0x380] sm:$0xff]
      %v861 = vld [vmem:[%s2 + $0x388] sm:$0xff]
      %v862 = vld [vmem:[%s2 + $0x390] sm:$0xff]
      %v863 = vld [vmem:[%s2 + $0x398] sm:$0xff]
      %v864 = vld [vmem:[%s2 + $0x3a0] sm:$0xff]
      %v865 = vld [vmem:[%s2 + $0x3a8] sm:$0xff]
      %v866 = vld [vmem:[%s2 + $0x3b0] sm:$0xff]
      %v867 = vld [vmem:[%s2 + $0x3b8] sm:$0xff]
      %v868 = vld [vmem:[%s2 + $0x3c0] sm:$0xff]
      %v869 = vld [vmem:[%s2 + $0x3c8] sm:$0xff]
      %v870 = vld [vmem:[%s2 + $0x3d0] sm:$0xff]
      %v871 = vld [vmem:[%s2 + $0x3d8] sm:$0xff]
      %v872 = vld [vmem:[%s2 + $0x3e0] sm:$0xff]
      %v873 = vld [vmem:[%s2 + $0x3e8] sm:$0xff]
      %v874 = vld [vmem:[%s2 + $0x3f0] sm:$0xff]
      %v875 = vld [vmem:[%s2 + $0x3f8] sm:$0xff]
      %v876 = vld [vmem:[%s2 + $0x400] sm:$0xff]
      %v877 = vld [vmem:[%s2 + $0x408] sm:$0xff]
      %v878 = vld [vmem:[%s2 + $0x410] sm:$0xff]
      %v879 = vld [vmem:[%s2 + $0x418] sm:$0xff]
      %v880 = vld [vmem:[%s2 + $0x420] sm:$0xff]
      %v881 = vld [vmem:[%s2 + $0x428] sm:$0xff]
      %v882 = vld [vmem:[%s2 + $0x430] sm:$0xff]
      %v883 = vld [vmem:[%s2 + $0x438] sm:$0xff]
      %v884 = vld [vmem:[%s2 + $0x440] sm:$0xff]
      %v885 = vld [vmem:[%s2 + $0x448] sm:$0xff]
      %v886 = vld [vmem:[%s2 + $0x450] sm:$0xff]
      %v887 = vld [vmem:[%s2 + $0x458] sm:$0xff]
      %v888 = vld [vmem:[%s2 + $0x460] sm:$0xff]
      %v889 = vld [vmem:[%s2 + $0x468] sm:$0xff]
      %v890 = vld [vmem:[%s2 + $0x470] sm:$0xff]
      %v891 = vld [vmem:[%s2 + $0x478] sm:$0xff]
      %v892 = vld [vmem:[%s2 + $0x480] sm:$0xff]
      %v893 = vld [vmem:[%s2 + $0x488] sm:$0xff]
      %v894 = vld [vmem:[%s2 + $0x490] sm:$0xff]
      %v895 = vld [vmem:[%s2 + $0x498] sm:$0xff]
      %v896 = vld [vmem:[%s2 + $0x4a0] sm:$0xff]
      %v897 = vld [vmem:[%s2 + $0x4a8] sm:$0xff]
      %v898 = vld [vmem:[%s2 + $0x4b0] sm:$0xff]
      %v899 = vld [vmem:[%s2 + $0x4b8] sm:$0xff]
      %v900 = vld [vmem:[%s2 + $0x4c0] sm:$0xff]
      %v901 = vld [vmem:[%s2 + $0x4c8] sm:$0xff]
      %v902 = vld [vmem:[%s2 + $0x4d0] sm:$0xff]
      %v903 = vld [vmem:[%s2 + $0x4d8] sm:$0xff]
      %v904 = vld [vmem:[%s2 + $0x4e0] sm:$0xff]
      %v905 = vld [vmem:[%s2 + $0x4e8] sm:$0xff]
      %v906 = vld [vmem:[%s2 + $0x4f0] sm:$0xff]
      %v907 = vld [vmem:[%s2 + $0x4f8] sm:$0xff]
      %909 = vset.pattern.permute.xlu0 0
      %910 = vperm.xlu0 %909, %v748
      %v911 = vpop.permute.xlu0 %910
      %914 = vset.pattern.permute.xlu0 0
      %915 = vperm.xlu0 %914, %v749
      %v916 = vpop.permute.xlu0 %915
      %919 = vset.pattern.permute.xlu0 0
      %920 = vperm.xlu0 %919, %v750
      %v921 = vpop.permute.xlu0 %920
      %924 = vset.pattern.permute.xlu0 0
      %925 = vperm.xlu0 %924, %v751
      %v926 = vpop.permute.xlu0 %925
      %929 = vset.pattern.permute.xlu0 0
      %930 = vperm.xlu0 %929, %v752
      %v931 = vpop.permute.xlu0 %930
      %934 = vset.pattern.permute.xlu0 0
      %935 = vperm.xlu0 %934, %v753
      %v936 = vpop.permute.xlu0 %935
      %939 = vset.pattern.permute.xlu0 0
      %940 = vperm.xlu0 %939, %v754
      %v941 = vpop.permute.xlu0 %940
      %944 = vset.pattern.permute.xlu0 0
      %945 = vperm.xlu0 %944, %v755
      %v946 = vpop.permute.xlu0 %945
      %949 = vset.pattern.permute.xlu0 0
      %950 = vperm.xlu0 %949, %v756
      %v951 = vpop.permute.xlu0 %950
      %954 = vset.pattern.permute.xlu0 0
      %955 = vperm.xlu0 %954, %v757
      %v956 = vpop.permute.xlu0 %955
      %959 = vset.pattern.permute.xlu0 0
      %960 = vperm.xlu0 %959, %v758
      %v961 = vpop.permute.xlu0 %960
      %964 = vset.pattern.permute.xlu0 0
      %965 = vperm.xlu0 %964, %v759
      %v966 = vpop.permute.xlu0 %965
      %969 = vset.pattern.permute.xlu0 0
      %970 = vperm.xlu0 %969, %v760
      %v971 = vpop.permute.xlu0 %970
      %974 = vset.pattern.permute.xlu0 0
      %975 = vperm.xlu0 %974, %v761
      %v976 = vpop.permute.xlu0 %975
      %979 = vset.pattern.permute.xlu0 0
      %980 = vperm.xlu0 %979, %v762
      %v981 = vpop.permute.xlu0 %980
      %984 = vset.pattern.permute.xlu0 0
      %985 = vperm.xlu0 %984, %v763
      %v986 = vpop.permute.xlu0 %985
      %989 = vset.pattern.permute.xlu0 0
      %990 = vperm.xlu0 %989, %v764
      %v991 = vpop.permute.xlu0 %990
      %994 = vset.pattern.permute.xlu0 0
      %995 = vperm.xlu0 %994, %v765
      %v996 = vpop.permute.xlu0 %995
      %999 = vset.pattern.permute.xlu0 0
      %1000 = vperm.xlu0 %999, %v766
      %v1001 = vpop.permute.xlu0 %1000
      %1004 = vset.pattern.permute.xlu0 0
      %1005 = vperm.xlu0 %1004, %v767
      %v1006 = vpop.permute.xlu0 %1005
      %1009 = vset.pattern.permute.xlu0 0
      %1010 = vperm.xlu0 %1009, %v768
      %v1011 = vpop.permute.xlu0 %1010
      %1014 = vset.pattern.permute.xlu0 0
      %1015 = vperm.xlu0 %1014, %v769
      %v1016 = vpop.permute.xlu0 %1015
      %1019 = vset.pattern.permute.xlu0 0
      %1020 = vperm.xlu0 %1019, %v770
      %v1021 = vpop.permute.xlu0 %1020
      %1024 = vset.pattern.permute.xlu0 0
      %1025 = vperm.xlu0 %1024, %v771
      %v1026 = vpop.permute.xlu0 %1025
      %1029 = vset.pattern.permute.xlu0 0
      %1030 = vperm.xlu0 %1029, %v772
      %v1031 = vpop.permute.xlu0 %1030
      %1034 = vset.pattern.permute.xlu0 0
      %1035 = vperm.xlu0 %1034, %v773
      %v1036 = vpop.permute.xlu0 %1035
      %1039 = vset.pattern.permute.xlu0 0
      %1040 = vperm.xlu0 %1039, %v774
      %v1041 = vpop.permute.xlu0 %1040
      %1044 = vset.pattern.permute.xlu0 0
      %1045 = vperm.xlu0 %1044, %v775
      %v1046 = vpop.permute.xlu0 %1045
      %1049 = vset.pattern.permute.xlu0 0
      %1050 = vperm.xlu0 %1049, %v776
      %v1051 = vpop.permute.xlu0 %1050
      %1054 = vset.pattern.permute.xlu0 0
      %1055 = vperm.xlu0 %1054, %v777
      %v1056 = vpop.permute.xlu0 %1055
      %1059 = vset.pattern.permute.xlu0 0
      %1060 = vperm.xlu0 %1059, %v778
      %v1061 = vpop.permute.xlu0 %1060
      %1064 = vset.pattern.permute.xlu0 0
      %1065 = vperm.xlu0 %1064, %v779
      %v1066 = vpop.permute.xlu0 %1065
      %1069 = vset.pattern.permute.xlu0 0
      %1070 = vperm.xlu0 %1069, %v780
      %v1071 = vpop.permute.xlu0 %1070
      %1074 = vset.pattern.permute.xlu0 0
      %1075 = vperm.xlu0 %1074, %v781
      %v1076 = vpop.permute.xlu0 %1075
      %1079 = vset.pattern.permute.xlu0 0
      %1080 = vperm.xlu0 %1079, %v782
      %v1081 = vpop.permute.xlu0 %1080
      %1084 = vset.pattern.permute.xlu0 0
      %1085 = vperm.xlu0 %1084, %v783
      %v1086 = vpop.permute.xlu0 %1085
      %1089 = vset.pattern.permute.xlu0 0
      %1090 = vperm.xlu0 %1089, %v784
      %v1091 = vpop.permute.xlu0 %1090
      %1094 = vset.pattern.permute.xlu0 0
      %1095 = vperm.xlu0 %1094, %v785
      %v1096 = vpop.permute.xlu0 %1095
      %1099 = vset.pattern.permute.xlu0 0
      %1100 = vperm.xlu0 %1099, %v786
      %v1101 = vpop.permute.xlu0 %1100
      %1104 = vset.pattern.permute.xlu0 0
      %1105 = vperm.xlu0 %1104, %v787
      %v1106 = vpop.permute.xlu0 %1105
      %1109 = vset.pattern.permute.xlu0 0
      %1110 = vperm.xlu0 %1109, %v788
      %v1111 = vpop.permute.xlu0 %1110
      %1114 = vset.pattern.permute.xlu0 0
      %1115 = vperm.xlu0 %1114, %v789
      %v1116 = vpop.permute.xlu0 %1115
      %1119 = vset.pattern.permute.xlu0 0
      %1120 = vperm.xlu0 %1119, %v790
      %v1121 = vpop.permute.xlu0 %1120
      %1124 = vset.pattern.permute.xlu0 0
      %1125 = vperm.xlu0 %1124, %v791
      %v1126 = vpop.permute.xlu0 %1125
      %1129 = vset.pattern.permute.xlu0 0
      %1130 = vperm.xlu0 %1129, %v792
      %v1131 = vpop.permute.xlu0 %1130
      %1134 = vset.pattern.permute.xlu0 0
      %1135 = vperm.xlu0 %1134, %v793
      %v1136 = vpop.permute.xlu0 %1135
      %1139 = vset.pattern.permute.xlu0 0
      %1140 = vperm.xlu0 %1139, %v794
      %v1141 = vpop.permute.xlu0 %1140
      %1144 = vset.pattern.permute.xlu0 0
      %1145 = vperm.xlu0 %1144, %v795
      %v1146 = vpop.permute.xlu0 %1145
      %1149 = vset.pattern.permute.xlu0 0
      %1150 = vperm.xlu0 %1149, %v796
      %v1151 = vpop.permute.xlu0 %1150
      %1154 = vset.pattern.permute.xlu0 0
      %1155 = vperm.xlu0 %1154, %v797
      %v1156 = vpop.permute.xlu0 %1155
      %1159 = vset.pattern.permute.xlu0 0
      %1160 = vperm.xlu0 %1159, %v798
      %v1161 = vpop.permute.xlu0 %1160
      %1164 = vset.pattern.permute.xlu0 0
      %1165 = vperm.xlu0 %1164, %v799
      %v1166 = vpop.permute.xlu0 %1165
      %1169 = vset.pattern.permute.xlu0 0
      %1170 = vperm.xlu0 %1169, %v800
      %v1171 = vpop.permute.xlu0 %1170
      %1174 = vset.pattern.permute.xlu0 0
      %1175 = vperm.xlu0 %1174, %v801
      %v1176 = vpop.permute.xlu0 %1175
      %1179 = vset.pattern.permute.xlu0 0
      %1180 = vperm.xlu0 %1179, %v802
      %v1181 = vpop.permute.xlu0 %1180
      %1184 = vset.pattern.permute.xlu0 0
      %1185 = vperm.xlu0 %1184, %v803
      %v1186 = vpop.permute.xlu0 %1185
      %1189 = vset.pattern.permute.xlu0 0
      %1190 = vperm.xlu0 %1189, %v804
      %v1191 = vpop.permute.xlu0 %1190
      %1194 = vset.pattern.permute.xlu0 0
      %1195 = vperm.xlu0 %1194, %v805
      %v1196 = vpop.permute.xlu0 %1195
      %1199 = vset.pattern.permute.xlu0 0
      %1200 = vperm.xlu0 %1199, %v806
      %v1201 = vpop.permute.xlu0 %1200
      %1204 = vset.pattern.permute.xlu0 0
      %1205 = vperm.xlu0 %1204, %v807
      %v1206 = vpop.permute.xlu0 %1205
      %1209 = vset.pattern.permute.xlu0 0
      %1210 = vperm.xlu0 %1209, %v808
      %v1211 = vpop.permute.xlu0 %1210
      %1214 = vset.pattern.permute.xlu0 0
      %1215 = vperm.xlu0 %1214, %v809
      %v1216 = vpop.permute.xlu0 %1215
      %1219 = vset.pattern.permute.xlu0 0
      %1220 = vperm.xlu0 %1219, %v810
      %v1221 = vpop.permute.xlu0 %1220
      %1224 = vset.pattern.permute.xlu0 0
      %1225 = vperm.xlu0 %1224, %v811
      %v1226 = vpop.permute.xlu0 %1225
      %1229 = vset.pattern.permute.xlu0 0
      %1230 = vperm.xlu0 %1229, %v812
      %v1231 = vpop.permute.xlu0 %1230
      %1234 = vset.pattern.permute.xlu0 0
      %1235 = vperm.xlu0 %1234, %v813
      %v1236 = vpop.permute.xlu0 %1235
      %1239 = vset.pattern.permute.xlu0 0
      %1240 = vperm.xlu0 %1239, %v814
      %v1241 = vpop.permute.xlu0 %1240
      %1244 = vset.pattern.permute.xlu0 0
      %1245 = vperm.xlu0 %1244, %v815
      %v1246 = vpop.permute.xlu0 %1245
      %1249 = vset.pattern.permute.xlu0 0
      %1250 = vperm.xlu0 %1249, %v816
      %v1251 = vpop.permute.xlu0 %1250
      %1254 = vset.pattern.permute.xlu0 0
      %1255 = vperm.xlu0 %1254, %v817
      %v1256 = vpop.permute.xlu0 %1255
      %1259 = vset.pattern.permute.xlu0 0
      %1260 = vperm.xlu0 %1259, %v818
      %v1261 = vpop.permute.xlu0 %1260
      %1264 = vset.pattern.permute.xlu0 0
      %1265 = vperm.xlu0 %1264, %v819
      %v1266 = vpop.permute.xlu0 %1265
      %1269 = vset.pattern.permute.xlu0 0
      %1270 = vperm.xlu0 %1269, %v820
      %v1271 = vpop.permute.xlu0 %1270
      %1274 = vset.pattern.permute.xlu0 0
      %1275 = vperm.xlu0 %1274, %v821
      %v1276 = vpop.permute.xlu0 %1275
      %1279 = vset.pattern.permute.xlu0 0
      %1280 = vperm.xlu0 %1279, %v822
      %v1281 = vpop.permute.xlu0 %1280
      %1284 = vset.pattern.permute.xlu0 0
      %1285 = vperm.xlu0 %1284, %v823
      %v1286 = vpop.permute.xlu0 %1285
      %1289 = vset.pattern.permute.xlu0 0
      %1290 = vperm.xlu0 %1289, %v824
      %v1291 = vpop.permute.xlu0 %1290
      %1294 = vset.pattern.permute.xlu0 0
      %1295 = vperm.xlu0 %1294, %v825
      %v1296 = vpop.permute.xlu0 %1295
      %1299 = vset.pattern.permute.xlu0 0
      %1300 = vperm.xlu0 %1299, %v826
      %v1301 = vpop.permute.xlu0 %1300
      %1304 = vset.pattern.permute.xlu0 0
      %1305 = vperm.xlu0 %1304, %v827
      %v1306 = vpop.permute.xlu0 %1305
      %1309 = vset.pattern.permute.xlu0 0
      %1310 = vperm.xlu0 %1309, %v828
      %v1311 = vpop.permute.xlu0 %1310
      %1314 = vset.pattern.permute.xlu0 0
      %1315 = vperm.xlu0 %1314, %v829
      %v1316 = vpop.permute.xlu0 %1315
      %1319 = vset.pattern.permute.xlu0 0
      %1320 = vperm.xlu0 %1319, %v830
      %v1321 = vpop.permute.xlu0 %1320
      %1324 = vset.pattern.permute.xlu0 0
      %1325 = vperm.xlu0 %1324, %v831
      %v1326 = vpop.permute.xlu0 %1325
      %1329 = vset.pattern.permute.xlu0 0
      %1330 = vperm.xlu0 %1329, %v832
      %v1331 = vpop.permute.xlu0 %1330
      %1334 = vset.pattern.permute.xlu0 0
      %1335 = vperm.xlu0 %1334, %v833
      %v1336 = vpop.permute.xlu0 %1335
      %1339 = vset.pattern.permute.xlu0 0
      %1340 = vperm.xlu0 %1339, %v834
      %v1341 = vpop.permute.xlu0 %1340
      %1344 = vset.pattern.permute.xlu0 0
      %1345 = vperm.xlu0 %1344, %v835
      %v1346 = vpop.permute.xlu0 %1345
      %1349 = vset.pattern.permute.xlu0 0
      %1350 = vperm.xlu0 %1349, %v836
      %v1351 = vpop.permute.xlu0 %1350
      %1354 = vset.pattern.permute.xlu0 0
      %1355 = vperm.xlu0 %1354, %v837
      %v1356 = vpop.permute.xlu0 %1355
      %1359 = vset.pattern.permute.xlu0 0
      %1360 = vperm.xlu0 %1359, %v838
      %v1361 = vpop.permute.xlu0 %1360
      %1364 = vset.pattern.permute.xlu0 0
      %1365 = vperm.xlu0 %1364, %v839
      %v1366 = vpop.permute.xlu0 %1365
      %1369 = vset.pattern.permute.xlu0 0
      %1370 = vperm.xlu0 %1369, %v840
      %v1371 = vpop.permute.xlu0 %1370
      %1374 = vset.pattern.permute.xlu0 0
      %1375 = vperm.xlu0 %1374, %v841
      %v1376 = vpop.permute.xlu0 %1375
      %1379 = vset.pattern.permute.xlu0 0
      %1380 = vperm.xlu0 %1379, %v842
      %v1381 = vpop.permute.xlu0 %1380
      %1384 = vset.pattern.permute.xlu0 0
      %1385 = vperm.xlu0 %1384, %v843
      %v1386 = vpop.permute.xlu0 %1385
      %1389 = vset.pattern.permute.xlu0 0
      %1390 = vperm.xlu0 %1389, %v844
      %v1391 = vpop.permute.xlu0 %1390
      %1394 = vset.pattern.permute.xlu0 0
      %1395 = vperm.xlu0 %1394, %v845
      %v1396 = vpop.permute.xlu0 %1395
      %1399 = vset.pattern.permute.xlu0 0
      %1400 = vperm.xlu0 %1399, %v846
      %v1401 = vpop.permute.xlu0 %1400
      %1404 = vset.pattern.permute.xlu0 0
      %1405 = vperm.xlu0 %1404, %v847
      %v1406 = vpop.permute.xlu0 %1405
      %1409 = vset.pattern.permute.xlu0 0
      %1410 = vperm.xlu0 %1409, %v848
      %v1411 = vpop.permute.xlu0 %1410
      %1414 = vset.pattern.permute.xlu0 0
      %1415 = vperm.xlu0 %1414, %v849
      %v1416 = vpop.permute.xlu0 %1415
      %1419 = vset.pattern.permute.xlu0 0
      %1420 = vperm.xlu0 %1419, %v850
      %v1421 = vpop.permute.xlu0 %1420
      %1424 = vset.pattern.permute.xlu0 0
      %1425 = vperm.xlu0 %1424, %v851
      %v1426 = vpop.permute.xlu0 %1425
      %1429 = vset.pattern.permute.xlu0 0
      %1430 = vperm.xlu0 %1429, %v852
      %v1431 = vpop.permute.xlu0 %1430
      %1434 = vset.pattern.permute.xlu0 0
      %1435 = vperm.xlu0 %1434, %v853
      %v1436 = vpop.permute.xlu0 %1435
      %1439 = vset.pattern.permute.xlu0 0
      %1440 = vperm.xlu0 %1439, %v854
      %v1441 = vpop.permute.xlu0 %1440
      %1444 = vset.pattern.permute.xlu0 0
      %1445 = vperm.xlu0 %1444, %v855
      %v1446 = vpop.permute.xlu0 %1445
      %1449 = vset.pattern.permute.xlu0 0
      %1450 = vperm.xlu0 %1449, %v856
      %v1451 = vpop.permute.xlu0 %1450
      %1454 = vset.pattern.permute.xlu0 0
      %1455 = vperm.xlu0 %1454, %v857
      %v1456 = vpop.permute.xlu0 %1455
      %1459 = vset.pattern.permute.xlu0 0
      %1460 = vperm.xlu0 %1459, %v858
      %v1461 = vpop.permute.xlu0 %1460
      %1464 = vset.pattern.permute.xlu0 0
      %1465 = vperm.xlu0 %1464, %v859
      %v1466 = vpop.permute.xlu0 %1465
      %1469 = vset.pattern.permute.xlu0 0
      %1470 = vperm.xlu0 %1469, %v860
      %v1471 = vpop.permute.xlu0 %1470
      %1474 = vset.pattern.permute.xlu0 0
      %1475 = vperm.xlu0 %1474, %v861
      %v1476 = vpop.permute.xlu0 %1475
      %1479 = vset.pattern.permute.xlu0 0
      %1480 = vperm.xlu0 %1479, %v862
      %v1481 = vpop.permute.xlu0 %1480
      %1484 = vset.pattern.permute.xlu0 0
      %1485 = vperm.xlu0 %1484, %v863
      %v1486 = vpop.permute.xlu0 %1485
      %1489 = vset.pattern.permute.xlu0 0
      %1490 = vperm.xlu0 %1489, %v864
      %v1491 = vpop.permute.xlu0 %1490
      %1494 = vset.pattern.permute.xlu0 0
      %1495 = vperm.xlu0 %1494, %v865
      %v1496 = vpop.permute.xlu0 %1495
      %1499 = vset.pattern.permute.xlu0 0
      %1500 = vperm.xlu0 %1499, %v866
      %v1501 = vpop.permute.xlu0 %1500
      %1504 = vset.pattern.permute.xlu0 0
      %1505 = vperm.xlu0 %1504, %v867
      %v1506 = vpop.permute.xlu0 %1505
      %1509 = vset.pattern.permute.xlu0 0
      %1510 = vperm.xlu0 %1509, %v868
      %v1511 = vpop.permute.xlu0 %1510
      %1514 = vset.pattern.permute.xlu0 0
      %1515 = vperm.xlu0 %1514, %v869
      %v1516 = vpop.permute.xlu0 %1515
      %1519 = vset.pattern.permute.xlu0 0
      %1520 = vperm.xlu0 %1519, %v870
      %v1521 = vpop.permute.xlu0 %1520
      %1524 = vset.pattern.permute.xlu0 0
      %1525 = vperm.xlu0 %1524, %v871
      %v1526 = vpop.permute.xlu0 %1525
      %1529 = vset.pattern.permute.xlu0 0
      %1530 = vperm.xlu0 %1529, %v872
      %v1531 = vpop.permute.xlu0 %1530
      %1534 = vset.pattern.permute.xlu0 0
      %1535 = vperm.xlu0 %1534, %v873
      %v1536 = vpop.permute.xlu0 %1535
      %1539 = vset.pattern.permute.xlu0 0
      %1540 = vperm.xlu0 %1539, %v874
      %v1541 = vpop.permute.xlu0 %1540
      %1544 = vset.pattern.permute.xlu0 0
      %1545 = vperm.xlu0 %1544, %v875
      %v1546 = vpop.permute.xlu0 %1545
      %1549 = vset.pattern.permute.xlu0 0
      %1550 = vperm.xlu0 %1549, %v876
      %v1551 = vpop.permute.xlu0 %1550
      %1554 = vset.pattern.permute.xlu0 0
      %1555 = vperm.xlu0 %1554, %v877
      %v1556 = vpop.permute.xlu0 %1555
      %1559 = vset.pattern.permute.xlu0 0
      %1560 = vperm.xlu0 %1559, %v878
      %v1561 = vpop.permute.xlu0 %1560
      %1564 = vset.pattern.permute.xlu0 0
      %1565 = vperm.xlu0 %1564, %v879
      %v1566 = vpop.permute.xlu0 %1565
      %1569 = vset.pattern.permute.xlu0 0
      %1570 = vperm.xlu0 %1569, %v880
      %v1571 = vpop.permute.xlu0 %1570
      %1574 = vset.pattern.permute.xlu0 0
      %1575 = vperm.xlu0 %1574, %v881
      %v1576 = vpop.permute.xlu0 %1575
      %1579 = vset.pattern.permute.xlu0 0
      %1580 = vperm.xlu0 %1579, %v882
      %v1581 = vpop.permute.xlu0 %1580
      %1584 = vset.pattern.permute.xlu0 0
      %1585 = vperm.xlu0 %1584, %v883
      %v1586 = vpop.permute.xlu0 %1585
      %1589 = vset.pattern.permute.xlu0 0
      %1590 = vperm.xlu0 %1589, %v884
      %v1591 = vpop.permute.xlu0 %1590
      %1594 = vset.pattern.permute.xlu0 0
      %1595 = vperm.xlu0 %1594, %v885
      %v1596 = vpop.permute.xlu0 %1595
      %1599 = vset.pattern.permute.xlu0 0
      %1600 = vperm.xlu0 %1599, %v886
      %v1601 = vpop.permute.xlu0 %1600
      %1604 = vset.pattern.permute.xlu0 0
      %1605 = vperm.xlu0 %1604, %v887
      %v1606 = vpop.permute.xlu0 %1605
      %1609 = vset.pattern.permute.xlu0 0
      %1610 = vperm.xlu0 %1609, %v888
      %v1611 = vpop.permute.xlu0 %1610
      %1614 = vset.pattern.permute.xlu0 0
      %1615 = vperm.xlu0 %1614, %v889
      %v1616 = vpop.permute.xlu0 %1615
      %1619 = vset.pattern.permute.xlu0 0
      %1620 = vperm.xlu0 %1619, %v890
      %v1621 = vpop.permute.xlu0 %1620
      %1624 = vset.pattern.permute.xlu0 0
      %1625 = vperm.xlu0 %1624, %v891
      %v1626 = vpop.permute.xlu0 %1625
      %1629 = vset.pattern.permute.xlu0 0
      %1630 = vperm.xlu0 %1629, %v892
      %v1631 = vpop.permute.xlu0 %1630
      %1634 = vset.pattern.permute.xlu0 0
      %1635 = vperm.xlu0 %1634, %v893
      %v1636 = vpop.permute.xlu0 %1635
      %1639 = vset.pattern.permute.xlu0 0
      %1640 = vperm.xlu0 %1639, %v894
      %v1641 = vpop.permute.xlu0 %1640
      %1644 = vset.pattern.permute.xlu0 0
      %1645 = vperm.xlu0 %1644, %v895
      %v1646 = vpop.permute.xlu0 %1645
      %1649 = vset.pattern.permute.xlu0 0
      %1650 = vperm.xlu0 %1649, %v896
      %v1651 = vpop.permute.xlu0 %1650
      %1654 = vset.pattern.permute.xlu0 0
      %1655 = vperm.xlu0 %1654, %v897
      %v1656 = vpop.permute.xlu0 %1655
      %1659 = vset.pattern.permute.xlu0 0
      %1660 = vperm.xlu0 %1659, %v898
      %v1661 = vpop.permute.xlu0 %1660
      %1664 = vset.pattern.permute.xlu0 0
      %1665 = vperm.xlu0 %1664, %v899
      %v1666 = vpop.permute.xlu0 %1665
      %1669 = vset.pattern.permute.xlu0 0
      %1670 = vperm.xlu0 %1669, %v900
      %v1671 = vpop.permute.xlu0 %1670
      %1674 = vset.pattern.permute.xlu0 0
      %1675 = vperm.xlu0 %1674, %v901
      %v1676 = vpop.permute.xlu0 %1675
      %1679 = vset.pattern.permute.xlu0 0
      %1680 = vperm.xlu0 %1679, %v902
      %v1681 = vpop.permute.xlu0 %1680
      %1684 = vset.pattern.permute.xlu0 0
      %1685 = vperm.xlu0 %1684, %v903
      %v1686 = vpop.permute.xlu0 %1685
      %1689 = vset.pattern.permute.xlu0 0
      %1690 = vperm.xlu0 %1689, %v904
      %v1691 = vpop.permute.xlu0 %1690
      %1694 = vset.pattern.permute.xlu0 0
      %1695 = vperm.xlu0 %1694, %v905
      %v1696 = vpop.permute.xlu0 %1695
      %1699 = vset.pattern.permute.xlu0 0
      %1700 = vperm.xlu0 %1699, %v906
      %v1701 = vpop.permute.xlu0 %1700
      %1704 = vset.pattern.permute.xlu0 0
      %1705 = vperm.xlu0 %1704, %v907
      %v1706 = vpop.permute.xlu0 %1705
      %v2028 = vunpack.c.l.b16 %v428
      %v2029 = vunpack.c.h.b16 %v428
      %v2030 = vunpack.c.l.b16 %v429
      %v2031 = vunpack.c.h.b16 %v429
      %v2032 = vunpack.c.l.b16 %v430
      %v2033 = vunpack.c.h.b16 %v430
      %v2034 = vunpack.c.l.b16 %v431
      %v2035 = vunpack.c.h.b16 %v431
      %v2036 = vunpack.c.l.b16 %v432
      %v2037 = vunpack.c.h.b16 %v432
      %v2038 = vunpack.c.l.b16 %v433
      %v2039 = vunpack.c.h.b16 %v433
      %v2040 = vunpack.c.l.b16 %v434
      %v2041 = vunpack.c.h.b16 %v434
      %v2042 = vunpack.c.l.b16 %v435
      %v2043 = vunpack.c.h.b16 %v435
      %v2044 = vunpack.c.l.b16 %v436
      %v2045 = vunpack.c.h.b16 %v436
      %v2046 = vunpack.c.l.b16 %v437
      %v2047 = vunpack.c.h.b16 %v437
      %v2048 = vunpack.c.l.b16 %v438
      %v2049 = vunpack.c.h.b16 %v438
      %v2050 = vunpack.c.l.b16 %v439
      %v2051 = vunpack.c.h.b16 %v439
      %v2052 = vunpack.c.l.b16 %v440
      %v2053 = vunpack.c.h.b16 %v440
      %v2054 = vunpack.c.l.b16 %v441
      %v2055 = vunpack.c.h.b16 %v441
      %v2056 = vunpack.c.l.b16 %v442
      %v2057 = vunpack.c.h.b16 %v442
      %v2058 = vunpack.c.l.b16 %v443
      %v2059 = vunpack.c.h.b16 %v443
      %v2060 = vunpack.c.l.b16 %v444
      %v2061 = vunpack.c.h.b16 %v444
      %v2062 = vunpack.c.l.b16 %v445
      %v2063 = vunpack.c.h.b16 %v445
      %v2064 = vunpack.c.l.b16 %v446
      %v2065 = vunpack.c.h.b16 %v446
      %v2066 = vunpack.c.l.b16 %v447
      %v2067 = vunpack.c.h.b16 %v447
      %v2068 = vunpack.c.l.b16 %v448
      %v2069 = vunpack.c.h.b16 %v448
      %v2070 = vunpack.c.l.b16 %v449
      %v2071 = vunpack.c.h.b16 %v449
      %v2072 = vunpack.c.l.b16 %v450
      %v2073 = vunpack.c.h.b16 %v450
      %v2074 = vunpack.c.l.b16 %v451
      %v2075 = vunpack.c.h.b16 %v451
      %v2076 = vunpack.c.l.b16 %v452
      %v2077 = vunpack.c.h.b16 %v452
      %v2078 = vunpack.c.l.b16 %v453
      %v2079 = vunpack.c.h.b16 %v453
      %v2080 = vunpack.c.l.b16 %v454
      %v2081 = vunpack.c.h.b16 %v454
      %v2082 = vunpack.c.l.b16 %v455
      %v2083 = vunpack.c.h.b16 %v455
      %v2084 = vunpack.c.l.b16 %v456
      %v2085 = vunpack.c.h.b16 %v456
      %v2086 = vunpack.c.l.b16 %v457
      %v2087 = vunpack.c.h.b16 %v457
      %v2088 = vunpack.c.l.b16 %v458
      %v2089 = vunpack.c.h.b16 %v458
      %v2090 = vunpack.c.l.b16 %v459
      %v2091 = vunpack.c.h.b16 %v459
      %v2092 = vunpack.c.l.b16 %v460
      %v2093 = vunpack.c.h.b16 %v460
      %v2094 = vunpack.c.l.b16 %v461
      %v2095 = vunpack.c.h.b16 %v461
      %v2096 = vunpack.c.l.b16 %v462
      %v2097 = vunpack.c.h.b16 %v462
      %v2098 = vunpack.c.l.b16 %v463
      %v2099 = vunpack.c.h.b16 %v463
      %v2100 = vunpack.c.l.b16 %v464
      %v2101 = vunpack.c.h.b16 %v464
      %v2102 = vunpack.c.l.b16 %v465
      %v2103 = vunpack.c.h.b16 %v465
      %v2104 = vunpack.c.l.b16 %v466
      %v2105 = vunpack.c.h.b16 %v466
      %v2106 = vunpack.c.l.b16 %v467
      %v2107 = vunpack.c.h.b16 %v467
      %v2108 = vunpack.c.l.b16 %v468
      %v2109 = vunpack.c.h.b16 %v468
      %v2110 = vunpack.c.l.b16 %v469
      %v2111 = vunpack.c.h.b16 %v469
      %v2112 = vunpack.c.l.b16 %v470
      %v2113 = vunpack.c.h.b16 %v470
      %v2114 = vunpack.c.l.b16 %v471
      %v2115 = vunpack.c.h.b16 %v471
      %v2116 = vunpack.c.l.b16 %v472
      %v2117 = vunpack.c.h.b16 %v472
      %v2118 = vunpack.c.l.b16 %v473
      %v2119 = vunpack.c.h.b16 %v473
      %v2120 = vunpack.c.l.b16 %v474
      %v2121 = vunpack.c.h.b16 %v474
      %v2122 = vunpack.c.l.b16 %v475
      %v2123 = vunpack.c.h.b16 %v475
      %v2124 = vunpack.c.l.b16 %v476
      %v2125 = vunpack.c.h.b16 %v476
      %v2126 = vunpack.c.l.b16 %v477
      %v2127 = vunpack.c.h.b16 %v477
      %v2128 = vunpack.c.l.b16 %v478
      %v2129 = vunpack.c.h.b16 %v478
      %v2130 = vunpack.c.l.b16 %v479
      %v2131 = vunpack.c.h.b16 %v479
      %v2132 = vunpack.c.l.b16 %v480
      %v2133 = vunpack.c.h.b16 %v480
      %v2134 = vunpack.c.l.b16 %v481
      %v2135 = vunpack.c.h.b16 %v481
      %v2136 = vunpack.c.l.b16 %v482
      %v2137 = vunpack.c.h.b16 %v482
      %v2138 = vunpack.c.l.b16 %v483
      %v2139 = vunpack.c.h.b16 %v483
      %v2140 = vunpack.c.l.b16 %v484
      %v2141 = vunpack.c.h.b16 %v484
      %v2142 = vunpack.c.l.b16 %v485
      %v2143 = vunpack.c.h.b16 %v485
      %v2144 = vunpack.c.l.b16 %v486
      %v2145 = vunpack.c.h.b16 %v486
      %v2146 = vunpack.c.l.b16 %v487
      %v2147 = vunpack.c.h.b16 %v487
      %v2148 = vunpack.c.l.b16 %v488
      %v2149 = vunpack.c.h.b16 %v488
      %v2150 = vunpack.c.l.b16 %v489
      %v2151 = vunpack.c.h.b16 %v489
      %v2152 = vunpack.c.l.b16 %v490
      %v2153 = vunpack.c.h.b16 %v490
      %v2154 = vunpack.c.l.b16 %v491
      %v2155 = vunpack.c.h.b16 %v491
      %v2156 = vunpack.c.l.b16 %v492
      %v2157 = vunpack.c.h.b16 %v492
      %v2158 = vunpack.c.l.b16 %v493
      %v2159 = vunpack.c.h.b16 %v493
      %v2160 = vunpack.c.l.b16 %v494
      %v2161 = vunpack.c.h.b16 %v494
      %v2162 = vunpack.c.l.b16 %v495
      %v2163 = vunpack.c.h.b16 %v495
      %v2164 = vunpack.c.l.b16 %v496
      %v2165 = vunpack.c.h.b16 %v496
      %v2166 = vunpack.c.l.b16 %v497
      %v2167 = vunpack.c.h.b16 %v497
      %v2168 = vunpack.c.l.b16 %v498
      %v2169 = vunpack.c.h.b16 %v498
      %v2170 = vunpack.c.l.b16 %v499
      %v2171 = vunpack.c.h.b16 %v499
      %v2172 = vunpack.c.l.b16 %v500
      %v2173 = vunpack.c.h.b16 %v500
      %v2174 = vunpack.c.l.b16 %v501
      %v2175 = vunpack.c.h.b16 %v501
      %v2176 = vunpack.c.l.b16 %v502
      %v2177 = vunpack.c.h.b16 %v502
      %v2178 = vunpack.c.l.b16 %v503
      %v2179 = vunpack.c.h.b16 %v503
      %v2180 = vunpack.c.l.b16 %v504
      %v2181 = vunpack.c.h.b16 %v504
      %v2182 = vunpack.c.l.b16 %v505
      %v2183 = vunpack.c.h.b16 %v505
      %v2184 = vunpack.c.l.b16 %v506
      %v2185 = vunpack.c.h.b16 %v506
      %v2186 = vunpack.c.l.b16 %v507
      %v2187 = vunpack.c.h.b16 %v507
      %v2188 = vunpack.c.l.b16 %v508
      %v2189 = vunpack.c.h.b16 %v508
      %v2190 = vunpack.c.l.b16 %v509
      %v2191 = vunpack.c.h.b16 %v509
      %v2192 = vunpack.c.l.b16 %v510
      %v2193 = vunpack.c.h.b16 %v510
      %v2194 = vunpack.c.l.b16 %v511
      %v2195 = vunpack.c.h.b16 %v511
      %v2196 = vunpack.c.l.b16 %v512
      %v2197 = vunpack.c.h.b16 %v512
      %v2198 = vunpack.c.l.b16 %v513
      %v2199 = vunpack.c.h.b16 %v513
      %v2200 = vunpack.c.l.b16 %v514
      %v2201 = vunpack.c.h.b16 %v514
      %v2202 = vunpack.c.l.b16 %v515
      %v2203 = vunpack.c.h.b16 %v515
      %v2204 = vunpack.c.l.b16 %v516
      %v2205 = vunpack.c.h.b16 %v516
      %v2206 = vunpack.c.l.b16 %v517
      %v2207 = vunpack.c.h.b16 %v517
      %v2208 = vunpack.c.l.b16 %v518
      %v2209 = vunpack.c.h.b16 %v518
      %v2210 = vunpack.c.l.b16 %v519
      %v2211 = vunpack.c.h.b16 %v519
      %v2212 = vunpack.c.l.b16 %v520
      %v2213 = vunpack.c.h.b16 %v520
      %v2214 = vunpack.c.l.b16 %v521
      %v2215 = vunpack.c.h.b16 %v521
      %v2216 = vunpack.c.l.b16 %v522
      %v2217 = vunpack.c.h.b16 %v522
      %v2218 = vunpack.c.l.b16 %v523
      %v2219 = vunpack.c.h.b16 %v523
      %v2220 = vunpack.c.l.b16 %v524
      %v2221 = vunpack.c.h.b16 %v524
      %v2222 = vunpack.c.l.b16 %v525
      %v2223 = vunpack.c.h.b16 %v525
      %v2224 = vunpack.c.l.b16 %v526
      %v2225 = vunpack.c.h.b16 %v526
      %v2226 = vunpack.c.l.b16 %v527
      %v2227 = vunpack.c.h.b16 %v527
      %v2228 = vunpack.c.l.b16 %v528
      %v2229 = vunpack.c.h.b16 %v528
      %v2230 = vunpack.c.l.b16 %v529
      %v2231 = vunpack.c.h.b16 %v529
      %v2232 = vunpack.c.l.b16 %v530
      %v2233 = vunpack.c.h.b16 %v530
      %v2234 = vunpack.c.l.b16 %v531
      %v2235 = vunpack.c.h.b16 %v531
      %v2236 = vunpack.c.l.b16 %v532
      %v2237 = vunpack.c.h.b16 %v532
      %v2238 = vunpack.c.l.b16 %v533
      %v2239 = vunpack.c.h.b16 %v533
      %v2240 = vunpack.c.l.b16 %v534
      %v2241 = vunpack.c.h.b16 %v534
      %v2242 = vunpack.c.l.b16 %v535
      %v2243 = vunpack.c.h.b16 %v535
      %v2244 = vunpack.c.l.b16 %v536
      %v2245 = vunpack.c.h.b16 %v536
      %v2246 = vunpack.c.l.b16 %v537
      %v2247 = vunpack.c.h.b16 %v537
      %v2248 = vunpack.c.l.b16 %v538
      %v2249 = vunpack.c.h.b16 %v538
      %v2250 = vunpack.c.l.b16 %v539
      %v2251 = vunpack.c.h.b16 %v539
      %v2252 = vunpack.c.l.b16 %v540
      %v2253 = vunpack.c.h.b16 %v540
      %v2254 = vunpack.c.l.b16 %v541
      %v2255 = vunpack.c.h.b16 %v541
      %v2256 = vunpack.c.l.b16 %v542
      %v2257 = vunpack.c.h.b16 %v542
      %v2258 = vunpack.c.l.b16 %v543
      %v2259 = vunpack.c.h.b16 %v543
      %v2260 = vunpack.c.l.b16 %v544
      %v2261 = vunpack.c.h.b16 %v544
      %v2262 = vunpack.c.l.b16 %v545
      %v2263 = vunpack.c.h.b16 %v545
      %v2264 = vunpack.c.l.b16 %v546
      %v2265 = vunpack.c.h.b16 %v546
      %v2266 = vunpack.c.l.b16 %v547
      %v2267 = vunpack.c.h.b16 %v547
      %v2268 = vunpack.c.l.b16 %v548
      %v2269 = vunpack.c.h.b16 %v548
      %v2270 = vunpack.c.l.b16 %v549
      %v2271 = vunpack.c.h.b16 %v549
      %v2272 = vunpack.c.l.b16 %v550
      %v2273 = vunpack.c.h.b16 %v550
      %v2274 = vunpack.c.l.b16 %v551
      %v2275 = vunpack.c.h.b16 %v551
      %v2276 = vunpack.c.l.b16 %v552
      %v2277 = vunpack.c.h.b16 %v552
      %v2278 = vunpack.c.l.b16 %v553
      %v2279 = vunpack.c.h.b16 %v553
      %v2280 = vunpack.c.l.b16 %v554
      %v2281 = vunpack.c.h.b16 %v554
      %v2282 = vunpack.c.l.b16 %v555
      %v2283 = vunpack.c.h.b16 %v555
      %v2284 = vunpack.c.l.b16 %v556
      %v2285 = vunpack.c.h.b16 %v556
      %v2286 = vunpack.c.l.b16 %v557
      %v2287 = vunpack.c.h.b16 %v557
      %v2288 = vunpack.c.l.b16 %v558
      %v2289 = vunpack.c.h.b16 %v558
      %v2290 = vunpack.c.l.b16 %v559
      %v2291 = vunpack.c.h.b16 %v559
      %v2292 = vunpack.c.l.b16 %v560
      %v2293 = vunpack.c.h.b16 %v560
      %v2294 = vunpack.c.l.b16 %v561
      %v2295 = vunpack.c.h.b16 %v561
      %v2296 = vunpack.c.l.b16 %v562
      %v2297 = vunpack.c.h.b16 %v562
      %v2298 = vunpack.c.l.b16 %v563
      %v2299 = vunpack.c.h.b16 %v563
      %v2300 = vunpack.c.l.b16 %v564
      %v2301 = vunpack.c.h.b16 %v564
      %v2302 = vunpack.c.l.b16 %v565
      %v2303 = vunpack.c.h.b16 %v565
      %v2304 = vunpack.c.l.b16 %v566
      %v2305 = vunpack.c.h.b16 %v566
      %v2306 = vunpack.c.l.b16 %v567
      %v2307 = vunpack.c.h.b16 %v567
      %v2308 = vunpack.c.l.b16 %v568
      %v2309 = vunpack.c.h.b16 %v568
      %v2310 = vunpack.c.l.b16 %v569
      %v2311 = vunpack.c.h.b16 %v569
      %v2312 = vunpack.c.l.b16 %v570
      %v2313 = vunpack.c.h.b16 %v570
      %v2314 = vunpack.c.l.b16 %v571
      %v2315 = vunpack.c.h.b16 %v571
      %v2316 = vunpack.c.l.b16 %v572
      %v2317 = vunpack.c.h.b16 %v572
      %v2318 = vunpack.c.l.b16 %v573
      %v2319 = vunpack.c.h.b16 %v573
      %v2320 = vunpack.c.l.b16 %v574
      %v2321 = vunpack.c.h.b16 %v574
      %v2322 = vunpack.c.l.b16 %v575
      %v2323 = vunpack.c.h.b16 %v575
      %v2324 = vunpack.c.l.b16 %v576
      %v2325 = vunpack.c.h.b16 %v576
      %v2326 = vunpack.c.l.b16 %v577
      %v2327 = vunpack.c.h.b16 %v577
      %v2328 = vunpack.c.l.b16 %v578
      %v2329 = vunpack.c.h.b16 %v578
      %v2330 = vunpack.c.l.b16 %v579
      %v2331 = vunpack.c.h.b16 %v579
      %v2332 = vunpack.c.l.b16 %v580
      %v2333 = vunpack.c.h.b16 %v580
      %v2334 = vunpack.c.l.b16 %v581
      %v2335 = vunpack.c.h.b16 %v581
      %v2336 = vunpack.c.l.b16 %v582
      %v2337 = vunpack.c.h.b16 %v582
      %v2338 = vunpack.c.l.b16 %v583
      %v2339 = vunpack.c.h.b16 %v583
      %v2340 = vunpack.c.l.b16 %v584
      %v2341 = vunpack.c.h.b16 %v584
      %v2342 = vunpack.c.l.b16 %v585
      %v2343 = vunpack.c.h.b16 %v585
      %v2344 = vunpack.c.l.b16 %v586
      %v2345 = vunpack.c.h.b16 %v586
      %v2346 = vunpack.c.l.b16 %v587
      %v2347 = vunpack.c.h.b16 %v587
      %v2348 = vunpack.c.l.b16 %v588
      %v2349 = vunpack.c.h.b16 %v588
      %v2350 = vunpack.c.l.b16 %v589
      %v2351 = vunpack.c.h.b16 %v589
      %v2352 = vunpack.c.l.b16 %v590
      %v2353 = vunpack.c.h.b16 %v590
      %v2354 = vunpack.c.l.b16 %v591
      %v2355 = vunpack.c.h.b16 %v591
      %v2356 = vunpack.c.l.b16 %v592
      %v2357 = vunpack.c.h.b16 %v592
      %v2358 = vunpack.c.l.b16 %v593
      %v2359 = vunpack.c.h.b16 %v593
      %v2360 = vunpack.c.l.b16 %v594
      %v2361 = vunpack.c.h.b16 %v594
      %v2362 = vunpack.c.l.b16 %v595
      %v2363 = vunpack.c.h.b16 %v595
      %v2364 = vunpack.c.l.b16 %v596
      %v2365 = vunpack.c.h.b16 %v596
      %v2366 = vunpack.c.l.b16 %v597
      %v2367 = vunpack.c.h.b16 %v597
      %v2368 = vunpack.c.l.b16 %v598
      %v2369 = vunpack.c.h.b16 %v598
      %v2370 = vunpack.c.l.b16 %v599
      %v2371 = vunpack.c.h.b16 %v599
      %v2372 = vunpack.c.l.b16 %v600
      %v2373 = vunpack.c.h.b16 %v600
      %v2374 = vunpack.c.l.b16 %v601
      %v2375 = vunpack.c.h.b16 %v601
      %v2376 = vunpack.c.l.b16 %v602
      %v2377 = vunpack.c.h.b16 %v602
      %v2378 = vunpack.c.l.b16 %v603
      %v2379 = vunpack.c.h.b16 %v603
      %v2380 = vunpack.c.l.b16 %v604
      %v2381 = vunpack.c.h.b16 %v604
      %v2382 = vunpack.c.l.b16 %v605
      %v2383 = vunpack.c.h.b16 %v605
      %v2384 = vunpack.c.l.b16 %v606
      %v2385 = vunpack.c.h.b16 %v606
      %v2386 = vunpack.c.l.b16 %v607
      %v2387 = vunpack.c.h.b16 %v607
      %v2388 = vunpack.c.l.b16 %v608
      %v2389 = vunpack.c.h.b16 %v608
      %v2390 = vunpack.c.l.b16 %v609
      %v2391 = vunpack.c.h.b16 %v609
      %v2392 = vunpack.c.l.b16 %v610
      %v2393 = vunpack.c.h.b16 %v610
      %v2394 = vunpack.c.l.b16 %v611
      %v2395 = vunpack.c.h.b16 %v611
      %v2396 = vunpack.c.l.b16 %v612
      %v2397 = vunpack.c.h.b16 %v612
      %v2398 = vunpack.c.l.b16 %v613
      %v2399 = vunpack.c.h.b16 %v613
      %v2400 = vunpack.c.l.b16 %v614
      %v2401 = vunpack.c.h.b16 %v614
      %v2402 = vunpack.c.l.b16 %v615
      %v2403 = vunpack.c.h.b16 %v615
      %v2404 = vunpack.c.l.b16 %v616
      %v2405 = vunpack.c.h.b16 %v616
      %v2406 = vunpack.c.l.b16 %v617
      %v2407 = vunpack.c.h.b16 %v617
      %v2408 = vunpack.c.l.b16 %v618
      %v2409 = vunpack.c.h.b16 %v618
      %v2410 = vunpack.c.l.b16 %v619
      %v2411 = vunpack.c.h.b16 %v619
      %v2412 = vunpack.c.l.b16 %v620
      %v2413 = vunpack.c.h.b16 %v620
      %v2414 = vunpack.c.l.b16 %v621
      %v2415 = vunpack.c.h.b16 %v621
      %v2416 = vunpack.c.l.b16 %v622
      %v2417 = vunpack.c.h.b16 %v622
      %v2418 = vunpack.c.l.b16 %v623
      %v2419 = vunpack.c.h.b16 %v623
      %v2420 = vunpack.c.l.b16 %v624
      %v2421 = vunpack.c.h.b16 %v624
      %v2422 = vunpack.c.l.b16 %v625
      %v2423 = vunpack.c.h.b16 %v625
      %v2424 = vunpack.c.l.b16 %v626
      %v2425 = vunpack.c.h.b16 %v626
      %v2426 = vunpack.c.l.b16 %v627
      %v2427 = vunpack.c.h.b16 %v627
      %v2428 = vunpack.c.l.b16 %v628
      %v2429 = vunpack.c.h.b16 %v628
      %v2430 = vunpack.c.l.b16 %v629
      %v2431 = vunpack.c.h.b16 %v629
      %v2432 = vunpack.c.l.b16 %v630
      %v2433 = vunpack.c.h.b16 %v630
      %v2434 = vunpack.c.l.b16 %v631
      %v2435 = vunpack.c.h.b16 %v631
      %v2436 = vunpack.c.l.b16 %v632
      %v2437 = vunpack.c.h.b16 %v632
      %v2438 = vunpack.c.l.b16 %v633
      %v2439 = vunpack.c.h.b16 %v633
      %v2440 = vunpack.c.l.b16 %v634
      %v2441 = vunpack.c.h.b16 %v634
      %v2442 = vunpack.c.l.b16 %v635
      %v2443 = vunpack.c.h.b16 %v635
      %v2444 = vunpack.c.l.b16 %v636
      %v2445 = vunpack.c.h.b16 %v636
      %v2446 = vunpack.c.l.b16 %v637
      %v2447 = vunpack.c.h.b16 %v637
      %v2448 = vunpack.c.l.b16 %v638
      %v2449 = vunpack.c.h.b16 %v638
      %v2450 = vunpack.c.l.b16 %v639
      %v2451 = vunpack.c.h.b16 %v639
      %v2452 = vunpack.c.l.b16 %v640
      %v2453 = vunpack.c.h.b16 %v640
      %v2454 = vunpack.c.l.b16 %v641
      %v2455 = vunpack.c.h.b16 %v641
      %v2456 = vunpack.c.l.b16 %v642
      %v2457 = vunpack.c.h.b16 %v642
      %v2458 = vunpack.c.l.b16 %v643
      %v2459 = vunpack.c.h.b16 %v643
      %v2460 = vunpack.c.l.b16 %v644
      %v2461 = vunpack.c.h.b16 %v644
      %v2462 = vunpack.c.l.b16 %v645
      %v2463 = vunpack.c.h.b16 %v645
      %v2464 = vunpack.c.l.b16 %v646
      %v2465 = vunpack.c.h.b16 %v646
      %v2466 = vunpack.c.l.b16 %v647
      %v2467 = vunpack.c.h.b16 %v647
      %v2468 = vunpack.c.l.b16 %v648
      %v2469 = vunpack.c.h.b16 %v648
      %v2470 = vunpack.c.l.b16 %v649
      %v2471 = vunpack.c.h.b16 %v649
      %v2472 = vunpack.c.l.b16 %v650
      %v2473 = vunpack.c.h.b16 %v650
      %v2474 = vunpack.c.l.b16 %v651
      %v2475 = vunpack.c.h.b16 %v651
      %v2476 = vunpack.c.l.b16 %v652
      %v2477 = vunpack.c.h.b16 %v652
      %v2478 = vunpack.c.l.b16 %v653
      %v2479 = vunpack.c.h.b16 %v653
      %v2480 = vunpack.c.l.b16 %v654
      %v2481 = vunpack.c.h.b16 %v654
      %v2482 = vunpack.c.l.b16 %v655
      %v2483 = vunpack.c.h.b16 %v655
      %v2484 = vunpack.c.l.b16 %v656
      %v2485 = vunpack.c.h.b16 %v656
      %v2486 = vunpack.c.l.b16 %v657
      %v2487 = vunpack.c.h.b16 %v657
      %v2488 = vunpack.c.l.b16 %v658
      %v2489 = vunpack.c.h.b16 %v658
      %v2490 = vunpack.c.l.b16 %v659
      %v2491 = vunpack.c.h.b16 %v659
      %v2492 = vunpack.c.l.b16 %v660
      %v2493 = vunpack.c.h.b16 %v660
      %v2494 = vunpack.c.l.b16 %v661
      %v2495 = vunpack.c.h.b16 %v661
      %v2496 = vunpack.c.l.b16 %v662
      %v2497 = vunpack.c.h.b16 %v662
      %v2498 = vunpack.c.l.b16 %v663
      %v2499 = vunpack.c.h.b16 %v663
      %v2500 = vunpack.c.l.b16 %v664
      %v2501 = vunpack.c.h.b16 %v664
      %v2502 = vunpack.c.l.b16 %v665
      %v2503 = vunpack.c.h.b16 %v665
      %v2504 = vunpack.c.l.b16 %v666
      %v2505 = vunpack.c.h.b16 %v666
      %v2506 = vunpack.c.l.b16 %v667
      %v2507 = vunpack.c.h.b16 %v667
      %v2508 = vunpack.c.l.b16 %v668
      %v2509 = vunpack.c.h.b16 %v668
      %v2510 = vunpack.c.l.b16 %v669
      %v2511 = vunpack.c.h.b16 %v669
      %v2512 = vunpack.c.l.b16 %v670
      %v2513 = vunpack.c.h.b16 %v670
      %v2514 = vunpack.c.l.b16 %v671
      %v2515 = vunpack.c.h.b16 %v671
      %v2516 = vunpack.c.l.b16 %v672
      %v2517 = vunpack.c.h.b16 %v672
      %v2518 = vunpack.c.l.b16 %v673
      %v2519 = vunpack.c.h.b16 %v673
      %v2520 = vunpack.c.l.b16 %v674
      %v2521 = vunpack.c.h.b16 %v674
      %v2522 = vunpack.c.l.b16 %v675
      %v2523 = vunpack.c.h.b16 %v675
      %v2524 = vunpack.c.l.b16 %v676
      %v2525 = vunpack.c.h.b16 %v676
      %v2526 = vunpack.c.l.b16 %v677
      %v2527 = vunpack.c.h.b16 %v677
      %v2528 = vunpack.c.l.b16 %v678
      %v2529 = vunpack.c.h.b16 %v678
      %v2530 = vunpack.c.l.b16 %v679
      %v2531 = vunpack.c.h.b16 %v679
      %v2532 = vunpack.c.l.b16 %v680
      %v2533 = vunpack.c.h.b16 %v680
      %v2534 = vunpack.c.l.b16 %v681
      %v2535 = vunpack.c.h.b16 %v681
      %v2536 = vunpack.c.l.b16 %v682
      %v2537 = vunpack.c.h.b16 %v682
      %v2538 = vunpack.c.l.b16 %v683
      %v2539 = vunpack.c.h.b16 %v683
      %v2540 = vunpack.c.l.b16 %v684
      %v2541 = vunpack.c.h.b16 %v684
      %v2542 = vunpack.c.l.b16 %v685
      %v2543 = vunpack.c.h.b16 %v685
      %v2544 = vunpack.c.l.b16 %v686
      %v2545 = vunpack.c.h.b16 %v686
      %v2546 = vunpack.c.l.b16 %v687
      %v2547 = vunpack.c.h.b16 %v687
      %v2548 = vunpack.c.l.b16 %v688
      %v2549 = vunpack.c.h.b16 %v688
      %v2550 = vunpack.c.l.b16 %v689
      %v2551 = vunpack.c.h.b16 %v689
      %v2552 = vunpack.c.l.b16 %v690
      %v2553 = vunpack.c.h.b16 %v690
      %v2554 = vunpack.c.l.b16 %v691
      %v2555 = vunpack.c.h.b16 %v691
      %v2556 = vunpack.c.l.b16 %v692
      %v2557 = vunpack.c.h.b16 %v692
      %v2558 = vunpack.c.l.b16 %v693
      %v2559 = vunpack.c.h.b16 %v693
      %v2560 = vunpack.c.l.b16 %v694
      %v2561 = vunpack.c.h.b16 %v694
      %v2562 = vunpack.c.l.b16 %v695
      %v2563 = vunpack.c.h.b16 %v695
      %v2564 = vunpack.c.l.b16 %v696
      %v2565 = vunpack.c.h.b16 %v696
      %v2566 = vunpack.c.l.b16 %v697
      %v2567 = vunpack.c.h.b16 %v697
      %v2568 = vunpack.c.l.b16 %v698
      %v2569 = vunpack.c.h.b16 %v698
      %v2570 = vunpack.c.l.b16 %v699
      %v2571 = vunpack.c.h.b16 %v699
      %v2572 = vunpack.c.l.b16 %v700
      %v2573 = vunpack.c.h.b16 %v700
      %v2574 = vunpack.c.l.b16 %v701
      %v2575 = vunpack.c.h.b16 %v701
      %v2576 = vunpack.c.l.b16 %v702
      %v2577 = vunpack.c.h.b16 %v702
      %v2578 = vunpack.c.l.b16 %v703
      %v2579 = vunpack.c.h.b16 %v703
      %v2580 = vunpack.c.l.b16 %v704
      %v2581 = vunpack.c.h.b16 %v704
      %v2582 = vunpack.c.l.b16 %v705
      %v2583 = vunpack.c.h.b16 %v705
      %v2584 = vunpack.c.l.b16 %v706
      %v2585 = vunpack.c.h.b16 %v706
      %v2586 = vunpack.c.l.b16 %v707
      %v2587 = vunpack.c.h.b16 %v707
      %v2588 = vunpack.c.l.b16 %v708
      %v2589 = vunpack.c.h.b16 %v708
      %v2590 = vunpack.c.l.b16 %v709
      %v2591 = vunpack.c.h.b16 %v709
      %v2592 = vunpack.c.l.b16 %v710
      %v2593 = vunpack.c.h.b16 %v710
      %v2594 = vunpack.c.l.b16 %v711
      %v2595 = vunpack.c.h.b16 %v711
      %v2596 = vunpack.c.l.b16 %v712
      %v2597 = vunpack.c.h.b16 %v712
      %v2598 = vunpack.c.l.b16 %v713
      %v2599 = vunpack.c.h.b16 %v713
      %v2600 = vunpack.c.l.b16 %v714
      %v2601 = vunpack.c.h.b16 %v714
      %v2602 = vunpack.c.l.b16 %v715
      %v2603 = vunpack.c.h.b16 %v715
      %v2604 = vunpack.c.l.b16 %v716
      %v2605 = vunpack.c.h.b16 %v716
      %v2606 = vunpack.c.l.b16 %v717
      %v2607 = vunpack.c.h.b16 %v717
      %v2608 = vunpack.c.l.b16 %v718
      %v2609 = vunpack.c.h.b16 %v718
      %v2610 = vunpack.c.l.b16 %v719
      %v2611 = vunpack.c.h.b16 %v719
      %v2612 = vunpack.c.l.b16 %v720
      %v2613 = vunpack.c.h.b16 %v720
      %v2614 = vunpack.c.l.b16 %v721
      %v2615 = vunpack.c.h.b16 %v721
      %v2616 = vunpack.c.l.b16 %v722
      %v2617 = vunpack.c.h.b16 %v722
      %v2618 = vunpack.c.l.b16 %v723
      %v2619 = vunpack.c.h.b16 %v723
      %v2620 = vunpack.c.l.b16 %v724
      %v2621 = vunpack.c.h.b16 %v724
      %v2622 = vunpack.c.l.b16 %v725
      %v2623 = vunpack.c.h.b16 %v725
      %v2624 = vunpack.c.l.b16 %v726
      %v2625 = vunpack.c.h.b16 %v726
      %v2626 = vunpack.c.l.b16 %v727
      %v2627 = vunpack.c.h.b16 %v727
      %v2628 = vunpack.c.l.b16 %v728
      %v2629 = vunpack.c.h.b16 %v728
      %v2630 = vunpack.c.l.b16 %v729
      %v2631 = vunpack.c.h.b16 %v729
      %v2632 = vunpack.c.l.b16 %v730
      %v2633 = vunpack.c.h.b16 %v730
      %v2634 = vunpack.c.l.b16 %v731
      %v2635 = vunpack.c.h.b16 %v731
      %v2636 = vunpack.c.l.b16 %v732
      %v2637 = vunpack.c.h.b16 %v732
      %v2638 = vunpack.c.l.b16 %v733
      %v2639 = vunpack.c.h.b16 %v733
      %v2640 = vunpack.c.l.b16 %v734
      %v2641 = vunpack.c.h.b16 %v734
      %v2642 = vunpack.c.l.b16 %v735
      %v2643 = vunpack.c.h.b16 %v735
      %v2644 = vunpack.c.l.b16 %v736
      %v2645 = vunpack.c.h.b16 %v736
      %v2646 = vunpack.c.l.b16 %v737
      %v2647 = vunpack.c.h.b16 %v737
      %v2648 = vunpack.c.l.b16 %v738
      %v2649 = vunpack.c.h.b16 %v738
      %v2650 = vunpack.c.l.b16 %v739
      %v2651 = vunpack.c.h.b16 %v739
      %v2652 = vunpack.c.l.b16 %v740
      %v2653 = vunpack.c.h.b16 %v740
      %v2654 = vunpack.c.l.b16 %v741
      %v2655 = vunpack.c.h.b16 %v741
      %v2656 = vunpack.c.l.b16 %v742
      %v2657 = vunpack.c.h.b16 %v742
      %v2658 = vunpack.c.l.b16 %v743
      %v2659 = vunpack.c.h.b16 %v743
      %v2660 = vunpack.c.l.b16 %v744
      %v2661 = vunpack.c.h.b16 %v744
      %v2662 = vunpack.c.l.b16 %v745
      %v2663 = vunpack.c.h.b16 %v745
      %v2664 = vunpack.c.l.b16 %v746
      %v2665 = vunpack.c.h.b16 %v746
      %v2666 = vunpack.c.l.b16 %v747
      %v2667 = vunpack.c.h.b16 %v747
      %v2668 = vpack.c.b16 %v2032, %v2028
      %v2669 = vpack.c.b16 %v2033, %v2029
      %v2670 = vpack.c.b16 %v2034, %v2030
      %v2671 = vpack.c.b16 %v2035, %v2031
      %v2672 = vpack.c.b16 %v2040, %v2036
      %v2673 = vpack.c.b16 %v2041, %v2037
      %v2674 = vpack.c.b16 %v2042, %v2038
      %v2675 = vpack.c.b16 %v2043, %v2039
      %v2676 = vpack.c.b16 %v2048, %v2044
      %v2677 = vpack.c.b16 %v2049, %v2045
      %v2678 = vpack.c.b16 %v2050, %v2046
      %v2679 = vpack.c.b16 %v2051, %v2047
      %v2680 = vpack.c.b16 %v2056, %v2052
      %v2681 = vpack.c.b16 %v2057, %v2053
      %v2682 = vpack.c.b16 %v2058, %v2054
      %v2683 = vpack.c.b16 %v2059, %v2055
      %v2684 = vpack.c.b16 %v2064, %v2060
      %v2685 = vpack.c.b16 %v2065, %v2061
      %v2686 = vpack.c.b16 %v2066, %v2062
      %v2687 = vpack.c.b16 %v2067, %v2063
      %v2688 = vpack.c.b16 %v2072, %v2068
      %v2689 = vpack.c.b16 %v2073, %v2069
      %v2690 = vpack.c.b16 %v2074, %v2070
      %v2691 = vpack.c.b16 %v2075, %v2071
      %v2692 = vpack.c.b16 %v2080, %v2076
      %v2693 = vpack.c.b16 %v2081, %v2077
      %v2694 = vpack.c.b16 %v2082, %v2078
      %v2695 = vpack.c.b16 %v2083, %v2079
      %v2696 = vpack.c.b16 %v2088, %v2084
      %v2697 = vpack.c.b16 %v2089, %v2085
      %v2698 = vpack.c.b16 %v2090, %v2086
      %v2699 = vpack.c.b16 %v2091, %v2087
      %v2700 = vpack.c.b16 %v2096, %v2092
      %v2701 = vpack.c.b16 %v2097, %v2093
      %v2702 = vpack.c.b16 %v2098, %v2094
      %v2703 = vpack.c.b16 %v2099, %v2095
      %v2704 = vpack.c.b16 %v2104, %v2100
      %v2705 = vpack.c.b16 %v2105, %v2101
      %v2706 = vpack.c.b16 %v2106, %v2102
      %v2707 = vpack.c.b16 %v2107, %v2103
      %v2708 = vpack.c.b16 %v2112, %v2108
      %v2709 = vpack.c.b16 %v2113, %v2109
      %v2710 = vpack.c.b16 %v2114, %v2110
      %v2711 = vpack.c.b16 %v2115, %v2111
      %v2712 = vpack.c.b16 %v2120, %v2116
      %v2713 = vpack.c.b16 %v2121, %v2117
      %v2714 = vpack.c.b16 %v2122, %v2118
      %v2715 = vpack.c.b16 %v2123, %v2119
      %v2716 = vpack.c.b16 %v2128, %v2124
      %v2717 = vpack.c.b16 %v2129, %v2125
      %v2718 = vpack.c.b16 %v2130, %v2126
      %v2719 = vpack.c.b16 %v2131, %v2127
      %v2720 = vpack.c.b16 %v2136, %v2132
      %v2721 = vpack.c.b16 %v2137, %v2133
      %v2722 = vpack.c.b16 %v2138, %v2134
      %v2723 = vpack.c.b16 %v2139, %v2135
      %v2724 = vpack.c.b16 %v2144, %v2140
      %v2725 = vpack.c.b16 %v2145, %v2141
      %v2726 = vpack.c.b16 %v2146, %v2142
      %v2727 = vpack.c.b16 %v2147, %v2143
      %v2728 = vpack.c.b16 %v2152, %v2148
      %v2729 = vpack.c.b16 %v2153, %v2149
      %v2730 = vpack.c.b16 %v2154, %v2150
      %v2731 = vpack.c.b16 %v2155, %v2151
      %v2732 = vpack.c.b16 %v2160, %v2156
      %v2733 = vpack.c.b16 %v2161, %v2157
      %v2734 = vpack.c.b16 %v2162, %v2158
      %v2735 = vpack.c.b16 %v2163, %v2159
      %v2736 = vpack.c.b16 %v2168, %v2164
      %v2737 = vpack.c.b16 %v2169, %v2165
      %v2738 = vpack.c.b16 %v2170, %v2166
      %v2739 = vpack.c.b16 %v2171, %v2167
      %v2740 = vpack.c.b16 %v2176, %v2172
      %v2741 = vpack.c.b16 %v2177, %v2173
      %v2742 = vpack.c.b16 %v2178, %v2174
      %v2743 = vpack.c.b16 %v2179, %v2175
      %v2744 = vpack.c.b16 %v2184, %v2180
      %v2745 = vpack.c.b16 %v2185, %v2181
      %v2746 = vpack.c.b16 %v2186, %v2182
      %v2747 = vpack.c.b16 %v2187, %v2183
      %v2748 = vpack.c.b16 %v2192, %v2188
      %v2749 = vpack.c.b16 %v2193, %v2189
      %v2750 = vpack.c.b16 %v2194, %v2190
      %v2751 = vpack.c.b16 %v2195, %v2191
      %v2752 = vpack.c.b16 %v2200, %v2196
      %v2753 = vpack.c.b16 %v2201, %v2197
      %v2754 = vpack.c.b16 %v2202, %v2198
      %v2755 = vpack.c.b16 %v2203, %v2199
      %v2756 = vpack.c.b16 %v2208, %v2204
      %v2757 = vpack.c.b16 %v2209, %v2205
      %v2758 = vpack.c.b16 %v2210, %v2206
      %v2759 = vpack.c.b16 %v2211, %v2207
      %v2760 = vpack.c.b16 %v2216, %v2212
      %v2761 = vpack.c.b16 %v2217, %v2213
      %v2762 = vpack.c.b16 %v2218, %v2214
      %v2763 = vpack.c.b16 %v2219, %v2215
      %v2764 = vpack.c.b16 %v2224, %v2220
      %v2765 = vpack.c.b16 %v2225, %v2221
      %v2766 = vpack.c.b16 %v2226, %v2222
      %v2767 = vpack.c.b16 %v2227, %v2223
      %v2768 = vpack.c.b16 %v2232, %v2228
      %v2769 = vpack.c.b16 %v2233, %v2229
      %v2770 = vpack.c.b16 %v2234, %v2230
      %v2771 = vpack.c.b16 %v2235, %v2231
      %v2772 = vpack.c.b16 %v2240, %v2236
      %v2773 = vpack.c.b16 %v2241, %v2237
      %v2774 = vpack.c.b16 %v2242, %v2238
      %v2775 = vpack.c.b16 %v2243, %v2239
      %v2776 = vpack.c.b16 %v2248, %v2244
      %v2777 = vpack.c.b16 %v2249, %v2245
      %v2778 = vpack.c.b16 %v2250, %v2246
      %v2779 = vpack.c.b16 %v2251, %v2247
      %v2780 = vpack.c.b16 %v2256, %v2252
      %v2781 = vpack.c.b16 %v2257, %v2253
      %v2782 = vpack.c.b16 %v2258, %v2254
      %v2783 = vpack.c.b16 %v2259, %v2255
      %v2784 = vpack.c.b16 %v2264, %v2260
      %v2785 = vpack.c.b16 %v2265, %v2261
      %v2786 = vpack.c.b16 %v2266, %v2262
      %v2787 = vpack.c.b16 %v2267, %v2263
      %v2788 = vpack.c.b16 %v2272, %v2268
      %v2789 = vpack.c.b16 %v2273, %v2269
      %v2790 = vpack.c.b16 %v2274, %v2270
      %v2791 = vpack.c.b16 %v2275, %v2271
      %v2792 = vpack.c.b16 %v2280, %v2276
      %v2793 = vpack.c.b16 %v2281, %v2277
      %v2794 = vpack.c.b16 %v2282, %v2278
      %v2795 = vpack.c.b16 %v2283, %v2279
      %v2796 = vpack.c.b16 %v2288, %v2284
      %v2797 = vpack.c.b16 %v2289, %v2285
      %v2798 = vpack.c.b16 %v2290, %v2286
      %v2799 = vpack.c.b16 %v2291, %v2287
      %v2800 = vpack.c.b16 %v2296, %v2292
      %v2801 = vpack.c.b16 %v2297, %v2293
      %v2802 = vpack.c.b16 %v2298, %v2294
      %v2803 = vpack.c.b16 %v2299, %v2295
      %v2804 = vpack.c.b16 %v2304, %v2300
      %v2805 = vpack.c.b16 %v2305, %v2301
      %v2806 = vpack.c.b16 %v2306, %v2302
      %v2807 = vpack.c.b16 %v2307, %v2303
      %v2808 = vpack.c.b16 %v2312, %v2308
      %v2809 = vpack.c.b16 %v2313, %v2309
      %v2810 = vpack.c.b16 %v2314, %v2310
      %v2811 = vpack.c.b16 %v2315, %v2311
      %v2812 = vpack.c.b16 %v2320, %v2316
      %v2813 = vpack.c.b16 %v2321, %v2317
      %v2814 = vpack.c.b16 %v2322, %v2318
      %v2815 = vpack.c.b16 %v2323, %v2319
      %v2816 = vpack.c.b16 %v2328, %v2324
      %v2817 = vpack.c.b16 %v2329, %v2325
      %v2818 = vpack.c.b16 %v2330, %v2326
      %v2819 = vpack.c.b16 %v2331, %v2327
      %v2820 = vpack.c.b16 %v2336, %v2332
      %v2821 = vpack.c.b16 %v2337, %v2333
      %v2822 = vpack.c.b16 %v2338, %v2334
      %v2823 = vpack.c.b16 %v2339, %v2335
      %v2824 = vpack.c.b16 %v2344, %v2340
      %v2825 = vpack.c.b16 %v2345, %v2341
      %v2826 = vpack.c.b16 %v2346, %v2342
      %v2827 = vpack.c.b16 %v2347, %v2343
      %v2828 = vpack.c.b16 %v2352, %v2348
      %v2829 = vpack.c.b16 %v2353, %v2349
      %v2830 = vpack.c.b16 %v2354, %v2350
      %v2831 = vpack.c.b16 %v2355, %v2351
      %v2832 = vpack.c.b16 %v2360, %v2356
      %v2833 = vpack.c.b16 %v2361, %v2357
      %v2834 = vpack.c.b16 %v2362, %v2358
      %v2835 = vpack.c.b16 %v2363, %v2359
      %v2836 = vpack.c.b16 %v2368, %v2364
      %v2837 = vpack.c.b16 %v2369, %v2365
      %v2838 = vpack.c.b16 %v2370, %v2366
      %v2839 = vpack.c.b16 %v2371, %v2367
      %v2840 = vpack.c.b16 %v2376, %v2372
      %v2841 = vpack.c.b16 %v2377, %v2373
      %v2842 = vpack.c.b16 %v2378, %v2374
      %v2843 = vpack.c.b16 %v2379, %v2375
      %v2844 = vpack.c.b16 %v2384, %v2380
      %v2845 = vpack.c.b16 %v2385, %v2381
      %v2846 = vpack.c.b16 %v2386, %v2382
      %v2847 = vpack.c.b16 %v2387, %v2383
      %v2848 = vpack.c.b16 %v2392, %v2388
      %v2849 = vpack.c.b16 %v2393, %v2389
      %v2850 = vpack.c.b16 %v2394, %v2390
      %v2851 = vpack.c.b16 %v2395, %v2391
      %v2852 = vpack.c.b16 %v2400, %v2396
      %v2853 = vpack.c.b16 %v2401, %v2397
      %v2854 = vpack.c.b16 %v2402, %v2398
      %v2855 = vpack.c.b16 %v2403, %v2399
      %v2856 = vpack.c.b16 %v2408, %v2404
      %v2857 = vpack.c.b16 %v2409, %v2405
      %v2858 = vpack.c.b16 %v2410, %v2406
      %v2859 = vpack.c.b16 %v2411, %v2407
      %v2860 = vpack.c.b16 %v2416, %v2412
      %v2861 = vpack.c.b16 %v2417, %v2413
      %v2862 = vpack.c.b16 %v2418, %v2414
      %v2863 = vpack.c.b16 %v2419, %v2415
      %v2864 = vpack.c.b16 %v2424, %v2420
      %v2865 = vpack.c.b16 %v2425, %v2421
      %v2866 = vpack.c.b16 %v2426, %v2422
      %v2867 = vpack.c.b16 %v2427, %v2423
      %v2868 = vpack.c.b16 %v2432, %v2428
      %v2869 = vpack.c.b16 %v2433, %v2429
      %v2870 = vpack.c.b16 %v2434, %v2430
      %v2871 = vpack.c.b16 %v2435, %v2431
      %v2872 = vpack.c.b16 %v2440, %v2436
      %v2873 = vpack.c.b16 %v2441, %v2437
      %v2874 = vpack.c.b16 %v2442, %v2438
      %v2875 = vpack.c.b16 %v2443, %v2439
      %v2876 = vpack.c.b16 %v2448, %v2444
      %v2877 = vpack.c.b16 %v2449, %v2445
      %v2878 = vpack.c.b16 %v2450, %v2446
      %v2879 = vpack.c.b16 %v2451, %v2447
      %v2880 = vpack.c.b16 %v2456, %v2452
      %v2881 = vpack.c.b16 %v2457, %v2453
      %v2882 = vpack.c.b16 %v2458, %v2454
      %v2883 = vpack.c.b16 %v2459, %v2455
      %v2884 = vpack.c.b16 %v2464, %v2460
      %v2885 = vpack.c.b16 %v2465, %v2461
      %v2886 = vpack.c.b16 %v2466, %v2462
      %v2887 = vpack.c.b16 %v2467, %v2463
      %v2888 = vpack.c.b16 %v2472, %v2468
      %v2889 = vpack.c.b16 %v2473, %v2469
      %v2890 = vpack.c.b16 %v2474, %v2470
      %v2891 = vpack.c.b16 %v2475, %v2471
      %v2892 = vpack.c.b16 %v2480, %v2476
      %v2893 = vpack.c.b16 %v2481, %v2477
      %v2894 = vpack.c.b16 %v2482, %v2478
      %v2895 = vpack.c.b16 %v2483, %v2479
      %v2896 = vpack.c.b16 %v2488, %v2484
      %v2897 = vpack.c.b16 %v2489, %v2485
      %v2898 = vpack.c.b16 %v2490, %v2486
      %v2899 = vpack.c.b16 %v2491, %v2487
      %v2900 = vpack.c.b16 %v2496, %v2492
      %v2901 = vpack.c.b16 %v2497, %v2493
      %v2902 = vpack.c.b16 %v2498, %v2494
      %v2903 = vpack.c.b16 %v2499, %v2495
      %v2904 = vpack.c.b16 %v2504, %v2500
      %v2905 = vpack.c.b16 %v2505, %v2501
      %v2906 = vpack.c.b16 %v2506, %v2502
      %v2907 = vpack.c.b16 %v2507, %v2503
      %v2908 = vpack.c.b16 %v2512, %v2508
      %v2909 = vpack.c.b16 %v2513, %v2509
      %v2910 = vpack.c.b16 %v2514, %v2510
      %v2911 = vpack.c.b16 %v2515, %v2511
      %v2912 = vpack.c.b16 %v2520, %v2516
      %v2913 = vpack.c.b16 %v2521, %v2517
      %v2914 = vpack.c.b16 %v2522, %v2518
      %v2915 = vpack.c.b16 %v2523, %v2519
      %v2916 = vpack.c.b16 %v2528, %v2524
      %v2917 = vpack.c.b16 %v2529, %v2525
      %v2918 = vpack.c.b16 %v2530, %v2526
      %v2919 = vpack.c.b16 %v2531, %v2527
      %v2920 = vpack.c.b16 %v2536, %v2532
      %v2921 = vpack.c.b16 %v2537, %v2533
      %v2922 = vpack.c.b16 %v2538, %v2534
      %v2923 = vpack.c.b16 %v2539, %v2535
      %v2924 = vpack.c.b16 %v2544, %v2540
      %v2925 = vpack.c.b16 %v2545, %v2541
      %v2926 = vpack.c.b16 %v2546, %v2542
      %v2927 = vpack.c.b16 %v2547, %v2543
      %v2928 = vpack.c.b16 %v2552, %v2548
      %v2929 = vpack.c.b16 %v2553, %v2549
      %v2930 = vpack.c.b16 %v2554, %v2550
      %v2931 = vpack.c.b16 %v2555, %v2551
      %v2932 = vpack.c.b16 %v2560, %v2556
      %v2933 = vpack.c.b16 %v2561, %v2557
      %v2934 = vpack.c.b16 %v2562, %v2558
      %v2935 = vpack.c.b16 %v2563, %v2559
      %v2936 = vpack.c.b16 %v2568, %v2564
      %v2937 = vpack.c.b16 %v2569, %v2565
      %v2938 = vpack.c.b16 %v2570, %v2566
      %v2939 = vpack.c.b16 %v2571, %v2567
      %v2940 = vpack.c.b16 %v2576, %v2572
      %v2941 = vpack.c.b16 %v2577, %v2573
      %v2942 = vpack.c.b16 %v2578, %v2574
      %v2943 = vpack.c.b16 %v2579, %v2575
      %v2944 = vpack.c.b16 %v2584, %v2580
      %v2945 = vpack.c.b16 %v2585, %v2581
      %v2946 = vpack.c.b16 %v2586, %v2582
      %v2947 = vpack.c.b16 %v2587, %v2583
      %v2948 = vpack.c.b16 %v2592, %v2588
      %v2949 = vpack.c.b16 %v2593, %v2589
      %v2950 = vpack.c.b16 %v2594, %v2590
      %v2951 = vpack.c.b16 %v2595, %v2591
      %v2952 = vpack.c.b16 %v2600, %v2596
      %v2953 = vpack.c.b16 %v2601, %v2597
      %v2954 = vpack.c.b16 %v2602, %v2598
      %v2955 = vpack.c.b16 %v2603, %v2599
      %v2956 = vpack.c.b16 %v2608, %v2604
      %v2957 = vpack.c.b16 %v2609, %v2605
      %v2958 = vpack.c.b16 %v2610, %v2606
      %v2959 = vpack.c.b16 %v2611, %v2607
      %v2960 = vpack.c.b16 %v2616, %v2612
      %v2961 = vpack.c.b16 %v2617, %v2613
      %v2962 = vpack.c.b16 %v2618, %v2614
      %v2963 = vpack.c.b16 %v2619, %v2615
      %v2964 = vpack.c.b16 %v2624, %v2620
      %v2965 = vpack.c.b16 %v2625, %v2621
      %v2966 = vpack.c.b16 %v2626, %v2622
      %v2967 = vpack.c.b16 %v2627, %v2623
      %v2968 = vpack.c.b16 %v2632, %v2628
      %v2969 = vpack.c.b16 %v2633, %v2629
      %v2970 = vpack.c.b16 %v2634, %v2630
      %v2971 = vpack.c.b16 %v2635, %v2631
      %v2972 = vpack.c.b16 %v2640, %v2636
      %v2973 = vpack.c.b16 %v2641, %v2637
      %v2974 = vpack.c.b16 %v2642, %v2638
      %v2975 = vpack.c.b16 %v2643, %v2639
      %v2976 = vpack.c.b16 %v2648, %v2644
      %v2977 = vpack.c.b16 %v2649, %v2645
      %v2978 = vpack.c.b16 %v2650, %v2646
      %v2979 = vpack.c.b16 %v2651, %v2647
      %v2980 = vpack.c.b16 %v2656, %v2652
      %v2981 = vpack.c.b16 %v2657, %v2653
      %v2982 = vpack.c.b16 %v2658, %v2654
      %v2983 = vpack.c.b16 %v2659, %v2655
      %v2984 = vpack.c.b16 %v2664, %v2660
      %v2985 = vpack.c.b16 %v2665, %v2661
      %v2986 = vpack.c.b16 %v2666, %v2662
      %v2987 = vpack.c.b16 %v2667, %v2663
      %vm3228 = vcmask 392192
      %v3230 = vsel %vm3228, %v2671, 0
      %v3233 = vsel %vm3228, %v2675, 0
      %v3236 = vsel %vm3228, %v2679, 0
      %v3239 = vsel %vm3228, %v2683, 0
      %v3242 = vsel %vm3228, %v2687, 0
      %v3245 = vsel %vm3228, %v2691, 0
      %v3248 = vsel %vm3228, %v2695, 0
      %v3251 = vsel %vm3228, %v2699, 0
      %v3254 = vsel %vm3228, %v2703, 0
      %v3257 = vsel %vm3228, %v2707, 0
      %v3260 = vsel %vm3228, %v2711, 0
      %v3263 = vsel %vm3228, %v2715, 0
      %v3266 = vsel %vm3228, %v2719, 0
      %v3269 = vsel %vm3228, %v2723, 0
      %v3272 = vsel %vm3228, %v2727, 0
      %v3275 = vsel %vm3228, %v2731, 0
      %v3278 = vsel %vm3228, %v2735, 0
      %v3281 = vsel %vm3228, %v2739, 0
      %v3284 = vsel %vm3228, %v2743, 0
      %v3287 = vsel %vm3228, %v2747, 0
      %v3290 = vsel %vm3228, %v2751, 0
      %v3293 = vsel %vm3228, %v2755, 0
      %v3296 = vsel %vm3228, %v2759, 0
      %v3299 = vsel %vm3228, %v2763, 0
      %v3302 = vsel %vm3228, %v2767, 0
      %v3305 = vsel %vm3228, %v2771, 0
      %v3308 = vsel %vm3228, %v2775, 0
      %v3311 = vsel %vm3228, %v2779, 0
      %v3314 = vsel %vm3228, %v2783, 0
      %v3317 = vsel %vm3228, %v2787, 0
      %v3320 = vsel %vm3228, %v2791, 0
      %v3323 = vsel %vm3228, %v2795, 0
      %v3326 = vsel %vm3228, %v2799, 0
      %v3329 = vsel %vm3228, %v2803, 0
      %v3332 = vsel %vm3228, %v2807, 0
      %v3335 = vsel %vm3228, %v2811, 0
      %v3338 = vsel %vm3228, %v2815, 0
      %v3341 = vsel %vm3228, %v2819, 0
      %v3344 = vsel %vm3228, %v2823, 0
      %v3347 = vsel %vm3228, %v2827, 0
      %v3350 = vsel %vm3228, %v2831, 0
      %v3353 = vsel %vm3228, %v2835, 0
      %v3356 = vsel %vm3228, %v2839, 0
      %v3359 = vsel %vm3228, %v2843, 0
      %v3362 = vsel %vm3228, %v2847, 0
      %v3365 = vsel %vm3228, %v2851, 0
      %v3368 = vsel %vm3228, %v2855, 0
      %v3371 = vsel %vm3228, %v2859, 0
      %v3374 = vsel %vm3228, %v2863, 0
      %v3377 = vsel %vm3228, %v2867, 0
      %v3380 = vsel %vm3228, %v2871, 0
      %v3383 = vsel %vm3228, %v2875, 0
      %v3386 = vsel %vm3228, %v2879, 0
      %v3389 = vsel %vm3228, %v2883, 0
      %v3392 = vsel %vm3228, %v2887, 0
      %v3395 = vsel %vm3228, %v2891, 0
      %v3398 = vsel %vm3228, %v2895, 0
      %v3401 = vsel %vm3228, %v2899, 0
      %v3404 = vsel %vm3228, %v2903, 0
      %v3407 = vsel %vm3228, %v2907, 0
      %v3410 = vsel %vm3228, %v2911, 0
      %v3413 = vsel %vm3228, %v2915, 0
      %v3416 = vsel %vm3228, %v2919, 0
      %v3419 = vsel %vm3228, %v2923, 0
      %v3422 = vsel %vm3228, %v2927, 0
      %v3425 = vsel %vm3228, %v2931, 0
      %v3428 = vsel %vm3228, %v2935, 0
      %v3431 = vsel %vm3228, %v2939, 0
      %v3434 = vsel %vm3228, %v2943, 0
      %v3437 = vsel %vm3228, %v2947, 0
      %v3440 = vsel %vm3228, %v2951, 0
      %v3443 = vsel %vm3228, %v2955, 0
      %v3446 = vsel %vm3228, %v2959, 0
      %v3449 = vsel %vm3228, %v2963, 0
      %v3452 = vsel %vm3228, %v2967, 0
      %v3455 = vsel %vm3228, %v2971, 0
      %v3458 = vsel %vm3228, %v2975, 0
      %v3461 = vsel %vm3228, %v2979, 0
      %v3464 = vsel %vm3228, %v2983, 0
      %v3467 = vsel %vm3228, %v2987, 0
      %3469 = vmatprep.subr.bf16.mxu0 0
      %3470 = vmatpush1.bf16.msra.mxu0 %v401
      %3471 = vmatprep.subr.bf16.mxu0 0
      %3472 = vmatpush1.bf16.msra.mxu0 %v402
      %3473 = vmatprep.subr.bf16.mxu0 0
      %3474 = vmatpush1.bf16.msra.mxu0 %v403
      %3475 = vmatprep.subr.bf16.mxu0 0
      %3476 = vmatpush1.bf16.msra.mxu0 %v404
      %3477 = vmatprep.subr.bf16.mxu0 0
      %3478 = vmatpush1.bf16.msra.mxu0 %v405
      %3479 = vmatprep.subr.bf16.mxu0 0
      %3480 = vmatpush1.bf16.msra.mxu0 %v406
      %3481 = vmatprep.subr.bf16.mxu0 0
      %3482 = vmatpush1.bf16.msra.mxu0 %v407
      %3483 = vmatprep.subr.bf16.mxu0 0
      %3484 = vmatpush1.bf16.msra.mxu0 %v408
      %3485 = vmatprep.subr.bf16.mxu0 0
      %3486 = vmatpush1.bf16.msra.mxu0 %v409
      %3487 = vmatprep.subr.bf16.mxu0 0
      %3488 = vmatpush1.bf16.msra.mxu0 %v410
      %3489 = vmatprep.subr.bf16.mxu0 0
      %3490 = vmatpush1.bf16.msra.mxu0 %v411
      %3491 = vmatprep.subr.bf16.mxu0 0
      %3492 = vmatpush1.bf16.msra.mxu0 %v412
      %3493 = vmatprep.subr.bf16.mxu0 0
      %3494 = vmatpush1.bf16.msra.mxu0 %v413
      %3495 = vmatprep.subr.bf16.mxu0 0
      %3496 = vmatpush1.bf16.msra.mxu0 %v414
      %3497 = vmatprep.subr.bf16.mxu0 0
      %3498 = vmatpush1.bf16.msra.mxu0 %v415
      %3499 = vmatprep.subr.bf16.mxu0 0
      %3500 = vmatpush1.bf16.msra.mxu0 %v416
      %3501 = vmatprep.mubr.bf16.mxu0 %v2669
      %3502 = vmatmul.mubr.bf16.gmra.mrb[0].mxu0 %v2668
      %v3503 = vpop.f32.mrb[0].mxu0
      %v3504 = vadd.f32 %v911, %v3503
      %v3505 = vpop.f32.mrb[0].mxu0
      %v3506 = vpop.f32.mrb[0].mxu0
      %v3507 = vadd.f32 %v916, %v3506
      %v3508 = vpop.f32.mrb[0].mxu0
      %3509 = vmatprep.mubr.bf16.mxu0 %v2673
      %3510 = vmatmul.mubr.bf16.gmra.mrb[0].mxu0 %v2672
      %v3511 = vpop.f32.mrb[0].mxu0
      %v3512 = vadd.f32 %v921, %v3511
      %v3513 = vpop.f32.mrb[0].mxu0
      %v3514 = vpop.f32.mrb[0].mxu0
      %v3515 = vadd.f32 %v926, %v3514
      %v3516 = vpop.f32.mrb[0].mxu0
      %3517 = vmatprep.mubr.bf16.mxu0 %v2677
      %3518 = vmatmul.mubr.bf16.gmra.mrb[0].mxu0 %v2676
      %v3519 = vpop.f32.mrb[0].mxu0
      %v3520 = vadd.f32 %v931, %v3519
      %v3521 = vpop.f32.mrb[0].mxu0
      %v3522 = vpop.f32.mrb[0].mxu0
      %v3523 = vadd.f32 %v936, %v3522
      %v3524 = vpop.f32.mrb[0].mxu0
      %3525 = vmatprep.mubr.bf16.mxu0 %v2681
      %3526 = vmatmul.mubr.bf16.gmra.mrb[0].mxu0 %v2680
      %v3527 = vpop.f32.mrb[0].mxu0
      %v3528 = vadd.f32 %v941, %v3527
      %v3529 = vpop.f32.mrb[0].mxu0
      %v3530 = vpop.f32.mrb[0].mxu0
      %v3531 = vadd.f32 %v946, %v3530
      %v3532 = vpop.f32.mrb[0].mxu0
      %3533 = vmatprep.mubr.bf16.mxu0 %v2685
      %3534 = vmatmul.mubr.bf16.gmra.mrb[0].mxu0 %v2684
      %v3535 = vpop.f32.mrb[0].mxu0
      %v3536 = vadd.f32 %v951, %v3535
      %v3537 = vpop.f32.mrb[0].mxu0
      %v3538 = vpop.f32.mrb[0].mxu0
      %v3539 = vadd.f32 %v956, %v3538
      %v3540 = vpop.f32.mrb[0].mxu0
      %3541 = vmatprep.mubr.bf16.mxu0 %v2689
      %3542 = vmatmul.mubr.bf16.gmra.mrb[0].mxu0 %v2688
      %v3543 = vpop.f32.mrb[0].mxu0
      %v3544 = vadd.f32 %v961, %v3543
      %v3545 = vpop.f32.mrb[0].mxu0
      %v3546 = vpop.f32.mrb[0].mxu0
      %v3547 = vadd.f32 %v966, %v3546
      %v3548 = vpop.f32.mrb[0].mxu0
      %3549 = vmatprep.mubr.bf16.mxu0 %v2693
      %3550 = vmatmul.mubr.bf16.gmra.mrb[0].mxu0 %v2692
      %v3551 = vpop.f32.mrb[0].mxu0
      %v3552 = vadd.f32 %v971, %v3551
      %v3553 = vpop.f32.mrb[0].mxu0
      %v3554 = vpop.f32.mrb[0].mxu0
      %v3555 = vadd.f32 %v976, %v3554
      %v3556 = vpop.f32.mrb[0].mxu0
      %3557 = vmatprep.mubr.bf16.mxu0 %v2697
      %3558 = vmatmul.mubr.bf16.gmra.mrb[0].mxu0 %v2696
      %v3559 = vpop.f32.mrb[0].mxu0
      %v3560 = vadd.f32 %v981, %v3559
      %v3561 = vpop.f32.mrb[0].mxu0
      %v3562 = vpop.f32.mrb[0].mxu0
      %v3563 = vadd.f32 %v986, %v3562
      %v3564 = vpop.f32.mrb[0].mxu0
      %3565 = vmatprep.mubr.bf16.mxu0 %v2701
      %3566 = vmatmul.mubr.bf16.gmra.mrb[0].mxu0 %v2700
      %v3567 = vpop.f32.mrb[0].mxu0
      %v3568 = vadd.f32 %v991, %v3567
      %v3569 = vpop.f32.mrb[0].mxu0
      %v3570 = vpop.f32.mrb[0].mxu0
      %v3571 = vadd.f32 %v996, %v3570
      %v3572 = vpop.f32.mrb[0].mxu0
      %3573 = vmatprep.mubr.bf16.mxu0 %v2705
      %3574 = vmatmul.mubr.bf16.gmra.mrb[0].mxu0 %v2704
      %v3575 = vpop.f32.mrb[0].mxu0
      %v3576 = vadd.f32 %v1001, %v3575
      %v3577 = vpop.f32.mrb[0].mxu0
      %v3578 = vpop.f32.mrb[0].mxu0
      %v3579 = vadd.f32 %v1006, %v3578
      %v3580 = vpop.f32.mrb[0].mxu0
      %3581 = vmatprep.mubr.bf16.mxu0 %v2709
      %3582 = vmatmul.mubr.bf16.gmra.mrb[0].mxu0 %v2708
      %v3583 = vpop.f32.mrb[0].mxu0
      %v3584 = vadd.f32 %v1011, %v3583
      %v3585 = vpop.f32.mrb[0].mxu0
      %v3586 = vpop.f32.mrb[0].mxu0
      %v3587 = vadd.f32 %v1016, %v3586
      %v3588 = vpop.f32.mrb[0].mxu0
      %3589 = vmatprep.mubr.bf16.mxu0 %v2713
      %3590 = vmatmul.mubr.bf16.gmra.mrb[0].mxu0 %v2712
      %v3591 = vpop.f32.mrb[0].mxu0
      %v3592 = vadd.f32 %v1021, %v3591
      %v3593 = vpop.f32.mrb[0].mxu0
      %v3594 = vpop.f32.mrb[0].mxu0
      %v3595 = vadd.f32 %v1026, %v3594
      %v3596 = vpop.f32.mrb[0].mxu0
      %3597 = vmatprep.mubr.bf16.mxu0 %v2717
      %3598 = vmatmul.mubr.bf16.gmra.mrb[0].mxu0 %v2716
      %v3599 = vpop.f32.mrb[0].mxu0
      %v3600 = vadd.f32 %v1031, %v3599
      %v3601 = vpop.f32.mrb[0].mxu0
      %v3602 = vpop.f32.mrb[0].mxu0
      %v3603 = vadd.f32 %v1036, %v3602
      %v3604 = vpop.f32.mrb[0].mxu0
      %3605 = vmatprep.mubr.bf16.mxu0 %v2721
      %3606 = vmatmul.mubr.bf16.gmra.mrb[0].mxu0 %v2720
      %v3607 = vpop.f32.mrb[0].mxu0
      %v3608 = vadd.f32 %v1041, %v3607
      %v3609 = vpop.f32.mrb[0].mxu0
      %v3610 = vpop.f32.mrb[0].mxu0
      %v3611 = vadd.f32 %v1046, %v3610
      %v3612 = vpop.f32.mrb[0].mxu0
      %3613 = vmatprep.mubr.bf16.mxu0 %v2725
      %3614 = vmatmul.mubr.bf16.gmra.mrb[0].mxu0 %v2724
      %v3615 = vpop.f32.mrb[0].mxu0
      %v3616 = vadd.f32 %v1051, %v3615
      %v3617 = vpop.f32.mrb[0].mxu0
      %v3618 = vpop.f32.mrb[0].mxu0
      %v3619 = vadd.f32 %v1056, %v3618
      %v3620 = vpop.f32.mrb[0].mxu0
      %3621 = vmatprep.mubr.bf16.mxu0 %v2729
      %3622 = vmatmul.mubr.bf16.gmra.mrb[0].mxu0 %v2728
      %v3623 = vpop.f32.mrb[0].mxu0
      %v3624 = vadd.f32 %v1061, %v3623
      %v3625 = vpop.f32.mrb[0].mxu0
      %v3626 = vpop.f32.mrb[0].mxu0
      %v3627 = vadd.f32 %v1066, %v3626
      %v3628 = vpop.f32.mrb[0].mxu0
      %3629 = vmatprep.mubr.bf16.mxu0 %v2733
      %3630 = vmatmul.mubr.bf16.gmra.mrb[0].mxu0 %v2732
      %v3631 = vpop.f32.mrb[0].mxu0
      %v3632 = vadd.f32 %v1071, %v3631
      %v3633 = vpop.f32.mrb[0].mxu0
      %v3634 = vpop.f32.mrb[0].mxu0
      %v3635 = vadd.f32 %v1076, %v3634
      %v3636 = vpop.f32.mrb[0].mxu0
      %3637 = vmatprep.mubr.bf16.mxu0 %v2737
      %3638 = vmatmul.mubr.bf16.gmra.mrb[0].mxu0 %v2736
      %v3639 = vpop.f32.mrb[0].mxu0
      %v3640 = vadd.f32 %v1081, %v3639
      %v3641 = vpop.f32.mrb[0].mxu0
      %v3642 = vpop.f32.mrb[0].mxu0
      %v3643 = vadd.f32 %v1086, %v3642
      %v3644 = vpop.f32.mrb[0].mxu0
      %3645 = vmatprep.mubr.bf16.mxu0 %v2741
      %3646 = vmatmul.mubr.bf16.gmra.mrb[0].mxu0 %v2740
      %v3647 = vpop.f32.mrb[0].mxu0
      %v3648 = vadd.f32 %v1091, %v3647
      %v3649 = vpop.f32.mrb[0].mxu0
      %v3650 = vpop.f32.mrb[0].mxu0
      %v3651 = vadd.f32 %v1096, %v3650
      %v3652 = vpop.f32.mrb[0].mxu0
      %3653 = vmatprep.mubr.bf16.mxu0 %v2745
      %3654 = vmatmul.mubr.bf16.gmra.mrb[0].mxu0 %v2744
      %v3655 = vpop.f32.mrb[0].mxu0
      %v3656 = vadd.f32 %v1101, %v3655
      %v3657 = vpop.f32.mrb[0].mxu0
      %v3658 = vpop.f32.mrb[0].mxu0
      %v3659 = vadd.f32 %v1106, %v3658
      %v3660 = vpop.f32.mrb[0].mxu0
      %3661 = vmatprep.mubr.bf16.mxu0 %v2749
      %3662 = vmatmul.mubr.bf16.gmra.mrb[0].mxu0 %v2748
      %v3663 = vpop.f32.mrb[0].mxu0
      %v3664 = vadd.f32 %v1111, %v3663
      %v3665 = vpop.f32.mrb[0].mxu0
      %v3666 = vpop.f32.mrb[0].mxu0
      %v3667 = vadd.f32 %v1116, %v3666
      %v3668 = vpop.f32.mrb[0].mxu0
      %3669 = vmatprep.mubr.bf16.mxu0 %v2753
      %3670 = vmatmul.mubr.bf16.gmra.mrb[0].mxu0 %v2752
      %v3671 = vpop.f32.mrb[0].mxu0
      %v3672 = vadd.f32 %v1121, %v3671
      %v3673 = vpop.f32.mrb[0].mxu0
      %v3674 = vpop.f32.mrb[0].mxu0
      %v3675 = vadd.f32 %v1126, %v3674
      %v3676 = vpop.f32.mrb[0].mxu0
      %3677 = vmatprep.mubr.bf16.mxu0 %v2757
      %3678 = vmatmul.mubr.bf16.gmra.mrb[0].mxu0 %v2756
      %v3679 = vpop.f32.mrb[0].mxu0
      %v3680 = vadd.f32 %v1131, %v3679
      %v3681 = vpop.f32.mrb[0].mxu0
      %v3682 = vpop.f32.mrb[0].mxu0
      %v3683 = vadd.f32 %v1136, %v3682
      %v3684 = vpop.f32.mrb[0].mxu0
      %3685 = vmatprep.mubr.bf16.mxu0 %v2761
      %3686 = vmatmul.mubr.bf16.gmra.mrb[0].mxu0 %v2760
      %v3687 = vpop.f32.mrb[0].mxu0
      %v3688 = vadd.f32 %v1141, %v3687
      %v3689 = vpop.f32.mrb[0].mxu0
      %v3690 = vpop.f32.mrb[0].mxu0
      %v3691 = vadd.f32 %v1146, %v3690
      %v3692 = vpop.f32.mrb[0].mxu0
      %3693 = vmatprep.mubr.bf16.mxu0 %v2765
      %3694 = vmatmul.mubr.bf16.gmra.mrb[0].mxu0 %v2764
      %v3695 = vpop.f32.mrb[0].mxu0
      %v3696 = vadd.f32 %v1151, %v3695
      %v3697 = vpop.f32.mrb[0].mxu0
      %v3698 = vpop.f32.mrb[0].mxu0
      %v3699 = vadd.f32 %v1156, %v3698
      %v3700 = vpop.f32.mrb[0].mxu0
      %3701 = vmatprep.mubr.bf16.mxu0 %v2769
      %3702 = vmatmul.mubr.bf16.gmra.mrb[0].mxu0 %v2768
      %v3703 = vpop.f32.mrb[0].mxu0
      %v3704 = vadd.f32 %v1161, %v3703
      %v3705 = vpop.f32.mrb[0].mxu0
      %v3706 = vpop.f32.mrb[0].mxu0
      %v3707 = vadd.f32 %v1166, %v3706
      %v3708 = vpop.f32.mrb[0].mxu0
      %3709 = vmatprep.mubr.bf16.mxu0 %v2773
      %3710 = vmatmul.mubr.bf16.gmra.mrb[0].mxu0 %v2772
      %v3711 = vpop.f32.mrb[0].mxu0
      %v3712 = vadd.f32 %v1171, %v3711
      %v3713 = vpop.f32.mrb[0].mxu0
      %v3714 = vpop.f32.mrb[0].mxu0
      %v3715 = vadd.f32 %v1176, %v3714
      %v3716 = vpop.f32.mrb[0].mxu0
      %3717 = vmatprep.mubr.bf16.mxu0 %v2777
      %3718 = vmatmul.mubr.bf16.gmra.mrb[0].mxu0 %v2776
      %v3719 = vpop.f32.mrb[0].mxu0
      %v3720 = vadd.f32 %v1181, %v3719
      %v3721 = vpop.f32.mrb[0].mxu0
      %v3722 = vpop.f32.mrb[0].mxu0
      %v3723 = vadd.f32 %v1186, %v3722
      %v3724 = vpop.f32.mrb[0].mxu0
      %3725 = vmatprep.mubr.bf16.mxu0 %v2781
      %3726 = vmatmul.mubr.bf16.gmra.mrb[0].mxu0 %v2780
      %v3727 = vpop.f32.mrb[0].mxu0
      %v3728 = vadd.f32 %v1191, %v3727
      %v3729 = vpop.f32.mrb[0].mxu0
      %v3730 = vpop.f32.mrb[0].mxu0
      %v3731 = vadd.f32 %v1196, %v3730
      %v3732 = vpop.f32.mrb[0].mxu0
      %3733 = vmatprep.mubr.bf16.mxu0 %v2785
      %3734 = vmatmul.mubr.bf16.gmra.mrb[0].mxu0 %v2784
      %v3735 = vpop.f32.mrb[0].mxu0
      %v3736 = vadd.f32 %v1201, %v3735
      %v3737 = vpop.f32.mrb[0].mxu0
      %v3738 = vpop.f32.mrb[0].mxu0
      %v3739 = vadd.f32 %v1206, %v3738
      %v3740 = vpop.f32.mrb[0].mxu0
      %3741 = vmatprep.mubr.bf16.mxu0 %v2789
      %3742 = vmatmul.mubr.bf16.gmra.mrb[0].mxu0 %v2788
      %v3743 = vpop.f32.mrb[0].mxu0
      %v3744 = vadd.f32 %v1211, %v3743
      %v3745 = vpop.f32.mrb[0].mxu0
      %v3746 = vpop.f32.mrb[0].mxu0
      %v3747 = vadd.f32 %v1216, %v3746
      %v3748 = vpop.f32.mrb[0].mxu0
      %3749 = vmatprep.mubr.bf16.mxu0 %v2793
      %3750 = vmatmul.mubr.bf16.gmra.mrb[0].mxu0 %v2792
      %v3751 = vpop.f32.mrb[0].mxu0
      %v3752 = vadd.f32 %v1221, %v3751
      %v3753 = vpop.f32.mrb[0].mxu0
      %v3754 = vpop.f32.mrb[0].mxu0
      %v3755 = vadd.f32 %v1226, %v3754
      %v3756 = vpop.f32.mrb[0].mxu0
      %3757 = vmatprep.mubr.bf16.mxu0 %v2797
      %3758 = vmatmul.mubr.bf16.gmra.mrb[0].mxu0 %v2796
      %v3759 = vpop.f32.mrb[0].mxu0
      %v3760 = vadd.f32 %v1231, %v3759
      %v3761 = vpop.f32.mrb[0].mxu0
      %v3762 = vpop.f32.mrb[0].mxu0
      %v3763 = vadd.f32 %v1236, %v3762
      %v3764 = vpop.f32.mrb[0].mxu0
      %3765 = vmatprep.mubr.bf16.mxu0 %v2801
      %3766 = vmatmul.mubr.bf16.gmra.mrb[0].mxu0 %v2800
      %v3767 = vpop.f32.mrb[0].mxu0
      %v3768 = vadd.f32 %v1241, %v3767
      %v3769 = vpop.f32.mrb[0].mxu0
      %v3770 = vpop.f32.mrb[0].mxu0
      %v3771 = vadd.f32 %v1246, %v3770
      %v3772 = vpop.f32.mrb[0].mxu0
      %3773 = vmatprep.mubr.bf16.mxu0 %v2805
      %3774 = vmatmul.mubr.bf16.gmra.mrb[0].mxu0 %v2804
      %v3775 = vpop.f32.mrb[0].mxu0
      %v3776 = vadd.f32 %v1251, %v3775
      %v3777 = vpop.f32.mrb[0].mxu0
      %v3778 = vpop.f32.mrb[0].mxu0
      %v3779 = vadd.f32 %v1256, %v3778
      %v3780 = vpop.f32.mrb[0].mxu0
      %3781 = vmatprep.mubr.bf16.mxu0 %v2809
      %3782 = vmatmul.mubr.bf16.gmra.mrb[0].mxu0 %v2808
      %v3783 = vpop.f32.mrb[0].mxu0
      %v3784 = vadd.f32 %v1261, %v3783
      %v3785 = vpop.f32.mrb[0].mxu0
      %v3786 = vpop.f32.mrb[0].mxu0
      %v3787 = vadd.f32 %v1266, %v3786
      %v3788 = vpop.f32.mrb[0].mxu0
      %3789 = vmatprep.mubr.bf16.mxu0 %v2813
      %3790 = vmatmul.mubr.bf16.gmra.mrb[0].mxu0 %v2812
      %v3791 = vpop.f32.mrb[0].mxu0
      %v3792 = vadd.f32 %v1271, %v3791
      %v3793 = vpop.f32.mrb[0].mxu0
      %v3794 = vpop.f32.mrb[0].mxu0
      %v3795 = vadd.f32 %v1276, %v3794
      %v3796 = vpop.f32.mrb[0].mxu0
      %3797 = vmatprep.mubr.bf16.mxu0 %v2817
      %3798 = vmatmul.mubr.bf16.gmra.mrb[0].mxu0 %v2816
      %v3799 = vpop.f32.mrb[0].mxu0
      %v3800 = vadd.f32 %v1281, %v3799
      %v3801 = vpop.f32.mrb[0].mxu0
      %v3802 = vpop.f32.mrb[0].mxu0
      %v3803 = vadd.f32 %v1286, %v3802
      %v3804 = vpop.f32.mrb[0].mxu0
      %3805 = vmatprep.mubr.bf16.mxu0 %v2821
      %3806 = vmatmul.mubr.bf16.gmra.mrb[0].mxu0 %v2820
      %v3807 = vpop.f32.mrb[0].mxu0
      %v3808 = vadd.f32 %v1291, %v3807
      %v3809 = vpop.f32.mrb[0].mxu0
      %v3810 = vpop.f32.mrb[0].mxu0
      %v3811 = vadd.f32 %v1296, %v3810
      %v3812 = vpop.f32.mrb[0].mxu0
      %3813 = vmatprep.mubr.bf16.mxu0 %v2825
      %3814 = vmatmul.mubr.bf16.gmra.mrb[0].mxu0 %v2824
      %v3815 = vpop.f32.mrb[0].mxu0
      %v3816 = vadd.f32 %v1301, %v3815
      %v3817 = vpop.f32.mrb[0].mxu0
      %v3818 = vpop.f32.mrb[0].mxu0
      %v3819 = vadd.f32 %v1306, %v3818
      %v3820 = vpop.f32.mrb[0].mxu0
      %3821 = vmatprep.mubr.bf16.mxu0 %v2829
      %3822 = vmatmul.mubr.bf16.gmra.mrb[0].mxu0 %v2828
      %v3823 = vpop.f32.mrb[0].mxu0
      %v3824 = vadd.f32 %v1311, %v3823
      %v3825 = vpop.f32.mrb[0].mxu0
      %v3826 = vpop.f32.mrb[0].mxu0
      %v3827 = vadd.f32 %v1316, %v3826
      %v3828 = vpop.f32.mrb[0].mxu0
      %3829 = vmatprep.mubr.bf16.mxu0 %v2833
      %3830 = vmatmul.mubr.bf16.gmra.mrb[0].mxu0 %v2832
      %v3831 = vpop.f32.mrb[0].mxu0
      %v3832 = vadd.f32 %v1321, %v3831
      %v3833 = vpop.f32.mrb[0].mxu0
      %v3834 = vpop.f32.mrb[0].mxu0
      %v3835 = vadd.f32 %v1326, %v3834
      %v3836 = vpop.f32.mrb[0].mxu0
      %3837 = vmatprep.mubr.bf16.mxu0 %v2837
      %3838 = vmatmul.mubr.bf16.gmra.mrb[0].mxu0 %v2836
      %v3839 = vpop.f32.mrb[0].mxu0
      %v3840 = vadd.f32 %v1331, %v3839
      %v3841 = vpop.f32.mrb[0].mxu0
      %v3842 = vpop.f32.mrb[0].mxu0
      %v3843 = vadd.f32 %v1336, %v3842
      %v3844 = vpop.f32.mrb[0].mxu0
      %3845 = vmatprep.mubr.bf16.mxu0 %v2841
      %3846 = vmatmul.mubr.bf16.gmra.mrb[0].mxu0 %v2840
      %v3847 = vpop.f32.mrb[0].mxu0
      %v3848 = vadd.f32 %v1341, %v3847
      %v3849 = vpop.f32.mrb[0].mxu0
      %v3850 = vpop.f32.mrb[0].mxu0
      %v3851 = vadd.f32 %v1346, %v3850
      %v3852 = vpop.f32.mrb[0].mxu0
      %3853 = vmatprep.mubr.bf16.mxu0 %v2845
      %3854 = vmatmul.mubr.bf16.gmra.mrb[0].mxu0 %v2844
      %v3855 = vpop.f32.mrb[0].mxu0
      %v3856 = vadd.f32 %v1351, %v3855
      %v3857 = vpop.f32.mrb[0].mxu0
      %v3858 = vpop.f32.mrb[0].mxu0
      %v3859 = vadd.f32 %v1356, %v3858
      %v3860 = vpop.f32.mrb[0].mxu0
      %3861 = vmatprep.mubr.bf16.mxu0 %v2849
      %3862 = vmatmul.mubr.bf16.gmra.mrb[0].mxu0 %v2848
      %v3863 = vpop.f32.mrb[0].mxu0
      %v3864 = vadd.f32 %v1361, %v3863
      %v3865 = vpop.f32.mrb[0].mxu0
      %v3866 = vpop.f32.mrb[0].mxu0
      %v3867 = vadd.f32 %v1366, %v3866
      %v3868 = vpop.f32.mrb[0].mxu0
      %3869 = vmatprep.mubr.bf16.mxu0 %v2853
      %3870 = vmatmul.mubr.bf16.gmra.mrb[0].mxu0 %v2852
      %v3871 = vpop.f32.mrb[0].mxu0
      %v3872 = vadd.f32 %v1371, %v3871
      %v3873 = vpop.f32.mrb[0].mxu0
      %v3874 = vpop.f32.mrb[0].mxu0
      %v3875 = vadd.f32 %v1376, %v3874
      %v3876 = vpop.f32.mrb[0].mxu0
      %3877 = vmatprep.mubr.bf16.mxu0 %v2857
      %3878 = vmatmul.mubr.bf16.gmra.mrb[0].mxu0 %v2856
      %v3879 = vpop.f32.mrb[0].mxu0
      %v3880 = vadd.f32 %v1381, %v3879
      %v3881 = vpop.f32.mrb[0].mxu0
      %v3882 = vpop.f32.mrb[0].mxu0
      %v3883 = vadd.f32 %v1386, %v3882
      %v3884 = vpop.f32.mrb[0].mxu0
      %3885 = vmatprep.mubr.bf16.mxu0 %v2861
      %3886 = vmatmul.mubr.bf16.gmra.mrb[0].mxu0 %v2860
      %v3887 = vpop.f32.mrb[0].mxu0
      %v3888 = vadd.f32 %v1391, %v3887
      %v3889 = vpop.f32.mrb[0].mxu0
      %v3890 = vpop.f32.mrb[0].mxu0
      %v3891 = vadd.f32 %v1396, %v3890
      %v3892 = vpop.f32.mrb[0].mxu0
      %3893 = vmatprep.mubr.bf16.mxu0 %v2865
      %3894 = vmatmul.mubr.bf16.gmra.mrb[0].mxu0 %v2864
      %v3895 = vpop.f32.mrb[0].mxu0
      %v3896 = vadd.f32 %v1401, %v3895
      %v3897 = vpop.f32.mrb[0].mxu0
      %v3898 = vpop.f32.mrb[0].mxu0
      %v3899 = vadd.f32 %v1406, %v3898
      %v3900 = vpop.f32.mrb[0].mxu0
      %3901 = vmatprep.mubr.bf16.mxu0 %v2869
      %3902 = vmatmul.mubr.bf16.gmra.mrb[0].mxu0 %v2868
      %v3903 = vpop.f32.mrb[0].mxu0
      %v3904 = vadd.f32 %v1411, %v3903
      %v3905 = vpop.f32.mrb[0].mxu0
      %v3906 = vpop.f32.mrb[0].mxu0
      %v3907 = vadd.f32 %v1416, %v3906
      %v3908 = vpop.f32.mrb[0].mxu0
      %3909 = vmatprep.mubr.bf16.mxu0 %v2873
      %3910 = vmatmul.mubr.bf16.gmra.mrb[0].mxu0 %v2872
      %v3911 = vpop.f32.mrb[0].mxu0
      %v3912 = vadd.f32 %v1421, %v3911
      %v3913 = vpop.f32.mrb[0].mxu0
      %v3914 = vpop.f32.mrb[0].mxu0
      %v3915 = vadd.f32 %v1426, %v3914
      %v3916 = vpop.f32.mrb[0].mxu0
      %3917 = vmatprep.mubr.bf16.mxu0 %v2877
      %3918 = vmatmul.mubr.bf16.gmra.mrb[0].mxu0 %v2876
      %v3919 = vpop.f32.mrb[0].mxu0
      %v3920 = vadd.f32 %v1431, %v3919
      %v3921 = vpop.f32.mrb[0].mxu0
      %v3922 = vpop.f32.mrb[0].mxu0
      %v3923 = vadd.f32 %v1436, %v3922
      %v3924 = vpop.f32.mrb[0].mxu0
      %3925 = vmatprep.mubr.bf16.mxu0 %v2881
      %3926 = vmatmul.mubr.bf16.gmra.mrb[0].mxu0 %v2880
      %v3927 = vpop.f32.mrb[0].mxu0
      %v3928 = vadd.f32 %v1441, %v3927
      %v3929 = vpop.f32.mrb[0].mxu0
      %v3930 = vpop.f32.mrb[0].mxu0
      %v3931 = vadd.f32 %v1446, %v3930
      %v3932 = vpop.f32.mrb[0].mxu0
      %3933 = vmatprep.mubr.bf16.mxu0 %v2885
      %3934 = vmatmul.mubr.bf16.gmra.mrb[0].mxu0 %v2884
      %v3935 = vpop.f32.mrb[0].mxu0
      %v3936 = vadd.f32 %v1451, %v3935
      %v3937 = vpop.f32.mrb[0].mxu0
      %v3938 = vpop.f32.mrb[0].mxu0
      %v3939 = vadd.f32 %v1456, %v3938
      %v3940 = vpop.f32.mrb[0].mxu0
      %3941 = vmatprep.mubr.bf16.mxu0 %v2889
      %3942 = vmatmul.mubr.bf16.gmra.mrb[0].mxu0 %v2888
      %v3943 = vpop.f32.mrb[0].mxu0
      %v3944 = vadd.f32 %v1461, %v3943
      %v3945 = vpop.f32.mrb[0].mxu0
      %v3946 = vpop.f32.mrb[0].mxu0
      %v3947 = vadd.f32 %v1466, %v3946
      %v3948 = vpop.f32.mrb[0].mxu0
      %3949 = vmatprep.mubr.bf16.mxu0 %v2893
      %3950 = vmatmul.mubr.bf16.gmra.mrb[0].mxu0 %v2892
      %v3951 = vpop.f32.mrb[0].mxu0
      %v3952 = vadd.f32 %v1471, %v3951
      %v3953 = vpop.f32.mrb[0].mxu0
      %v3954 = vpop.f32.mrb[0].mxu0
      %v3955 = vadd.f32 %v1476, %v3954
      %v3956 = vpop.f32.mrb[0].mxu0
      %3957 = vmatprep.mubr.bf16.mxu0 %v2897
      %3958 = vmatmul.mubr.bf16.gmra.mrb[0].mxu0 %v2896
      %v3959 = vpop.f32.mrb[0].mxu0
      %v3960 = vadd.f32 %v1481, %v3959
      %v3961 = vpop.f32.mrb[0].mxu0
      %v3962 = vpop.f32.mrb[0].mxu0
      %v3963 = vadd.f32 %v1486, %v3962
      %v3964 = vpop.f32.mrb[0].mxu0
      %3965 = vmatprep.mubr.bf16.mxu0 %v2901
      %3966 = vmatmul.mubr.bf16.gmra.mrb[0].mxu0 %v2900
      %v3967 = vpop.f32.mrb[0].mxu0
      %v3968 = vadd.f32 %v1491, %v3967
      %v3969 = vpop.f32.mrb[0].mxu0
      %v3970 = vpop.f32.mrb[0].mxu0
      %v3971 = vadd.f32 %v1496, %v3970
      %v3972 = vpop.f32.mrb[0].mxu0
      %3973 = vmatprep.mubr.bf16.mxu0 %v2905
      %3974 = vmatmul.mubr.bf16.gmra.mrb[0].mxu0 %v2904
      %v3975 = vpop.f32.mrb[0].mxu0
      %v3976 = vadd.f32 %v1501, %v3975
      %v3977 = vpop.f32.mrb[0].mxu0
      %v3978 = vpop.f32.mrb[0].mxu0
      %v3979 = vadd.f32 %v1506, %v3978
      %v3980 = vpop.f32.mrb[0].mxu0
      %3981 = vmatprep.mubr.bf16.mxu0 %v2909
      %3982 = vmatmul.mubr.bf16.gmra.mrb[0].mxu0 %v2908
      %v3983 = vpop.f32.mrb[0].mxu0
      %v3984 = vadd.f32 %v1511, %v3983
      %v3985 = vpop.f32.mrb[0].mxu0
      %v3986 = vpop.f32.mrb[0].mxu0
      %v3987 = vadd.f32 %v1516, %v3986
      %v3988 = vpop.f32.mrb[0].mxu0
      %3989 = vmatprep.mubr.bf16.mxu0 %v2913
      %3990 = vmatmul.mubr.bf16.gmra.mrb[0].mxu0 %v2912
      %v3991 = vpop.f32.mrb[0].mxu0
      %v3992 = vadd.f32 %v1521, %v3991
      %v3993 = vpop.f32.mrb[0].mxu0
      %v3994 = vpop.f32.mrb[0].mxu0
      %v3995 = vadd.f32 %v1526, %v3994
      %v3996 = vpop.f32.mrb[0].mxu0
      %3997 = vmatprep.mubr.bf16.mxu0 %v2917
      %3998 = vmatmul.mubr.bf16.gmra.mrb[0].mxu0 %v2916
      %v3999 = vpop.f32.mrb[0].mxu0
      %v4000 = vadd.f32 %v1531, %v3999
      %v4001 = vpop.f32.mrb[0].mxu0
      %v4002 = vpop.f32.mrb[0].mxu0
      %v4003 = vadd.f32 %v1536, %v4002
      %v4004 = vpop.f32.mrb[0].mxu0
      %4005 = vmatprep.mubr.bf16.mxu0 %v2921
      %4006 = vmatmul.mubr.bf16.gmra.mrb[0].mxu0 %v2920
      %v4007 = vpop.f32.mrb[0].mxu0
      %v4008 = vadd.f32 %v1541, %v4007
      %v4009 = vpop.f32.mrb[0].mxu0
      %v4010 = vpop.f32.mrb[0].mxu0
      %v4011 = vadd.f32 %v1546, %v4010
      %v4012 = vpop.f32.mrb[0].mxu0
      %4013 = vmatprep.mubr.bf16.mxu0 %v2925
      %4014 = vmatmul.mubr.bf16.gmra.mrb[0].mxu0 %v2924
      %v4015 = vpop.f32.mrb[0].mxu0
      %v4016 = vadd.f32 %v1551, %v4015
      %v4017 = vpop.f32.mrb[0].mxu0
      %v4018 = vpop.f32.mrb[0].mxu0
      %v4019 = vadd.f32 %v1556, %v4018
      %v4020 = vpop.f32.mrb[0].mxu0
      %4021 = vmatprep.mubr.bf16.mxu0 %v2929
      %4022 = vmatmul.mubr.bf16.gmra.mrb[0].mxu0 %v2928
      %v4023 = vpop.f32.mrb[0].mxu0
      %v4024 = vadd.f32 %v1561, %v4023
      %v4025 = vpop.f32.mrb[0].mxu0
      %v4026 = vpop.f32.mrb[0].mxu0
      %v4027 = vadd.f32 %v1566, %v4026
      %v4028 = vpop.f32.mrb[0].mxu0
      %4029 = vmatprep.mubr.bf16.mxu0 %v2933
      %4030 = vmatmul.mubr.bf16.gmra.mrb[0].mxu0 %v2932
      %v4031 = vpop.f32.mrb[0].mxu0
      %v4032 = vadd.f32 %v1571, %v4031
      %v4033 = vpop.f32.mrb[0].mxu0
      %v4034 = vpop.f32.mrb[0].mxu0
      %v4035 = vadd.f32 %v1576, %v4034
      %v4036 = vpop.f32.mrb[0].mxu0
      %4037 = vmatprep.mubr.bf16.mxu0 %v2937
      %4038 = vmatmul.mubr.bf16.gmra.mrb[0].mxu0 %v2936
      %v4039 = vpop.f32.mrb[0].mxu0
      %v4040 = vadd.f32 %v1581, %v4039
      %v4041 = vpop.f32.mrb[0].mxu0
      %v4042 = vpop.f32.mrb[0].mxu0
      %v4043 = vadd.f32 %v1586, %v4042
      %v4044 = vpop.f32.mrb[0].mxu0
      %4045 = vmatprep.mubr.bf16.mxu0 %v2941
      %4046 = vmatmul.mubr.bf16.gmra.mrb[0].mxu0 %v2940
      %v4047 = vpop.f32.mrb[0].mxu0
      %v4048 = vadd.f32 %v1591, %v4047
      %v4049 = vpop.f32.mrb[0].mxu0
      %v4050 = vpop.f32.mrb[0].mxu0
      %v4051 = vadd.f32 %v1596, %v4050
      %v4052 = vpop.f32.mrb[0].mxu0
      %4053 = vmatprep.mubr.bf16.mxu0 %v2945
      %4054 = vmatmul.mubr.bf16.gmra.mrb[0].mxu0 %v2944
      %v4055 = vpop.f32.mrb[0].mxu0
      %v4056 = vadd.f32 %v1601, %v4055
      %v4057 = vpop.f32.mrb[0].mxu0
      %v4058 = vpop.f32.mrb[0].mxu0
      %v4059 = vadd.f32 %v1606, %v4058
      %v4060 = vpop.f32.mrb[0].mxu0
      %4061 = vmatprep.mubr.bf16.mxu0 %v2949
      %4062 = vmatmul.mubr.bf16.gmra.mrb[0].mxu0 %v2948
      %v4063 = vpop.f32.mrb[0].mxu0
      %v4064 = vadd.f32 %v1611, %v4063
      %v4065 = vpop.f32.mrb[0].mxu0
      %v4066 = vpop.f32.mrb[0].mxu0
      %v4067 = vadd.f32 %v1616, %v4066
      %v4068 = vpop.f32.mrb[0].mxu0
      %4069 = vmatprep.mubr.bf16.mxu0 %v2953
      %4070 = vmatmul.mubr.bf16.gmra.mrb[0].mxu0 %v2952
      %v4071 = vpop.f32.mrb[0].mxu0
      %v4072 = vadd.f32 %v1621, %v4071
      %v4073 = vpop.f32.mrb[0].mxu0
      %v4074 = vpop.f32.mrb[0].mxu0
      %v4075 = vadd.f32 %v1626, %v4074
      %v4076 = vpop.f32.mrb[0].mxu0
      %4077 = vmatprep.mubr.bf16.mxu0 %v2957
      %4078 = vmatmul.mubr.bf16.gmra.mrb[0].mxu0 %v2956
      %v4079 = vpop.f32.mrb[0].mxu0
      %v4080 = vadd.f32 %v1631, %v4079
      %v4081 = vpop.f32.mrb[0].mxu0
      %v4082 = vpop.f32.mrb[0].mxu0
      %v4083 = vadd.f32 %v1636, %v4082
      %v4084 = vpop.f32.mrb[0].mxu0
      %4085 = vmatprep.mubr.bf16.mxu0 %v2961
      %4086 = vmatmul.mubr.bf16.gmra.mrb[0].mxu0 %v2960
      %v4087 = vpop.f32.mrb[0].mxu0
      %v4088 = vadd.f32 %v1641, %v4087
      %v4089 = vpop.f32.mrb[0].mxu0
      %v4090 = vpop.f32.mrb[0].mxu0
      %v4091 = vadd.f32 %v1646, %v4090
      %v4092 = vpop.f32.mrb[0].mxu0
      %4093 = vmatprep.mubr.bf16.mxu0 %v2965
      %4094 = vmatmul.mubr.bf16.gmra.mrb[0].mxu0 %v2964
      %v4095 = vpop.f32.mrb[0].mxu0
      %v4096 = vadd.f32 %v1651, %v4095
      %v4097 = vpop.f32.mrb[0].mxu0
      %v4098 = vpop.f32.mrb[0].mxu0
      %v4099 = vadd.f32 %v1656, %v4098
      %v4100 = vpop.f32.mrb[0].mxu0
      %4101 = vmatprep.mubr.bf16.mxu0 %v2969
      %4102 = vmatmul.mubr.bf16.gmra.mrb[0].mxu0 %v2968
      %v4103 = vpop.f32.mrb[0].mxu0
      %v4104 = vadd.f32 %v1661, %v4103
      %v4105 = vpop.f32.mrb[0].mxu0
      %v4106 = vpop.f32.mrb[0].mxu0
      %v4107 = vadd.f32 %v1666, %v4106
      %v4108 = vpop.f32.mrb[0].mxu0
      %4109 = vmatprep.mubr.bf16.mxu0 %v2973
      %4110 = vmatmul.mubr.bf16.gmra.mrb[0].mxu0 %v2972
      %v4111 = vpop.f32.mrb[0].mxu0
      %v4112 = vadd.f32 %v1671, %v4111
      %v4113 = vpop.f32.mrb[0].mxu0
      %v4114 = vpop.f32.mrb[0].mxu0
      %v4115 = vadd.f32 %v1676, %v4114
      %v4116 = vpop.f32.mrb[0].mxu0
      %4117 = vmatprep.mubr.bf16.mxu0 %v2977
      %4118 = vmatmul.mubr.bf16.gmra.mrb[0].mxu0 %v2976
      %v4119 = vpop.f32.mrb[0].mxu0
      %v4120 = vadd.f32 %v1681, %v4119
      %v4121 = vpop.f32.mrb[0].mxu0
      %v4122 = vpop.f32.mrb[0].mxu0
      %v4123 = vadd.f32 %v1686, %v4122
      %v4124 = vpop.f32.mrb[0].mxu0
      %4125 = vmatprep.mubr.bf16.mxu0 %v2981
      %4126 = vmatmul.mubr.bf16.gmra.mrb[0].mxu0 %v2980
      %v4127 = vpop.f32.mrb[0].mxu0
      %v4128 = vadd.f32 %v1691, %v4127
      %v4129 = vpop.f32.mrb[0].mxu0
      %v4130 = vpop.f32.mrb[0].mxu0
      %v4131 = vadd.f32 %v1696, %v4130
      %v4132 = vpop.f32.mrb[0].mxu0
      %4133 = vmatprep.mubr.bf16.mxu0 %v2985
      %4134 = vmatmul.mubr.bf16.gmra.mrb[0].mxu0 %v2984
      %v4135 = vpop.f32.mrb[0].mxu0
      %v4136 = vadd.f32 %v1701, %v4135
      %v4137 = vpop.f32.mrb[0].mxu0
      %v4138 = vpop.f32.mrb[0].mxu0
      %v4139 = vadd.f32 %v1706, %v4138
      %v4140 = vpop.f32.mrb[0].mxu0
      %4141 = vdwg.mxu0
      %4142 = vmatprep.subr.bf16.mxu0 0
      %4143 = vmatpush1.bf16.msra.mxu0 %v417
      %4144 = vmatprep.subr.bf16.mxu0 0
      %4145 = vmatpush1.bf16.msra.mxu0 %v418
      %4146 = vmatprep.subr.bf16.mxu0 0
      %4147 = vmatpush1.bf16.msra.mxu0 %v419
      %4148 = vmatprep.subr.bf16.mxu0 0
      %4149 = vmatpush1.bf16.msra.mxu0 %v420
      %4150 = vmatprep.subr.bf16.mxu0 0
      %4151 = vmatpush1.bf16.msra.mxu0 %v421
      %4152 = vmatprep.subr.bf16.mxu0 0
      %4153 = vmatpush1.bf16.msra.mxu0 %v422
      %4154 = vmatprep.subr.bf16.mxu0 0
      %4155 = vmatpush1.bf16.msra.mxu0 %v423
      %4156 = vmatprep.subr.bf16.mxu0 0
      %4157 = vmatpush1.bf16.msra.mxu0 %v424
      %4158 = vmatprep.subr.bf16.mxu0 0
      %4159 = vmatpush1.bf16.msra.mxu0 %v425
      %4160 = vmatprep.subr.bf16.mxu0 0
      %4161 = vmatpush1.bf16.msra.mxu0 %v426
      %4162 = vmatprep.subr.bf16.mxu0 0
      %4163 = vmatpush1.bf16.msra.mxu0 %v427
      %4164 = vmatprep.subr.bf16.mxu0 0
      %4165 = vmatpush1.bf16.msra.mxu0 0
      %4166 = vmatprep.subr.bf16.mxu0 0
      %4167 = vmatpush1.bf16.msra.mxu0 0
      %4168 = vmatprep.subr.bf16.mxu0 0
      %4169 = vmatpush1.bf16.msra.mxu0 0
      %4170 = vmatprep.subr.bf16.mxu0 0
      %4171 = vmatpush1.bf16.msra.mxu0 0
      %4172 = vmatprep.subr.bf16.mxu0 0
      %4173 = vmatpush1.bf16.msra.mxu0 0
      %4174 = vmatprep.mubr.bf16.mxu0 %v3230
      %4175 = vmatmul.mubr.bf16.gmra.mrb[0].mxu0 %v2670
      %v4176 = vpop.f32.mrb[0].mxu0
      %v4177 = vadd.f32 %v3504, %v4176
      %v4178 = vpop.f32.mrb[0].mxu0
      %v4179 = vpop.f32.mrb[0].mxu0
      %v4180 = vadd.f32 %v3507, %v4179
      %v4181 = vpop.f32.mrb[0].mxu0
      %4182 = vmatprep.mubr.bf16.mxu0 %v3233
      %4183 = vmatmul.mubr.bf16.gmra.mrb[0].mxu0 %v2674
      %v4184 = vpop.f32.mrb[0].mxu0
      %v4185 = vadd.f32 %v3512, %v4184
      %v4186 = vpop.f32.mrb[0].mxu0
      %v4187 = vpop.f32.mrb[0].mxu0
      %v4188 = vadd.f32 %v3515, %v4187
      %v4189 = vpop.f32.mrb[0].mxu0
      %4190 = vmatprep.mubr.bf16.mxu0 %v3236
      %4191 = vmatmul.mubr.bf16.gmra.mrb[0].mxu0 %v2678
      %v4192 = vpop.f32.mrb[0].mxu0
      %v4193 = vadd.f32 %v3520, %v4192
      %v4194 = vpop.f32.mrb[0].mxu0
      %v4195 = vpop.f32.mrb[0].mxu0
      %v4196 = vadd.f32 %v3523, %v4195
      %v4197 = vpop.f32.mrb[0].mxu0
      %4198 = vmatprep.mubr.bf16.mxu0 %v3239
      %4199 = vmatmul.mubr.bf16.gmra.mrb[0].mxu0 %v2682
      %v4200 = vpop.f32.mrb[0].mxu0
      %v4201 = vadd.f32 %v3528, %v4200
      %v4202 = vpop.f32.mrb[0].mxu0
      %v4203 = vpop.f32.mrb[0].mxu0
      %v4204 = vadd.f32 %v3531, %v4203
      %v4205 = vpop.f32.mrb[0].mxu0
      %4206 = vmatprep.mubr.bf16.mxu0 %v3242
      %4207 = vmatmul.mubr.bf16.gmra.mrb[0].mxu0 %v2686
      %v4208 = vpop.f32.mrb[0].mxu0
      %v4209 = vadd.f32 %v3536, %v4208
      %v4210 = vpop.f32.mrb[0].mxu0
      %v4211 = vpop.f32.mrb[0].mxu0
      %v4212 = vadd.f32 %v3539, %v4211
      %v4213 = vpop.f32.mrb[0].mxu0
      %4214 = vmatprep.mubr.bf16.mxu0 %v3245
      %4215 = vmatmul.mubr.bf16.gmra.mrb[0].mxu0 %v2690
      %v4216 = vpop.f32.mrb[0].mxu0
      %v4217 = vadd.f32 %v3544, %v4216
      %v4218 = vpop.f32.mrb[0].mxu0
      %v4219 = vpop.f32.mrb[0].mxu0
      %v4220 = vadd.f32 %v3547, %v4219
      %v4221 = vpop.f32.mrb[0].mxu0
      %4222 = vmatprep.mubr.bf16.mxu0 %v3248
      %4223 = vmatmul.mubr.bf16.gmra.mrb[0].mxu0 %v2694
      %v4224 = vpop.f32.mrb[0].mxu0
      %v4225 = vadd.f32 %v3552, %v4224
      %v4226 = vpop.f32.mrb[0].mxu0
      %v4227 = vpop.f32.mrb[0].mxu0
      %v4228 = vadd.f32 %v3555, %v4227
      %v4229 = vpop.f32.mrb[0].mxu0
      %4230 = vmatprep.mubr.bf16.mxu0 %v3251
      %4231 = vmatmul.mubr.bf16.gmra.mrb[0].mxu0 %v2698
      %v4232 = vpop.f32.mrb[0].mxu0
      %v4233 = vadd.f32 %v3560, %v4232
      %v4234 = vpop.f32.mrb[0].mxu0
      %v4235 = vpop.f32.mrb[0].mxu0
      %v4236 = vadd.f32 %v3563, %v4235
      %v4237 = vpop.f32.mrb[0].mxu0
      %4238 = vmatprep.mubr.bf16.mxu0 %v3254
      %4239 = vmatmul.mubr.bf16.gmra.mrb[0].mxu0 %v2702
      %v4240 = vpop.f32.mrb[0].mxu0
      %v4241 = vadd.f32 %v3568, %v4240
      %v4242 = vpop.f32.mrb[0].mxu0
      %v4243 = vpop.f32.mrb[0].mxu0
      %v4244 = vadd.f32 %v3571, %v4243
      %v4245 = vpop.f32.mrb[0].mxu0
      %4246 = vmatprep.mubr.bf16.mxu0 %v3257
      %4247 = vmatmul.mubr.bf16.gmra.mrb[0].mxu0 %v2706
      %v4248 = vpop.f32.mrb[0].mxu0
      %v4249 = vadd.f32 %v3576, %v4248
      %v4250 = vpop.f32.mrb[0].mxu0
      %v4251 = vpop.f32.mrb[0].mxu0
      %v4252 = vadd.f32 %v3579, %v4251
      %v4253 = vpop.f32.mrb[0].mxu0
      %4254 = vmatprep.mubr.bf16.mxu0 %v3260
      %4255 = vmatmul.mubr.bf16.gmra.mrb[0].mxu0 %v2710
      %v4256 = vpop.f32.mrb[0].mxu0
      %v4257 = vadd.f32 %v3584, %v4256
      %v4258 = vpop.f32.mrb[0].mxu0
      %v4259 = vpop.f32.mrb[0].mxu0
      %v4260 = vadd.f32 %v3587, %v4259
      %v4261 = vpop.f32.mrb[0].mxu0
      %4262 = vmatprep.mubr.bf16.mxu0 %v3263
      %4263 = vmatmul.mubr.bf16.gmra.mrb[0].mxu0 %v2714
      %v4264 = vpop.f32.mrb[0].mxu0
      %v4265 = vadd.f32 %v3592, %v4264
      %v4266 = vpop.f32.mrb[0].mxu0
      %v4267 = vpop.f32.mrb[0].mxu0
      %v4268 = vadd.f32 %v3595, %v4267
      %v4269 = vpop.f32.mrb[0].mxu0
      %4270 = vmatprep.mubr.bf16.mxu0 %v3266
      %4271 = vmatmul.mubr.bf16.gmra.mrb[0].mxu0 %v2718
      %v4272 = vpop.f32.mrb[0].mxu0
      %v4273 = vadd.f32 %v3600, %v4272
      %v4274 = vpop.f32.mrb[0].mxu0
      %v4275 = vpop.f32.mrb[0].mxu0
      %v4276 = vadd.f32 %v3603, %v4275
      %v4277 = vpop.f32.mrb[0].mxu0
      %4278 = vmatprep.mubr.bf16.mxu0 %v3269
      %4279 = vmatmul.mubr.bf16.gmra.mrb[0].mxu0 %v2722
      %v4280 = vpop.f32.mrb[0].mxu0
      %v4281 = vadd.f32 %v3608, %v4280
      %v4282 = vpop.f32.mrb[0].mxu0
      %v4283 = vpop.f32.mrb[0].mxu0
      %v4284 = vadd.f32 %v3611, %v4283
      %v4285 = vpop.f32.mrb[0].mxu0
      %4286 = vmatprep.mubr.bf16.mxu0 %v3272
      %4287 = vmatmul.mubr.bf16.gmra.mrb[0].mxu0 %v2726
      %v4288 = vpop.f32.mrb[0].mxu0
      %v4289 = vadd.f32 %v3616, %v4288
      %v4290 = vpop.f32.mrb[0].mxu0
      %v4291 = vpop.f32.mrb[0].mxu0
      %v4292 = vadd.f32 %v3619, %v4291
      %v4293 = vpop.f32.mrb[0].mxu0
      %4294 = vmatprep.mubr.bf16.mxu0 %v3275
      %4295 = vmatmul.mubr.bf16.gmra.mrb[0].mxu0 %v2730
      %v4296 = vpop.f32.mrb[0].mxu0
      %v4297 = vadd.f32 %v3624, %v4296
      %v4298 = vpop.f32.mrb[0].mxu0
      %v4299 = vpop.f32.mrb[0].mxu0
      %v4300 = vadd.f32 %v3627, %v4299
      %v4301 = vpop.f32.mrb[0].mxu0
      %4302 = vmatprep.mubr.bf16.mxu0 %v3278
      %4303 = vmatmul.mubr.bf16.gmra.mrb[0].mxu0 %v2734
      %v4304 = vpop.f32.mrb[0].mxu0
      %v4305 = vadd.f32 %v3632, %v4304
      %v4306 = vpop.f32.mrb[0].mxu0
      %v4307 = vpop.f32.mrb[0].mxu0
      %v4308 = vadd.f32 %v3635, %v4307
      %v4309 = vpop.f32.mrb[0].mxu0
      %4310 = vmatprep.mubr.bf16.mxu0 %v3281
      %4311 = vmatmul.mubr.bf16.gmra.mrb[0].mxu0 %v2738
      %v4312 = vpop.f32.mrb[0].mxu0
      %v4313 = vadd.f32 %v3640, %v4312
      %v4314 = vpop.f32.mrb[0].mxu0
      %v4315 = vpop.f32.mrb[0].mxu0
      %v4316 = vadd.f32 %v3643, %v4315
      %v4317 = vpop.f32.mrb[0].mxu0
      %4318 = vmatprep.mubr.bf16.mxu0 %v3284
      %4319 = vmatmul.mubr.bf16.gmra.mrb[0].mxu0 %v2742
      %v4320 = vpop.f32.mrb[0].mxu0
      %v4321 = vadd.f32 %v3648, %v4320
      %v4322 = vpop.f32.mrb[0].mxu0
      %v4323 = vpop.f32.mrb[0].mxu0
      %v4324 = vadd.f32 %v3651, %v4323
      %v4325 = vpop.f32.mrb[0].mxu0
      %4326 = vmatprep.mubr.bf16.mxu0 %v3287
      %4327 = vmatmul.mubr.bf16.gmra.mrb[0].mxu0 %v2746
      %v4328 = vpop.f32.mrb[0].mxu0
      %v4329 = vadd.f32 %v3656, %v4328
      %v4330 = vpop.f32.mrb[0].mxu0
      %v4331 = vpop.f32.mrb[0].mxu0
      %v4332 = vadd.f32 %v3659, %v4331
      %v4333 = vpop.f32.mrb[0].mxu0
      %4334 = vmatprep.mubr.bf16.mxu0 %v3290
      %4335 = vmatmul.mubr.bf16.gmra.mrb[0].mxu0 %v2750
      %v4336 = vpop.f32.mrb[0].mxu0
      %v4337 = vadd.f32 %v3664, %v4336
      %v4338 = vpop.f32.mrb[0].mxu0
      %v4339 = vpop.f32.mrb[0].mxu0
      %v4340 = vadd.f32 %v3667, %v4339
      %v4341 = vpop.f32.mrb[0].mxu0
      %4342 = vmatprep.mubr.bf16.mxu0 %v3293
      %4343 = vmatmul.mubr.bf16.gmra.mrb[0].mxu0 %v2754
      %v4344 = vpop.f32.mrb[0].mxu0
      %v4345 = vadd.f32 %v3672, %v4344
      %v4346 = vpop.f32.mrb[0].mxu0
      %v4347 = vpop.f32.mrb[0].mxu0
      %v4348 = vadd.f32 %v3675, %v4347
      %v4349 = vpop.f32.mrb[0].mxu0
      %4350 = vmatprep.mubr.bf16.mxu0 %v3296
      %4351 = vmatmul.mubr.bf16.gmra.mrb[0].mxu0 %v2758
      %v4352 = vpop.f32.mrb[0].mxu0
      %v4353 = vadd.f32 %v3680, %v4352
      %v4354 = vpop.f32.mrb[0].mxu0
      %v4355 = vpop.f32.mrb[0].mxu0
      %v4356 = vadd.f32 %v3683, %v4355
      %v4357 = vpop.f32.mrb[0].mxu0
      %4358 = vmatprep.mubr.bf16.mxu0 %v3299
      %4359 = vmatmul.mubr.bf16.gmra.mrb[0].mxu0 %v2762
      %v4360 = vpop.f32.mrb[0].mxu0
      %v4361 = vadd.f32 %v3688, %v4360
      %v4362 = vpop.f32.mrb[0].mxu0
      %v4363 = vpop.f32.mrb[0].mxu0
      %v4364 = vadd.f32 %v3691, %v4363
      %v4365 = vpop.f32.mrb[0].mxu0
      %4366 = vmatprep.mubr.bf16.mxu0 %v3302
      %4367 = vmatmul.mubr.bf16.gmra.mrb[0].mxu0 %v2766
      %v4368 = vpop.f32.mrb[0].mxu0
      %v4369 = vadd.f32 %v3696, %v4368
      %v4370 = vpop.f32.mrb[0].mxu0
      %v4371 = vpop.f32.mrb[0].mxu0
      %v4372 = vadd.f32 %v3699, %v4371
      %v4373 = vpop.f32.mrb[0].mxu0
      %4374 = vmatprep.mubr.bf16.mxu0 %v3305
      %4375 = vmatmul.mubr.bf16.gmra.mrb[0].mxu0 %v2770
      %v4376 = vpop.f32.mrb[0].mxu0
      %v4377 = vadd.f32 %v3704, %v4376
      %v4378 = vpop.f32.mrb[0].mxu0
      %v4379 = vpop.f32.mrb[0].mxu0
      %v4380 = vadd.f32 %v3707, %v4379
      %v4381 = vpop.f32.mrb[0].mxu0
      %4382 = vmatprep.mubr.bf16.mxu0 %v3308
      %4383 = vmatmul.mubr.bf16.gmra.mrb[0].mxu0 %v2774
      %v4384 = vpop.f32.mrb[0].mxu0
      %v4385 = vadd.f32 %v3712, %v4384
      %v4386 = vpop.f32.mrb[0].mxu0
      %v4387 = vpop.f32.mrb[0].mxu0
      %v4388 = vadd.f32 %v3715, %v4387
      %v4389 = vpop.f32.mrb[0].mxu0
      %4390 = vmatprep.mubr.bf16.mxu0 %v3311
      %4391 = vmatmul.mubr.bf16.gmra.mrb[0].mxu0 %v2778
      %v4392 = vpop.f32.mrb[0].mxu0
      %v4393 = vadd.f32 %v3720, %v4392
      %v4394 = vpop.f32.mrb[0].mxu0
      %v4395 = vpop.f32.mrb[0].mxu0
      %v4396 = vadd.f32 %v3723, %v4395
      %v4397 = vpop.f32.mrb[0].mxu0
      %4398 = vmatprep.mubr.bf16.mxu0 %v3314
      %4399 = vmatmul.mubr.bf16.gmra.mrb[0].mxu0 %v2782
      %v4400 = vpop.f32.mrb[0].mxu0
      %v4401 = vadd.f32 %v3728, %v4400
      %v4402 = vpop.f32.mrb[0].mxu0
      %v4403 = vpop.f32.mrb[0].mxu0
      %v4404 = vadd.f32 %v3731, %v4403
      %v4405 = vpop.f32.mrb[0].mxu0
      %4406 = vmatprep.mubr.bf16.mxu0 %v3317
      %4407 = vmatmul.mubr.bf16.gmra.mrb[0].mxu0 %v2786
      %v4408 = vpop.f32.mrb[0].mxu0
      %v4409 = vadd.f32 %v3736, %v4408
      %v4410 = vpop.f32.mrb[0].mxu0
      %v4411 = vpop.f32.mrb[0].mxu0
      %v4412 = vadd.f32 %v3739, %v4411
      %v4413 = vpop.f32.mrb[0].mxu0
      %4414 = vmatprep.mubr.bf16.mxu0 %v3320
      %4415 = vmatmul.mubr.bf16.gmra.mrb[0].mxu0 %v2790
      %v4416 = vpop.f32.mrb[0].mxu0
      %v4417 = vadd.f32 %v3744, %v4416
      %v4418 = vpop.f32.mrb[0].mxu0
      %v4419 = vpop.f32.mrb[0].mxu0
      %v4420 = vadd.f32 %v3747, %v4419
      %v4421 = vpop.f32.mrb[0].mxu0
      %4422 = vmatprep.mubr.bf16.mxu0 %v3323
      %4423 = vmatmul.mubr.bf16.gmra.mrb[0].mxu0 %v2794
      %v4424 = vpop.f32.mrb[0].mxu0
      %v4425 = vadd.f32 %v3752, %v4424
      %v4426 = vpop.f32.mrb[0].mxu0
      %v4427 = vpop.f32.mrb[0].mxu0
      %v4428 = vadd.f32 %v3755, %v4427
      %v4429 = vpop.f32.mrb[0].mxu0
      %4430 = vmatprep.mubr.bf16.mxu0 %v3326
      %4431 = vmatmul.mubr.bf16.gmra.mrb[0].mxu0 %v2798
      %v4432 = vpop.f32.mrb[0].mxu0
      %v4433 = vadd.f32 %v3760, %v4432
      %v4434 = vpop.f32.mrb[0].mxu0
      %v4435 = vpop.f32.mrb[0].mxu0
      %v4436 = vadd.f32 %v3763, %v4435
      %v4437 = vpop.f32.mrb[0].mxu0
      %4438 = vmatprep.mubr.bf16.mxu0 %v3329
      %4439 = vmatmul.mubr.bf16.gmra.mrb[0].mxu0 %v2802
      %v4440 = vpop.f32.mrb[0].mxu0
      %v4441 = vadd.f32 %v3768, %v4440
      %v4442 = vpop.f32.mrb[0].mxu0
      %v4443 = vpop.f32.mrb[0].mxu0
      %v4444 = vadd.f32 %v3771, %v4443
      %v4445 = vpop.f32.mrb[0].mxu0
      %4446 = vmatprep.mubr.bf16.mxu0 %v3332
      %4447 = vmatmul.mubr.bf16.gmra.mrb[0].mxu0 %v2806
      %v4448 = vpop.f32.mrb[0].mxu0
      %v4449 = vadd.f32 %v3776, %v4448
      %v4450 = vpop.f32.mrb[0].mxu0
      %v4451 = vpop.f32.mrb[0].mxu0
      %v4452 = vadd.f32 %v3779, %v4451
      %v4453 = vpop.f32.mrb[0].mxu0
      %4454 = vmatprep.mubr.bf16.mxu0 %v3335
      %4455 = vmatmul.mubr.bf16.gmra.mrb[0].mxu0 %v2810
      %v4456 = vpop.f32.mrb[0].mxu0
      %v4457 = vadd.f32 %v3784, %v4456
      %v4458 = vpop.f32.mrb[0].mxu0
      %v4459 = vpop.f32.mrb[0].mxu0
      %v4460 = vadd.f32 %v3787, %v4459
      %v4461 = vpop.f32.mrb[0].mxu0
      %4462 = vmatprep.mubr.bf16.mxu0 %v3338
      %4463 = vmatmul.mubr.bf16.gmra.mrb[0].mxu0 %v2814
      %v4464 = vpop.f32.mrb[0].mxu0
      %v4465 = vadd.f32 %v3792, %v4464
      %v4466 = vpop.f32.mrb[0].mxu0
      %v4467 = vpop.f32.mrb[0].mxu0
      %v4468 = vadd.f32 %v3795, %v4467
      %v4469 = vpop.f32.mrb[0].mxu0
      %4470 = vmatprep.mubr.bf16.mxu0 %v3341
      %4471 = vmatmul.mubr.bf16.gmra.mrb[0].mxu0 %v2818
      %v4472 = vpop.f32.mrb[0].mxu0
      %v4473 = vadd.f32 %v3800, %v4472
      %v4474 = vpop.f32.mrb[0].mxu0
      %v4475 = vpop.f32.mrb[0].mxu0
      %v4476 = vadd.f32 %v3803, %v4475
      %v4477 = vpop.f32.mrb[0].mxu0
      %4478 = vmatprep.mubr.bf16.mxu0 %v3344
      %4479 = vmatmul.mubr.bf16.gmra.mrb[0].mxu0 %v2822
      %v4480 = vpop.f32.mrb[0].mxu0
      %v4481 = vadd.f32 %v3808, %v4480
      %v4482 = vpop.f32.mrb[0].mxu0
      %v4483 = vpop.f32.mrb[0].mxu0
      %v4484 = vadd.f32 %v3811, %v4483
      %v4485 = vpop.f32.mrb[0].mxu0
      %4486 = vmatprep.mubr.bf16.mxu0 %v3347
      %4487 = vmatmul.mubr.bf16.gmra.mrb[0].mxu0 %v2826
      %v4488 = vpop.f32.mrb[0].mxu0
      %v4489 = vadd.f32 %v3816, %v4488
      %v4490 = vpop.f32.mrb[0].mxu0
      %v4491 = vpop.f32.mrb[0].mxu0
      %v4492 = vadd.f32 %v3819, %v4491
      %v4493 = vpop.f32.mrb[0].mxu0
      %4494 = vmatprep.mubr.bf16.mxu0 %v3350
      %4495 = vmatmul.mubr.bf16.gmra.mrb[0].mxu0 %v2830
      %v4496 = vpop.f32.mrb[0].mxu0
      %v4497 = vadd.f32 %v3824, %v4496
      %v4498 = vpop.f32.mrb[0].mxu0
      %v4499 = vpop.f32.mrb[0].mxu0
      %v4500 = vadd.f32 %v3827, %v4499
      %v4501 = vpop.f32.mrb[0].mxu0
      %4502 = vmatprep.mubr.bf16.mxu0 %v3353
      %4503 = vmatmul.mubr.bf16.gmra.mrb[0].mxu0 %v2834
      %v4504 = vpop.f32.mrb[0].mxu0
      %v4505 = vadd.f32 %v3832, %v4504
      %v4506 = vpop.f32.mrb[0].mxu0
      %v4507 = vpop.f32.mrb[0].mxu0
      %v4508 = vadd.f32 %v3835, %v4507
      %v4509 = vpop.f32.mrb[0].mxu0
      %4510 = vmatprep.mubr.bf16.mxu0 %v3356
      %4511 = vmatmul.mubr.bf16.gmra.mrb[0].mxu0 %v2838
      %v4512 = vpop.f32.mrb[0].mxu0
      %v4513 = vadd.f32 %v3840, %v4512
      %v4514 = vpop.f32.mrb[0].mxu0
      %v4515 = vpop.f32.mrb[0].mxu0
      %v4516 = vadd.f32 %v3843, %v4515
      %v4517 = vpop.f32.mrb[0].mxu0
      %4518 = vmatprep.mubr.bf16.mxu0 %v3359
      %4519 = vmatmul.mubr.bf16.gmra.mrb[0].mxu0 %v2842
      %v4520 = vpop.f32.mrb[0].mxu0
      %v4521 = vadd.f32 %v3848, %v4520
      %v4522 = vpop.f32.mrb[0].mxu0
      %v4523 = vpop.f32.mrb[0].mxu0
      %v4524 = vadd.f32 %v3851, %v4523
      %v4525 = vpop.f32.mrb[0].mxu0
      %4526 = vmatprep.mubr.bf16.mxu0 %v3362
      %4527 = vmatmul.mubr.bf16.gmra.mrb[0].mxu0 %v2846
      %v4528 = vpop.f32.mrb[0].mxu0
      %v4529 = vadd.f32 %v3856, %v4528
      %v4530 = vpop.f32.mrb[0].mxu0
      %v4531 = vpop.f32.mrb[0].mxu0
      %v4532 = vadd.f32 %v3859, %v4531
      %v4533 = vpop.f32.mrb[0].mxu0
      %4534 = vmatprep.mubr.bf16.mxu0 %v3365
      %4535 = vmatmul.mubr.bf16.gmra.mrb[0].mxu0 %v2850
      %v4536 = vpop.f32.mrb[0].mxu0
      %v4537 = vadd.f32 %v3864, %v4536
      %v4538 = vpop.f32.mrb[0].mxu0
      %v4539 = vpop.f32.mrb[0].mxu0
      %v4540 = vadd.f32 %v3867, %v4539
      %v4541 = vpop.f32.mrb[0].mxu0
      %4542 = vmatprep.mubr.bf16.mxu0 %v3368
      %4543 = vmatmul.mubr.bf16.gmra.mrb[0].mxu0 %v2854
      %v4544 = vpop.f32.mrb[0].mxu0
      %v4545 = vadd.f32 %v3872, %v4544
      %v4546 = vpop.f32.mrb[0].mxu0
      %v4547 = vpop.f32.mrb[0].mxu0
      %v4548 = vadd.f32 %v3875, %v4547
      %v4549 = vpop.f32.mrb[0].mxu0
      %4550 = vmatprep.mubr.bf16.mxu0 %v3371
      %4551 = vmatmul.mubr.bf16.gmra.mrb[0].mxu0 %v2858
      %v4552 = vpop.f32.mrb[0].mxu0
      %v4553 = vadd.f32 %v3880, %v4552
      %v4554 = vpop.f32.mrb[0].mxu0
      %v4555 = vpop.f32.mrb[0].mxu0
      %v4556 = vadd.f32 %v3883, %v4555
      %v4557 = vpop.f32.mrb[0].mxu0
      %4558 = vmatprep.mubr.bf16.mxu0 %v3374
      %4559 = vmatmul.mubr.bf16.gmra.mrb[0].mxu0 %v2862
      %v4560 = vpop.f32.mrb[0].mxu0
      %v4561 = vadd.f32 %v3888, %v4560
      %v4562 = vpop.f32.mrb[0].mxu0
      %v4563 = vpop.f32.mrb[0].mxu0
      %v4564 = vadd.f32 %v3891, %v4563
      %v4565 = vpop.f32.mrb[0].mxu0
      %4566 = vmatprep.mubr.bf16.mxu0 %v3377
      %4567 = vmatmul.mubr.bf16.gmra.mrb[0].mxu0 %v2866
      %v4568 = vpop.f32.mrb[0].mxu0
      %v4569 = vadd.f32 %v3896, %v4568
      %v4570 = vpop.f32.mrb[0].mxu0
      %v4571 = vpop.f32.mrb[0].mxu0
      %v4572 = vadd.f32 %v3899, %v4571
      %v4573 = vpop.f32.mrb[0].mxu0
      %4574 = vmatprep.mubr.bf16.mxu0 %v3380
      %4575 = vmatmul.mubr.bf16.gmra.mrb[0].mxu0 %v2870
      %v4576 = vpop.f32.mrb[0].mxu0
      %v4577 = vadd.f32 %v3904, %v4576
      %v4578 = vpop.f32.mrb[0].mxu0
      %v4579 = vpop.f32.mrb[0].mxu0
      %v4580 = vadd.f32 %v3907, %v4579
      %v4581 = vpop.f32.mrb[0].mxu0
      %4582 = vmatprep.mubr.bf16.mxu0 %v3383
      %4583 = vmatmul.mubr.bf16.gmra.mrb[0].mxu0 %v2874
      %v4584 = vpop.f32.mrb[0].mxu0
      %v4585 = vadd.f32 %v3912, %v4584
      %v4586 = vpop.f32.mrb[0].mxu0
      %v4587 = vpop.f32.mrb[0].mxu0
      %v4588 = vadd.f32 %v3915, %v4587
      %v4589 = vpop.f32.mrb[0].mxu0
      %4590 = vmatprep.mubr.bf16.mxu0 %v3386
      %4591 = vmatmul.mubr.bf16.gmra.mrb[0].mxu0 %v2878
      %v4592 = vpop.f32.mrb[0].mxu0
      %v4593 = vadd.f32 %v3920, %v4592
      %v4594 = vpop.f32.mrb[0].mxu0
      %v4595 = vpop.f32.mrb[0].mxu0
      %v4596 = vadd.f32 %v3923, %v4595
      %v4597 = vpop.f32.mrb[0].mxu0
      %4598 = vmatprep.mubr.bf16.mxu0 %v3389
      %4599 = vmatmul.mubr.bf16.gmra.mrb[0].mxu0 %v2882
      %v4600 = vpop.f32.mrb[0].mxu0
      %v4601 = vadd.f32 %v3928, %v4600
      %v4602 = vpop.f32.mrb[0].mxu0
      %v4603 = vpop.f32.mrb[0].mxu0
      %v4604 = vadd.f32 %v3931, %v4603
      %v4605 = vpop.f32.mrb[0].mxu0
      %4606 = vmatprep.mubr.bf16.mxu0 %v3392
      %4607 = vmatmul.mubr.bf16.gmra.mrb[0].mxu0 %v2886
      %v4608 = vpop.f32.mrb[0].mxu0
      %v4609 = vadd.f32 %v3936, %v4608
      %v4610 = vpop.f32.mrb[0].mxu0
      %v4611 = vpop.f32.mrb[0].mxu0
      %v4612 = vadd.f32 %v3939, %v4611
      %v4613 = vpop.f32.mrb[0].mxu0
      %4614 = vmatprep.mubr.bf16.mxu0 %v3395
      %4615 = vmatmul.mubr.bf16.gmra.mrb[0].mxu0 %v2890
      %v4616 = vpop.f32.mrb[0].mxu0
      %v4617 = vadd.f32 %v3944, %v4616
      %v4618 = vpop.f32.mrb[0].mxu0
      %v4619 = vpop.f32.mrb[0].mxu0
      %v4620 = vadd.f32 %v3947, %v4619
      %v4621 = vpop.f32.mrb[0].mxu0
      %4622 = vmatprep.mubr.bf16.mxu0 %v3398
      %4623 = vmatmul.mubr.bf16.gmra.mrb[0].mxu0 %v2894
      %v4624 = vpop.f32.mrb[0].mxu0
      %v4625 = vadd.f32 %v3952, %v4624
      %v4626 = vpop.f32.mrb[0].mxu0
      %v4627 = vpop.f32.mrb[0].mxu0
      %v4628 = vadd.f32 %v3955, %v4627
      %v4629 = vpop.f32.mrb[0].mxu0
      %4630 = vmatprep.mubr.bf16.mxu0 %v3401
      %4631 = vmatmul.mubr.bf16.gmra.mrb[0].mxu0 %v2898
      %v4632 = vpop.f32.mrb[0].mxu0
      %v4633 = vadd.f32 %v3960, %v4632
      %v4634 = vpop.f32.mrb[0].mxu0
      %v4635 = vpop.f32.mrb[0].mxu0
      %v4636 = vadd.f32 %v3963, %v4635
      %v4637 = vpop.f32.mrb[0].mxu0
      %4638 = vmatprep.mubr.bf16.mxu0 %v3404
      %4639 = vmatmul.mubr.bf16.gmra.mrb[0].mxu0 %v2902
      %v4640 = vpop.f32.mrb[0].mxu0
      %v4641 = vadd.f32 %v3968, %v4640
      %v4642 = vpop.f32.mrb[0].mxu0
      %v4643 = vpop.f32.mrb[0].mxu0
      %v4644 = vadd.f32 %v3971, %v4643
      %v4645 = vpop.f32.mrb[0].mxu0
      %4646 = vmatprep.mubr.bf16.mxu0 %v3407
      %4647 = vmatmul.mubr.bf16.gmra.mrb[0].mxu0 %v2906
      %v4648 = vpop.f32.mrb[0].mxu0
      %v4649 = vadd.f32 %v3976, %v4648
      %v4650 = vpop.f32.mrb[0].mxu0
      %v4651 = vpop.f32.mrb[0].mxu0
      %v4652 = vadd.f32 %v3979, %v4651
      %v4653 = vpop.f32.mrb[0].mxu0
      %4654 = vmatprep.mubr.bf16.mxu0 %v3410
      %4655 = vmatmul.mubr.bf16.gmra.mrb[0].mxu0 %v2910
      %v4656 = vpop.f32.mrb[0].mxu0
      %v4657 = vadd.f32 %v3984, %v4656
      %v4658 = vpop.f32.mrb[0].mxu0
      %v4659 = vpop.f32.mrb[0].mxu0
      %v4660 = vadd.f32 %v3987, %v4659
      %v4661 = vpop.f32.mrb[0].mxu0
      %4662 = vmatprep.mubr.bf16.mxu0 %v3413
      %4663 = vmatmul.mubr.bf16.gmra.mrb[0].mxu0 %v2914
      %v4664 = vpop.f32.mrb[0].mxu0
      %v4665 = vadd.f32 %v3992, %v4664
      %v4666 = vpop.f32.mrb[0].mxu0
      %v4667 = vpop.f32.mrb[0].mxu0
      %v4668 = vadd.f32 %v3995, %v4667
      %v4669 = vpop.f32.mrb[0].mxu0
      %4670 = vmatprep.mubr.bf16.mxu0 %v3416
      %4671 = vmatmul.mubr.bf16.gmra.mrb[0].mxu0 %v2918
      %v4672 = vpop.f32.mrb[0].mxu0
      %v4673 = vadd.f32 %v4000, %v4672
      %v4674 = vpop.f32.mrb[0].mxu0
      %v4675 = vpop.f32.mrb[0].mxu0
      %v4676 = vadd.f32 %v4003, %v4675
      %v4677 = vpop.f32.mrb[0].mxu0
      %4678 = vmatprep.mubr.bf16.mxu0 %v3419
      %4679 = vmatmul.mubr.bf16.gmra.mrb[0].mxu0 %v2922
      %v4680 = vpop.f32.mrb[0].mxu0
      %v4681 = vadd.f32 %v4008, %v4680
      %v4682 = vpop.f32.mrb[0].mxu0
      %v4683 = vpop.f32.mrb[0].mxu0
      %v4684 = vadd.f32 %v4011, %v4683
      %v4685 = vpop.f32.mrb[0].mxu0
      %4686 = vmatprep.mubr.bf16.mxu0 %v3422
      %4687 = vmatmul.mubr.bf16.gmra.mrb[0].mxu0 %v2926
      %v4688 = vpop.f32.mrb[0].mxu0
      %v4689 = vadd.f32 %v4016, %v4688
      %v4690 = vpop.f32.mrb[0].mxu0
      %v4691 = vpop.f32.mrb[0].mxu0
      %v4692 = vadd.f32 %v4019, %v4691
      %v4693 = vpop.f32.mrb[0].mxu0
      %4694 = vmatprep.mubr.bf16.mxu0 %v3425
      %4695 = vmatmul.mubr.bf16.gmra.mrb[0].mxu0 %v2930
      %v4696 = vpop.f32.mrb[0].mxu0
      %v4697 = vadd.f32 %v4024, %v4696
      %v4698 = vpop.f32.mrb[0].mxu0
      %v4699 = vpop.f32.mrb[0].mxu0
      %v4700 = vadd.f32 %v4027, %v4699
      %v4701 = vpop.f32.mrb[0].mxu0
      %4702 = vmatprep.mubr.bf16.mxu0 %v3428
      %4703 = vmatmul.mubr.bf16.gmra.mrb[0].mxu0 %v2934
      %v4704 = vpop.f32.mrb[0].mxu0
      %v4705 = vadd.f32 %v4032, %v4704
      %v4706 = vpop.f32.mrb[0].mxu0
      %v4707 = vpop.f32.mrb[0].mxu0
      %v4708 = vadd.f32 %v4035, %v4707
      %v4709 = vpop.f32.mrb[0].mxu0
      %4710 = vmatprep.mubr.bf16.mxu0 %v3431
      %4711 = vmatmul.mubr.bf16.gmra.mrb[0].mxu0 %v2938
      %v4712 = vpop.f32.mrb[0].mxu0
      %v4713 = vadd.f32 %v4040, %v4712
      %v4714 = vpop.f32.mrb[0].mxu0
      %v4715 = vpop.f32.mrb[0].mxu0
      %v4716 = vadd.f32 %v4043, %v4715
      %v4717 = vpop.f32.mrb[0].mxu0
      %4718 = vmatprep.mubr.bf16.mxu0 %v3434
      %4719 = vmatmul.mubr.bf16.gmra.mrb[0].mxu0 %v2942
      %v4720 = vpop.f32.mrb[0].mxu0
      %v4721 = vadd.f32 %v4048, %v4720
      %v4722 = vpop.f32.mrb[0].mxu0
      %v4723 = vpop.f32.mrb[0].mxu0
      %v4724 = vadd.f32 %v4051, %v4723
      %v4725 = vpop.f32.mrb[0].mxu0
      %4726 = vmatprep.mubr.bf16.mxu0 %v3437
      %4727 = vmatmul.mubr.bf16.gmra.mrb[0].mxu0 %v2946
      %v4728 = vpop.f32.mrb[0].mxu0
      %v4729 = vadd.f32 %v4056, %v4728
      %v4730 = vpop.f32.mrb[0].mxu0
      %v4731 = vpop.f32.mrb[0].mxu0
      %v4732 = vadd.f32 %v4059, %v4731
      %v4733 = vpop.f32.mrb[0].mxu0
      %4734 = vmatprep.mubr.bf16.mxu0 %v3440
      %4735 = vmatmul.mubr.bf16.gmra.mrb[0].mxu0 %v2950
      %v4736 = vpop.f32.mrb[0].mxu0
      %v4737 = vadd.f32 %v4064, %v4736
      %v4738 = vpop.f32.mrb[0].mxu0
      %v4739 = vpop.f32.mrb[0].mxu0
      %v4740 = vadd.f32 %v4067, %v4739
      %v4741 = vpop.f32.mrb[0].mxu0
      %4742 = vmatprep.mubr.bf16.mxu0 %v3443
      %4743 = vmatmul.mubr.bf16.gmra.mrb[0].mxu0 %v2954
      %v4744 = vpop.f32.mrb[0].mxu0
      %v4745 = vadd.f32 %v4072, %v4744
      %v4746 = vpop.f32.mrb[0].mxu0
      %v4747 = vpop.f32.mrb[0].mxu0
      %v4748 = vadd.f32 %v4075, %v4747
      %v4749 = vpop.f32.mrb[0].mxu0
      %4750 = vmatprep.mubr.bf16.mxu0 %v3446
      %4751 = vmatmul.mubr.bf16.gmra.mrb[0].mxu0 %v2958
      %v4752 = vpop.f32.mrb[0].mxu0
      %v4753 = vadd.f32 %v4080, %v4752
      %v4754 = vpop.f32.mrb[0].mxu0
      %v4755 = vpop.f32.mrb[0].mxu0
      %v4756 = vadd.f32 %v4083, %v4755
      %v4757 = vpop.f32.mrb[0].mxu0
      %4758 = vmatprep.mubr.bf16.mxu0 %v3449
      %4759 = vmatmul.mubr.bf16.gmra.mrb[0].mxu0 %v2962
      %v4760 = vpop.f32.mrb[0].mxu0
      %v4761 = vadd.f32 %v4088, %v4760
      %v4762 = vpop.f32.mrb[0].mxu0
      %v4763 = vpop.f32.mrb[0].mxu0
      %v4764 = vadd.f32 %v4091, %v4763
      %v4765 = vpop.f32.mrb[0].mxu0
      %4766 = vmatprep.mubr.bf16.mxu0 %v3452
      %4767 = vmatmul.mubr.bf16.gmra.mrb[0].mxu0 %v2966
      %v4768 = vpop.f32.mrb[0].mxu0
      %v4769 = vadd.f32 %v4096, %v4768
      %v4770 = vpop.f32.mrb[0].mxu0
      %v4771 = vpop.f32.mrb[0].mxu0
      %v4772 = vadd.f32 %v4099, %v4771
      %v4773 = vpop.f32.mrb[0].mxu0
      %4774 = vmatprep.mubr.bf16.mxu0 %v3455
      %4775 = vmatmul.mubr.bf16.gmra.mrb[0].mxu0 %v2970
      %v4776 = vpop.f32.mrb[0].mxu0
      %v4777 = vadd.f32 %v4104, %v4776
      %v4778 = vpop.f32.mrb[0].mxu0
      %v4779 = vpop.f32.mrb[0].mxu0
      %v4780 = vadd.f32 %v4107, %v4779
      %v4781 = vpop.f32.mrb[0].mxu0
      %4782 = vmatprep.mubr.bf16.mxu0 %v3458
      %4783 = vmatmul.mubr.bf16.gmra.mrb[0].mxu0 %v2974
      %v4784 = vpop.f32.mrb[0].mxu0
      %v4785 = vadd.f32 %v4112, %v4784
      %v4786 = vpop.f32.mrb[0].mxu0
      %v4787 = vpop.f32.mrb[0].mxu0
      %v4788 = vadd.f32 %v4115, %v4787
      %v4789 = vpop.f32.mrb[0].mxu0
      %4790 = vmatprep.mubr.bf16.mxu0 %v3461
      %4791 = vmatmul.mubr.bf16.gmra.mrb[0].mxu0 %v2978
      %v4792 = vpop.f32.mrb[0].mxu0
      %v4793 = vadd.f32 %v4120, %v4792
      %v4794 = vpop.f32.mrb[0].mxu0
      %v4795 = vpop.f32.mrb[0].mxu0
      %v4796 = vadd.f32 %v4123, %v4795
      %v4797 = vpop.f32.mrb[0].mxu0
      %4798 = vmatprep.mubr.bf16.mxu0 %v3464
      %4799 = vmatmul.mubr.bf16.gmra.mrb[0].mxu0 %v2982
      %v4800 = vpop.f32.mrb[0].mxu0
      %v4801 = vadd.f32 %v4128, %v4800
      %v4802 = vpop.f32.mrb[0].mxu0
      %v4803 = vpop.f32.mrb[0].mxu0
      %v4804 = vadd.f32 %v4131, %v4803
      %v4805 = vpop.f32.mrb[0].mxu0
      %4806 = vmatprep.mubr.bf16.mxu0 %v3467
      %4807 = vmatmul.mubr.bf16.gmra.mrb[0].mxu0 %v2986
      %v4808 = vpop.f32.mrb[0].mxu0
      %v4809 = vadd.f32 %v4136, %v4808
      %v4810 = vpop.f32.mrb[0].mxu0
      %v4811 = vpop.f32.mrb[0].mxu0
      %v4812 = vadd.f32 %v4139, %v4811
      %v4813 = vpop.f32.mrb[0].mxu0
      %4814 = vdwg.mxu0
      %v4815 = vmax.f32 %v4177, 0.0
      %v4816 = vmax.f32 %v4180, 0.0
      %v4817 = vmax.f32 %v4185, 0.0
      %v4818 = vmax.f32 %v4188, 0.0
      %v4819 = vmax.f32 %v4193, 0.0
      %v4820 = vmax.f32 %v4196, 0.0
      %v4821 = vmax.f32 %v4201, 0.0
      %v4822 = vmax.f32 %v4204, 0.0
      %v4823 = vmax.f32 %v4209, 0.0
      %v4824 = vmax.f32 %v4212, 0.0
      %v4825 = vmax.f32 %v4217, 0.0
      %v4826 = vmax.f32 %v4220, 0.0
      %v4827 = vmax.f32 %v4225, 0.0
      %v4828 = vmax.f32 %v4228, 0.0
      %v4829 = vmax.f32 %v4233, 0.0
      %v4830 = vmax.f32 %v4236, 0.0
      %v4831 = vmax.f32 %v4241, 0.0
      %v4832 = vmax.f32 %v4244, 0.0
      %v4833 = vmax.f32 %v4249, 0.0
      %v4834 = vmax.f32 %v4252, 0.0
      %v4835 = vmax.f32 %v4257, 0.0
      %v4836 = vmax.f32 %v4260, 0.0
      %v4837 = vmax.f32 %v4265, 0.0
      %v4838 = vmax.f32 %v4268, 0.0
      %v4839 = vmax.f32 %v4273, 0.0
      %v4840 = vmax.f32 %v4276, 0.0
      %v4841 = vmax.f32 %v4281, 0.0
      %v4842 = vmax.f32 %v4284, 0.0
      %v4843 = vmax.f32 %v4289, 0.0
      %v4844 = vmax.f32 %v4292, 0.0
      %v4845 = vmax.f32 %v4297, 0.0
      %v4846 = vmax.f32 %v4300, 0.0
      %v4847 = vmax.f32 %v4305, 0.0
      %v4848 = vmax.f32 %v4308, 0.0
      %v4849 = vmax.f32 %v4313, 0.0
      %v4850 = vmax.f32 %v4316, 0.0
      %v4851 = vmax.f32 %v4321, 0.0
      %v4852 = vmax.f32 %v4324, 0.0
      %v4853 = vmax.f32 %v4329, 0.0
      %v4854 = vmax.f32 %v4332, 0.0
      %v4855 = vmax.f32 %v4337, 0.0
      %v4856 = vmax.f32 %v4340, 0.0
      %v4857 = vmax.f32 %v4345, 0.0
      %v4858 = vmax.f32 %v4348, 0.0
      %v4859 = vmax.f32 %v4353, 0.0
      %v4860 = vmax.f32 %v4356, 0.0
      %v4861 = vmax.f32 %v4361, 0.0
      %v4862 = vmax.f32 %v4364, 0.0
      %v4863 = vmax.f32 %v4369, 0.0
      %v4864 = vmax.f32 %v4372, 0.0
      %v4865 = vmax.f32 %v4377, 0.0
      %v4866 = vmax.f32 %v4380, 0.0
      %v4867 = vmax.f32 %v4385, 0.0
      %v4868 = vmax.f32 %v4388, 0.0
      %v4869 = vmax.f32 %v4393, 0.0
      %v4870 = vmax.f32 %v4396, 0.0
      %v4871 = vmax.f32 %v4401, 0.0
      %v4872 = vmax.f32 %v4404, 0.0
      %v4873 = vmax.f32 %v4409, 0.0
      %v4874 = vmax.f32 %v4412, 0.0
      %v4875 = vmax.f32 %v4417, 0.0
      %v4876 = vmax.f32 %v4420, 0.0
      %v4877 = vmax.f32 %v4425, 0.0
      %v4878 = vmax.f32 %v4428, 0.0
      %v4879 = vmax.f32 %v4433, 0.0
      %v4880 = vmax.f32 %v4436, 0.0
      %v4881 = vmax.f32 %v4441, 0.0
      %v4882 = vmax.f32 %v4444, 0.0
      %v4883 = vmax.f32 %v4449, 0.0
      %v4884 = vmax.f32 %v4452, 0.0
      %v4885 = vmax.f32 %v4457, 0.0
      %v4886 = vmax.f32 %v4460, 0.0
      %v4887 = vmax.f32 %v4465, 0.0
      %v4888 = vmax.f32 %v4468, 0.0
      %v4889 = vmax.f32 %v4473, 0.0
      %v4890 = vmax.f32 %v4476, 0.0
      %v4891 = vmax.f32 %v4481, 0.0
      %v4892 = vmax.f32 %v4484, 0.0
      %v4893 = vmax.f32 %v4489, 0.0
      %v4894 = vmax.f32 %v4492, 0.0
      %v4895 = vmax.f32 %v4497, 0.0
      %v4896 = vmax.f32 %v4500, 0.0
      %v4897 = vmax.f32 %v4505, 0.0
      %v4898 = vmax.f32 %v4508, 0.0
      %v4899 = vmax.f32 %v4513, 0.0
      %v4900 = vmax.f32 %v4516, 0.0
      %v4901 = vmax.f32 %v4521, 0.0
      %v4902 = vmax.f32 %v4524, 0.0
      %v4903 = vmax.f32 %v4529, 0.0
      %v4904 = vmax.f32 %v4532, 0.0
      %v4905 = vmax.f32 %v4537, 0.0
      %v4906 = vmax.f32 %v4540, 0.0
      %v4907 = vmax.f32 %v4545, 0.0
      %v4908 = vmax.f32 %v4548, 0.0
      %v4909 = vmax.f32 %v4553, 0.0
      %v4910 = vmax.f32 %v4556, 0.0
      %v4911 = vmax.f32 %v4561, 0.0
      %v4912 = vmax.f32 %v4564, 0.0
      %v4913 = vmax.f32 %v4569, 0.0
      %v4914 = vmax.f32 %v4572, 0.0
      %v4915 = vmax.f32 %v4577, 0.0
      %v4916 = vmax.f32 %v4580, 0.0
      %v4917 = vmax.f32 %v4585, 0.0
      %v4918 = vmax.f32 %v4588, 0.0
      %v4919 = vmax.f32 %v4593, 0.0
      %v4920 = vmax.f32 %v4596, 0.0
      %v4921 = vmax.f32 %v4601, 0.0
      %v4922 = vmax.f32 %v4604, 0.0
      %v4923 = vmax.f32 %v4609, 0.0
      %v4924 = vmax.f32 %v4612, 0.0
      %v4925 = vmax.f32 %v4617, 0.0
      %v4926 = vmax.f32 %v4620, 0.0
      %v4927 = vmax.f32 %v4625, 0.0
      %v4928 = vmax.f32 %v4628, 0.0
      %v4929 = vmax.f32 %v4633, 0.0
      %v4930 = vmax.f32 %v4636, 0.0
      %v4931 = vmax.f32 %v4641, 0.0
      %v4932 = vmax.f32 %v4644, 0.0
      %v4933 = vmax.f32 %v4649, 0.0
      %v4934 = vmax.f32 %v4652, 0.0
      %v4935 = vmax.f32 %v4657, 0.0
      %v4936 = vmax.f32 %v4660, 0.0
      %v4937 = vmax.f32 %v4665, 0.0
      %v4938 = vmax.f32 %v4668, 0.0
      %v4939 = vmax.f32 %v4673, 0.0
      %v4940 = vmax.f32 %v4676, 0.0
      %v4941 = vmax.f32 %v4681, 0.0
      %v4942 = vmax.f32 %v4684, 0.0
      %v4943 = vmax.f32 %v4689, 0.0
      %v4944 = vmax.f32 %v4692, 0.0
      %v4945 = vmax.f32 %v4697, 0.0
      %v4946 = vmax.f32 %v4700, 0.0
      %v4947 = vmax.f32 %v4705, 0.0
      %v4948 = vmax.f32 %v4708, 0.0
      %v4949 = vmax.f32 %v4713, 0.0
      %v4950 = vmax.f32 %v4716, 0.0
      %v4951 = vmax.f32 %v4721, 0.0
      %v4952 = vmax.f32 %v4724, 0.0
      %v4953 = vmax.f32 %v4729, 0.0
      %v4954 = vmax.f32 %v4732, 0.0
      %v4955 = vmax.f32 %v4737, 0.0
      %v4956 = vmax.f32 %v4740, 0.0
      %v4957 = vmax.f32 %v4745, 0.0
      %v4958 = vmax.f32 %v4748, 0.0
      %v4959 = vmax.f32 %v4753, 0.0
      %v4960 = vmax.f32 %v4756, 0.0
      %v4961 = vmax.f32 %v4761, 0.0
      %v4962 = vmax.f32 %v4764, 0.0
      %v4963 = vmax.f32 %v4769, 0.0
      %v4964 = vmax.f32 %v4772, 0.0
      %v4965 = vmax.f32 %v4777, 0.0
      %v4966 = vmax.f32 %v4780, 0.0
      %v4967 = vmax.f32 %v4785, 0.0
      %v4968 = vmax.f32 %v4788, 0.0
      %v4969 = vmax.f32 %v4793, 0.0
      %v4970 = vmax.f32 %v4796, 0.0
      %v4971 = vmax.f32 %v4801, 0.0
      %v4972 = vmax.f32 %v4804, 0.0
      %v4973 = vmax.f32 %v4809, 0.0
      %v4974 = vmax.f32 %v4812, 0.0
      %vm4975 = vcmask 89088
      %4976 = vst.msk [vmem:[%s233] sm:$0xff] %vm4975, %v4815
      %4977 = vst.msk [vmem:[%s233 + $0x8] sm:$0xff] %vm4975, %v4816
      %4978 = vst.msk [vmem:[%s233 + $0x10] sm:$0xff] %vm4975, %v4817
      %4979 = vst.msk [vmem:[%s233 + $0x18] sm:$0xff] %vm4975, %v4818
      %4980 = vst.msk [vmem:[%s233 + $0x20] sm:$0xff] %vm4975, %v4819
      %4981 = vst.msk [vmem:[%s233 + $0x28] sm:$0xff] %vm4975, %v4820
      %4982 = vst.msk [vmem:[%s233 + $0x30] sm:$0xff] %vm4975, %v4821
      %4983 = vst.msk [vmem:[%s233 + $0x38] sm:$0xff] %vm4975, %v4822
      %4984 = vst.msk [vmem:[%s233 + $0x40] sm:$0xff] %vm4975, %v4823
      %4985 = vst.msk [vmem:[%s233 + $0x48] sm:$0xff] %vm4975, %v4824
      %4986 = vst.msk [vmem:[%s233 + $0x50] sm:$0xff] %vm4975, %v4825
      %4987 = vst.msk [vmem:[%s233 + $0x58] sm:$0xff] %vm4975, %v4826
      %4988 = vst.msk [vmem:[%s233 + $0x60] sm:$0xff] %vm4975, %v4827
      %4989 = vst.msk [vmem:[%s233 + $0x68] sm:$0xff] %vm4975, %v4828
      %4990 = vst.msk [vmem:[%s233 + $0x70] sm:$0xff] %vm4975, %v4829
      %4991 = vst.msk [vmem:[%s233 + $0x78] sm:$0xff] %vm4975, %v4830
      %4992 = vst.msk [vmem:[%s233 + $0x80] sm:$0xff] %vm4975, %v4831
      %4993 = vst.msk [vmem:[%s233 + $0x88] sm:$0xff] %vm4975, %v4832
      %4994 = vst.msk [vmem:[%s233 + $0x90] sm:$0xff] %vm4975, %v4833
      %4995 = vst.msk [vmem:[%s233 + $0x98] sm:$0xff] %vm4975, %v4834
      %4996 = vst.msk [vmem:[%s233 + $0xa0] sm:$0xff] %vm4975, %v4835
      %4997 = vst.msk [vmem:[%s233 + $0xa8] sm:$0xff] %vm4975, %v4836
      %4998 = vst.msk [vmem:[%s233 + $0xb0] sm:$0xff] %vm4975, %v4837
      %4999 = vst.msk [vmem:[%s233 + $0xb8] sm:$0xff] %vm4975, %v4838
      %5000 = vst.msk [vmem:[%s233 + $0xc0] sm:$0xff] %vm4975, %v4839
      %5001 = vst.msk [vmem:[%s233 + $0xc8] sm:$0xff] %vm4975, %v4840
      %5002 = vst.msk [vmem:[%s233 + $0xd0] sm:$0xff] %vm4975, %v4841
      %5003 = vst.msk [vmem:[%s233 + $0xd8] sm:$0xff] %vm4975, %v4842
      %5004 = vst.msk [vmem:[%s233 + $0xe0] sm:$0xff] %vm4975, %v4843
      %5005 = vst.msk [vmem:[%s233 + $0xe8] sm:$0xff] %vm4975, %v4844
      %5006 = vst.msk [vmem:[%s233 + $0xf0] sm:$0xff] %vm4975, %v4845
      %5007 = vst.msk [vmem:[%s233 + $0xf8] sm:$0xff] %vm4975, %v4846
      %5008 = vst.msk [vmem:[%s233 + $0x100] sm:$0xff] %vm4975, %v4847
      %5009 = vst.msk [vmem:[%s233 + $0x108] sm:$0xff] %vm4975, %v4848
      %5010 = vst.msk [vmem:[%s233 + $0x110] sm:$0xff] %vm4975, %v4849
      %5011 = vst.msk [vmem:[%s233 + $0x118] sm:$0xff] %vm4975, %v4850
      %5012 = vst.msk [vmem:[%s233 + $0x120] sm:$0xff] %vm4975, %v4851
      %5013 = vst.msk [vmem:[%s233 + $0x128] sm:$0xff] %vm4975, %v4852
      %5014 = vst.msk [vmem:[%s233 + $0x130] sm:$0xff] %vm4975, %v4853
      %5015 = vst.msk [vmem:[%s233 + $0x138] sm:$0xff] %vm4975, %v4854
      %5016 = vst.msk [vmem:[%s233 + $0x140] sm:$0xff] %vm4975, %v4855
      %5017 = vst.msk [vmem:[%s233 + $0x148] sm:$0xff] %vm4975, %v4856
      %5018 = vst.msk [vmem:[%s233 + $0x150] sm:$0xff] %vm4975, %v4857
      %5019 = vst.msk [vmem:[%s233 + $0x158] sm:$0xff] %vm4975, %v4858
      %5020 = vst.msk [vmem:[%s233 + $0x160] sm:$0xff] %vm4975, %v4859
      %5021 = vst.msk [vmem:[%s233 + $0x168] sm:$0xff] %vm4975, %v4860
      %5022 = vst.msk [vmem:[%s233 + $0x170] sm:$0xff] %vm4975, %v4861
      %5023 = vst.msk [vmem:[%s233 + $0x178] sm:$0xff] %vm4975, %v4862
      %5024 = vst.msk [vmem:[%s233 + $0x180] sm:$0xff] %vm4975, %v4863
      %5025 = vst.msk [vmem:[%s233 + $0x188] sm:$0xff] %vm4975, %v4864
      %5026 = vst.msk [vmem:[%s233 + $0x190] sm:$0xff] %vm4975, %v4865
      %5027 = vst.msk [vmem:[%s233 + $0x198] sm:$0xff] %vm4975, %v4866
      %5028 = vst.msk [vmem:[%s233 + $0x1a0] sm:$0xff] %vm4975, %v4867
      %5029 = vst.msk [vmem:[%s233 + $0x1a8] sm:$0xff] %vm4975, %v4868
      %5030 = vst.msk [vmem:[%s233 + $0x1b0] sm:$0xff] %vm4975, %v4869
      %5031 = vst.msk [vmem:[%s233 + $0x1b8] sm:$0xff] %vm4975, %v4870
      %5032 = vst.msk [vmem:[%s233 + $0x1c0] sm:$0xff] %vm4975, %v4871
      %5033 = vst.msk [vmem:[%s233 + $0x1c8] sm:$0xff] %vm4975, %v4872
      %5034 = vst.msk [vmem:[%s233 + $0x1d0] sm:$0xff] %vm4975, %v4873
      %5035 = vst.msk [vmem:[%s233 + $0x1d8] sm:$0xff] %vm4975, %v4874
      %5036 = vst.msk [vmem:[%s233 + $0x1e0] sm:$0xff] %vm4975, %v4875
      %5037 = vst.msk [vmem:[%s233 + $0x1e8] sm:$0xff] %vm4975, %v4876
      %5038 = vst.msk [vmem:[%s233 + $0x1f0] sm:$0xff] %vm4975, %v4877
      %5039 = vst.msk [vmem:[%s233 + $0x1f8] sm:$0xff] %vm4975, %v4878
      %5040 = vst.msk [vmem:[%s243] sm:$0xff] %vm4975, %v4879
      %5041 = vst.msk [vmem:[%s243 + $0x8] sm:$0xff] %vm4975, %v4880
      %5042 = vst.msk [vmem:[%s243 + $0x10] sm:$0xff] %vm4975, %v4881
      %5043 = vst.msk [vmem:[%s243 + $0x18] sm:$0xff] %vm4975, %v4882
      %5044 = vst.msk [vmem:[%s243 + $0x20] sm:$0xff] %vm4975, %v4883
      %5045 = vst.msk [vmem:[%s243 + $0x28] sm:$0xff] %vm4975, %v4884
      %5046 = vst.msk [vmem:[%s243 + $0x30] sm:$0xff] %vm4975, %v4885
      %5047 = vst.msk [vmem:[%s243 + $0x38] sm:$0xff] %vm4975, %v4886
      %5048 = vst.msk [vmem:[%s243 + $0x40] sm:$0xff] %vm4975, %v4887
      %5049 = vst.msk [vmem:[%s243 + $0x48] sm:$0xff] %vm4975, %v4888
      %5050 = vst.msk [vmem:[%s243 + $0x50] sm:$0xff] %vm4975, %v4889
      %5051 = vst.msk [vmem:[%s243 + $0x58] sm:$0xff] %vm4975, %v4890
      %5052 = vst.msk [vmem:[%s243 + $0x60] sm:$0xff] %vm4975, %v4891
      %5053 = vst.msk [vmem:[%s243 + $0x68] sm:$0xff] %vm4975, %v4892
      %5054 = vst.msk [vmem:[%s243 + $0x70] sm:$0xff] %vm4975, %v4893
      %5055 = vst.msk [vmem:[%s243 + $0x78] sm:$0xff] %vm4975, %v4894
      %5056 = vst.msk [vmem:[%s243 + $0x80] sm:$0xff] %vm4975, %v4895
      %5057 = vst.msk [vmem:[%s243 + $0x88] sm:$0xff] %vm4975, %v4896
      %5058 = vst.msk [vmem:[%s243 + $0x90] sm:$0xff] %vm4975, %v4897
      %5059 = vst.msk [vmem:[%s243 + $0x98] sm:$0xff] %vm4975, %v4898
      %5060 = vst.msk [vmem:[%s243 + $0xa0] sm:$0xff] %vm4975, %v4899
      %5061 = vst.msk [vmem:[%s243 + $0xa8] sm:$0xff] %vm4975, %v4900
      %5062 = vst.msk [vmem:[%s243 + $0xb0] sm:$0xff] %vm4975, %v4901
      %5063 = vst.msk [vmem:[%s243 + $0xb8] sm:$0xff] %vm4975, %v4902
      %5064 = vst.msk [vmem:[%s243 + $0xc0] sm:$0xff] %vm4975, %v4903
      %5065 = vst.msk [vmem:[%s243 + $0xc8] sm:$0xff] %vm4975, %v4904
      %5066 = vst.msk [vmem:[%s243 + $0xd0] sm:$0xff] %vm4975, %v4905
      %5067 = vst.msk [vmem:[%s243 + $0xd8] sm:$0xff] %vm4975, %v4906
      %5068 = vst.msk [vmem:[%s243 + $0xe0] sm:$0xff] %vm4975, %v4907
      %5069 = vst.msk [vmem:[%s243 + $0xe8] sm:$0xff] %vm4975, %v4908
      %5070 = vst.msk [vmem:[%s243 + $0xf0] sm:$0xff] %vm4975, %v4909
      %5071 = vst.msk [vmem:[%s243 + $0xf8] sm:$0xff] %vm4975, %v4910
      %5072 = vst.msk [vmem:[%s243 + $0x100] sm:$0xff] %vm4975, %v4911
      %5073 = vst.msk [vmem:[%s243 + $0x108] sm:$0xff] %vm4975, %v4912
      %5074 = vst.msk [vmem:[%s243 + $0x110] sm:$0xff] %vm4975, %v4913
      %5075 = vst.msk [vmem:[%s243 + $0x118] sm:$0xff] %vm4975, %v4914
      %5076 = vst.msk [vmem:[%s243 + $0x120] sm:$0xff] %vm4975, %v4915
      %5077 = vst.msk [vmem:[%s243 + $0x128] sm:$0xff] %vm4975, %v4916
      %5078 = vst.msk [vmem:[%s243 + $0x130] sm:$0xff] %vm4975, %v4917
      %5079 = vst.msk [vmem:[%s243 + $0x138] sm:$0xff] %vm4975, %v4918
      %5080 = vst.msk [vmem:[%s243 + $0x140] sm:$0xff] %vm4975, %v4919
      %5081 = vst.msk [vmem:[%s243 + $0x148] sm:$0xff] %vm4975, %v4920
      %5082 = vst.msk [vmem:[%s243 + $0x150] sm:$0xff] %vm4975, %v4921
      %5083 = vst.msk [vmem:[%s243 + $0x158] sm:$0xff] %vm4975, %v4922
      %5084 = vst.msk [vmem:[%s243 + $0x160] sm:$0xff] %vm4975, %v4923
      %5085 = vst.msk [vmem:[%s243 + $0x168] sm:$0xff] %vm4975, %v4924
      %5086 = vst.msk [vmem:[%s243 + $0x170] sm:$0xff] %vm4975, %v4925
      %5087 = vst.msk [vmem:[%s243 + $0x178] sm:$0xff] %vm4975, %v4926
      %5088 = vst.msk [vmem:[%s243 + $0x180] sm:$0xff] %vm4975, %v4927
      %5089 = vst.msk [vmem:[%s243 + $0x188] sm:$0xff] %vm4975, %v4928
      %5090 = vst.msk [vmem:[%s243 + $0x190] sm:$0xff] %vm4975, %v4929
      %5091 = vst.msk [vmem:[%s243 + $0x198] sm:$0xff] %vm4975, %v4930
      %5092 = vst.msk [vmem:[%s243 + $0x1a0] sm:$0xff] %vm4975, %v4931
      %5093 = vst.msk [vmem:[%s243 + $0x1a8] sm:$0xff] %vm4975, %v4932
      %5094 = vst.msk [vmem:[%s243 + $0x1b0] sm:$0xff] %vm4975, %v4933
      %5095 = vst.msk [vmem:[%s243 + $0x1b8] sm:$0xff] %vm4975, %v4934
      %5096 = vst.msk [vmem:[%s243 + $0x1c0] sm:$0xff] %vm4975, %v4935
      %5097 = vst.msk [vmem:[%s243 + $0x1c8] sm:$0xff] %vm4975, %v4936
      %5098 = vst.msk [vmem:[%s243 + $0x1d0] sm:$0xff] %vm4975, %v4937
      %5099 = vst.msk [vmem:[%s243 + $0x1d8] sm:$0xff] %vm4975, %v4938
      %5100 = vst.msk [vmem:[%s243 + $0x1e0] sm:$0xff] %vm4975, %v4939
      %5101 = vst.msk [vmem:[%s243 + $0x1e8] sm:$0xff] %vm4975, %v4940
      %5102 = vst.msk [vmem:[%s243 + $0x1f0] sm:$0xff] %vm4975, %v4941
      %5103 = vst.msk [vmem:[%s243 + $0x1f8] sm:$0xff] %vm4975, %v4942
      %5104 = vst.msk [vmem:[%s243 + $0x200] sm:$0xff] %vm4975, %v4943
      %5105 = vst.msk [vmem:[%s243 + $0x208] sm:$0xff] %vm4975, %v4944
      %5106 = vst.msk [vmem:[%s243 + $0x210] sm:$0xff] %vm4975, %v4945
      %5107 = vst.msk [vmem:[%s243 + $0x218] sm:$0xff] %vm4975, %v4946
      %5108 = vst.msk [vmem:[%s243 + $0x220] sm:$0xff] %vm4975, %v4947
      %5109 = vst.msk [vmem:[%s243 + $0x228] sm:$0xff] %vm4975, %v4948
      %5110 = vst.msk [vmem:[%s243 + $0x230] sm:$0xff] %vm4975, %v4949
      %5111 = vst.msk [vmem:[%s243 + $0x238] sm:$0xff] %vm4975, %v4950
      %5112 = vst.msk [vmem:[%s243 + $0x240] sm:$0xff] %vm4975, %v4951
      %5113 = vst.msk [vmem:[%s243 + $0x248] sm:$0xff] %vm4975, %v4952
      %5114 = vst.msk [vmem:[%s243 + $0x250] sm:$0xff] %vm4975, %v4953
      %5115 = vst.msk [vmem:[%s243 + $0x258] sm:$0xff] %vm4975, %v4954
      %5116 = vst.msk [vmem:[%s243 + $0x260] sm:$0xff] %vm4975, %v4955
      %5117 = vst.msk [vmem:[%s243 + $0x268] sm:$0xff] %vm4975, %v4956
      %5118 = vst.msk [vmem:[%s243 + $0x270] sm:$0xff] %vm4975, %v4957
      %5119 = vst.msk [vmem:[%s243 + $0x278] sm:$0xff] %vm4975, %v4958
      %5120 = vst.msk [vmem:[%s243 + $0x280] sm:$0xff] %vm4975, %v4959
      %5121 = vst.msk [vmem:[%s243 + $0x288] sm:$0xff] %vm4975, %v4960
      %5122 = vst.msk [vmem:[%s243 + $0x290] sm:$0xff] %vm4975, %v4961
      %5123 = vst.msk [vmem:[%s243 + $0x298] sm:$0xff] %vm4975, %v4962
      %5124 = vst.msk [vmem:[%s243 + $0x2a0] sm:$0xff] %vm4975, %v4963
      %5125 = vst.msk [vmem:[%s243 + $0x2a8] sm:$0xff] %vm4975, %v4964
      %5126 = vst.msk [vmem:[%s243 + $0x2b0] sm:$0xff] %vm4975, %v4965
      %5127 = vst.msk [vmem:[%s243 + $0x2b8] sm:$0xff] %vm4975, %v4966
      %5128 = vst.msk [vmem:[%s243 + $0x2c0] sm:$0xff] %vm4975, %v4967
      %5129 = vst.msk [vmem:[%s243 + $0x2c8] sm:$0xff] %vm4975, %v4968
      %5130 = vst.msk [vmem:[%s243 + $0x2d0] sm:$0xff] %vm4975, %v4969
      %5131 = vst.msk [vmem:[%s243 + $0x2d8] sm:$0xff] %vm4975, %v4970
      %5132 = vst.msk [vmem:[%s243 + $0x2e0] sm:$0xff] %vm4975, %v4971
      %5133 = vst.msk [vmem:[%s243 + $0x2e8] sm:$0xff] %vm4975, %v4972
      %5134 = vst.msk [vmem:[%s243 + $0x2f0] sm:$0xff] %vm4975, %v4973
      %5135 = vst.msk [vmem:[%s243 + $0x2f8] sm:$0xff] %vm4975, %v4974
      %s5136 = smul.u32 2, %s21
      %p5137 = scmp.lt.s32.totalorder %s20, 1
      %s5138 = scalar_select %p5137, %s20, 1
      %p5139 = scmp.lt.s32.totalorder %s5136, 1
      %s5140 = scalar_select %p5139, %s5136, 1
      %s5141 = smul.addr %s5138, 64
      %s5142 = sadd.s32 %s5140, %s5141
      %s5143 = smul.addr %s5142, 8
      %s5144 = scalar_lea.vmem %s3, %s5143
      %s5145 = smul.u32 2, %s21
      %p5146 = scmp.lt.s32.totalorder %s20, 1
      %s5147 = scalar_select %p5146, %s20, 1
      %p5148 = scmp.lt.s32.totalorder %s5145, 1
      %s5149 = scalar_select %p5148, %s5145, 1
      %s5150 = smul.addr %s5147, 96
      %s5151 = sadd.s32 %s5149, %s5150
      %s5152 = smul.addr %s5151, 8
      %s5153 = scalar_lea.vmem %s4, %s5152
      // Predicated region
      $region33: #{model_forward.2} parent=31 // pred_check
        %p5154 = pneg %p116
      $region34: #{model_forward.2} parent=31 // pred_check_branch
        %5156 = sbr.rel (%p5154) target = $region36
      $region35: #{model_forward.2} parent=31 // pred_region
        %s5157 = smul.u32 2, %s21
      $region36: #{model_forward.2} parent=31 // pred_fallthru
        _
      // Predicated region
      $region37: #{model_forward.2} parent=31 // pred_check
        %p5158 = pneg %p144
      $region38: #{model_forward.2} parent=31 // pred_check_branch
        %5160 = sbr.rel (%p5158) target = $region40
      $region39: #{model_forward.2} parent=31 // pred_region
        %s5161 = smul.u32 2, %s21
      $region40: #{model_forward.2} parent=31 // pred_fallthru
        _
    $region32: #{model_forward.2} parent=5 // pred_fallthru
      _
    %p5162 = scmp.le.s32.totalorder 2, %s11
    // Predicated region
    $region41: #{model_forward.2} parent=5 // pred_check
      %p5163 = pneg %p5162
    $region42: #{model_forward.2} parent=5 // pred_check_branch
      %5165 = sbr.rel (%p5163) target = $region44
    $region43: #{model_forward.2} parent=5 // pred_region
      %s5166 = ssub.s32 %s11, 2
      // Predicated region
      $region45: #{model_forward.2} parent=43 // pred_check
        %p5167 = pneg %p122
      $region46: #{model_forward.2} parent=43 // pred_check_branch
        %5169 = sbr.rel (%p5167) target = $region48
      $region47: #{model_forward.2} parent=43 // pred_region
        %s5170 = smul.u32 2, %s23
        %p5171 = scmp.lt.s32.totalorder %s22, 1
        %s5172 = scalar_select %p5171, %s22, 1
        %p5173 = scmp.lt.s32.totalorder %s5170, 1
        %s5174 = scalar_select %p5173, %s5170, 1
        %s5175 = smul.addr %s5172, 64
        %s5176 = sadd.s32 %s5174, %s5175
        %s5177 = smul.addr %s5176, 8
        %s5178 = scalar_lea.vmem %s3, %s5177
      $region48: #{model_forward.2} parent=43 // pred_fallthru
        _
      // Predicated region
      $region49: #{model_forward.2} parent=43 // pred_check
        %p5179 = pneg %p150
      $region50: #{model_forward.2} parent=43 // pred_check_branch
        %5181 = sbr.rel (%p5179) target = $region52
      $region51: #{model_forward.2} parent=43 // pred_region
        %s5182 = smul.u32 2, %s23
        %p5183 = scmp.lt.s32.totalorder %s22, 1
        %s5184 = scalar_select %p5183, %s22, 1
        %p5185 = scmp.lt.s32.totalorder %s5182, 1
        %s5186 = scalar_select %p5185, %s5182, 1
        %s5187 = smul.addr %s5184, 96
        %s5188 = sadd.s32 %s5186, %s5187
        %s5189 = smul.addr %s5188, 8
        %s5190 = scalar_lea.vmem %s4, %s5189
      $region52: #{model_forward.2} parent=43 // pred_fallthru
        _
    $region44: #{model_forward.2} parent=5 // pred_fallthru
      _
  $region6: #{model_forward.2} parent=0 // loop_footer
    %s15 = sadd.s32 1, %s11
  $region7: #{model_forward.2} parent=0 // loop_footer_branch
    %10 = sbr.rel target = $region3
  $region8: #{model_forward.2} parent=0 // loop_exit
    _

// kernel: model_forward.3
$region0: #{model_forward.3}
  #allocation0 [shape = 'u32[]', space=smem, size = 0x4, offset = 0x4, fixed_abs, tag = 'smem constant byte address 0x4 - core index']
  #allocation1 [shape = 'u32[144,128]{1,0:T(1,128)}', space=vmem, size = 0x12000, scoped, tag = 'internal scratch']
  %s0 = inlined_call_operand.vmem [shape: f32[2,3,24,16], index: 0, kind: input, shape index: {}]
  %s1 = inlined_call_operand.vmem [shape: bf16[1024,288], index: 1, kind: input, shape index: {}]
  %s2 = inlined_call_operand.vmem [shape: f32[1024,1], index: 2, kind: input, shape index: {}]
  %s3 = inlined_call_operand.vmem [shape: f32[2,64,13,13], index: 3, kind: output, shape index: {}]
  %s4 = sld [smem:[#allocation0]]
  $region45: #{model_forward.3} parent=0
    _
  %s6 = ssub.s32 1, %s4
  %s7 = scalar_select 0, %s6, %s4
  loop: start=0, step=1, limit=4
  $region2: #{model_forward.3} parent=0 // loop_pre_header
    _
  $region3: #{model_forward.3} parent=0 // loop_header
    %s9 = sphi 0, %s13
    %p10 = scmp.ge.s32.totalorder %s9, 4
    %s16 = sphi 0, %s28
    %s17 = sphi 0, %s24
    %s18 = sphi 0, %s16
    %s19 = sphi 0, %s17
    %s20 = sphi 0, %s18
    %s21 = sphi 0, %s19
    %s31 = sphi 0, %s33
    %s34 = sphi 0, %s31
    %s35 = sphi 0, %s34
    %s51 = sphi 0, %s35
    %s55 = sphi 0, %s55
    %s57 = sphi 0, %s55
    %s58 = sphi 0, %s57
    %s72 = sphi 0, %s58
    %s76 = sphi 0, %s76
    %s78 = sphi 0, %s76
    %s79 = sphi 0, %s78
    %s93 = sphi 0, %s79
    %s101 = sphi 0, %s103
    %s104 = sphi 0, %s101
    %s105 = sphi 0, %s104
    %s121 = sphi 0, %s105
  $region4: #{model_forward.3} parent=0 // loop_header_branch
    %12 = sbr.rel (%p10) target = $region8
  $region5: #{model_forward.3} parent=0 // loop_body
    %s14 = ssub.s32 %s9, 1
    %s15 = ssub.s32 %s9, 2
    %s22 = sadd.s32 1, %s17
    %p23 = scmp.ge.s32.totalorder %s22, 1
    %s24 = scalar_select %p23, 0, %s22
    %s25 = sadd.s32 1, %s16
    %s26 = scalar_select %p23, %s25, %s16
    %p27 = scmp.ge.s32.totalorder %s26, 2
    %s28 = scalar_select %p27, 0, %s26
    %s29 = ssub.s32 %s16, %s28
    %p30 = scmp.eq.s32.totalorder %s29, 0
    %s32 = sadd.s32 %s31, 1
    %s33 = scalar_select %p30, %s31, %s32
    %p36 = pneg %p30
    %p37 = scmp.eq.s32.totalorder %s9, 1
    %p38 = por %p36, %p37
    %p39 = scmp.ne.s32.totalorder %s31, %s34
    %p40 = scmp.eq.s32.totalorder %s9, 0
    %p41 = por %p39, %p40
    %p42 = scmp.ne.s32.totalorder %s31, %s34
    %p43 = scmp.eq.s32.totalorder %s14, 1
    %p44 = por %p42, %p43
    %p45 = scmp.ne.s32.totalorder %s34, %s35
    %p46 = scmp.eq.s32.totalorder %s14, 0
    %p47 = por %p45, %p46
    %p48 = scmp.ne.s32.totalorder %s34, %s35
    %p49 = scmp.eq.s32.totalorder %s15, 1
    %p50 = por %p48, %p49
    %p52 = scmp.ne.s32.totalorder %s35, %s51
    %p53 = scmp.eq.s32.totalorder %s15, 0
    %p54 = por %p52, %p53
    %s56 = sadd.s32 %s55, 1
    %p59 = scmp.eq.s32.totalorder %s9, 1
    %p60 = scmp.ne.s32.totalorder %s55, %s57
    %p61 = scmp.eq.s32.totalorder %s9, 0
    %p62 = por %p60, %p61
    %p63 = scmp.ne.s32.totalorder %s55, %s57
    %p64 = scmp.eq.s32.totalorder %s14, 1
    %p65 = por %p63, %p64
    %p66 = scmp.ne.s32.totalorder %s57, %s58
    %p67 = scmp.eq.s32.totalorder %s14, 0
    %p68 = por %p66, %p67
    %p69 = scmp.ne.s32.totalorder %s57, %s58
    %p70 = scmp.eq.s32.totalorder %s15, 1
    %p71 = por %p69, %p70
    %p73 = scmp.ne.s32.totalorder %s58, %s72
    %p74 = scmp.eq.s32.totalorder %s15, 0
    %p75 = por %p73, %p74
    %s77 = sadd.s32 %s76, 1
    %p80 = scmp.eq.s32.totalorder %s9, 1
    %p81 = scmp.ne.s32.totalorder %s76, %s78
    %p82 = scmp.eq.s32.totalorder %s9, 0
    %p83 = por %p81, %p82
    %p84 = scmp.ne.s32.totalorder %s76, %s78
    %p85 = scmp.eq.s32.totalorder %s14, 1
    %p86 = por %p84, %p85
    %p87 = scmp.ne.s32.totalorder %s78, %s79
    %p88 = scmp.eq.s32.totalorder %s14, 0
    %p89 = por %p87, %p88
    %p90 = scmp.ne.s32.totalorder %s78, %s79
    %p91 = scmp.eq.s32.totalorder %s15, 1
    %p92 = por %p90, %p91
    %p94 = scmp.ne.s32.totalorder %s79, %s93
    %p95 = scmp.eq.s32.totalorder %s15, 0
    %p96 = por %p94, %p95
    %s97 = ssub.s32 %s16, %s28
    %s98 = ssub.s32 %s17, %s24
    %s99 = sor.u32 %s97, %s98
    %p100 = scmp.eq.s32.totalorder %s99, 0
    %s102 = sadd.s32 %s101, 1
    %s103 = scalar_select %p100, %s101, %s102
    %p106 = pneg %p100
    %p107 = scmp.eq.s32.totalorder %s9, 1
    %p108 = por %p106, %p107
    %p109 = scmp.ne.s32.totalorder %s101, %s104
    %p110 = scmp.eq.s32.totalorder %s9, 0
    %p111 = por %p109, %p110
    %p112 = scmp.ne.s32.totalorder %s101, %s104
    %p113 = scmp.eq.s32.totalorder %s14, 1
    %p114 = por %p112, %p113
    %p115 = scmp.ne.s32.totalorder %s104, %s105
    %p116 = scmp.eq.s32.totalorder %s14, 0
    %p117 = por %p115, %p116
    %p118 = scmp.ne.s32.totalorder %s104, %s105
    %p119 = scmp.eq.s32.totalorder %s15, 1
    %p120 = por %p118, %p119
    %p122 = scmp.ne.s32.totalorder %s105, %s121
    %p123 = scmp.eq.s32.totalorder %s15, 0
    %p124 = por %p122, %p123
    %p125 = scmp.le.s32.totalorder 1, %s9
    %p126 = scmp.lt.s32.totalorder %s9, 3
    %p127 = pnand %p125, %p126
    %p128 = pneg %p127
    // Predicated region
    $region9: #{model_forward.3} parent=5 // pred_check
      _
    $region10: #{model_forward.3} parent=5 // pred_check_branch
      %130 = sbr.rel (%p127) target = $region12
    $region11: #{model_forward.3} parent=5 // pred_region
      %s131 = ssub.s32 %s9, 1
      // Predicated region
      $region13: #{model_forward.3} parent=11 // pred_check
        %p132 = pneg %p68
      $region14: #{model_forward.3} parent=11 // pred_check_branch
        %134 = sbr.rel (%p132) target = $region16
      $region15: #{model_forward.3} parent=11 // pred_region
        _
      $region16: #{model_forward.3} parent=11 // pred_fallthru
        _
      // Predicated region
      $region17: #{model_forward.3} parent=11 // pred_check
        %p135 = pneg %p89
      $region18: #{model_forward.3} parent=11 // pred_check_branch
        %137 = sbr.rel (%p135) target = $region20
      $region19: #{model_forward.3} parent=11 // pred_region
        _
      $region20: #{model_forward.3} parent=11 // pred_fallthru
        _
    $region12: #{model_forward.3} parent=5 // pred_fallthru
      _
    %p138 = scmp.lt.s32.totalorder %s9, 2
    // Predicated region
    $region21: #{model_forward.3} parent=5 // pred_check
      %p139 = pneg %p138
    $region22: #{model_forward.3} parent=5 // pred_check_branch
      %141 = sbr.rel (%p139) target = $region24
    $region23: #{model_forward.3} parent=5 // pred_region
      // Predicated region
      $region25: #{model_forward.3} parent=23 // pred_check
        %p142 = pneg %p41
      $region26: #{model_forward.3} parent=23 // pred_check_branch
        %144 = sbr.rel (%p142) target = $region28
      $region27: #{model_forward.3} parent=23 // pred_region
        %p145 = scmp.lt.s32.totalorder %s16, 1
        %s146 = scalar_select %p145, %s16, 1
        %s147 = smul.addr %s146, 9
        %s148 = smul.addr %s147, 8
        %s149 = scalar_lea.vmem %s0, %s148
      $region28: #{model_forward.3} parent=23 // pred_fallthru
        _
    $region24: #{model_forward.3} parent=5 // pred_fallthru
      _
    %p150 = scmp.le.s32.totalorder 1, %s9
    %p151 = scmp.lt.s32.totalorder %s9, 3
    %p152 = pnand %p150, %p151
    %p153 = pneg %p152
    // Predicated region
    $region29: #{model_forward.3} parent=5 // pred_check
      _
    $region30: #{model_forward.3} parent=5 // pred_check_branch
      %155 = sbr.rel (%p152) target = $region32
    $region31: #{model_forward.3} parent=5 // pred_region
      %s156 = ssub.s32 %s9, 1
      %p157 = scmp.lt.s32.totalorder %s18, 1
      %s158 = scalar_select %p157, %s18, 1
      %s159 = smul.addr %s158, 9
      %s160 = smul.addr %s159, 8
      %s161 = scalar_lea.vmem %s0, %s160
      %p162 = pneg %p47
      %p163 = pneg %p44
      %p164 = pneg %p68
      %p165 = pneg %p65
      %p166 = pneg %p89
      %p167 = pneg %p86
      %p168 = pneg %p117
      %p169 = pneg %p114
      %s170 = smul.u32 2, %s19
      %p171 = scmp.lt.s32.totalorder %s18, 1
      %s172 = scalar_select %p171, %s18, 1
      %p173 = scmp.lt.s32.totalorder %s170, 1
      %s174 = scalar_select %p173, %s170, 1
      %s175 = smul.addr %s172, 128
      %s176 = sadd.s32 %s174, %s175
      %s177 = smul.addr %s176, 8
      %s178 = scalar_lea.vmem %s3, %s177
      %p179 = scmp.lt.s32.totalorder %s18, 1
      %s180 = scalar_select %p179, %s18, 1
      %s181 = smul.addr %s180, 9
      %s182 = smul.addr %s181, 8
      %s183 = scalar_lea.vmem %s0, %s182
      %s184 = smul.u32 2, %s19
      %p185 = scmp.lt.s32.totalorder %s18, 1
      %s186 = scalar_select %p185, %s18, 1
      %p187 = scmp.lt.s32.totalorder %s184, 1
      %s188 = scalar_select %p187, %s184, 1
      %s189 = smul.addr %s186, 128
      %s190 = sadd.s32 %s188, %s189
      %s191 = smul.addr %s190, 8
      %s192 = scalar_lea.vmem %s3, %s191
      %s193 = smul.u32 2, %s19
      %s195 = smul.u32 %s19, 16
      %s196 = scalar_lea.vmem %s183, %s195
      %v197 = vld [vmem:[%s196] sm:$0xff]
      %v198 = vld [vmem:[%s196 + $0x8] sm:$0xff]
      %v199 = vld [vmem:[%s196 + $0x10] sm:$0xff]
      %v200 = vld [vmem:[%s196 + $0x18] sm:$0xff]
      %v201 = vld [vmem:[%s196 + $0x20] sm:$0xff]
      %v202 = vld [vmem:[%s196 + $0x28] sm:$0xff]
      %v203 = vld [vmem:[%s196 + $0x30] sm:$0xff]
      %v204 = vld [vmem:[%s196 + $0x38] sm:$0xff]
      %v205 = vld [vmem:[%s196 + $0x40] sm:$0xff]
      %209 = vrot.lane.b32.xlu0 %v197, 127
      %v210 = vpop.permute.xlu0 %209
      %211 = vrot.lane.b32.xlu0 %v198, 127
      %v212 = vpop.permute.xlu0 %211
      %213 = vrot.lane.b32.xlu0 %v199, 127
      %v214 = vpop.permute.xlu0 %213
      %221 = vrot.lane.b32.xlu0 %v200, 127
      %v222 = vpop.permute.xlu0 %221
      %223 = vrot.lane.b32.xlu0 %v201, 127
      %v224 = vpop.permute.xlu0 %223
      %225 = vrot.lane.b32.xlu0 %v202, 127
      %v226 = vpop.permute.xlu0 %225
      %233 = vrot.lane.b32.xlu0 %v203, 127
      %v234 = vpop.permute.xlu0 %233
      %235 = vrot.lane.b32.xlu0 %v204, 127
      %v236 = vpop.permute.xlu0 %235
      %237 = vrot.lane.b32.xlu0 %v205, 127
      %v238 = vpop.permute.xlu0 %237
      %242 = vrot.lane.b32.xlu0 %v197, 126
      %v243 = vpop.permute.xlu0 %242
      %244 = vrot.lane.b32.xlu0 %v198, 126
      %v245 = vpop.permute.xlu0 %244
      %246 = vrot.lane.b32.xlu0 %v199, 126
      %v247 = vpop.permute.xlu0 %246
      %251 = vrot.lane.b32.xlu0 %v200, 126
      %v252 = vpop.permute.xlu0 %251
      %253 = vrot.lane.b32.xlu0 %v201, 126
      %v254 = vpop.permute.xlu0 %253
      %255 = vrot.lane.b32.xlu0 %v202, 126
      %v256 = vpop.permute.xlu0 %255
      %260 = vrot.lane.b32.xlu0 %v203, 126
      %v261 = vpop.permute.xlu0 %260
      %262 = vrot.lane.b32.xlu0 %v204, 126
      %v263 = vpop.permute.xlu0 %262
      %264 = vrot.lane.b32.xlu0 %v205, 126
      %v265 = vpop.permute.xlu0 %264
      %269 = vrot.lane.b32.xlu0 %v197, 125
      %v270 = vpop.permute.xlu0 %269
      %271 = vrot.lane.b32.xlu0 %v198, 125
      %v272 = vpop.permute.xlu0 %271
      %273 = vrot.lane.b32.xlu0 %v199, 125
      %v274 = vpop.permute.xlu0 %273
      %278 = vrot.lane.b32.xlu0 %v200, 125
      %v279 = vpop.permute.xlu0 %278
      %280 = vrot.lane.b32.xlu0 %v201, 125
      %v281 = vpop.permute.xlu0 %280
      %282 = vrot.lane.b32.xlu0 %v202, 125
      %v283 = vpop.permute.xlu0 %282
      %287 = vrot.lane.b32.xlu0 %v203, 125
      %v288 = vpop.permute.xlu0 %287
      %289 = vrot.lane.b32.xlu0 %v204, 125
      %v290 = vpop.permute.xlu0 %289
      %291 = vrot.lane.b32.xlu0 %v205, 125
      %v292 = vpop.permute.xlu0 %291
      %v296 = vpack.c.bf16 %v198, %v197
      %v297 = vpack.c.bf16 %v200, %v199
      %v298 = vpack.c.bf16 %v202, %v201
      %v299 = vpack.c.bf16 %v204, %v203
      %v300 = vpack.c.bf16 %v210, %v205
      %v301 = vpack.c.bf16 %v214, %v212
      %v302 = vpack.c.bf16 %v224, %v222
      %v303 = vpack.c.bf16 %v234, %v226
      %v304 = vpack.c.bf16 %v238, %v236
      %v305 = vpack.c.bf16 %v245, %v243
      %v306 = vpack.c.bf16 %v252, %v247
      %v307 = vpack.c.bf16 %v256, %v254
      %v308 = vpack.c.bf16 %v263, %v261
      %v309 = vpack.c.bf16 %v270, %v265
      %v310 = vpack.c.bf16 %v274, %v272
      %v311 = vpack.c.bf16 %v281, %v279
      %v312 = vpack.c.bf16 %v288, %v283
      %v313 = vpack.c.bf16 %v292, %v290
      %v314 = vld [vmem:[%s1] sm:$0xff]
      %v315 = vld [vmem:[%s1 + $0x8] sm:$0xf]
      %v316 = vld [vmem:[%s1 + $0xc] sm:$0xff]
      %v317 = vld [vmem:[%s1 + $0x14] sm:$0xf]
      %v318 = vld [vmem:[%s1 + $0x18] sm:$0xff]
      %v319 = vld [vmem:[%s1 + $0x20] sm:$0xf]
      %v320 = vld [vmem:[%s1 + $0x24] sm:$0xff]
      %v321 = vld [vmem:[%s1 + $0x2c] sm:$0xf]
      %v322 = vld [vmem:[%s1 + $0x30] sm:$0xff]
      %v323 = vld [vmem:[%s1 + $0x38] sm:$0xf]
      %v324 = vld [vmem:[%s1 + $0x3c] sm:$0xff]
      %v325 = vld [vmem:[%s1 + $0x44] sm:$0xf]
      %v326 = vld [vmem:[%s1 + $0x48] sm:$0xff]
      %v327 = vld [vmem:[%s1 + $0x50] sm:$0xf]
      %v328 = vld [vmem:[%s1 + $0x54] sm:$0xff]
      %v329 = vld [vmem:[%s1 + $0x5c] sm:$0xf]
      %v330 = vld [vmem:[%s1 + $0x60] sm:$0xff]
      %v331 = vld [vmem:[%s1 + $0x68] sm:$0xf]
      %v332 = vld [vmem:[%s1 + $0x6c] sm:$0xff]
      %v333 = vld [vmem:[%s1 + $0x74] sm:$0xf]
      %v334 = vld [vmem:[%s1 + $0x78] sm:$0xff]
      %v335 = vld [vmem:[%s1 + $0x80] sm:$0xf]
      %v336 = vld [vmem:[%s1 + $0x84] sm:$0xff]
      %v337 = vld [vmem:[%s1 + $0x8c] sm:$0xf]
      %v338 = vld [vmem:[%s1 + $0x90] sm:$0xff]
      %v339 = vld [vmem:[%s1 + $0x98] sm:$0xf]
      %v340 = vld [vmem:[%s1 + $0x9c] sm:$0xff]
      %v341 = vld [vmem:[%s1 + $0xa4] sm:$0xf]
      %v342 = vld [vmem:[%s1 + $0xa8] sm:$0xff]
      %v343 = vld [vmem:[%s1 + $0xb0] sm:$0xf]
      %v344 = vld [vmem:[%s1 + $0xb4] sm:$0xff]
      %v345 = vld [vmem:[%s1 + $0xbc] sm:$0xf]
      %v346 = vld [vmem:[%s1 + $0xc0] sm:$0xff]
      %v347 = vld [vmem:[%s1 + $0xc8] sm:$0xf]
      %v348 = vld [vmem:[%s1 + $0xcc] sm:$0xff]
      %v349 = vld [vmem:[%s1 + $0xd4] sm:$0xf]
      %v350 = vld [vmem:[%s1 + $0xd8] sm:$0xff]
      %v351 = vld [vmem:[%s1 + $0xe0] sm:$0xf]
      %v352 = vld [vmem:[%s1 + $0xe4] sm:$0xff]
      %v353 = vld [vmem:[%s1 + $0xec] sm:$0xf]
      %v354 = vld [vmem:[%s1 + $0xf0] sm:$0xff]
      %v355 = vld [vmem:[%s1 + $0xf8] sm:$0xf]
      %v356 = vld [vmem:[%s1 + $0xfc] sm:$0xff]
      %v357 = vld [vmem:[%s1 + $0x104] sm:$0xf]
      %v358 = vld [vmem:[%s1 + $0x108] sm:$0xff]
      %v359 = vld [vmem:[%s1 + $0x110] sm:$0xf]
      %v360 = vld [vmem:[%s1 + $0x114] sm:$0xff]
      %v361 = vld [vmem:[%s1 + $0x11c] sm:$0xf]
      %v362 = vld [vmem:[%s1 + $0x120] sm:$0xff]
      %v363 = vld [vmem:[%s1 + $0x128] sm:$0xf]
      %v364 = vld [vmem:[%s1 + $0x12c] sm:$0xff]
      %v365 = vld [vmem:[%s1 + $0x134] sm:$0xf]
      %v366 = vld [vmem:[%s1 + $0x138] sm:$0xff]
      %v367 = vld [vmem:[%s1 + $0x140] sm:$0xf]
      %v368 = vld [vmem:[%s1 + $0x144] sm:$0xff]
      %v369 = vld [vmem:[%s1 + $0x14c] sm:$0xf]
      %v370 = vld [vmem:[%s1 + $0x150] sm:$0xff]
      %v371 = vld [vmem:[%s1 + $0x158] sm:$0xf]
      %v372 = vld [vmem:[%s1 + $0x15c] sm:$0xff]
      %v373 = vld [vmem:[%s1 + $0x164] sm:$0xf]
      %v374 = vld [vmem:[%s1 + $0x168] sm:$0xff]
      %v375 = vld [vmem:[%s1 + $0x170] sm:$0xf]
      %v376 = vld [vmem:[%s1 + $0x174] sm:$0xff]
      %v377 = vld [vmem:[%s1 + $0x17c] sm:$0xf]
      %v378 = vld [vmem:[%s1 + $0x180] sm:$0xff]
      %v379 = vld [vmem:[%s1 + $0x188] sm:$0xf]
      %v380 = vld [vmem:[%s1 + $0x18c] sm:$0xff]
      %v381 = vld [vmem:[%s1 + $0x194] sm:$0xf]
      %v382 = vld [vmem:[%s1 + $0x198] sm:$0xff]
      %v383 = vld [vmem:[%s1 + $0x1a0] sm:$0xf]
      %v384 = vld [vmem:[%s1 + $0x1a4] sm:$0xff]
      %v385 = vld [vmem:[%s1 + $0x1ac] sm:$0xf]
      %v386 = vld [vmem:[%s1 + $0x1b0] sm:$0xff]
      %v387 = vld [vmem:[%s1 + $0x1b8] sm:$0xf]
      %v388 = vld [vmem:[%s1 + $0x1bc] sm:$0xff]
      %v389 = vld [vmem:[%s1 + $0x1c4] sm:$0xf]
      %v390 = vld [vmem:[%s1 + $0x1c8] sm:$0xff]
      %v391 = vld [vmem:[%s1 + $0x1d0] sm:$0xf]
      %v392 = vld [vmem:[%s1 + $0x1d4] sm:$0xff]
      %v393 = vld [vmem:[%s1 + $0x1dc] sm:$0xf]
      %v394 = vld [vmem:[%s1 + $0x1e0] sm:$0xff]
      %v395 = vld [vmem:[%s1 + $0x1e8] sm:$0xf]
      %v396 = vld [vmem:[%s1 + $0x1ec] sm:$0xff]
      %v397 = vld [vmem:[%s1 + $0x1f4] sm:$0xf]
      %v398 = vld [vmem:[%s1 + $0x1f8] sm:$0xff]
      %v399 = vld [vmem:[%s1 + $0x200] sm:$0xf]
      %v400 = vld [vmem:[%s1 + $0x204] sm:$0xff]
      %v401 = vld [vmem:[%s1 + $0x20c] sm:$0xf]
      %v402 = vld [vmem:[%s1 + $0x210] sm:$0xff]
      %v403 = vld [vmem:[%s1 + $0x218] sm:$0xf]
      %v404 = vld [vmem:[%s1 + $0x21c] sm:$0xff]
      %v405 = vld [vmem:[%s1 + $0x224] sm:$0xf]
      %v406 = vld [vmem:[%s1 + $0x228] sm:$0xff]
      %v407 = vld [vmem:[%s1 + $0x230] sm:$0xf]
      %v408 = vld [vmem:[%s1 + $0x234] sm:$0xff]
      %v409 = vld [vmem:[%s1 + $0x23c] sm:$0xf]
      %v410 = vld [vmem:[%s1 + $0x240] sm:$0xff]
      %v411 = vld [vmem:[%s1 + $0x248] sm:$0xf]
      %v412 = vld [vmem:[%s1 + $0x24c] sm:$0xff]
      %v413 = vld [vmem:[%s1 + $0x254] sm:$0xf]
      %v414 = vld [vmem:[%s1 + $0x258] sm:$0xff]
      %v415 = vld [vmem:[%s1 + $0x260] sm:$0xf]
      %v416 = vld [vmem:[%s1 + $0x264] sm:$0xff]
      %v417 = vld [vmem:[%s1 + $0x26c] sm:$0xf]
      %v418 = vld [vmem:[%s1 + $0x270] sm:$0xff]
      %v419 = vld [vmem:[%s1 + $0x278] sm:$0xf]
      %v420 = vld [vmem:[%s1 + $0x27c] sm:$0xff]
      %v421 = vld [vmem:[%s1 + $0x284] sm:$0xf]
      %v422 = vld [vmem:[%s1 + $0x288] sm:$0xff]
      %v423 = vld [vmem:[%s1 + $0x290] sm:$0xf]
      %v424 = vld [vmem:[%s1 + $0x294] sm:$0xff]
      %v425 = vld [vmem:[%s1 + $0x29c] sm:$0xf]
      %v426 = vld [vmem:[%s1 + $0x2a0] sm:$0xff]
      %v427 = vld [vmem:[%s1 + $0x2a8] sm:$0xf]
      %v428 = vld [vmem:[%s1 + $0x2ac] sm:$0xff]
      %v429 = vld [vmem:[%s1 + $0x2b4] sm:$0xf]
      %v430 = vld [vmem:[%s1 + $0x2b8] sm:$0xff]
      %v431 = vld [vmem:[%s1 + $0x2c0] sm:$0xf]
      %v432 = vld [vmem:[%s1 + $0x2c4] sm:$0xff]
      %v433 = vld [vmem:[%s1 + $0x2cc] sm:$0xf]
      %v434 = vld [vmem:[%s1 + $0x2d0] sm:$0xff]
      %v435 = vld [vmem:[%s1 + $0x2d8] sm:$0xf]
      %v436 = vld [vmem:[%s1 + $0x2dc] sm:$0xff]
      %v437 = vld [vmem:[%s1 + $0x2e4] sm:$0xf]
      %v438 = vld [vmem:[%s1 + $0x2e8] sm:$0xff]
      %v439 = vld [vmem:[%s1 + $0x2f0] sm:$0xf]
      %v440 = vld [vmem:[%s1 + $0x2f4] sm:$0xff]
      %v441 = vld [vmem:[%s1 + $0x2fc] sm:$0xf]
      %v442 = vld [vmem:[%s1 + $0x300] sm:$0xff]
      %v443 = vld [vmem:[%s1 + $0x308] sm:$0xf]
      %v444 = vld [vmem:[%s1 + $0x30c] sm:$0xff]
      %v445 = vld [vmem:[%s1 + $0x314] sm:$0xf]
      %v446 = vld [vmem:[%s1 + $0x318] sm:$0xff]
      %v447 = vld [vmem:[%s1 + $0x320] sm:$0xf]
      %v448 = vld [vmem:[%s1 + $0x324] sm:$0xff]
      %v449 = vld [vmem:[%s1 + $0x32c] sm:$0xf]
      %v450 = vld [vmem:[%s1 + $0x330] sm:$0xff]
      %v451 = vld [vmem:[%s1 + $0x338] sm:$0xf]
      %v452 = vld [vmem:[%s1 + $0x33c] sm:$0xff]
      %v453 = vld [vmem:[%s1 + $0x344] sm:$0xf]
      %v454 = vld [vmem:[%s1 + $0x348] sm:$0xff]
      %v455 = vld [vmem:[%s1 + $0x350] sm:$0xf]
      %v456 = vld [vmem:[%s1 + $0x354] sm:$0xff]
      %v457 = vld [vmem:[%s1 + $0x35c] sm:$0xf]
      %v458 = vld [vmem:[%s1 + $0x360] sm:$0xff]
      %v459 = vld [vmem:[%s1 + $0x368] sm:$0xf]
      %v460 = vld [vmem:[%s1 + $0x36c] sm:$0xff]
      %v461 = vld [vmem:[%s1 + $0x374] sm:$0xf]
      %v462 = vld [vmem:[%s1 + $0x378] sm:$0xff]
      %v463 = vld [vmem:[%s1 + $0x380] sm:$0xf]
      %v464 = vld [vmem:[%s1 + $0x384] sm:$0xff]
      %v465 = vld [vmem:[%s1 + $0x38c] sm:$0xf]
      %v466 = vld [vmem:[%s1 + $0x390] sm:$0xff]
      %v467 = vld [vmem:[%s1 + $0x398] sm:$0xf]
      %v468 = vld [vmem:[%s1 + $0x39c] sm:$0xff]
      %v469 = vld [vmem:[%s1 + $0x3a4] sm:$0xf]
      %v470 = vld [vmem:[%s1 + $0x3a8] sm:$0xff]
      %v471 = vld [vmem:[%s1 + $0x3b0] sm:$0xf]
      %v472 = vld [vmem:[%s1 + $0x3b4] sm:$0xff]
      %v473 = vld [vmem:[%s1 + $0x3bc] sm:$0xf]
      %v474 = vld [vmem:[%s1 + $0x3c0] sm:$0xff]
      %v475 = vld [vmem:[%s1 + $0x3c8] sm:$0xf]
      %v476 = vld [vmem:[%s1 + $0x3cc] sm:$0xff]
      %v477 = vld [vmem:[%s1 + $0x3d4] sm:$0xf]
      %v478 = vld [vmem:[%s1 + $0x3d8] sm:$0xff]
      %v479 = vld [vmem:[%s1 + $0x3e0] sm:$0xf]
      %v480 = vld [vmem:[%s1 + $0x3e4] sm:$0xff]
      %v481 = vld [vmem:[%s1 + $0x3ec] sm:$0xf]
      %v482 = vld [vmem:[%s1 + $0x3f0] sm:$0xff]
      %v483 = vld [vmem:[%s1 + $0x3f8] sm:$0xf]
      %v484 = vld [vmem:[%s1 + $0x3fc] sm:$0xff]
      %v485 = vld [vmem:[%s1 + $0x404] sm:$0xf]
      %v486 = vld [vmem:[%s1 + $0x408] sm:$0xff]
      %v487 = vld [vmem:[%s1 + $0x410] sm:$0xf]
      %v488 = vld [vmem:[%s1 + $0x414] sm:$0xff]
      %v489 = vld [vmem:[%s1 + $0x41c] sm:$0xf]
      %v490 = vld [vmem:[%s1 + $0x420] sm:$0xff]
      %v491 = vld [vmem:[%s1 + $0x428] sm:$0xf]
      %v492 = vld [vmem:[%s1 + $0x42c] sm:$0xff]
      %v493 = vld [vmem:[%s1 + $0x434] sm:$0xf]
      %v494 = vld [vmem:[%s1 + $0x438] sm:$0xff]
      %v495 = vld [vmem:[%s1 + $0x440] sm:$0xf]
      %v496 = vld [vmem:[%s1 + $0x444] sm:$0xff]
      %v497 = vld [vmem:[%s1 + $0x44c] sm:$0xf]
      %v498 = vld [vmem:[%s1 + $0x450] sm:$0xff]
      %v499 = vld [vmem:[%s1 + $0x458] sm:$0xf]
      %v500 = vld [vmem:[%s1 + $0x45c] sm:$0xff]
      %v501 = vld [vmem:[%s1 + $0x464] sm:$0xf]
      %v502 = vld [vmem:[%s1 + $0x468] sm:$0xff]
      %v503 = vld [vmem:[%s1 + $0x470] sm:$0xf]
      %v504 = vld [vmem:[%s1 + $0x474] sm:$0xff]
      %v505 = vld [vmem:[%s1 + $0x47c] sm:$0xf]
      %v506 = vld [vmem:[%s1 + $0x480] sm:$0xff]
      %v507 = vld [vmem:[%s1 + $0x488] sm:$0xf]
      %v508 = vld [vmem:[%s1 + $0x48c] sm:$0xff]
      %v509 = vld [vmem:[%s1 + $0x494] sm:$0xf]
      %v510 = vld [vmem:[%s1 + $0x498] sm:$0xff]
      %v511 = vld [vmem:[%s1 + $0x4a0] sm:$0xf]
      %v512 = vld [vmem:[%s1 + $0x4a4] sm:$0xff]
      %v513 = vld [vmem:[%s1 + $0x4ac] sm:$0xf]
      %v514 = vld [vmem:[%s1 + $0x4b0] sm:$0xff]
      %v515 = vld [vmem:[%s1 + $0x4b8] sm:$0xf]
      %v516 = vld [vmem:[%s1 + $0x4bc] sm:$0xff]
      %v517 = vld [vmem:[%s1 + $0x4c4] sm:$0xf]
      %v518 = vld [vmem:[%s1 + $0x4c8] sm:$0xff]
      %v519 = vld [vmem:[%s1 + $0x4d0] sm:$0xf]
      %v520 = vld [vmem:[%s1 + $0x4d4] sm:$0xff]
      %v521 = vld [vmem:[%s1 + $0x4dc] sm:$0xf]
      %v522 = vld [vmem:[%s1 + $0x4e0] sm:$0xff]
      %v523 = vld [vmem:[%s1 + $0x4e8] sm:$0xf]
      %v524 = vld [vmem:[%s1 + $0x4ec] sm:$0xff]
      %v525 = vld [vmem:[%s1 + $0x4f4] sm:$0xf]
      %v526 = vld [vmem:[%s1 + $0x4f8] sm:$0xff]
      %v527 = vld [vmem:[%s1 + $0x500] sm:$0xf]
      %v528 = vld [vmem:[%s1 + $0x504] sm:$0xff]
      %v529 = vld [vmem:[%s1 + $0x50c] sm:$0xf]
      %v530 = vld [vmem:[%s1 + $0x510] sm:$0xff]
      %v531 = vld [vmem:[%s1 + $0x518] sm:$0xf]
      %v532 = vld [vmem:[%s1 + $0x51c] sm:$0xff]
      %v533 = vld [vmem:[%s1 + $0x524] sm:$0xf]
      %v534 = vld [vmem:[%s1 + $0x528] sm:$0xff]
      %v535 = vld [vmem:[%s1 + $0x530] sm:$0xf]
      %v536 = vld [vmem:[%s1 + $0x534] sm:$0xff]
      %v537 = vld [vmem:[%s1 + $0x53c] sm:$0xf]
      %v538 = vld [vmem:[%s1 + $0x540] sm:$0xff]
      %v539 = vld [vmem:[%s1 + $0x548] sm:$0xf]
      %v540 = vld [vmem:[%s1 + $0x54c] sm:$0xff]
      %v541 = vld [vmem:[%s1 + $0x554] sm:$0xf]
      %v542 = vld [vmem:[%s1 + $0x558] sm:$0xff]
      %v543 = vld [vmem:[%s1 + $0x560] sm:$0xf]
      %v544 = vld [vmem:[%s1 + $0x564] sm:$0xff]
      %v545 = vld [vmem:[%s1 + $0x56c] sm:$0xf]
      %v546 = vld [vmem:[%s1 + $0x570] sm:$0xff]
      %v547 = vld [vmem:[%s1 + $0x578] sm:$0xf]
      %v548 = vld [vmem:[%s1 + $0x57c] sm:$0xff]
      %v549 = vld [vmem:[%s1 + $0x584] sm:$0xf]
      %v550 = vld [vmem:[%s1 + $0x588] sm:$0xff]
      %v551 = vld [vmem:[%s1 + $0x590] sm:$0xf]
      %v552 = vld [vmem:[%s1 + $0x594] sm:$0xff]
      %v553 = vld [vmem:[%s1 + $0x59c] sm:$0xf]
      %v554 = vld [vmem:[%s1 + $0x5a0] sm:$0xff]
      %v555 = vld [vmem:[%s1 + $0x5a8] sm:$0xf]
      %v556 = vld [vmem:[%s1 + $0x5ac] sm:$0xff]
      %v557 = vld [vmem:[%s1 + $0x5b4] sm:$0xf]
      %v558 = vld [vmem:[%s1 + $0x5b8] sm:$0xff]
      %v559 = vld [vmem:[%s1 + $0x5c0] sm:$0xf]
      %v560 = vld [vmem:[%s1 + $0x5c4] sm:$0xff]
      %v561 = vld [vmem:[%s1 + $0x5cc] sm:$0xf]
      %v562 = vld [vmem:[%s1 + $0x5d0] sm:$0xff]
      %v563 = vld [vmem:[%s1 + $0x5d8] sm:$0xf]
      %v564 = vld [vmem:[%s1 + $0x5dc] sm:$0xff]
      %v565 = vld [vmem:[%s1 + $0x5e4] sm:$0xf]
      %v566 = vld [vmem:[%s1 + $0x5e8] sm:$0xff]
      %v567 = vld [vmem:[%s1 + $0x5f0] sm:$0xf]
      %v568 = vld [vmem:[%s1 + $0x5f4] sm:$0xff]
      %v569 = vld [vmem:[%s1 + $0x5fc] sm:$0xf]
      %v570 = vld [vmem:[%s2] sm:$0xff]
      %v571 = vld [vmem:[%s2 + $0x8] sm:$0xff]
      %v572 = vld [vmem:[%s2 + $0x10] sm:$0xff]
      %v573 = vld [vmem:[%s2 + $0x18] sm:$0xff]
      %v574 = vld [vmem:[%s2 + $0x20] sm:$0xff]
      %v575 = vld [vmem:[%s2 + $0x28] sm:$0xff]
      %v576 = vld [vmem:[%s2 + $0x30] sm:$0xff]
      %v577 = vld [vmem:[%s2 + $0x38] sm:$0xff]
      %v578 = vld [vmem:[%s2 + $0x40] sm:$0xff]
      %v579 = vld [vmem:[%s2 + $0x48] sm:$0xff]
      %v580 = vld [vmem:[%s2 + $0x50] sm:$0xff]
      %v581 = vld [vmem:[%s2 + $0x58] sm:$0xff]
      %v582 = vld [vmem:[%s2 + $0x60] sm:$0xff]
      %v583 = vld [vmem:[%s2 + $0x68] sm:$0xff]
      %v584 = vld [vmem:[%s2 + $0x70] sm:$0xff]
      %v585 = vld [vmem:[%s2 + $0x78] sm:$0xff]
      %v586 = vld [vmem:[%s2 + $0x80] sm:$0xff]
      %v587 = vld [vmem:[%s2 + $0x88] sm:$0xff]
      %v588 = vld [vmem:[%s2 + $0x90] sm:$0xff]
      %v589 = vld [vmem:[%s2 + $0x98] sm:$0xff]
      %v590 = vld [vmem:[%s2 + $0xa0] sm:$0xff]
      %v591 = vld [vmem:[%s2 + $0xa8] sm:$0xff]
      %v592 = vld [vmem:[%s2 + $0xb0] sm:$0xff]
      %v593 = vld [vmem:[%s2 + $0xb8] sm:$0xff]
      %v594 = vld [vmem:[%s2 + $0xc0] sm:$0xff]
      %v595 = vld [vmem:[%s2 + $0xc8] sm:$0xff]
      %v596 = vld [vmem:[%s2 + $0xd0] sm:$0xff]
      %v597 = vld [vmem:[%s2 + $0xd8] sm:$0xff]
      %v598 = vld [vmem:[%s2 + $0xe0] sm:$0xff]
      %v599 = vld [vmem:[%s2 + $0xe8] sm:$0xff]
      %v600 = vld [vmem:[%s2 + $0xf0] sm:$0xff]
      %v601 = vld [vmem:[%s2 + $0xf8] sm:$0xff]
      %v602 = vld [vmem:[%s2 + $0x100] sm:$0xff]
      %v603 = vld [vmem:[%s2 + $0x108] sm:$0xff]
      %v604 = vld [vmem:[%s2 + $0x110] sm:$0xff]
      %v605 = vld [vmem:[%s2 + $0x118] sm:$0xff]
      %v606 = vld [vmem:[%s2 + $0x120] sm:$0xff]
      %v607 = vld [vmem:[%s2 + $0x128] sm:$0xff]
      %v608 = vld [vmem:[%s2 + $0x130] sm:$0xff]
      %v609 = vld [vmem:[%s2 + $0x138] sm:$0xff]
      %v610 = vld [vmem:[%s2 + $0x140] sm:$0xff]
      %v611 = vld [vmem:[%s2 + $0x148] sm:$0xff]
      %v612 = vld [vmem:[%s2 + $0x150] sm:$0xff]
      %v613 = vld [vmem:[%s2 + $0x158] sm:$0xff]
      %v614 = vld [vmem:[%s2 + $0x160] sm:$0xff]
      %v615 = vld [vmem:[%s2 + $0x168] sm:$0xff]
      %v616 = vld [vmem:[%s2 + $0x170] sm:$0xff]
      %v617 = vld [vmem:[%s2 + $0x178] sm:$0xff]
      %v618 = vld [vmem:[%s2 + $0x180] sm:$0xff]
      %v619 = vld [vmem:[%s2 + $0x188] sm:$0xff]
      %v620 = vld [vmem:[%s2 + $0x190] sm:$0xff]
      %v621 = vld [vmem:[%s2 + $0x198] sm:$0xff]
      %v622 = vld [vmem:[%s2 + $0x1a0] sm:$0xff]
      %v623 = vld [vmem:[%s2 + $0x1a8] sm:$0xff]
      %v624 = vld [vmem:[%s2 + $0x1b0] sm:$0xff]
      %v625 = vld [vmem:[%s2 + $0x1b8] sm:$0xff]
      %v626 = vld [vmem:[%s2 + $0x1c0] sm:$0xff]
      %v627 = vld [vmem:[%s2 + $0x1c8] sm:$0xff]
      %v628 = vld [vmem:[%s2 + $0x1d0] sm:$0xff]
      %v629 = vld [vmem:[%s2 + $0x1d8] sm:$0xff]
      %v630 = vld [vmem:[%s2 + $0x1e0] sm:$0xff]
      %v631 = vld [vmem:[%s2 + $0x1e8] sm:$0xff]
      %v632 = vld [vmem:[%s2 + $0x1f0] sm:$0xff]
      %v633 = vld [vmem:[%s2 + $0x1f8] sm:$0xff]
      %v634 = vld [vmem:[%s2 + $0x200] sm:$0xff]
      %v635 = vld [vmem:[%s2 + $0x208] sm:$0xff]
      %v636 = vld [vmem:[%s2 + $0x210] sm:$0xff]
      %v637 = vld [vmem:[%s2 + $0x218] sm:$0xff]
      %v638 = vld [vmem:[%s2 + $0x220] sm:$0xff]
      %v639 = vld [vmem:[%s2 + $0x228] sm:$0xff]
      %v640 = vld [vmem:[%s2 + $0x230] sm:$0xff]
      %v641 = vld [vmem:[%s2 + $0x238] sm:$0xff]
      %v642 = vld [vmem:[%s2 + $0x240] sm:$0xff]
      %v643 = vld [vmem:[%s2 + $0x248] sm:$0xff]
      %v644 = vld [vmem:[%s2 + $0x250] sm:$0xff]
      %v645 = vld [vmem:[%s2 + $0x258] sm:$0xff]
      %v646 = vld [vmem:[%s2 + $0x260] sm:$0xff]
      %v647 = vld [vmem:[%s2 + $0x268] sm:$0xff]
      %v648 = vld [vmem:[%s2 + $0x270] sm:$0xff]
      %v649 = vld [vmem:[%s2 + $0x278] sm:$0xff]
      %v650 = vld [vmem:[%s2 + $0x280] sm:$0xff]
      %v651 = vld [vmem:[%s2 + $0x288] sm:$0xff]
      %v652 = vld [vmem:[%s2 + $0x290] sm:$0xff]
      %v653 = vld [vmem:[%s2 + $0x298] sm:$0xff]
      %v654 = vld [vmem:[%s2 + $0x2a0] sm:$0xff]
      %v655 = vld [vmem:[%s2 + $0x2a8] sm:$0xff]
      %v656 = vld [vmem:[%s2 + $0x2b0] sm:$0xff]
      %v657 = vld [vmem:[%s2 + $0x2b8] sm:$0xff]
      %v658 = vld [vmem:[%s2 + $0x2c0] sm:$0xff]
      %v659 = vld [vmem:[%s2 + $0x2c8] sm:$0xff]
      %v660 = vld [vmem:[%s2 + $0x2d0] sm:$0xff]
      %v661 = vld [vmem:[%s2 + $0x2d8] sm:$0xff]
      %v662 = vld [vmem:[%s2 + $0x2e0] sm:$0xff]
      %v663 = vld [vmem:[%s2 + $0x2e8] sm:$0xff]
      %v664 = vld [vmem:[%s2 + $0x2f0] sm:$0xff]
      %v665 = vld [vmem:[%s2 + $0x2f8] sm:$0xff]
      %v666 = vld [vmem:[%s2 + $0x300] sm:$0xff]
      %v667 = vld [vmem:[%s2 + $0x308] sm:$0xff]
      %v668 = vld [vmem:[%s2 + $0x310] sm:$0xff]
      %v669 = vld [vmem:[%s2 + $0x318] sm:$0xff]
      %v670 = vld [vmem:[%s2 + $0x320] sm:$0xff]
      %v671 = vld [vmem:[%s2 + $0x328] sm:$0xff]
      %v672 = vld [vmem:[%s2 + $0x330] sm:$0xff]
      %v673 = vld [vmem:[%s2 + $0x338] sm:$0xff]
      %v674 = vld [vmem:[%s2 + $0x340] sm:$0xff]
      %v675 = vld [vmem:[%s2 + $0x348] sm:$0xff]
      %v676 = vld [vmem:[%s2 + $0x350] sm:$0xff]
      %v677 = vld [vmem:[%s2 + $0x358] sm:$0xff]
      %v678 = vld [vmem:[%s2 + $0x360] sm:$0xff]
      %v679 = vld [vmem:[%s2 + $0x368] sm:$0xff]
      %v680 = vld [vmem:[%s2 + $0x370] sm:$0xff]
      %v681 = vld [vmem:[%s2 + $0x378] sm:$0xff]
      %v682 = vld [vmem:[%s2 + $0x380] sm:$0xff]
      %v683 = vld [vmem:[%s2 + $0x388] sm:$0xff]
      %v684 = vld [vmem:[%s2 + $0x390] sm:$0xff]
      %v685 = vld [vmem:[%s2 + $0x398] sm:$0xff]
      %v686 = vld [vmem:[%s2 + $0x3a0] sm:$0xff]
      %v687 = vld [vmem:[%s2 + $0x3a8] sm:$0xff]
      %v688 = vld [vmem:[%s2 + $0x3b0] sm:$0xff]
      %v689 = vld [vmem:[%s2 + $0x3b8] sm:$0xff]
      %v690 = vld [vmem:[%s2 + $0x3c0] sm:$0xff]
      %v691 = vld [vmem:[%s2 + $0x3c8] sm:$0xff]
      %v692 = vld [vmem:[%s2 + $0x3d0] sm:$0xff]
      %v693 = vld [vmem:[%s2 + $0x3d8] sm:$0xff]
      %v694 = vld [vmem:[%s2 + $0x3e0] sm:$0xff]
      %v695 = vld [vmem:[%s2 + $0x3e8] sm:$0xff]
      %v696 = vld [vmem:[%s2 + $0x3f0] sm:$0xff]
      %v697 = vld [vmem:[%s2 + $0x3f8] sm:$0xff]
      %699 = vset.pattern.permute.xlu0 0
      %700 = vperm.xlu0 %699, %v570
      %v701 = vpop.permute.xlu0 %700
      %704 = vset.pattern.permute.xlu0 0
      %705 = vperm.xlu0 %704, %v571
      %v706 = vpop.permute.xlu0 %705
      %709 = vset.pattern.permute.xlu0 0
      %710 = vperm.xlu0 %709, %v572
      %v711 = vpop.permute.xlu0 %710
      %714 = vset.pattern.permute.xlu0 0
      %715 = vperm.xlu0 %714, %v573
      %v716 = vpop.permute.xlu0 %715
      %719 = vset.pattern.permute.xlu0 0
      %720 = vperm.xlu0 %719, %v574
      %v721 = vpop.permute.xlu0 %720
      %724 = vset.pattern.permute.xlu0 0
      %725 = vperm.xlu0 %724, %v575
      %v726 = vpop.permute.xlu0 %725
      %729 = vset.pattern.permute.xlu0 0
      %730 = vperm.xlu0 %729, %v576
      %v731 = vpop.permute.xlu0 %730
      %734 = vset.pattern.permute.xlu0 0
      %735 = vperm.xlu0 %734, %v577
      %v736 = vpop.permute.xlu0 %735
      %739 = vset.pattern.permute.xlu0 0
      %740 = vperm.xlu0 %739, %v578
      %v741 = vpop.permute.xlu0 %740
      %744 = vset.pattern.permute.xlu0 0
      %745 = vperm.xlu0 %744, %v579
      %v746 = vpop.permute.xlu0 %745
      %749 = vset.pattern.permute.xlu0 0
      %750 = vperm.xlu0 %749, %v580
      %v751 = vpop.permute.xlu0 %750
      %754 = vset.pattern.permute.xlu0 0
      %755 = vperm.xlu0 %754, %v581
      %v756 = vpop.permute.xlu0 %755
      %759 = vset.pattern.permute.xlu0 0
      %760 = vperm.xlu0 %759, %v582
      %v761 = vpop.permute.xlu0 %760
      %764 = vset.pattern.permute.xlu0 0
      %765 = vperm.xlu0 %764, %v583
      %v766 = vpop.permute.xlu0 %765
      %769 = vset.pattern.permute.xlu0 0
      %770 = vperm.xlu0 %769, %v584
      %v771 = vpop.permute.xlu0 %770
      %774 = vset.pattern.permute.xlu0 0
      %775 = vperm.xlu0 %774, %v585
      %v776 = vpop.permute.xlu0 %775
      %779 = vset.pattern.permute.xlu0 0
      %780 = vperm.xlu0 %779, %v586
      %v781 = vpop.permute.xlu0 %780
      %784 = vset.pattern.permute.xlu0 0
      %785 = vperm.xlu0 %784, %v587
      %v786 = vpop.permute.xlu0 %785
      %789 = vset.pattern.permute.xlu0 0
      %790 = vperm.xlu0 %789, %v588
      %v791 = vpop.permute.xlu0 %790
      %794 = vset.pattern.permute.xlu0 0
      %795 = vperm.xlu0 %794, %v589
      %v796 = vpop.permute.xlu0 %795
      %799 = vset.pattern.permute.xlu0 0
      %800 = vperm.xlu0 %799, %v590
      %v801 = vpop.permute.xlu0 %800
      %804 = vset.pattern.permute.xlu0 0
      %805 = vperm.xlu0 %804, %v591
      %v806 = vpop.permute.xlu0 %805
      %809 = vset.pattern.permute.xlu0 0
      %810 = vperm.xlu0 %809, %v592
      %v811 = vpop.permute.xlu0 %810
      %814 = vset.pattern.permute.xlu0 0
      %815 = vperm.xlu0 %814, %v593
      %v816 = vpop.permute.xlu0 %815
      %819 = vset.pattern.permute.xlu0 0
      %820 = vperm.xlu0 %819, %v594
      %v821 = vpop.permute.xlu0 %820
      %824 = vset.pattern.permute.xlu0 0
      %825 = vperm.xlu0 %824, %v595
      %v826 = vpop.permute.xlu0 %825
      %829 = vset.pattern.permute.xlu0 0
      %830 = vperm.xlu0 %829, %v596
      %v831 = vpop.permute.xlu0 %830
      %834 = vset.pattern.permute.xlu0 0
      %835 = vperm.xlu0 %834, %v597
      %v836 = vpop.permute.xlu0 %835
      %839 = vset.pattern.permute.xlu0 0
      %840 = vperm.xlu0 %839, %v598
      %v841 = vpop.permute.xlu0 %840
      %844 = vset.pattern.permute.xlu0 0
      %845 = vperm.xlu0 %844, %v599
      %v846 = vpop.permute.xlu0 %845
      %849 = vset.pattern.permute.xlu0 0
      %850 = vperm.xlu0 %849, %v600
      %v851 = vpop.permute.xlu0 %850
      %854 = vset.pattern.permute.xlu0 0
      %855 = vperm.xlu0 %854, %v601
      %v856 = vpop.permute.xlu0 %855
      %859 = vset.pattern.permute.xlu0 0
      %860 = vperm.xlu0 %859, %v602
      %v861 = vpop.permute.xlu0 %860
      %864 = vset.pattern.permute.xlu0 0
      %865 = vperm.xlu0 %864, %v603
      %v866 = vpop.permute.xlu0 %865
      %869 = vset.pattern.permute.xlu0 0
      %870 = vperm.xlu0 %869, %v604
      %v871 = vpop.permute.xlu0 %870
      %874 = vset.pattern.permute.xlu0 0
      %875 = vperm.xlu0 %874, %v605
      %v876 = vpop.permute.xlu0 %875
      %879 = vset.pattern.permute.xlu0 0
      %880 = vperm.xlu0 %879, %v606
      %v881 = vpop.permute.xlu0 %880
      %884 = vset.pattern.permute.xlu0 0
      %885 = vperm.xlu0 %884, %v607
      %v886 = vpop.permute.xlu0 %885
      %889 = vset.pattern.permute.xlu0 0
      %890 = vperm.xlu0 %889, %v608
      %v891 = vpop.permute.xlu0 %890
      %894 = vset.pattern.permute.xlu0 0
      %895 = vperm.xlu0 %894, %v609
      %v896 = vpop.permute.xlu0 %895
      %899 = vset.pattern.permute.xlu0 0
      %900 = vperm.xlu0 %899, %v610
      %v901 = vpop.permute.xlu0 %900
      %904 = vset.pattern.permute.xlu0 0
      %905 = vperm.xlu0 %904, %v611
      %v906 = vpop.permute.xlu0 %905
      %909 = vset.pattern.permute.xlu0 0
      %910 = vperm.xlu0 %909, %v612
      %v911 = vpop.permute.xlu0 %910
      %914 = vset.pattern.permute.xlu0 0
      %915 = vperm.xlu0 %914, %v613
      %v916 = vpop.permute.xlu0 %915
      %919 = vset.pattern.permute.xlu0 0
      %920 = vperm.xlu0 %919, %v614
      %v921 = vpop.permute.xlu0 %920
      %924 = vset.pattern.permute.xlu0 0
      %925 = vperm.xlu0 %924, %v615
      %v926 = vpop.permute.xlu0 %925
      %929 = vset.pattern.permute.xlu0 0
      %930 = vperm.xlu0 %929, %v616
      %v931 = vpop.permute.xlu0 %930
      %934 = vset.pattern.permute.xlu0 0
      %935 = vperm.xlu0 %934, %v617
      %v936 = vpop.permute.xlu0 %935
      %939 = vset.pattern.permute.xlu0 0
      %940 = vperm.xlu0 %939, %v618
      %v941 = vpop.permute.xlu0 %940
      %944 = vset.pattern.permute.xlu0 0
      %945 = vperm.xlu0 %944, %v619
      %v946 = vpop.permute.xlu0 %945
      %949 = vset.pattern.permute.xlu0 0
      %950 = vperm.xlu0 %949, %v620
      %v951 = vpop.permute.xlu0 %950
      %954 = vset.pattern.permute.xlu0 0
      %955 = vperm.xlu0 %954, %v621
      %v956 = vpop.permute.xlu0 %955
      %959 = vset.pattern.permute.xlu0 0
      %960 = vperm.xlu0 %959, %v622
      %v961 = vpop.permute.xlu0 %960
      %964 = vset.pattern.permute.xlu0 0
      %965 = vperm.xlu0 %964, %v623
      %v966 = vpop.permute.xlu0 %965
      %969 = vset.pattern.permute.xlu0 0
      %970 = vperm.xlu0 %969, %v624
      %v971 = vpop.permute.xlu0 %970
      %974 = vset.pattern.permute.xlu0 0
      %975 = vperm.xlu0 %974, %v625
      %v976 = vpop.permute.xlu0 %975
      %979 = vset.pattern.permute.xlu0 0
      %980 = vperm.xlu0 %979, %v626
      %v981 = vpop.permute.xlu0 %980
      %984 = vset.pattern.permute.xlu0 0
      %985 = vperm.xlu0 %984, %v627
      %v986 = vpop.permute.xlu0 %985
      %989 = vset.pattern.permute.xlu0 0
      %990 = vperm.xlu0 %989, %v628
      %v991 = vpop.permute.xlu0 %990
      %994 = vset.pattern.permute.xlu0 0
      %995 = vperm.xlu0 %994, %v629
      %v996 = vpop.permute.xlu0 %995
      %999 = vset.pattern.permute.xlu0 0
      %1000 = vperm.xlu0 %999, %v630
      %v1001 = vpop.permute.xlu0 %1000
      %1004 = vset.pattern.permute.xlu0 0
      %1005 = vperm.xlu0 %1004, %v631
      %v1006 = vpop.permute.xlu0 %1005
      %1009 = vset.pattern.permute.xlu0 0
      %1010 = vperm.xlu0 %1009, %v632
      %v1011 = vpop.permute.xlu0 %1010
      %1014 = vset.pattern.permute.xlu0 0
      %1015 = vperm.xlu0 %1014, %v633
      %v1016 = vpop.permute.xlu0 %1015
      %1019 = vset.pattern.permute.xlu0 0
      %1020 = vperm.xlu0 %1019, %v634
      %v1021 = vpop.permute.xlu0 %1020
      %1024 = vset.pattern.permute.xlu0 0
      %1025 = vperm.xlu0 %1024, %v635
      %v1026 = vpop.permute.xlu0 %1025
      %1029 = vset.pattern.permute.xlu0 0
      %1030 = vperm.xlu0 %1029, %v636
      %v1031 = vpop.permute.xlu0 %1030
      %1034 = vset.pattern.permute.xlu0 0
      %1035 = vperm.xlu0 %1034, %v637
      %v1036 = vpop.permute.xlu0 %1035
      %1039 = vset.pattern.permute.xlu0 0
      %1040 = vperm.xlu0 %1039, %v638
      %v1041 = vpop.permute.xlu0 %1040
      %1044 = vset.pattern.permute.xlu0 0
      %1045 = vperm.xlu0 %1044, %v639
      %v1046 = vpop.permute.xlu0 %1045
      %1049 = vset.pattern.permute.xlu0 0
      %1050 = vperm.xlu0 %1049, %v640
      %v1051 = vpop.permute.xlu0 %1050
      %1054 = vset.pattern.permute.xlu0 0
      %1055 = vperm.xlu0 %1054, %v641
      %v1056 = vpop.permute.xlu0 %1055
      %1059 = vset.pattern.permute.xlu0 0
      %1060 = vperm.xlu0 %1059, %v642
      %v1061 = vpop.permute.xlu0 %1060
      %1064 = vset.pattern.permute.xlu0 0
      %1065 = vperm.xlu0 %1064, %v643
      %v1066 = vpop.permute.xlu0 %1065
      %1069 = vset.pattern.permute.xlu0 0
      %1070 = vperm.xlu0 %1069, %v644
      %v1071 = vpop.permute.xlu0 %1070
      %1074 = vset.pattern.permute.xlu0 0
      %1075 = vperm.xlu0 %1074, %v645
      %v1076 = vpop.permute.xlu0 %1075
      %1079 = vset.pattern.permute.xlu0 0
      %1080 = vperm.xlu0 %1079, %v646
      %v1081 = vpop.permute.xlu0 %1080
      %1084 = vset.pattern.permute.xlu0 0
      %1085 = vperm.xlu0 %1084, %v647
      %v1086 = vpop.permute.xlu0 %1085
      %1089 = vset.pattern.permute.xlu0 0
      %1090 = vperm.xlu0 %1089, %v648
      %v1091 = vpop.permute.xlu0 %1090
      %1094 = vset.pattern.permute.xlu0 0
      %1095 = vperm.xlu0 %1094, %v649
      %v1096 = vpop.permute.xlu0 %1095
      %1099 = vset.pattern.permute.xlu0 0
      %1100 = vperm.xlu0 %1099, %v650
      %v1101 = vpop.permute.xlu0 %1100
      %1104 = vset.pattern.permute.xlu0 0
      %1105 = vperm.xlu0 %1104, %v651
      %v1106 = vpop.permute.xlu0 %1105
      %1109 = vset.pattern.permute.xlu0 0
      %1110 = vperm.xlu0 %1109, %v652
      %v1111 = vpop.permute.xlu0 %1110
      %1114 = vset.pattern.permute.xlu0 0
      %1115 = vperm.xlu0 %1114, %v653
      %v1116 = vpop.permute.xlu0 %1115
      %1119 = vset.pattern.permute.xlu0 0
      %1120 = vperm.xlu0 %1119, %v654
      %v1121 = vpop.permute.xlu0 %1120
      %1124 = vset.pattern.permute.xlu0 0
      %1125 = vperm.xlu0 %1124, %v655
      %v1126 = vpop.permute.xlu0 %1125
      %1129 = vset.pattern.permute.xlu0 0
      %1130 = vperm.xlu0 %1129, %v656
      %v1131 = vpop.permute.xlu0 %1130
      %1134 = vset.pattern.permute.xlu0 0
      %1135 = vperm.xlu0 %1134, %v657
      %v1136 = vpop.permute.xlu0 %1135
      %1139 = vset.pattern.permute.xlu0 0
      %1140 = vperm.xlu0 %1139, %v658
      %v1141 = vpop.permute.xlu0 %1140
      %1144 = vset.pattern.permute.xlu0 0
      %1145 = vperm.xlu0 %1144, %v659
      %v1146 = vpop.permute.xlu0 %1145
      %1149 = vset.pattern.permute.xlu0 0
      %1150 = vperm.xlu0 %1149, %v660
      %v1151 = vpop.permute.xlu0 %1150
      %1154 = vset.pattern.permute.xlu0 0
      %1155 = vperm.xlu0 %1154, %v661
      %v1156 = vpop.permute.xlu0 %1155
      %1159 = vset.pattern.permute.xlu0 0
      %1160 = vperm.xlu0 %1159, %v662
      %v1161 = vpop.permute.xlu0 %1160
      %1164 = vset.pattern.permute.xlu0 0
      %1165 = vperm.xlu0 %1164, %v663
      %v1166 = vpop.permute.xlu0 %1165
      %1169 = vset.pattern.permute.xlu0 0
      %1170 = vperm.xlu0 %1169, %v664
      %v1171 = vpop.permute.xlu0 %1170
      %1174 = vset.pattern.permute.xlu0 0
      %1175 = vperm.xlu0 %1174, %v665
      %v1176 = vpop.permute.xlu0 %1175
      %1179 = vset.pattern.permute.xlu0 0
      %1180 = vperm.xlu0 %1179, %v666
      %v1181 = vpop.permute.xlu0 %1180
      %1184 = vset.pattern.permute.xlu0 0
      %1185 = vperm.xlu0 %1184, %v667
      %v1186 = vpop.permute.xlu0 %1185
      %1189 = vset.pattern.permute.xlu0 0
      %1190 = vperm.xlu0 %1189, %v668
      %v1191 = vpop.permute.xlu0 %1190
      %1194 = vset.pattern.permute.xlu0 0
      %1195 = vperm.xlu0 %1194, %v669
      %v1196 = vpop.permute.xlu0 %1195
      %1199 = vset.pattern.permute.xlu0 0
      %1200 = vperm.xlu0 %1199, %v670
      %v1201 = vpop.permute.xlu0 %1200
      %1204 = vset.pattern.permute.xlu0 0
      %1205 = vperm.xlu0 %1204, %v671
      %v1206 = vpop.permute.xlu0 %1205
      %1209 = vset.pattern.permute.xlu0 0
      %1210 = vperm.xlu0 %1209, %v672
      %v1211 = vpop.permute.xlu0 %1210
      %1214 = vset.pattern.permute.xlu0 0
      %1215 = vperm.xlu0 %1214, %v673
      %v1216 = vpop.permute.xlu0 %1215
      %1219 = vset.pattern.permute.xlu0 0
      %1220 = vperm.xlu0 %1219, %v674
      %v1221 = vpop.permute.xlu0 %1220
      %1224 = vset.pattern.permute.xlu0 0
      %1225 = vperm.xlu0 %1224, %v675
      %v1226 = vpop.permute.xlu0 %1225
      %1229 = vset.pattern.permute.xlu0 0
      %1230 = vperm.xlu0 %1229, %v676
      %v1231 = vpop.permute.xlu0 %1230
      %1234 = vset.pattern.permute.xlu0 0
      %1235 = vperm.xlu0 %1234, %v677
      %v1236 = vpop.permute.xlu0 %1235
      %1239 = vset.pattern.permute.xlu0 0
      %1240 = vperm.xlu0 %1239, %v678
      %v1241 = vpop.permute.xlu0 %1240
      %1244 = vset.pattern.permute.xlu0 0
      %1245 = vperm.xlu0 %1244, %v679
      %v1246 = vpop.permute.xlu0 %1245
      %1249 = vset.pattern.permute.xlu0 0
      %1250 = vperm.xlu0 %1249, %v680
      %v1251 = vpop.permute.xlu0 %1250
      %1254 = vset.pattern.permute.xlu0 0
      %1255 = vperm.xlu0 %1254, %v681
      %v1256 = vpop.permute.xlu0 %1255
      %1259 = vset.pattern.permute.xlu0 0
      %1260 = vperm.xlu0 %1259, %v682
      %v1261 = vpop.permute.xlu0 %1260
      %1264 = vset.pattern.permute.xlu0 0
      %1265 = vperm.xlu0 %1264, %v683
      %v1266 = vpop.permute.xlu0 %1265
      %1269 = vset.pattern.permute.xlu0 0
      %1270 = vperm.xlu0 %1269, %v684
      %v1271 = vpop.permute.xlu0 %1270
      %1274 = vset.pattern.permute.xlu0 0
      %1275 = vperm.xlu0 %1274, %v685
      %v1276 = vpop.permute.xlu0 %1275
      %1279 = vset.pattern.permute.xlu0 0
      %1280 = vperm.xlu0 %1279, %v686
      %v1281 = vpop.permute.xlu0 %1280
      %1284 = vset.pattern.permute.xlu0 0
      %1285 = vperm.xlu0 %1284, %v687
      %v1286 = vpop.permute.xlu0 %1285
      %1289 = vset.pattern.permute.xlu0 0
      %1290 = vperm.xlu0 %1289, %v688
      %v1291 = vpop.permute.xlu0 %1290
      %1294 = vset.pattern.permute.xlu0 0
      %1295 = vperm.xlu0 %1294, %v689
      %v1296 = vpop.permute.xlu0 %1295
      %1299 = vset.pattern.permute.xlu0 0
      %1300 = vperm.xlu0 %1299, %v690
      %v1301 = vpop.permute.xlu0 %1300
      %1304 = vset.pattern.permute.xlu0 0
      %1305 = vperm.xlu0 %1304, %v691
      %v1306 = vpop.permute.xlu0 %1305
      %1309 = vset.pattern.permute.xlu0 0
      %1310 = vperm.xlu0 %1309, %v692
      %v1311 = vpop.permute.xlu0 %1310
      %1314 = vset.pattern.permute.xlu0 0
      %1315 = vperm.xlu0 %1314, %v693
      %v1316 = vpop.permute.xlu0 %1315
      %1319 = vset.pattern.permute.xlu0 0
      %1320 = vperm.xlu0 %1319, %v694
      %v1321 = vpop.permute.xlu0 %1320
      %1324 = vset.pattern.permute.xlu0 0
      %1325 = vperm.xlu0 %1324, %v695
      %v1326 = vpop.permute.xlu0 %1325
      %1329 = vset.pattern.permute.xlu0 0
      %1330 = vperm.xlu0 %1329, %v696
      %v1331 = vpop.permute.xlu0 %1330
      %1334 = vset.pattern.permute.xlu0 0
      %1335 = vperm.xlu0 %1334, %v697
      %v1336 = vpop.permute.xlu0 %1335
      %v1594 = vunpack.c.l.b16 %v314
      %v1595 = vunpack.c.h.b16 %v314
      %v1596 = vunpack.c.l.b16 %v315
      %v1597 = vunpack.c.l.b16 %v316
      %v1598 = vunpack.c.h.b16 %v316
      %v1599 = vunpack.c.l.b16 %v317
      %v1600 = vunpack.c.l.b16 %v318
      %v1601 = vunpack.c.h.b16 %v318
      %v1602 = vunpack.c.l.b16 %v319
      %v1603 = vunpack.c.l.b16 %v320
      %v1604 = vunpack.c.h.b16 %v320
      %v1605 = vunpack.c.l.b16 %v321
      %v1606 = vunpack.c.l.b16 %v322
      %v1607 = vunpack.c.h.b16 %v322
      %v1608 = vunpack.c.l.b16 %v323
      %v1609 = vunpack.c.l.b16 %v324
      %v1610 = vunpack.c.h.b16 %v324
      %v1611 = vunpack.c.l.b16 %v325
      %v1612 = vunpack.c.l.b16 %v326
      %v1613 = vunpack.c.h.b16 %v326
      %v1614 = vunpack.c.l.b16 %v327
      %v1615 = vunpack.c.l.b16 %v328
      %v1616 = vunpack.c.h.b16 %v328
      %v1617 = vunpack.c.l.b16 %v329
      %v1618 = vunpack.c.l.b16 %v330
      %v1619 = vunpack.c.h.b16 %v330
      %v1620 = vunpack.c.l.b16 %v331
      %v1621 = vunpack.c.l.b16 %v332
      %v1622 = vunpack.c.h.b16 %v332
      %v1623 = vunpack.c.l.b16 %v333
      %v1624 = vunpack.c.l.b16 %v334
      %v1625 = vunpack.c.h.b16 %v334
      %v1626 = vunpack.c.l.b16 %v335
      %v1627 = vunpack.c.l.b16 %v336
      %v1628 = vunpack.c.h.b16 %v336
      %v1629 = vunpack.c.l.b16 %v337
      %v1630 = vunpack.c.l.b16 %v338
      %v1631 = vunpack.c.h.b16 %v338
      %v1632 = vunpack.c.l.b16 %v339
      %v1633 = vunpack.c.l.b16 %v340
      %v1634 = vunpack.c.h.b16 %v340
      %v1635 = vunpack.c.l.b16 %v341
      %v1636 = vunpack.c.l.b16 %v342
      %v1637 = vunpack.c.h.b16 %v342
      %v1638 = vunpack.c.l.b16 %v343
      %v1639 = vunpack.c.l.b16 %v344
      %v1640 = vunpack.c.h.b16 %v344
      %v1641 = vunpack.c.l.b16 %v345
      %v1642 = vunpack.c.l.b16 %v346
      %v1643 = vunpack.c.h.b16 %v346
      %v1644 = vunpack.c.l.b16 %v347
      %v1645 = vunpack.c.l.b16 %v348
      %v1646 = vunpack.c.h.b16 %v348
      %v1647 = vunpack.c.l.b16 %v349
      %v1648 = vunpack.c.l.b16 %v350
      %v1649 = vunpack.c.h.b16 %v350
      %v1650 = vunpack.c.l.b16 %v351
      %v1651 = vunpack.c.l.b16 %v352
      %v1652 = vunpack.c.h.b16 %v352
      %v1653 = vunpack.c.l.b16 %v353
      %v1654 = vunpack.c.l.b16 %v354
      %v1655 = vunpack.c.h.b16 %v354
      %v1656 = vunpack.c.l.b16 %v355
      %v1657 = vunpack.c.l.b16 %v356
      %v1658 = vunpack.c.h.b16 %v356
      %v1659 = vunpack.c.l.b16 %v357
      %v1660 = vunpack.c.l.b16 %v358
      %v1661 = vunpack.c.h.b16 %v358
      %v1662 = vunpack.c.l.b16 %v359
      %v1663 = vunpack.c.l.b16 %v360
      %v1664 = vunpack.c.h.b16 %v360
      %v1665 = vunpack.c.l.b16 %v361
      %v1666 = vunpack.c.l.b16 %v362
      %v1667 = vunpack.c.h.b16 %v362
      %v1668 = vunpack.c.l.b16 %v363
      %v1669 = vunpack.c.l.b16 %v364
      %v1670 = vunpack.c.h.b16 %v364
      %v1671 = vunpack.c.l.b16 %v365
      %v1672 = vunpack.c.l.b16 %v366
      %v1673 = vunpack.c.h.b16 %v366
      %v1674 = vunpack.c.l.b16 %v367
      %v1675 = vunpack.c.l.b16 %v368
      %v1676 = vunpack.c.h.b16 %v368
      %v1677 = vunpack.c.l.b16 %v369
      %v1678 = vunpack.c.l.b16 %v370
      %v1679 = vunpack.c.h.b16 %v370
      %v1680 = vunpack.c.l.b16 %v371
      %v1681 = vunpack.c.l.b16 %v372
      %v1682 = vunpack.c.h.b16 %v372
      %v1683 = vunpack.c.l.b16 %v373
      %v1684 = vunpack.c.l.b16 %v374
      %v1685 = vunpack.c.h.b16 %v374
      %v1686 = vunpack.c.l.b16 %v375
      %v1687 = vunpack.c.l.b16 %v376
      %v1688 = vunpack.c.h.b16 %v376
      %v1689 = vunpack.c.l.b16 %v377
      %v1690 = vunpack.c.l.b16 %v378
      %v1691 = vunpack.c.h.b16 %v378
      %v1692 = vunpack.c.l.b16 %v379
      %v1693 = vunpack.c.l.b16 %v380
      %v1694 = vunpack.c.h.b16 %v380
      %v1695 = vunpack.c.l.b16 %v381
      %v1696 = vunpack.c.l.b16 %v382
      %v1697 = vunpack.c.h.b16 %v382
      %v1698 = vunpack.c.l.b16 %v383
      %v1699 = vunpack.c.l.b16 %v384
      %v1700 = vunpack.c.h.b16 %v384
      %v1701 = vunpack.c.l.b16 %v385
      %v1702 = vunpack.c.l.b16 %v386
      %v1703 = vunpack.c.h.b16 %v386
      %v1704 = vunpack.c.l.b16 %v387
      %v1705 = vunpack.c.l.b16 %v388
      %v1706 = vunpack.c.h.b16 %v388
      %v1707 = vunpack.c.l.b16 %v389
      %v1708 = vunpack.c.l.b16 %v390
      %v1709 = vunpack.c.h.b16 %v390
      %v1710 = vunpack.c.l.b16 %v391
      %v1711 = vunpack.c.l.b16 %v392
      %v1712 = vunpack.c.h.b16 %v392
      %v1713 = vunpack.c.l.b16 %v393
      %v1714 = vunpack.c.l.b16 %v394
      %v1715 = vunpack.c.h.b16 %v394
      %v1716 = vunpack.c.l.b16 %v395
      %v1717 = vunpack.c.l.b16 %v396
      %v1718 = vunpack.c.h.b16 %v396
      %v1719 = vunpack.c.l.b16 %v397
      %v1720 = vunpack.c.l.b16 %v398
      %v1721 = vunpack.c.h.b16 %v398
      %v1722 = vunpack.c.l.b16 %v399
      %v1723 = vunpack.c.l.b16 %v400
      %v1724 = vunpack.c.h.b16 %v400
      %v1725 = vunpack.c.l.b16 %v401
      %v1726 = vunpack.c.l.b16 %v402
      %v1727 = vunpack.c.h.b16 %v402
      %v1728 = vunpack.c.l.b16 %v403
      %v1729 = vunpack.c.l.b16 %v404
      %v1730 = vunpack.c.h.b16 %v404
      %v1731 = vunpack.c.l.b16 %v405
      %v1732 = vunpack.c.l.b16 %v406
      %v1733 = vunpack.c.h.b16 %v406
      %v1734 = vunpack.c.l.b16 %v407
      %v1735 = vunpack.c.l.b16 %v408
      %v1736 = vunpack.c.h.b16 %v408
      %v1737 = vunpack.c.l.b16 %v409
      %v1738 = vunpack.c.l.b16 %v410
      %v1739 = vunpack.c.h.b16 %v410
      %v1740 = vunpack.c.l.b16 %v411
      %v1741 = vunpack.c.l.b16 %v412
      %v1742 = vunpack.c.h.b16 %v412
      %v1743 = vunpack.c.l.b16 %v413
      %v1744 = vunpack.c.l.b16 %v414
      %v1745 = vunpack.c.h.b16 %v414
      %v1746 = vunpack.c.l.b16 %v415
      %v1747 = vunpack.c.l.b16 %v416
      %v1748 = vunpack.c.h.b16 %v416
      %v1749 = vunpack.c.l.b16 %v417
      %v1750 = vunpack.c.l.b16 %v418
      %v1751 = vunpack.c.h.b16 %v418
      %v1752 = vunpack.c.l.b16 %v419
      %v1753 = vunpack.c.l.b16 %v420
      %v1754 = vunpack.c.h.b16 %v420
      %v1755 = vunpack.c.l.b16 %v421
      %v1756 = vunpack.c.l.b16 %v422
      %v1757 = vunpack.c.h.b16 %v422
      %v1758 = vunpack.c.l.b16 %v423
      %v1759 = vunpack.c.l.b16 %v424
      %v1760 = vunpack.c.h.b16 %v424
      %v1761 = vunpack.c.l.b16 %v425
      %v1762 = vunpack.c.l.b16 %v426
      %v1763 = vunpack.c.h.b16 %v426
      %v1764 = vunpack.c.l.b16 %v427
      %v1765 = vunpack.c.l.b16 %v428
      %v1766 = vunpack.c.h.b16 %v428
      %v1767 = vunpack.c.l.b16 %v429
      %v1768 = vunpack.c.l.b16 %v430
      %v1769 = vunpack.c.h.b16 %v430
      %v1770 = vunpack.c.l.b16 %v431
      %v1771 = vunpack.c.l.b16 %v432
      %v1772 = vunpack.c.h.b16 %v432
      %v1773 = vunpack.c.l.b16 %v433
      %v1774 = vunpack.c.l.b16 %v434
      %v1775 = vunpack.c.h.b16 %v434
      %v1776 = vunpack.c.l.b16 %v435
      %v1777 = vunpack.c.l.b16 %v436
      %v1778 = vunpack.c.h.b16 %v436
      %v1779 = vunpack.c.l.b16 %v437
      %v1780 = vunpack.c.l.b16 %v438
      %v1781 = vunpack.c.h.b16 %v438
      %v1782 = vunpack.c.l.b16 %v439
      %v1783 = vunpack.c.l.b16 %v440
      %v1784 = vunpack.c.h.b16 %v440
      %v1785 = vunpack.c.l.b16 %v441
      %v1786 = vunpack.c.l.b16 %v442
      %v1787 = vunpack.c.h.b16 %v442
      %v1788 = vunpack.c.l.b16 %v443
      %v1789 = vunpack.c.l.b16 %v444
      %v1790 = vunpack.c.h.b16 %v444
      %v1791 = vunpack.c.l.b16 %v445
      %v1792 = vunpack.c.l.b16 %v446
      %v1793 = vunpack.c.h.b16 %v446
      %v1794 = vunpack.c.l.b16 %v447
      %v1795 = vunpack.c.l.b16 %v448
      %v1796 = vunpack.c.h.b16 %v448
      %v1797 = vunpack.c.l.b16 %v449
      %v1798 = vunpack.c.l.b16 %v450
      %v1799 = vunpack.c.h.b16 %v450
      %v1800 = vunpack.c.l.b16 %v451
      %v1801 = vunpack.c.l.b16 %v452
      %v1802 = vunpack.c.h.b16 %v452
      %v1803 = vunpack.c.l.b16 %v453
      %v1804 = vunpack.c.l.b16 %v454
      %v1805 = vunpack.c.h.b16 %v454
      %v1806 = vunpack.c.l.b16 %v455
      %v1807 = vunpack.c.l.b16 %v456
      %v1808 = vunpack.c.h.b16 %v456
      %v1809 = vunpack.c.l.b16 %v457
      %v1810 = vunpack.c.l.b16 %v458
      %v1811 = vunpack.c.h.b16 %v458
      %v1812 = vunpack.c.l.b16 %v459
      %v1813 = vunpack.c.l.b16 %v460
      %v1814 = vunpack.c.h.b16 %v460
      %v1815 = vunpack.c.l.b16 %v461
      %v1816 = vunpack.c.l.b16 %v462
      %v1817 = vunpack.c.h.b16 %v462
      %v1818 = vunpack.c.l.b16 %v463
      %v1819 = vunpack.c.l.b16 %v464
      %v1820 = vunpack.c.h.b16 %v464
      %v1821 = vunpack.c.l.b16 %v465
      %v1822 = vunpack.c.l.b16 %v466
      %v1823 = vunpack.c.h.b16 %v466
      %v1824 = vunpack.c.l.b16 %v467
      %v1825 = vunpack.c.l.b16 %v468
      %v1826 = vunpack.c.h.b16 %v468
      %v1827 = vunpack.c.l.b16 %v469
      %v1828 = vunpack.c.l.b16 %v470
      %v1829 = vunpack.c.h.b16 %v470
      %v1830 = vunpack.c.l.b16 %v471
      %v1831 = vunpack.c.l.b16 %v472
      %v1832 = vunpack.c.h.b16 %v472
      %v1833 = vunpack.c.l.b16 %v473
      %v1834 = vunpack.c.l.b16 %v474
      %v1835 = vunpack.c.h.b16 %v474
      %v1836 = vunpack.c.l.b16 %v475
      %v1837 = vunpack.c.l.b16 %v476
      %v1838 = vunpack.c.h.b16 %v476
      %v1839 = vunpack.c.l.b16 %v477
      %v1840 = vunpack.c.l.b16 %v478
      %v1841 = vunpack.c.h.b16 %v478
      %v1842 = vunpack.c.l.b16 %v479
      %v1843 = vunpack.c.l.b16 %v480
      %v1844 = vunpack.c.h.b16 %v480
      %v1845 = vunpack.c.l.b16 %v481
      %v1846 = vunpack.c.l.b16 %v482
      %v1847 = vunpack.c.h.b16 %v482
      %v1848 = vunpack.c.l.b16 %v483
      %v1849 = vunpack.c.l.b16 %v484
      %v1850 = vunpack.c.h.b16 %v484
      %v1851 = vunpack.c.l.b16 %v485
      %v1852 = vunpack.c.l.b16 %v486
      %v1853 = vunpack.c.h.b16 %v486
      %v1854 = vunpack.c.l.b16 %v487
      %v1855 = vunpack.c.l.b16 %v488
      %v1856 = vunpack.c.h.b16 %v488
      %v1857 = vunpack.c.l.b16 %v489
      %v1858 = vunpack.c.l.b16 %v490
      %v1859 = vunpack.c.h.b16 %v490
      %v1860 = vunpack.c.l.b16 %v491
      %v1861 = vunpack.c.l.b16 %v492
      %v1862 = vunpack.c.h.b16 %v492
      %v1863 = vunpack.c.l.b16 %v493
      %v1864 = vunpack.c.l.b16 %v494
      %v1865 = vunpack.c.h.b16 %v494
      %v1866 = vunpack.c.l.b16 %v495
      %v1867 = vunpack.c.l.b16 %v496
      %v1868 = vunpack.c.h.b16 %v496
      %v1869 = vunpack.c.l.b16 %v497
      %v1870 = vunpack.c.l.b16 %v498
      %v1871 = vunpack.c.h.b16 %v498
      %v1872 = vunpack.c.l.b16 %v499
      %v1873 = vunpack.c.l.b16 %v500
      %v1874 = vunpack.c.h.b16 %v500
      %v1875 = vunpack.c.l.b16 %v501
      %v1876 = vunpack.c.l.b16 %v502
      %v1877 = vunpack.c.h.b16 %v502
      %v1878 = vunpack.c.l.b16 %v503
      %v1879 = vunpack.c.l.b16 %v504
      %v1880 = vunpack.c.h.b16 %v504
      %v1881 = vunpack.c.l.b16 %v505
      %v1882 = vunpack.c.l.b16 %v506
      %v1883 = vunpack.c.h.b16 %v506
      %v1884 = vunpack.c.l.b16 %v507
      %v1885 = vunpack.c.l.b16 %v508
      %v1886 = vunpack.c.h.b16 %v508
      %v1887 = vunpack.c.l.b16 %v509
      %v1888 = vunpack.c.l.b16 %v510
      %v1889 = vunpack.c.h.b16 %v510
      %v1890 = vunpack.c.l.b16 %v511
      %v1891 = vunpack.c.l.b16 %v512
      %v1892 = vunpack.c.h.b16 %v512
      %v1893 = vunpack.c.l.b16 %v513
      %v1894 = vunpack.c.l.b16 %v514
      %v1895 = vunpack.c.h.b16 %v514
      %v1896 = vunpack.c.l.b16 %v515
      %v1897 = vunpack.c.l.b16 %v516
      %v1898 = vunpack.c.h.b16 %v516
      %v1899 = vunpack.c.l.b16 %v517
      %v1900 = vunpack.c.l.b16 %v518
      %v1901 = vunpack.c.h.b16 %v518
      %v1902 = vunpack.c.l.b16 %v519
      %v1903 = vunpack.c.l.b16 %v520
      %v1904 = vunpack.c.h.b16 %v520
      %v1905 = vunpack.c.l.b16 %v521
      %v1906 = vunpack.c.l.b16 %v522
      %v1907 = vunpack.c.h.b16 %v522
      %v1908 = vunpack.c.l.b16 %v523
      %v1909 = vunpack.c.l.b16 %v524
      %v1910 = vunpack.c.h.b16 %v524
      %v1911 = vunpack.c.l.b16 %v525
      %v1912 = vunpack.c.l.b16 %v526
      %v1913 = vunpack.c.h.b16 %v526
      %v1914 = vunpack.c.l.b16 %v527
      %v1915 = vunpack.c.l.b16 %v528
      %v1916 = vunpack.c.h.b16 %v528
      %v1917 = vunpack.c.l.b16 %v529
      %v1918 = vunpack.c.l.b16 %v530
      %v1919 = vunpack.c.h.b16 %v530
      %v1920 = vunpack.c.l.b16 %v531
      %v1921 = vunpack.c.l.b16 %v532
      %v1922 = vunpack.c.h.b16 %v532
      %v1923 = vunpack.c.l.b16 %v533
      %v1924 = vunpack.c.l.b16 %v534
      %v1925 = vunpack.c.h.b16 %v534
      %v1926 = vunpack.c.l.b16 %v535
      %v1927 = vunpack.c.l.b16 %v536
      %v1928 = vunpack.c.h.b16 %v536
      %v1929 = vunpack.c.l.b16 %v537
      %v1930 = vunpack.c.l.b16 %v538
      %v1931 = vunpack.c.h.b16 %v538
      %v1932 = vunpack.c.l.b16 %v539
      %v1933 = vunpack.c.l.b16 %v540
      %v1934 = vunpack.c.h.b16 %v540
      %v1935 = vunpack.c.l.b16 %v541
      %v1936 = vunpack.c.l.b16 %v542
      %v1937 = vunpack.c.h.b16 %v542
      %v1938 = vunpack.c.l.b16 %v543
      %v1939 = vunpack.c.l.b16 %v544
      %v1940 = vunpack.c.h.b16 %v544
      %v1941 = vunpack.c.l.b16 %v545
      %v1942 = vunpack.c.l.b16 %v546
      %v1943 = vunpack.c.h.b16 %v546
      %v1944 = vunpack.c.l.b16 %v547
      %v1945 = vunpack.c.l.b16 %v548
      %v1946 = vunpack.c.h.b16 %v548
      %v1947 = vunpack.c.l.b16 %v549
      %v1948 = vunpack.c.l.b16 %v550
      %v1949 = vunpack.c.h.b16 %v550
      %v1950 = vunpack.c.l.b16 %v551
      %v1951 = vunpack.c.l.b16 %v552
      %v1952 = vunpack.c.h.b16 %v552
      %v1953 = vunpack.c.l.b16 %v553
      %v1954 = vunpack.c.l.b16 %v554
      %v1955 = vunpack.c.h.b16 %v554
      %v1956 = vunpack.c.l.b16 %v555
      %v1957 = vunpack.c.l.b16 %v556
      %v1958 = vunpack.c.h.b16 %v556
      %v1959 = vunpack.c.l.b16 %v557
      %v1960 = vunpack.c.l.b16 %v558
      %v1961 = vunpack.c.h.b16 %v558
      %v1962 = vunpack.c.l.b16 %v559
      %v1963 = vunpack.c.l.b16 %v560
      %v1964 = vunpack.c.h.b16 %v560
      %v1965 = vunpack.c.l.b16 %v561
      %v1966 = vunpack.c.l.b16 %v562
      %v1967 = vunpack.c.h.b16 %v562
      %v1968 = vunpack.c.l.b16 %v563
      %v1969 = vunpack.c.l.b16 %v564
      %v1970 = vunpack.c.h.b16 %v564
      %v1971 = vunpack.c.l.b16 %v565
      %v1972 = vunpack.c.l.b16 %v566
      %v1973 = vunpack.c.h.b16 %v566
      %v1974 = vunpack.c.l.b16 %v567
      %v1975 = vunpack.c.l.b16 %v568
      %v1976 = vunpack.c.h.b16 %v568
      %v1977 = vunpack.c.l.b16 %v569
      %v1978 = vpack.c.b16 %v1597, %v1594
      %v1979 = vpack.c.b16 %v1598, %v1595
      %v1980 = vpack.c.b16 %v1599, %v1596
      %v1981 = vpack.c.b16 %v1603, %v1600
      %v1982 = vpack.c.b16 %v1604, %v1601
      %v1983 = vpack.c.b16 %v1605, %v1602
      %v1984 = vpack.c.b16 %v1609, %v1606
      %v1985 = vpack.c.b16 %v1610, %v1607
      %v1986 = vpack.c.b16 %v1611, %v1608
      %v1987 = vpack.c.b16 %v1615, %v1612
      %v1988 = vpack.c.b16 %v1616, %v1613
      %v1989 = vpack.c.b16 %v1617, %v1614
      %v1990 = vpack.c.b16 %v1621, %v1618
      %v1991 = vpack.c.b16 %v1622, %v1619
      %v1992 = vpack.c.b16 %v1623, %v1620
      %v1993 = vpack.c.b16 %v1627, %v1624
      %v1994 = vpack.c.b16 %v1628, %v1625
      %v1995 = vpack.c.b16 %v1629, %v1626
      %v1996 = vpack.c.b16 %v1633, %v1630
      %v1997 = vpack.c.b16 %v1634, %v1631
      %v1998 = vpack.c.b16 %v1635, %v1632
      %v1999 = vpack.c.b16 %v1639, %v1636
      %v2000 = vpack.c.b16 %v1640, %v1637
      %v2001 = vpack.c.b16 %v1641, %v1638
      %v2002 = vpack.c.b16 %v1645, %v1642
      %v2003 = vpack.c.b16 %v1646, %v1643
      %v2004 = vpack.c.b16 %v1647, %v1644
      %v2005 = vpack.c.b16 %v1651, %v1648
      %v2006 = vpack.c.b16 %v1652, %v1649
      %v2007 = vpack.c.b16 %v1653, %v1650
      %v2008 = vpack.c.b16 %v1657, %v1654
      %v2009 = vpack.c.b16 %v1658, %v1655
      %v2010 = vpack.c.b16 %v1659, %v1656
      %v2011 = vpack.c.b16 %v1663, %v1660
      %v2012 = vpack.c.b16 %v1664, %v1661
      %v2013 = vpack.c.b16 %v1665, %v1662
      %v2014 = vpack.c.b16 %v1669, %v1666
      %v2015 = vpack.c.b16 %v1670, %v1667
      %v2016 = vpack.c.b16 %v1671, %v1668
      %v2017 = vpack.c.b16 %v1675, %v1672
      %v2018 = vpack.c.b16 %v1676, %v1673
      %v2019 = vpack.c.b16 %v1677, %v1674
      %v2020 = vpack.c.b16 %v1681, %v1678
      %v2021 = vpack.c.b16 %v1682, %v1679
      %v2022 = vpack.c.b16 %v1683, %v1680
      %v2023 = vpack.c.b16 %v1687, %v1684
      %v2024 = vpack.c.b16 %v1688, %v1685
      %v2025 = vpack.c.b16 %v1689, %v1686
      %v2026 = vpack.c.b16 %v1693, %v1690
      %v2027 = vpack.c.b16 %v1694, %v1691
      %v2028 = vpack.c.b16 %v1695, %v1692
      %v2029 = vpack.c.b16 %v1699, %v1696
      %v2030 = vpack.c.b16 %v1700, %v1697
      %v2031 = vpack.c.b16 %v1701, %v1698
      %v2032 = vpack.c.b16 %v1705, %v1702
      %v2033 = vpack.c.b16 %v1706, %v1703
      %v2034 = vpack.c.b16 %v1707, %v1704
      %v2035 = vpack.c.b16 %v1711, %v1708
      %v2036 = vpack.c.b16 %v1712, %v1709
      %v2037 = vpack.c.b16 %v1713, %v1710
      %v2038 = vpack.c.b16 %v1717, %v1714
      %v2039 = vpack.c.b16 %v1718, %v1715
      %v2040 = vpack.c.b16 %v1719, %v1716
      %v2041 = vpack.c.b16 %v1723, %v1720
      %v2042 = vpack.c.b16 %v1724, %v1721
      %v2043 = vpack.c.b16 %v1725, %v1722
      %v2044 = vpack.c.b16 %v1729, %v1726
      %v2045 = vpack.c.b16 %v1730, %v1727
      %v2046 = vpack.c.b16 %v1731, %v1728
      %v2047 = vpack.c.b16 %v1735, %v1732
      %v2048 = vpack.c.b16 %v1736, %v1733
      %v2049 = vpack.c.b16 %v1737, %v1734
      %v2050 = vpack.c.b16 %v1741, %v1738
      %v2051 = vpack.c.b16 %v1742, %v1739
      %v2052 = vpack.c.b16 %v1743, %v1740
      %v2053 = vpack.c.b16 %v1747, %v1744
      %v2054 = vpack.c.b16 %v1748, %v1745
      %v2055 = vpack.c.b16 %v1749, %v1746
      %v2056 = vpack.c.b16 %v1753, %v1750
      %v2057 = vpack.c.b16 %v1754, %v1751
      %v2058 = vpack.c.b16 %v1755, %v1752
      %v2059 = vpack.c.b16 %v1759, %v1756
      %v2060 = vpack.c.b16 %v1760, %v1757
      %v2061 = vpack.c.b16 %v1761, %v1758
      %v2062 = vpack.c.b16 %v1765, %v1762
      %v2063 = vpack.c.b16 %v1766, %v1763
      %v2064 = vpack.c.b16 %v1767, %v1764
      %v2065 = vpack.c.b16 %v1771, %v1768
      %v2066 = vpack.c.b16 %v1772, %v1769
      %v2067 = vpack.c.b16 %v1773, %v1770
      %v2068 = vpack.c.b16 %v1777, %v1774
      %v2069 = vpack.c.b16 %v1778, %v1775
      %v2070 = vpack.c.b16 %v1779, %v1776
      %v2071 = vpack.c.b16 %v1783, %v1780
      %v2072 = vpack.c.b16 %v1784, %v1781
      %v2073 = vpack.c.b16 %v1785, %v1782
      %v2074 = vpack.c.b16 %v1789, %v1786
      %v2075 = vpack.c.b16 %v1790, %v1787
      %v2076 = vpack.c.b16 %v1791, %v1788
      %v2077 = vpack.c.b16 %v1795, %v1792
      %v2078 = vpack.c.b16 %v1796, %v1793
      %v2079 = vpack.c.b16 %v1797, %v1794
      %v2080 = vpack.c.b16 %v1801, %v1798
      %v2081 = vpack.c.b16 %v1802, %v1799
      %v2082 = vpack.c.b16 %v1803, %v1800
      %v2083 = vpack.c.b16 %v1807, %v1804
      %v2084 = vpack.c.b16 %v1808, %v1805
      %v2085 = vpack.c.b16 %v1809, %v1806
      %v2086 = vpack.c.b16 %v1813, %v1810
      %v2087 = vpack.c.b16 %v1814, %v1811
      %v2088 = vpack.c.b16 %v1815, %v1812
      %v2089 = vpack.c.b16 %v1819, %v1816
      %v2090 = vpack.c.b16 %v1820, %v1817
      %v2091 = vpack.c.b16 %v1821, %v1818
      %v2092 = vpack.c.b16 %v1825, %v1822
      %v2093 = vpack.c.b16 %v1826, %v1823
      %v2094 = vpack.c.b16 %v1827, %v1824
      %v2095 = vpack.c.b16 %v1831, %v1828
      %v2096 = vpack.c.b16 %v1832, %v1829
      %v2097 = vpack.c.b16 %v1833, %v1830
      %v2098 = vpack.c.b16 %v1837, %v1834
      %v2099 = vpack.c.b16 %v1838, %v1835
      %v2100 = vpack.c.b16 %v1839, %v1836
      %v2101 = vpack.c.b16 %v1843, %v1840
      %v2102 = vpack.c.b16 %v1844, %v1841
      %v2103 = vpack.c.b16 %v1845, %v1842
      %v2104 = vpack.c.b16 %v1849, %v1846
      %v2105 = vpack.c.b16 %v1850, %v1847
      %v2106 = vpack.c.b16 %v1851, %v1848
      %v2107 = vpack.c.b16 %v1855, %v1852
      %v2108 = vpack.c.b16 %v1856, %v1853
      %v2109 = vpack.c.b16 %v1857, %v1854
      %v2110 = vpack.c.b16 %v1861, %v1858
      %v2111 = vpack.c.b16 %v1862, %v1859
      %v2112 = vpack.c.b16 %v1863, %v1860
      %v2113 = vpack.c.b16 %v1867, %v1864
      %v2114 = vpack.c.b16 %v1868, %v1865
      %v2115 = vpack.c.b16 %v1869, %v1866
      %v2116 = vpack.c.b16 %v1873, %v1870
      %v2117 = vpack.c.b16 %v1874, %v1871
      %v2118 = vpack.c.b16 %v1875, %v1872
      %v2119 = vpack.c.b16 %v1879, %v1876
      %v2120 = vpack.c.b16 %v1880, %v1877
      %v2121 = vpack.c.b16 %v1881, %v1878
      %v2122 = vpack.c.b16 %v1885, %v1882
      %v2123 = vpack.c.b16 %v1886, %v1883
      %v2124 = vpack.c.b16 %v1887, %v1884
      %v2125 = vpack.c.b16 %v1891, %v1888
      %v2126 = vpack.c.b16 %v1892, %v1889
      %v2127 = vpack.c.b16 %v1893, %v1890
      %v2128 = vpack.c.b16 %v1897, %v1894
      %v2129 = vpack.c.b16 %v1898, %v1895
      %v2130 = vpack.c.b16 %v1899, %v1896
      %v2131 = vpack.c.b16 %v1903, %v1900
      %v2132 = vpack.c.b16 %v1904, %v1901
      %v2133 = vpack.c.b16 %v1905, %v1902
      %v2134 = vpack.c.b16 %v1909, %v1906
      %v2135 = vpack.c.b16 %v1910, %v1907
      %v2136 = vpack.c.b16 %v1911, %v1908
      %v2137 = vpack.c.b16 %v1915, %v1912
      %v2138 = vpack.c.b16 %v1916, %v1913
      %v2139 = vpack.c.b16 %v1917, %v1914
      %v2140 = vpack.c.b16 %v1921, %v1918
      %v2141 = vpack.c.b16 %v1922, %v1919
      %v2142 = vpack.c.b16 %v1923, %v1920
      %v2143 = vpack.c.b16 %v1927, %v1924
      %v2144 = vpack.c.b16 %v1928, %v1925
      %v2145 = vpack.c.b16 %v1929, %v1926
      %v2146 = vpack.c.b16 %v1933, %v1930
      %v2147 = vpack.c.b16 %v1934, %v1931
      %v2148 = vpack.c.b16 %v1935, %v1932
      %v2149 = vpack.c.b16 %v1939, %v1936
      %v2150 = vpack.c.b16 %v1940, %v1937
      %v2151 = vpack.c.b16 %v1941, %v1938
      %v2152 = vpack.c.b16 %v1945, %v1942
      %v2153 = vpack.c.b16 %v1946, %v1943
      %v2154 = vpack.c.b16 %v1947, %v1944
      %v2155 = vpack.c.b16 %v1951, %v1948
      %v2156 = vpack.c.b16 %v1952, %v1949
      %v2157 = vpack.c.b16 %v1953, %v1950
      %v2158 = vpack.c.b16 %v1957, %v1954
      %v2159 = vpack.c.b16 %v1958, %v1955
      %v2160 = vpack.c.b16 %v1959, %v1956
      %v2161 = vpack.c.b16 %v1963, %v1960
      %v2162 = vpack.c.b16 %v1964, %v1961
      %v2163 = vpack.c.b16 %v1965, %v1962
      %v2164 = vpack.c.b16 %v1969, %v1966
      %v2165 = vpack.c.b16 %v1970, %v1967
      %v2166 = vpack.c.b16 %v1971, %v1968
      %v2167 = vpack.c.b16 %v1975, %v1972
      %v2168 = vpack.c.b16 %v1976, %v1973
      %v2169 = vpack.c.b16 %v1977, %v1974
      %vm2298 = vcmask 261120
      %v2300 = vsel %vm2298, %v1980, 0
      %v2303 = vsel %vm2298, %v1983, 0
      %v2306 = vsel %vm2298, %v1986, 0
      %v2309 = vsel %vm2298, %v1989, 0
      %v2312 = vsel %vm2298, %v1992, 0
      %v2315 = vsel %vm2298, %v1995, 0
      %v2318 = vsel %vm2298, %v1998, 0
      %v2321 = vsel %vm2298, %v2001, 0
      %v2324 = vsel %vm2298, %v2004, 0
      %v2327 = vsel %vm2298, %v2007, 0
      %v2330 = vsel %vm2298, %v2010, 0
      %v2333 = vsel %vm2298, %v2013, 0
      %v2336 = vsel %vm2298, %v2016, 0
      %v2339 = vsel %vm2298, %v2019, 0
      %v2342 = vsel %vm2298, %v2022, 0
      %v2345 = vsel %vm2298, %v2025, 0
      %v2348 = vsel %vm2298, %v2028, 0
      %v2351 = vsel %vm2298, %v2031, 0
      %v2354 = vsel %vm2298, %v2034, 0
      %v2357 = vsel %vm2298, %v2037, 0
      %v2360 = vsel %vm2298, %v2040, 0
      %v2363 = vsel %vm2298, %v2043, 0
      %v2366 = vsel %vm2298, %v2046, 0
      %v2369 = vsel %vm2298, %v2049, 0
      %v2372 = vsel %vm2298, %v2052, 0
      %v2375 = vsel %vm2298, %v2055, 0
      %v2378 = vsel %vm2298, %v2058, 0
      %v2381 = vsel %vm2298, %v2061, 0
      %v2384 = vsel %vm2298, %v2064, 0
      %v2387 = vsel %vm2298, %v2067, 0
      %v2390 = vsel %vm2298, %v2070, 0
      %v2393 = vsel %vm2298, %v2073, 0
      %v2396 = vsel %vm2298, %v2076, 0
      %v2399 = vsel %vm2298, %v2079, 0
      %v2402 = vsel %vm2298, %v2082, 0
      %v2405 = vsel %vm2298, %v2085, 0
      %v2408 = vsel %vm2298, %v2088, 0
      %v2411 = vsel %vm2298, %v2091, 0
      %v2414 = vsel %vm2298, %v2094, 0
      %v2417 = vsel %vm2298, %v2097, 0
      %v2420 = vsel %vm2298, %v2100, 0
      %v2423 = vsel %vm2298, %v2103, 0
      %v2426 = vsel %vm2298, %v2106, 0
      %v2429 = vsel %vm2298, %v2109, 0
      %v2432 = vsel %vm2298, %v2112, 0
      %v2435 = vsel %vm2298, %v2115, 0
      %v2438 = vsel %vm2298, %v2118, 0
      %v2441 = vsel %vm2298, %v2121, 0
      %v2444 = vsel %vm2298, %v2124, 0
      %v2447 = vsel %vm2298, %v2127, 0
      %v2450 = vsel %vm2298, %v2130, 0
      %v2453 = vsel %vm2298, %v2133, 0
      %v2456 = vsel %vm2298, %v2136, 0
      %v2459 = vsel %vm2298, %v2139, 0
      %v2462 = vsel %vm2298, %v2142, 0
      %v2465 = vsel %vm2298, %v2145, 0
      %v2468 = vsel %vm2298, %v2148, 0
      %v2471 = vsel %vm2298, %v2151, 0
      %v2474 = vsel %vm2298, %v2154, 0
      %v2477 = vsel %vm2298, %v2157, 0
      %v2480 = vsel %vm2298, %v2160, 0
      %v2483 = vsel %vm2298, %v2163, 0
      %v2486 = vsel %vm2298, %v2166, 0
      %v2489 = vsel %vm2298, %v2169, 0
      %2491 = vmatprep.subr.bf16.mxu0 0
      %2492 = vmatpush1.bf16.msra.mxu0 %v296
      %2493 = vmatprep.subr.bf16.mxu0 0
      %2494 = vmatpush1.bf16.msra.mxu0 %v297
      %2495 = vmatprep.subr.bf16.mxu0 0
      %2496 = vmatpush1.bf16.msra.mxu0 %v298
      %2497 = vmatprep.subr.bf16.mxu0 0
      %2498 = vmatpush1.bf16.msra.mxu0 %v299
      %2499 = vmatprep.subr.bf16.mxu0 0
      %2500 = vmatpush1.bf16.msra.mxu0 %v300
      %2501 = vmatprep.subr.bf16.mxu0 0
      %2502 = vmatpush1.bf16.msra.mxu0 %v301
      %2503 = vmatprep.subr.bf16.mxu0 0
      %2504 = vmatpush1.bf16.msra.mxu0 %v302
      %2505 = vmatprep.subr.bf16.mxu0 0
      %2506 = vmatpush1.bf16.msra.mxu0 %v303
      %2507 = vmatprep.subr.bf16.mxu0 0
      %2508 = vmatpush1.bf16.msra.mxu0 %v304
      %2509 = vmatprep.subr.bf16.mxu0 0
      %2510 = vmatpush1.bf16.msra.mxu0 %v305
      %2511 = vmatprep.subr.bf16.mxu0 0
      %2512 = vmatpush1.bf16.msra.mxu0 %v306
      %2513 = vmatprep.subr.bf16.mxu0 0
      %2514 = vmatpush1.bf16.msra.mxu0 %v307
      %2515 = vmatprep.subr.bf16.mxu0 0
      %2516 = vmatpush1.bf16.msra.mxu0 %v308
      %2517 = vmatprep.subr.bf16.mxu0 0
      %2518 = vmatpush1.bf16.msra.mxu0 %v309
      %2519 = vmatprep.subr.bf16.mxu0 0
      %2520 = vmatpush1.bf16.msra.mxu0 %v310
      %2521 = vmatprep.subr.bf16.mxu0 0
      %2522 = vmatpush1.bf16.msra.mxu0 %v311
      %2523 = vmatprep.mubr.bf16.mxu0 %v1979
      %2524 = vmatmul.mubr.bf16.gmra.mrb[0].mxu0 %v1978
      %v2525 = vpop.f32.mrb[0].mxu0
      %v2526 = vadd.f32 %v701, %v2525
      %v2527 = vpop.f32.mrb[0].mxu0
      %v2528 = vpop.f32.mrb[0].mxu0
      %v2529 = vadd.f32 %v706, %v2528
      %v2530 = vpop.f32.mrb[0].mxu0
      %2531 = vmatprep.mubr.bf16.mxu0 %v1982
      %2532 = vmatmul.mubr.bf16.gmra.mrb[0].mxu0 %v1981
      %v2533 = vpop.f32.mrb[0].mxu0
      %v2534 = vadd.f32 %v711, %v2533
      %v2535 = vpop.f32.mrb[0].mxu0
      %v2536 = vpop.f32.mrb[0].mxu0
      %v2537 = vadd.f32 %v716, %v2536
      %v2538 = vpop.f32.mrb[0].mxu0
      %2539 = vmatprep.mubr.bf16.mxu0 %v1985
      %2540 = vmatmul.mubr.bf16.gmra.mrb[0].mxu0 %v1984
      %v2541 = vpop.f32.mrb[0].mxu0
      %v2542 = vadd.f32 %v721, %v2541
      %v2543 = vpop.f32.mrb[0].mxu0
      %v2544 = vpop.f32.mrb[0].mxu0
      %v2545 = vadd.f32 %v726, %v2544
      %v2546 = vpop.f32.mrb[0].mxu0
      %2547 = vmatprep.mubr.bf16.mxu0 %v1988
      %2548 = vmatmul.mubr.bf16.gmra.mrb[0].mxu0 %v1987
      %v2549 = vpop.f32.mrb[0].mxu0
      %v2550 = vadd.f32 %v731, %v2549
      %v2551 = vpop.f32.mrb[0].mxu0
      %v2552 = vpop.f32.mrb[0].mxu0
      %v2553 = vadd.f32 %v736, %v2552
      %v2554 = vpop.f32.mrb[0].mxu0
      %2555 = vmatprep.mubr.bf16.mxu0 %v1991
      %2556 = vmatmul.mubr.bf16.gmra.mrb[0].mxu0 %v1990
      %v2557 = vpop.f32.mrb[0].mxu0
      %v2558 = vadd.f32 %v741, %v2557
      %v2559 = vpop.f32.mrb[0].mxu0
      %v2560 = vpop.f32.mrb[0].mxu0
      %v2561 = vadd.f32 %v746, %v2560
      %v2562 = vpop.f32.mrb[0].mxu0
      %2563 = vmatprep.mubr.bf16.mxu0 %v1994
      %2564 = vmatmul.mubr.bf16.gmra.mrb[0].mxu0 %v1993
      %v2565 = vpop.f32.mrb[0].mxu0
      %v2566 = vadd.f32 %v751, %v2565
      %v2567 = vpop.f32.mrb[0].mxu0
      %v2568 = vpop.f32.mrb[0].mxu0
      %v2569 = vadd.f32 %v756, %v2568
      %v2570 = vpop.f32.mrb[0].mxu0
      %2571 = vmatprep.mubr.bf16.mxu0 %v1997
      %2572 = vmatmul.mubr.bf16.gmra.mrb[0].mxu0 %v1996
      %v2573 = vpop.f32.mrb[0].mxu0
      %v2574 = vadd.f32 %v761, %v2573
      %v2575 = vpop.f32.mrb[0].mxu0
      %v2576 = vpop.f32.mrb[0].mxu0
      %v2577 = vadd.f32 %v766, %v2576
      %v2578 = vpop.f32.mrb[0].mxu0
      %2579 = vmatprep.mubr.bf16.mxu0 %v2000
      %2580 = vmatmul.mubr.bf16.gmra.mrb[0].mxu0 %v1999
      %v2581 = vpop.f32.mrb[0].mxu0
      %v2582 = vadd.f32 %v771, %v2581
      %v2583 = vpop.f32.mrb[0].mxu0
      %v2584 = vpop.f32.mrb[0].mxu0
      %v2585 = vadd.f32 %v776, %v2584
      %v2586 = vpop.f32.mrb[0].mxu0
      %2587 = vmatprep.mubr.bf16.mxu0 %v2003
      %2588 = vmatmul.mubr.bf16.gmra.mrb[0].mxu0 %v2002
      %v2589 = vpop.f32.mrb[0].mxu0
      %v2590 = vadd.f32 %v781, %v2589
      %v2591 = vpop.f32.mrb[0].mxu0
      %v2592 = vpop.f32.mrb[0].mxu0
      %v2593 = vadd.f32 %v786, %v2592
      %v2594 = vpop.f32.mrb[0].mxu0
      %2595 = vmatprep.mubr.bf16.mxu0 %v2006
      %2596 = vmatmul.mubr.bf16.gmra.mrb[0].mxu0 %v2005
      %v2597 = vpop.f32.mrb[0].mxu0
      %v2598 = vadd.f32 %v791, %v2597
      %v2599 = vpop.f32.mrb[0].mxu0
      %v2600 = vpop.f32.mrb[0].mxu0
      %v2601 = vadd.f32 %v796, %v2600
      %v2602 = vpop.f32.mrb[0].mxu0
      %2603 = vmatprep.mubr.bf16.mxu0 %v2009
      %2604 = vmatmul.mubr.bf16.gmra.mrb[0].mxu0 %v2008
      %v2605 = vpop.f32.mrb[0].mxu0
      %v2606 = vadd.f32 %v801, %v2605
      %v2607 = vpop.f32.mrb[0].mxu0
      %v2608 = vpop.f32.mrb[0].mxu0
      %v2609 = vadd.f32 %v806, %v2608
      %v2610 = vpop.f32.mrb[0].mxu0
      %2611 = vmatprep.mubr.bf16.mxu0 %v2012
      %2612 = vmatmul.mubr.bf16.gmra.mrb[0].mxu0 %v2011
      %v2613 = vpop.f32.mrb[0].mxu0
      %v2614 = vadd.f32 %v811, %v2613
      %v2615 = vpop.f32.mrb[0].mxu0
      %v2616 = vpop.f32.mrb[0].mxu0
      %v2617 = vadd.f32 %v816, %v2616
      %v2618 = vpop.f32.mrb[0].mxu0
      %2619 = vmatprep.mubr.bf16.mxu0 %v2015
      %2620 = vmatmul.mubr.bf16.gmra.mrb[0].mxu0 %v2014
      %v2621 = vpop.f32.mrb[0].mxu0
      %v2622 = vadd.f32 %v821, %v2621
      %v2623 = vpop.f32.mrb[0].mxu0
      %v2624 = vpop.f32.mrb[0].mxu0
      %v2625 = vadd.f32 %v826, %v2624
      %v2626 = vpop.f32.mrb[0].mxu0
      %2627 = vmatprep.mubr.bf16.mxu0 %v2018
      %2628 = vmatmul.mubr.bf16.gmra.mrb[0].mxu0 %v2017
      %v2629 = vpop.f32.mrb[0].mxu0
      %v2630 = vadd.f32 %v831, %v2629
      %v2631 = vpop.f32.mrb[0].mxu0
      %v2632 = vpop.f32.mrb[0].mxu0
      %v2633 = vadd.f32 %v836, %v2632
      %v2634 = vpop.f32.mrb[0].mxu0
      %2635 = vmatprep.mubr.bf16.mxu0 %v2021
      %2636 = vmatmul.mubr.bf16.gmra.mrb[0].mxu0 %v2020
      %v2637 = vpop.f32.mrb[0].mxu0
      %v2638 = vadd.f32 %v841, %v2637
      %v2639 = vpop.f32.mrb[0].mxu0
      %v2640 = vpop.f32.mrb[0].mxu0
      %v2641 = vadd.f32 %v846, %v2640
      %v2642 = vpop.f32.mrb[0].mxu0
      %2643 = vmatprep.mubr.bf16.mxu0 %v2024
      %2644 = vmatmul.mubr.bf16.gmra.mrb[0].mxu0 %v2023
      %v2645 = vpop.f32.mrb[0].mxu0
      %v2646 = vadd.f32 %v851, %v2645
      %v2647 = vpop.f32.mrb[0].mxu0
      %v2648 = vpop.f32.mrb[0].mxu0
      %v2649 = vadd.f32 %v856, %v2648
      %v2650 = vpop.f32.mrb[0].mxu0
      %2651 = vmatprep.mubr.bf16.mxu0 %v2027
      %2652 = vmatmul.mubr.bf16.gmra.mrb[0].mxu0 %v2026
      %v2653 = vpop.f32.mrb[0].mxu0
      %v2654 = vadd.f32 %v861, %v2653
      %v2655 = vpop.f32.mrb[0].mxu0
      %v2656 = vpop.f32.mrb[0].mxu0
      %v2657 = vadd.f32 %v866, %v2656
      %v2658 = vpop.f32.mrb[0].mxu0
      %2659 = vmatprep.mubr.bf16.mxu0 %v2030
      %2660 = vmatmul.mubr.bf16.gmra.mrb[0].mxu0 %v2029
      %v2661 = vpop.f32.mrb[0].mxu0
      %v2662 = vadd.f32 %v871, %v2661
      %v2663 = vpop.f32.mrb[0].mxu0
      %v2664 = vpop.f32.mrb[0].mxu0
      %v2665 = vadd.f32 %v876, %v2664
      %v2666 = vpop.f32.mrb[0].mxu0
      %2667 = vmatprep.mubr.bf16.mxu0 %v2033
      %2668 = vmatmul.mubr.bf16.gmra.mrb[0].mxu0 %v2032
      %v2669 = vpop.f32.mrb[0].mxu0
      %v2670 = vadd.f32 %v881, %v2669
      %v2671 = vpop.f32.mrb[0].mxu0
      %v2672 = vpop.f32.mrb[0].mxu0
      %v2673 = vadd.f32 %v886, %v2672
      %v2674 = vpop.f32.mrb[0].mxu0
      %2675 = vmatprep.mubr.bf16.mxu0 %v2036
      %2676 = vmatmul.mubr.bf16.gmra.mrb[0].mxu0 %v2035
      %v2677 = vpop.f32.mrb[0].mxu0
      %v2678 = vadd.f32 %v891, %v2677
      %v2679 = vpop.f32.mrb[0].mxu0
      %v2680 = vpop.f32.mrb[0].mxu0
      %v2681 = vadd.f32 %v896, %v2680
      %v2682 = vpop.f32.mrb[0].mxu0
      %2683 = vmatprep.mubr.bf16.mxu0 %v2039
      %2684 = vmatmul.mubr.bf16.gmra.mrb[0].mxu0 %v2038
      %v2685 = vpop.f32.mrb[0].mxu0
      %v2686 = vadd.f32 %v901, %v2685
      %v2687 = vpop.f32.mrb[0].mxu0
      %v2688 = vpop.f32.mrb[0].mxu0
      %v2689 = vadd.f32 %v906, %v2688
      %v2690 = vpop.f32.mrb[0].mxu0
      %2691 = vmatprep.mubr.bf16.mxu0 %v2042
      %2692 = vmatmul.mubr.bf16.gmra.mrb[0].mxu0 %v2041
      %v2693 = vpop.f32.mrb[0].mxu0
      %v2694 = vadd.f32 %v911, %v2693
      %v2695 = vpop.f32.mrb[0].mxu0
      %v2696 = vpop.f32.mrb[0].mxu0
      %v2697 = vadd.f32 %v916, %v2696
      %v2698 = vpop.f32.mrb[0].mxu0
      %2699 = vmatprep.mubr.bf16.mxu0 %v2045
      %2700 = vmatmul.mubr.bf16.gmra.mrb[0].mxu0 %v2044
      %v2701 = vpop.f32.mrb[0].mxu0
      %v2702 = vadd.f32 %v921, %v2701
      %v2703 = vpop.f32.mrb[0].mxu0
      %v2704 = vpop.f32.mrb[0].mxu0
      %v2705 = vadd.f32 %v926, %v2704
      %v2706 = vpop.f32.mrb[0].mxu0
      %2707 = vmatprep.mubr.bf16.mxu0 %v2048
      %2708 = vmatmul.mubr.bf16.gmra.mrb[0].mxu0 %v2047
      %v2709 = vpop.f32.mrb[0].mxu0
      %v2710 = vadd.f32 %v931, %v2709
      %v2711 = vpop.f32.mrb[0].mxu0
      %v2712 = vpop.f32.mrb[0].mxu0
      %v2713 = vadd.f32 %v936, %v2712
      %v2714 = vpop.f32.mrb[0].mxu0
      %2715 = vmatprep.mubr.bf16.mxu0 %v2051
      %2716 = vmatmul.mubr.bf16.gmra.mrb[0].mxu0 %v2050
      %v2717 = vpop.f32.mrb[0].mxu0
      %v2718 = vadd.f32 %v941, %v2717
      %v2719 = vpop.f32.mrb[0].mxu0
      %v2720 = vpop.f32.mrb[0].mxu0
      %v2721 = vadd.f32 %v946, %v2720
      %v2722 = vpop.f32.mrb[0].mxu0
      %2723 = vmatprep.mubr.bf16.mxu0 %v2054
      %2724 = vmatmul.mubr.bf16.gmra.mrb[0].mxu0 %v2053
      %v2725 = vpop.f32.mrb[0].mxu0
      %v2726 = vadd.f32 %v951, %v2725
      %v2727 = vpop.f32.mrb[0].mxu0
      %v2728 = vpop.f32.mrb[0].mxu0
      %v2729 = vadd.f32 %v956, %v2728
      %v2730 = vpop.f32.mrb[0].mxu0
      %2731 = vmatprep.mubr.bf16.mxu0 %v2057
      %2732 = vmatmul.mubr.bf16.gmra.mrb[0].mxu0 %v2056
      %v2733 = vpop.f32.mrb[0].mxu0
      %v2734 = vadd.f32 %v961, %v2733
      %v2735 = vpop.f32.mrb[0].mxu0
      %v2736 = vpop.f32.mrb[0].mxu0
      %v2737 = vadd.f32 %v966, %v2736
      %v2738 = vpop.f32.mrb[0].mxu0
      %2739 = vmatprep.mubr.bf16.mxu0 %v2060
      %2740 = vmatmul.mubr.bf16.gmra.mrb[0].mxu0 %v2059
      %v2741 = vpop.f32.mrb[0].mxu0
      %v2742 = vadd.f32 %v971, %v2741
      %v2743 = vpop.f32.mrb[0].mxu0
      %v2744 = vpop.f32.mrb[0].mxu0
      %v2745 = vadd.f32 %v976, %v2744
      %v2746 = vpop.f32.mrb[0].mxu0
      %2747 = vmatprep.mubr.bf16.mxu0 %v2063
      %2748 = vmatmul.mubr.bf16.gmra.mrb[0].mxu0 %v2062
      %v2749 = vpop.f32.mrb[0].mxu0
      %v2750 = vadd.f32 %v981, %v2749
      %v2751 = vpop.f32.mrb[0].mxu0
      %v2752 = vpop.f32.mrb[0].mxu0
      %v2753 = vadd.f32 %v986, %v2752
      %v2754 = vpop.f32.mrb[0].mxu0
      %2755 = vmatprep.mubr.bf16.mxu0 %v2066
      %2756 = vmatmul.mubr.bf16.gmra.mrb[0].mxu0 %v2065
      %v2757 = vpop.f32.mrb[0].mxu0
      %v2758 = vadd.f32 %v991, %v2757
      %v2759 = vpop.f32.mrb[0].mxu0
      %v2760 = vpop.f32.mrb[0].mxu0
      %v2761 = vadd.f32 %v996, %v2760
      %v2762 = vpop.f32.mrb[0].mxu0
      %2763 = vmatprep.mubr.bf16.mxu0 %v2069
      %2764 = vmatmul.mubr.bf16.gmra.mrb[0].mxu0 %v2068
      %v2765 = vpop.f32.mrb[0].mxu0
      %v2766 = vadd.f32 %v1001, %v2765
      %v2767 = vpop.f32.mrb[0].mxu0
      %v2768 = vpop.f32.mrb[0].mxu0
      %v2769 = vadd.f32 %v1006, %v2768
      %v2770 = vpop.f32.mrb[0].mxu0
      %2771 = vmatprep.mubr.bf16.mxu0 %v2072
      %2772 = vmatmul.mubr.bf16.gmra.mrb[0].mxu0 %v2071
      %v2773 = vpop.f32.mrb[0].mxu0
      %v2774 = vadd.f32 %v1011, %v2773
      %v2775 = vpop.f32.mrb[0].mxu0
      %v2776 = vpop.f32.mrb[0].mxu0
      %v2777 = vadd.f32 %v1016, %v2776
      %v2778 = vpop.f32.mrb[0].mxu0
      %2779 = vmatprep.mubr.bf16.mxu0 %v2075
      %2780 = vmatmul.mubr.bf16.gmra.mrb[0].mxu0 %v2074
      %v2781 = vpop.f32.mrb[0].mxu0
      %v2782 = vadd.f32 %v1021, %v2781
      %v2783 = vpop.f32.mrb[0].mxu0
      %v2784 = vpop.f32.mrb[0].mxu0
      %v2785 = vadd.f32 %v1026, %v2784
      %v2786 = vpop.f32.mrb[0].mxu0
      %2787 = vmatprep.mubr.bf16.mxu0 %v2078
      %2788 = vmatmul.mubr.bf16.gmra.mrb[0].mxu0 %v2077
      %v2789 = vpop.f32.mrb[0].mxu0
      %v2790 = vadd.f32 %v1031, %v2789
      %v2791 = vpop.f32.mrb[0].mxu0
      %v2792 = vpop.f32.mrb[0].mxu0
      %v2793 = vadd.f32 %v1036, %v2792
      %v2794 = vpop.f32.mrb[0].mxu0
      %2795 = vmatprep.mubr.bf16.mxu0 %v2081
      %2796 = vmatmul.mubr.bf16.gmra.mrb[0].mxu0 %v2080
      %v2797 = vpop.f32.mrb[0].mxu0
      %v2798 = vadd.f32 %v1041, %v2797
      %v2799 = vpop.f32.mrb[0].mxu0
      %v2800 = vpop.f32.mrb[0].mxu0
      %v2801 = vadd.f32 %v1046, %v2800
      %v2802 = vpop.f32.mrb[0].mxu0
      %2803 = vmatprep.mubr.bf16.mxu0 %v2084
      %2804 = vmatmul.mubr.bf16.gmra.mrb[0].mxu0 %v2083
      %v2805 = vpop.f32.mrb[0].mxu0
      %v2806 = vadd.f32 %v1051, %v2805
      %v2807 = vpop.f32.mrb[0].mxu0
      %v2808 = vpop.f32.mrb[0].mxu0
      %v2809 = vadd.f32 %v1056, %v2808
      %v2810 = vpop.f32.mrb[0].mxu0
      %2811 = vmatprep.mubr.bf16.mxu0 %v2087
      %2812 = vmatmul.mubr.bf16.gmra.mrb[0].mxu0 %v2086
      %v2813 = vpop.f32.mrb[0].mxu0
      %v2814 = vadd.f32 %v1061, %v2813
      %v2815 = vpop.f32.mrb[0].mxu0
      %v2816 = vpop.f32.mrb[0].mxu0
      %v2817 = vadd.f32 %v1066, %v2816
      %v2818 = vpop.f32.mrb[0].mxu0
      %2819 = vmatprep.mubr.bf16.mxu0 %v2090
      %2820 = vmatmul.mubr.bf16.gmra.mrb[0].mxu0 %v2089
      %v2821 = vpop.f32.mrb[0].mxu0
      %v2822 = vadd.f32 %v1071, %v2821
      %v2823 = vpop.f32.mrb[0].mxu0
      %v2824 = vpop.f32.mrb[0].mxu0
      %v2825 = vadd.f32 %v1076, %v2824
      %v2826 = vpop.f32.mrb[0].mxu0
      %2827 = vmatprep.mubr.bf16.mxu0 %v2093
      %2828 = vmatmul.mubr.bf16.gmra.mrb[0].mxu0 %v2092
      %v2829 = vpop.f32.mrb[0].mxu0
      %v2830 = vadd.f32 %v1081, %v2829
      %v2831 = vpop.f32.mrb[0].mxu0
      %v2832 = vpop.f32.mrb[0].mxu0
      %v2833 = vadd.f32 %v1086, %v2832
      %v2834 = vpop.f32.mrb[0].mxu0
      %2835 = vmatprep.mubr.bf16.mxu0 %v2096
      %2836 = vmatmul.mubr.bf16.gmra.mrb[0].mxu0 %v2095
      %v2837 = vpop.f32.mrb[0].mxu0
      %v2838 = vadd.f32 %v1091, %v2837
      %v2839 = vpop.f32.mrb[0].mxu0
      %v2840 = vpop.f32.mrb[0].mxu0
      %v2841 = vadd.f32 %v1096, %v2840
      %v2842 = vpop.f32.mrb[0].mxu0
      %2843 = vmatprep.mubr.bf16.mxu0 %v2099
      %2844 = vmatmul.mubr.bf16.gmra.mrb[0].mxu0 %v2098
      %v2845 = vpop.f32.mrb[0].mxu0
      %v2846 = vadd.f32 %v1101, %v2845
      %v2847 = vpop.f32.mrb[0].mxu0
      %v2848 = vpop.f32.mrb[0].mxu0
      %v2849 = vadd.f32 %v1106, %v2848
      %v2850 = vpop.f32.mrb[0].mxu0
      %2851 = vmatprep.mubr.bf16.mxu0 %v2102
      %2852 = vmatmul.mubr.bf16.gmra.mrb[0].mxu0 %v2101
      %v2853 = vpop.f32.mrb[0].mxu0
      %v2854 = vadd.f32 %v1111, %v2853
      %v2855 = vpop.f32.mrb[0].mxu0
      %v2856 = vpop.f32.mrb[0].mxu0
      %v2857 = vadd.f32 %v1116, %v2856
      %v2858 = vpop.f32.mrb[0].mxu0
      %2859 = vmatprep.mubr.bf16.mxu0 %v2105
      %2860 = vmatmul.mubr.bf16.gmra.mrb[0].mxu0 %v2104
      %v2861 = vpop.f32.mrb[0].mxu0
      %v2862 = vadd.f32 %v1121, %v2861
      %v2863 = vpop.f32.mrb[0].mxu0
      %v2864 = vpop.f32.mrb[0].mxu0
      %v2865 = vadd.f32 %v1126, %v2864
      %v2866 = vpop.f32.mrb[0].mxu0
      %2867 = vmatprep.mubr.bf16.mxu0 %v2108
      %2868 = vmatmul.mubr.bf16.gmra.mrb[0].mxu0 %v2107
      %v2869 = vpop.f32.mrb[0].mxu0
      %v2870 = vadd.f32 %v1131, %v2869
      %v2871 = vpop.f32.mrb[0].mxu0
      %v2872 = vpop.f32.mrb[0].mxu0
      %v2873 = vadd.f32 %v1136, %v2872
      %v2874 = vpop.f32.mrb[0].mxu0
      %2875 = vmatprep.mubr.bf16.mxu0 %v2111
      %2876 = vmatmul.mubr.bf16.gmra.mrb[0].mxu0 %v2110
      %v2877 = vpop.f32.mrb[0].mxu0
      %v2878 = vadd.f32 %v1141, %v2877
      %v2879 = vpop.f32.mrb[0].mxu0
      %v2880 = vpop.f32.mrb[0].mxu0
      %v2881 = vadd.f32 %v1146, %v2880
      %v2882 = vpop.f32.mrb[0].mxu0
      %2883 = vmatprep.mubr.bf16.mxu0 %v2114
      %2884 = vmatmul.mubr.bf16.gmra.mrb[0].mxu0 %v2113
      %v2885 = vpop.f32.mrb[0].mxu0
      %v2886 = vadd.f32 %v1151, %v2885
      %v2887 = vpop.f32.mrb[0].mxu0
      %v2888 = vpop.f32.mrb[0].mxu0
      %v2889 = vadd.f32 %v1156, %v2888
      %v2890 = vpop.f32.mrb[0].mxu0
      %2891 = vmatprep.mubr.bf16.mxu0 %v2117
      %2892 = vmatmul.mubr.bf16.gmra.mrb[0].mxu0 %v2116
      %v2893 = vpop.f32.mrb[0].mxu0
      %v2894 = vadd.f32 %v1161, %v2893
      %v2895 = vpop.f32.mrb[0].mxu0
      %v2896 = vpop.f32.mrb[0].mxu0
      %v2897 = vadd.f32 %v1166, %v2896
      %v2898 = vpop.f32.mrb[0].mxu0
      %2899 = vmatprep.mubr.bf16.mxu0 %v2120
      %2900 = vmatmul.mubr.bf16.gmra.mrb[0].mxu0 %v2119
      %v2901 = vpop.f32.mrb[0].mxu0
      %v2902 = vadd.f32 %v1171, %v2901
      %v2903 = vpop.f32.mrb[0].mxu0
      %v2904 = vpop.f32.mrb[0].mxu0
      %v2905 = vadd.f32 %v1176, %v2904
      %v2906 = vpop.f32.mrb[0].mxu0
      %2907 = vmatprep.mubr.bf16.mxu0 %v2123
      %2908 = vmatmul.mubr.bf16.gmra.mrb[0].mxu0 %v2122
      %v2909 = vpop.f32.mrb[0].mxu0
      %v2910 = vadd.f32 %v1181, %v2909
      %v2911 = vpop.f32.mrb[0].mxu0
      %v2912 = vpop.f32.mrb[0].mxu0
      %v2913 = vadd.f32 %v1186, %v2912
      %v2914 = vpop.f32.mrb[0].mxu0
      %2915 = vmatprep.mubr.bf16.mxu0 %v2126
      %2916 = vmatmul.mubr.bf16.gmra.mrb[0].mxu0 %v2125
      %v2917 = vpop.f32.mrb[0].mxu0
      %v2918 = vadd.f32 %v1191, %v2917
      %v2919 = vpop.f32.mrb[0].mxu0
      %v2920 = vpop.f32.mrb[0].mxu0
      %v2921 = vadd.f32 %v1196, %v2920
      %v2922 = vpop.f32.mrb[0].mxu0
      %2923 = vmatprep.mubr.bf16.mxu0 %v2129
      %2924 = vmatmul.mubr.bf16.gmra.mrb[0].mxu0 %v2128
      %v2925 = vpop.f32.mrb[0].mxu0
      %v2926 = vadd.f32 %v1201, %v2925
      %v2927 = vpop.f32.mrb[0].mxu0
      %v2928 = vpop.f32.mrb[0].mxu0
      %v2929 = vadd.f32 %v1206, %v2928
      %v2930 = vpop.f32.mrb[0].mxu0
      %2931 = vmatprep.mubr.bf16.mxu0 %v2132
      %2932 = vmatmul.mubr.bf16.gmra.mrb[0].mxu0 %v2131
      %v2933 = vpop.f32.mrb[0].mxu0
      %v2934 = vadd.f32 %v1211, %v2933
      %v2935 = vpop.f32.mrb[0].mxu0
      %v2936 = vpop.f32.mrb[0].mxu0
      %v2937 = vadd.f32 %v1216, %v2936
      %v2938 = vpop.f32.mrb[0].mxu0
      %2939 = vmatprep.mubr.bf16.mxu0 %v2135
      %2940 = vmatmul.mubr.bf16.gmra.mrb[0].mxu0 %v2134
      %v2941 = vpop.f32.mrb[0].mxu0
      %v2942 = vadd.f32 %v1221, %v2941
      %v2943 = vpop.f32.mrb[0].mxu0
      %v2944 = vpop.f32.mrb[0].mxu0
      %v2945 = vadd.f32 %v1226, %v2944
      %v2946 = vpop.f32.mrb[0].mxu0
      %2947 = vmatprep.mubr.bf16.mxu0 %v2138
      %2948 = vmatmul.mubr.bf16.gmra.mrb[0].mxu0 %v2137
      %v2949 = vpop.f32.mrb[0].mxu0
      %v2950 = vadd.f32 %v1231, %v2949
      %v2951 = vpop.f32.mrb[0].mxu0
      %v2952 = vpop.f32.mrb[0].mxu0
      %v2953 = vadd.f32 %v1236, %v2952
      %v2954 = vpop.f32.mrb[0].mxu0
      %2955 = vmatprep.mubr.bf16.mxu0 %v2141
      %2956 = vmatmul.mubr.bf16.gmra.mrb[0].mxu0 %v2140
      %v2957 = vpop.f32.mrb[0].mxu0
      %v2958 = vadd.f32 %v1241, %v2957
      %v2959 = vpop.f32.mrb[0].mxu0
      %v2960 = vpop.f32.mrb[0].mxu0
      %v2961 = vadd.f32 %v1246, %v2960
      %v2962 = vpop.f32.mrb[0].mxu0
      %2963 = vmatprep.mubr.bf16.mxu0 %v2144
      %2964 = vmatmul.mubr.bf16.gmra.mrb[0].mxu0 %v2143
      %v2965 = vpop.f32.mrb[0].mxu0
      %v2966 = vadd.f32 %v1251, %v2965
      %v2967 = vpop.f32.mrb[0].mxu0
      %v2968 = vpop.f32.mrb[0].mxu0
      %v2969 = vadd.f32 %v1256, %v2968
      %v2970 = vpop.f32.mrb[0].mxu0
      %2971 = vmatprep.mubr.bf16.mxu0 %v2147
      %2972 = vmatmul.mubr.bf16.gmra.mrb[0].mxu0 %v2146
      %v2973 = vpop.f32.mrb[0].mxu0
      %v2974 = vadd.f32 %v1261, %v2973
      %v2975 = vpop.f32.mrb[0].mxu0
      %v2976 = vpop.f32.mrb[0].mxu0
      %v2977 = vadd.f32 %v1266, %v2976
      %v2978 = vpop.f32.mrb[0].mxu0
      %2979 = vmatprep.mubr.bf16.mxu0 %v2150
      %2980 = vmatmul.mubr.bf16.gmra.mrb[0].mxu0 %v2149
      %v2981 = vpop.f32.mrb[0].mxu0
      %v2982 = vadd.f32 %v1271, %v2981
      %v2983 = vpop.f32.mrb[0].mxu0
      %v2984 = vpop.f32.mrb[0].mxu0
      %v2985 = vadd.f32 %v1276, %v2984
      %v2986 = vpop.f32.mrb[0].mxu0
      %2987 = vmatprep.mubr.bf16.mxu0 %v2153
      %2988 = vmatmul.mubr.bf16.gmra.mrb[0].mxu0 %v2152
      %v2989 = vpop.f32.mrb[0].mxu0
      %v2990 = vadd.f32 %v1281, %v2989
      %v2991 = vpop.f32.mrb[0].mxu0
      %v2992 = vpop.f32.mrb[0].mxu0
      %v2993 = vadd.f32 %v1286, %v2992
      %v2994 = vpop.f32.mrb[0].mxu0
      %2995 = vmatprep.mubr.bf16.mxu0 %v2156
      %2996 = vmatmul.mubr.bf16.gmra.mrb[0].mxu0 %v2155
      %v2997 = vpop.f32.mrb[0].mxu0
      %v2998 = vadd.f32 %v1291, %v2997
      %v2999 = vpop.f32.mrb[0].mxu0
      %v3000 = vpop.f32.mrb[0].mxu0
      %v3001 = vadd.f32 %v1296, %v3000
      %v3002 = vpop.f32.mrb[0].mxu0
      %3003 = vmatprep.mubr.bf16.mxu0 %v2159
      %3004 = vmatmul.mubr.bf16.gmra.mrb[0].mxu0 %v2158
      %v3005 = vpop.f32.mrb[0].mxu0
      %v3006 = vadd.f32 %v1301, %v3005
      %v3007 = vpop.f32.mrb[0].mxu0
      %v3008 = vpop.f32.mrb[0].mxu0
      %v3009 = vadd.f32 %v1306, %v3008
      %v3010 = vpop.f32.mrb[0].mxu0
      %3011 = vmatprep.mubr.bf16.mxu0 %v2162
      %3012 = vmatmul.mubr.bf16.gmra.mrb[0].mxu0 %v2161
      %v3013 = vpop.f32.mrb[0].mxu0
      %v3014 = vadd.f32 %v1311, %v3013
      %v3015 = vpop.f32.mrb[0].mxu0
      %v3016 = vpop.f32.mrb[0].mxu0
      %v3017 = vadd.f32 %v1316, %v3016
      %v3018 = vpop.f32.mrb[0].mxu0
      %3019 = vmatprep.mubr.bf16.mxu0 %v2165
      %3020 = vmatmul.mubr.bf16.gmra.mrb[0].mxu0 %v2164
      %v3021 = vpop.f32.mrb[0].mxu0
      %v3022 = vadd.f32 %v1321, %v3021
      %v3023 = vpop.f32.mrb[0].mxu0
      %v3024 = vpop.f32.mrb[0].mxu0
      %v3025 = vadd.f32 %v1326, %v3024
      %v3026 = vpop.f32.mrb[0].mxu0
      %3027 = vmatprep.mubr.bf16.mxu0 %v2168
      %3028 = vmatmul.mubr.bf16.gmra.mrb[0].mxu0 %v2167
      %v3029 = vpop.f32.mrb[0].mxu0
      %v3030 = vadd.f32 %v1331, %v3029
      %v3031 = vpop.f32.mrb[0].mxu0
      %v3032 = vpop.f32.mrb[0].mxu0
      %v3033 = vadd.f32 %v1336, %v3032
      %v3034 = vpop.f32.mrb[0].mxu0
      %3035 = vdwg.mxu0
      %3036 = vmatprep.subr.bf16.mxu0 0
      %3037 = vmatpush1.bf16.msra.mxu0 %v312
      %3038 = vmatprep.subr.bf16.mxu0 0
      %3039 = vmatpush1.bf16.msra.mxu0 %v313
      %3040 = vmatprep.subr.bf16.mxu0 0
      %3041 = vmatpush1.bf16.msra.mxu0 0
      %3042 = vmatprep.subr.bf16.mxu0 0
      %3043 = vmatpush1.bf16.msra.mxu0 0
      %3044 = vmatprep.subr.bf16.mxu0 0
      %3045 = vmatpush1.bf16.msra.mxu0 0
      %3046 = vmatprep.subr.bf16.mxu0 0
      %3047 = vmatpush1.bf16.msra.mxu0 0
      %3048 = vmatprep.subr.bf16.mxu0 0
      %3049 = vmatpush1.bf16.msra.mxu0 0
      %3050 = vmatprep.subr.bf16.mxu0 0
      %3051 = vmatpush1.bf16.msra.mxu0 0
      %3052 = vmatprep.subr.bf16.mxu0 0
      %3053 = vmatpush1.bf16.msra.mxu0 0
      %3054 = vmatprep.subr.bf16.mxu0 0
      %3055 = vmatpush1.bf16.msra.mxu0 0
      %3056 = vmatprep.subr.bf16.mxu0 0
      %3057 = vmatpush1.bf16.msra.mxu0 0
      %3058 = vmatprep.subr.bf16.mxu0 0
      %3059 = vmatpush1.bf16.msra.mxu0 0
      %3060 = vmatprep.subr.bf16.mxu0 0
      %3061 = vmatpush1.bf16.msra.mxu0 0
      %3062 = vmatprep.subr.bf16.mxu0 0
      %3063 = vmatpush1.bf16.msra.mxu0 0
      %3064 = vmatprep.subr.bf16.mxu0 0
      %3065 = vmatpush1.bf16.msra.mxu0 0
      %3066 = vmatprep.subr.bf16.mxu0 0
      %3067 = vmatpush1.bf16.msra.mxu0 0
      %3068 = vmatprep.mubr.bf16.mxu0 0
      %3069 = vmatmul.mubr.bf16.gmra.mrb[0].mxu0 %v2300
      %v3070 = vpop.f32.mrb[0].mxu0
      %v3071 = vadd.f32 %v2526, %v3070
      %v3072 = vpop.f32.mrb[0].mxu0
      %v3073 = vpop.f32.mrb[0].mxu0
      %v3074 = vadd.f32 %v2529, %v3073
      %v3075 = vpop.f32.mrb[0].mxu0
      %3076 = vmatprep.mubr.bf16.mxu0 0
      %3077 = vmatmul.mubr.bf16.gmra.mrb[0].mxu0 %v2303
      %v3078 = vpop.f32.mrb[0].mxu0
      %v3079 = vadd.f32 %v2534, %v3078
      %v3080 = vpop.f32.mrb[0].mxu0
      %v3081 = vpop.f32.mrb[0].mxu0
      %v3082 = vadd.f32 %v2537, %v3081
      %v3083 = vpop.f32.mrb[0].mxu0
      %3084 = vmatprep.mubr.bf16.mxu0 0
      %3085 = vmatmul.mubr.bf16.gmra.mrb[0].mxu0 %v2306
      %v3086 = vpop.f32.mrb[0].mxu0
      %v3087 = vadd.f32 %v2542, %v3086
      %v3088 = vpop.f32.mrb[0].mxu0
      %v3089 = vpop.f32.mrb[0].mxu0
      %v3090 = vadd.f32 %v2545, %v3089
      %v3091 = vpop.f32.mrb[0].mxu0
      %3092 = vmatprep.mubr.bf16.mxu0 0
      %3093 = vmatmul.mubr.bf16.gmra.mrb[0].mxu0 %v2309
      %v3094 = vpop.f32.mrb[0].mxu0
      %v3095 = vadd.f32 %v2550, %v3094
      %v3096 = vpop.f32.mrb[0].mxu0
      %v3097 = vpop.f32.mrb[0].mxu0
      %v3098 = vadd.f32 %v2553, %v3097
      %v3099 = vpop.f32.mrb[0].mxu0
      %3100 = vmatprep.mubr.bf16.mxu0 0
      %3101 = vmatmul.mubr.bf16.gmra.mrb[0].mxu0 %v2312
      %v3102 = vpop.f32.mrb[0].mxu0
      %v3103 = vadd.f32 %v2558, %v3102
      %v3104 = vpop.f32.mrb[0].mxu0
      %v3105 = vpop.f32.mrb[0].mxu0
      %v3106 = vadd.f32 %v2561, %v3105
      %v3107 = vpop.f32.mrb[0].mxu0
      %3108 = vmatprep.mubr.bf16.mxu0 0
      %3109 = vmatmul.mubr.bf16.gmra.mrb[0].mxu0 %v2315
      %v3110 = vpop.f32.mrb[0].mxu0
      %v3111 = vadd.f32 %v2566, %v3110
      %v3112 = vpop.f32.mrb[0].mxu0
      %v3113 = vpop.f32.mrb[0].mxu0
      %v3114 = vadd.f32 %v2569, %v3113
      %v3115 = vpop.f32.mrb[0].mxu0
      %3116 = vmatprep.mubr.bf16.mxu0 0
      %3117 = vmatmul.mubr.bf16.gmra.mrb[0].mxu0 %v2318
      %v3118 = vpop.f32.mrb[0].mxu0
      %v3119 = vadd.f32 %v2574, %v3118
      %v3120 = vpop.f32.mrb[0].mxu0
      %v3121 = vpop.f32.mrb[0].mxu0
      %v3122 = vadd.f32 %v2577, %v3121
      %v3123 = vpop.f32.mrb[0].mxu0
      %3124 = vmatprep.mubr.bf16.mxu0 0
      %3125 = vmatmul.mubr.bf16.gmra.mrb[0].mxu0 %v2321
      %v3126 = vpop.f32.mrb[0].mxu0
      %v3127 = vadd.f32 %v2582, %v3126
      %v3128 = vpop.f32.mrb[0].mxu0
      %v3129 = vpop.f32.mrb[0].mxu0
      %v3130 = vadd.f32 %v2585, %v3129
      %v3131 = vpop.f32.mrb[0].mxu0
      %3132 = vmatprep.mubr.bf16.mxu0 0
      %3133 = vmatmul.mubr.bf16.gmra.mrb[0].mxu0 %v2324
      %v3134 = vpop.f32.mrb[0].mxu0
      %v3135 = vadd.f32 %v2590, %v3134
      %v3136 = vpop.f32.mrb[0].mxu0
      %v3137 = vpop.f32.mrb[0].mxu0
      %v3138 = vadd.f32 %v2593, %v3137
      %v3139 = vpop.f32.mrb[0].mxu0
      %3140 = vmatprep.mubr.bf16.mxu0 0
      %3141 = vmatmul.mubr.bf16.gmra.mrb[0].mxu0 %v2327
      %v3142 = vpop.f32.mrb[0].mxu0
      %v3143 = vadd.f32 %v2598, %v3142
      %v3144 = vpop.f32.mrb[0].mxu0
      %v3145 = vpop.f32.mrb[0].mxu0
      %v3146 = vadd.f32 %v2601, %v3145
      %v3147 = vpop.f32.mrb[0].mxu0
      %3148 = vmatprep.mubr.bf16.mxu0 0
      %3149 = vmatmul.mubr.bf16.gmra.mrb[0].mxu0 %v2330
      %v3150 = vpop.f32.mrb[0].mxu0
      %v3151 = vadd.f32 %v2606, %v3150
      %v3152 = vpop.f32.mrb[0].mxu0
      %v3153 = vpop.f32.mrb[0].mxu0
      %v3154 = vadd.f32 %v2609, %v3153
      %v3155 = vpop.f32.mrb[0].mxu0
      %3156 = vmatprep.mubr.bf16.mxu0 0
      %3157 = vmatmul.mubr.bf16.gmra.mrb[0].mxu0 %v2333
      %v3158 = vpop.f32.mrb[0].mxu0
      %v3159 = vadd.f32 %v2614, %v3158
      %v3160 = vpop.f32.mrb[0].mxu0
      %v3161 = vpop.f32.mrb[0].mxu0
      %v3162 = vadd.f32 %v2617, %v3161
      %v3163 = vpop.f32.mrb[0].mxu0
      %3164 = vmatprep.mubr.bf16.mxu0 0
      %3165 = vmatmul.mubr.bf16.gmra.mrb[0].mxu0 %v2336
      %v3166 = vpop.f32.mrb[0].mxu0
      %v3167 = vadd.f32 %v2622, %v3166
      %v3168 = vpop.f32.mrb[0].mxu0
      %v3169 = vpop.f32.mrb[0].mxu0
      %v3170 = vadd.f32 %v2625, %v3169
      %v3171 = vpop.f32.mrb[0].mxu0
      %3172 = vmatprep.mubr.bf16.mxu0 0
      %3173 = vmatmul.mubr.bf16.gmra.mrb[0].mxu0 %v2339
      %v3174 = vpop.f32.mrb[0].mxu0
      %v3175 = vadd.f32 %v2630, %v3174
      %v3176 = vpop.f32.mrb[0].mxu0
      %v3177 = vpop.f32.mrb[0].mxu0
      %v3178 = vadd.f32 %v2633, %v3177
      %v3179 = vpop.f32.mrb[0].mxu0
      %3180 = vmatprep.mubr.bf16.mxu0 0
      %3181 = vmatmul.mubr.bf16.gmra.mrb[0].mxu0 %v2342
      %v3182 = vpop.f32.mrb[0].mxu0
      %v3183 = vadd.f32 %v2638, %v3182
      %v3184 = vpop.f32.mrb[0].mxu0
      %v3185 = vpop.f32.mrb[0].mxu0
      %v3186 = vadd.f32 %v2641, %v3185
      %v3187 = vpop.f32.mrb[0].mxu0
      %3188 = vmatprep.mubr.bf16.mxu0 0
      %3189 = vmatmul.mubr.bf16.gmra.mrb[0].mxu0 %v2345
      %v3190 = vpop.f32.mrb[0].mxu0
      %v3191 = vadd.f32 %v2646, %v3190
      %v3192 = vpop.f32.mrb[0].mxu0
      %v3193 = vpop.f32.mrb[0].mxu0
      %v3194 = vadd.f32 %v2649, %v3193
      %v3195 = vpop.f32.mrb[0].mxu0
      %3196 = vmatprep.mubr.bf16.mxu0 0
      %3197 = vmatmul.mubr.bf16.gmra.mrb[0].mxu0 %v2348
      %v3198 = vpop.f32.mrb[0].mxu0
      %v3199 = vadd.f32 %v2654, %v3198
      %v3200 = vpop.f32.mrb[0].mxu0
      %v3201 = vpop.f32.mrb[0].mxu0
      %v3202 = vadd.f32 %v2657, %v3201
      %v3203 = vpop.f32.mrb[0].mxu0
      %3204 = vmatprep.mubr.bf16.mxu0 0
      %3205 = vmatmul.mubr.bf16.gmra.mrb[0].mxu0 %v2351
      %v3206 = vpop.f32.mrb[0].mxu0
      %v3207 = vadd.f32 %v2662, %v3206
      %v3208 = vpop.f32.mrb[0].mxu0
      %v3209 = vpop.f32.mrb[0].mxu0
      %v3210 = vadd.f32 %v2665, %v3209
      %v3211 = vpop.f32.mrb[0].mxu0
      %3212 = vmatprep.mubr.bf16.mxu0 0
      %3213 = vmatmul.mubr.bf16.gmra.mrb[0].mxu0 %v2354
      %v3214 = vpop.f32.mrb[0].mxu0
      %v3215 = vadd.f32 %v2670, %v3214
      %v3216 = vpop.f32.mrb[0].mxu0
      %v3217 = vpop.f32.mrb[0].mxu0
      %v3218 = vadd.f32 %v2673, %v3217
      %v3219 = vpop.f32.mrb[0].mxu0
      %3220 = vmatprep.mubr.bf16.mxu0 0
      %3221 = vmatmul.mubr.bf16.gmra.mrb[0].mxu0 %v2357
      %v3222 = vpop.f32.mrb[0].mxu0
      %v3223 = vadd.f32 %v2678, %v3222
      %v3224 = vpop.f32.mrb[0].mxu0
      %v3225 = vpop.f32.mrb[0].mxu0
      %v3226 = vadd.f32 %v2681, %v3225
      %v3227 = vpop.f32.mrb[0].mxu0
      %3228 = vmatprep.mubr.bf16.mxu0 0
      %3229 = vmatmul.mubr.bf16.gmra.mrb[0].mxu0 %v2360
      %v3230 = vpop.f32.mrb[0].mxu0
      %v3231 = vadd.f32 %v2686, %v3230
      %v3232 = vpop.f32.mrb[0].mxu0
      %v3233 = vpop.f32.mrb[0].mxu0
      %v3234 = vadd.f32 %v2689, %v3233
      %v3235 = vpop.f32.mrb[0].mxu0
      %3236 = vmatprep.mubr.bf16.mxu0 0
      %3237 = vmatmul.mubr.bf16.gmra.mrb[0].mxu0 %v2363
      %v3238 = vpop.f32.mrb[0].mxu0
      %v3239 = vadd.f32 %v2694, %v3238
      %v3240 = vpop.f32.mrb[0].mxu0
      %v3241 = vpop.f32.mrb[0].mxu0
      %v3242 = vadd.f32 %v2697, %v3241
      %v3243 = vpop.f32.mrb[0].mxu0
      %3244 = vmatprep.mubr.bf16.mxu0 0
      %3245 = vmatmul.mubr.bf16.gmra.mrb[0].mxu0 %v2366
      %v3246 = vpop.f32.mrb[0].mxu0
      %v3247 = vadd.f32 %v2702, %v3246
      %v3248 = vpop.f32.mrb[0].mxu0
      %v3249 = vpop.f32.mrb[0].mxu0
      %v3250 = vadd.f32 %v2705, %v3249
      %v3251 = vpop.f32.mrb[0].mxu0
      %3252 = vmatprep.mubr.bf16.mxu0 0
      %3253 = vmatmul.mubr.bf16.gmra.mrb[0].mxu0 %v2369
      %v3254 = vpop.f32.mrb[0].mxu0
      %v3255 = vadd.f32 %v2710, %v3254
      %v3256 = vpop.f32.mrb[0].mxu0
      %v3257 = vpop.f32.mrb[0].mxu0
      %v3258 = vadd.f32 %v2713, %v3257
      %v3259 = vpop.f32.mrb[0].mxu0
      %3260 = vmatprep.mubr.bf16.mxu0 0
      %3261 = vmatmul.mubr.bf16.gmra.mrb[0].mxu0 %v2372
      %v3262 = vpop.f32.mrb[0].mxu0
      %v3263 = vadd.f32 %v2718, %v3262
      %v3264 = vpop.f32.mrb[0].mxu0
      %v3265 = vpop.f32.mrb[0].mxu0
      %v3266 = vadd.f32 %v2721, %v3265
      %v3267 = vpop.f32.mrb[0].mxu0
      %3268 = vmatprep.mubr.bf16.mxu0 0
      %3269 = vmatmul.mubr.bf16.gmra.mrb[0].mxu0 %v2375
      %v3270 = vpop.f32.mrb[0].mxu0
      %v3271 = vadd.f32 %v2726, %v3270
      %v3272 = vpop.f32.mrb[0].mxu0
      %v3273 = vpop.f32.mrb[0].mxu0
      %v3274 = vadd.f32 %v2729, %v3273
      %v3275 = vpop.f32.mrb[0].mxu0
      %3276 = vmatprep.mubr.bf16.mxu0 0
      %3277 = vmatmul.mubr.bf16.gmra.mrb[0].mxu0 %v2378
      %v3278 = vpop.f32.mrb[0].mxu0
      %v3279 = vadd.f32 %v2734, %v3278
      %v3280 = vpop.f32.mrb[0].mxu0
      %v3281 = vpop.f32.mrb[0].mxu0
      %v3282 = vadd.f32 %v2737, %v3281
      %v3283 = vpop.f32.mrb[0].mxu0
      %3284 = vmatprep.mubr.bf16.mxu0 0
      %3285 = vmatmul.mubr.bf16.gmra.mrb[0].mxu0 %v2381
      %v3286 = vpop.f32.mrb[0].mxu0
      %v3287 = vadd.f32 %v2742, %v3286
      %v3288 = vpop.f32.mrb[0].mxu0
      %v3289 = vpop.f32.mrb[0].mxu0
      %v3290 = vadd.f32 %v2745, %v3289
      %v3291 = vpop.f32.mrb[0].mxu0
      %3292 = vmatprep.mubr.bf16.mxu0 0
      %3293 = vmatmul.mubr.bf16.gmra.mrb[0].mxu0 %v2384
      %v3294 = vpop.f32.mrb[0].mxu0
      %v3295 = vadd.f32 %v2750, %v3294
      %v3296 = vpop.f32.mrb[0].mxu0
      %v3297 = vpop.f32.mrb[0].mxu0
      %v3298 = vadd.f32 %v2753, %v3297
      %v3299 = vpop.f32.mrb[0].mxu0
      %3300 = vmatprep.mubr.bf16.mxu0 0
      %3301 = vmatmul.mubr.bf16.gmra.mrb[0].mxu0 %v2387
      %v3302 = vpop.f32.mrb[0].mxu0
      %v3303 = vadd.f32 %v2758, %v3302
      %v3304 = vpop.f32.mrb[0].mxu0
      %v3305 = vpop.f32.mrb[0].mxu0
      %v3306 = vadd.f32 %v2761, %v3305
      %v3307 = vpop.f32.mrb[0].mxu0
      %3308 = vmatprep.mubr.bf16.mxu0 0
      %3309 = vmatmul.mubr.bf16.gmra.mrb[0].mxu0 %v2390
      %v3310 = vpop.f32.mrb[0].mxu0
      %v3311 = vadd.f32 %v2766, %v3310
      %v3312 = vpop.f32.mrb[0].mxu0
      %v3313 = vpop.f32.mrb[0].mxu0
      %v3314 = vadd.f32 %v2769, %v3313
      %v3315 = vpop.f32.mrb[0].mxu0
      %3316 = vmatprep.mubr.bf16.mxu0 0
      %3317 = vmatmul.mubr.bf16.gmra.mrb[0].mxu0 %v2393
      %v3318 = vpop.f32.mrb[0].mxu0
      %v3319 = vadd.f32 %v2774, %v3318
      %v3320 = vpop.f32.mrb[0].mxu0
      %v3321 = vpop.f32.mrb[0].mxu0
      %v3322 = vadd.f32 %v2777, %v3321
      %v3323 = vpop.f32.mrb[0].mxu0
      %3324 = vmatprep.mubr.bf16.mxu0 0
      %3325 = vmatmul.mubr.bf16.gmra.mrb[0].mxu0 %v2396
      %v3326 = vpop.f32.mrb[0].mxu0
      %v3327 = vadd.f32 %v2782, %v3326
      %v3328 = vpop.f32.mrb[0].mxu0
      %v3329 = vpop.f32.mrb[0].mxu0
      %v3330 = vadd.f32 %v2785, %v3329
      %v3331 = vpop.f32.mrb[0].mxu0
      %3332 = vmatprep.mubr.bf16.mxu0 0
      %3333 = vmatmul.mubr.bf16.gmra.mrb[0].mxu0 %v2399
      %v3334 = vpop.f32.mrb[0].mxu0
      %v3335 = vadd.f32 %v2790, %v3334
      %v3336 = vpop.f32.mrb[0].mxu0
      %v3337 = vpop.f32.mrb[0].mxu0
      %v3338 = vadd.f32 %v2793, %v3337
      %v3339 = vpop.f32.mrb[0].mxu0
      %3340 = vmatprep.mubr.bf16.mxu0 0
      %3341 = vmatmul.mubr.bf16.gmra.mrb[0].mxu0 %v2402
      %v3342 = vpop.f32.mrb[0].mxu0
      %v3343 = vadd.f32 %v2798, %v3342
      %v3344 = vpop.f32.mrb[0].mxu0
      %v3345 = vpop.f32.mrb[0].mxu0
      %v3346 = vadd.f32 %v2801, %v3345
      %v3347 = vpop.f32.mrb[0].mxu0
      %3348 = vmatprep.mubr.bf16.mxu0 0
      %3349 = vmatmul.mubr.bf16.gmra.mrb[0].mxu0 %v2405
      %v3350 = vpop.f32.mrb[0].mxu0
      %v3351 = vadd.f32 %v2806, %v3350
      %v3352 = vpop.f32.mrb[0].mxu0
      %v3353 = vpop.f32.mrb[0].mxu0
      %v3354 = vadd.f32 %v2809, %v3353
      %v3355 = vpop.f32.mrb[0].mxu0
      %3356 = vmatprep.mubr.bf16.mxu0 0
      %3357 = vmatmul.mubr.bf16.gmra.mrb[0].mxu0 %v2408
      %v3358 = vpop.f32.mrb[0].mxu0
      %v3359 = vadd.f32 %v2814, %v3358
      %v3360 = vpop.f32.mrb[0].mxu0
      %v3361 = vpop.f32.mrb[0].mxu0
      %v3362 = vadd.f32 %v2817, %v3361
      %v3363 = vpop.f32.mrb[0].mxu0
      %3364 = vmatprep.mubr.bf16.mxu0 0
      %3365 = vmatmul.mubr.bf16.gmra.mrb[0].mxu0 %v2411
      %v3366 = vpop.f32.mrb[0].mxu0
      %v3367 = vadd.f32 %v2822, %v3366
      %v3368 = vpop.f32.mrb[0].mxu0
      %v3369 = vpop.f32.mrb[0].mxu0
      %v3370 = vadd.f32 %v2825, %v3369
      %v3371 = vpop.f32.mrb[0].mxu0
      %3372 = vmatprep.mubr.bf16.mxu0 0
      %3373 = vmatmul.mubr.bf16.gmra.mrb[0].mxu0 %v2414
      %v3374 = vpop.f32.mrb[0].mxu0
      %v3375 = vadd.f32 %v2830, %v3374
      %v3376 = vpop.f32.mrb[0].mxu0
      %v3377 = vpop.f32.mrb[0].mxu0
      %v3378 = vadd.f32 %v2833, %v3377
      %v3379 = vpop.f32.mrb[0].mxu0
      %3380 = vmatprep.mubr.bf16.mxu0 0
      %3381 = vmatmul.mubr.bf16.gmra.mrb[0].mxu0 %v2417
      %v3382 = vpop.f32.mrb[0].mxu0
      %v3383 = vadd.f32 %v2838, %v3382
      %v3384 = vpop.f32.mrb[0].mxu0
      %v3385 = vpop.f32.mrb[0].mxu0
      %v3386 = vadd.f32 %v2841, %v3385
      %v3387 = vpop.f32.mrb[0].mxu0
      %3388 = vmatprep.mubr.bf16.mxu0 0
      %3389 = vmatmul.mubr.bf16.gmra.mrb[0].mxu0 %v2420
      %v3390 = vpop.f32.mrb[0].mxu0
      %v3391 = vadd.f32 %v2846, %v3390
      %v3392 = vpop.f32.mrb[0].mxu0
      %v3393 = vpop.f32.mrb[0].mxu0
      %v3394 = vadd.f32 %v2849, %v3393
      %v3395 = vpop.f32.mrb[0].mxu0
      %3396 = vmatprep.mubr.bf16.mxu0 0
      %3397 = vmatmul.mubr.bf16.gmra.mrb[0].mxu0 %v2423
      %v3398 = vpop.f32.mrb[0].mxu0
      %v3399 = vadd.f32 %v2854, %v3398
      %v3400 = vpop.f32.mrb[0].mxu0
      %v3401 = vpop.f32.mrb[0].mxu0
      %v3402 = vadd.f32 %v2857, %v3401
      %v3403 = vpop.f32.mrb[0].mxu0
      %3404 = vmatprep.mubr.bf16.mxu0 0
      %3405 = vmatmul.mubr.bf16.gmra.mrb[0].mxu0 %v2426
      %v3406 = vpop.f32.mrb[0].mxu0
      %v3407 = vadd.f32 %v2862, %v3406
      %v3408 = vpop.f32.mrb[0].mxu0
      %v3409 = vpop.f32.mrb[0].mxu0
      %v3410 = vadd.f32 %v2865, %v3409
      %v3411 = vpop.f32.mrb[0].mxu0
      %3412 = vmatprep.mubr.bf16.mxu0 0
      %3413 = vmatmul.mubr.bf16.gmra.mrb[0].mxu0 %v2429
      %v3414 = vpop.f32.mrb[0].mxu0
      %v3415 = vadd.f32 %v2870, %v3414
      %v3416 = vpop.f32.mrb[0].mxu0
      %v3417 = vpop.f32.mrb[0].mxu0
      %v3418 = vadd.f32 %v2873, %v3417
      %v3419 = vpop.f32.mrb[0].mxu0
      %3420 = vmatprep.mubr.bf16.mxu0 0
      %3421 = vmatmul.mubr.bf16.gmra.mrb[0].mxu0 %v2432
      %v3422 = vpop.f32.mrb[0].mxu0
      %v3423 = vadd.f32 %v2878, %v3422
      %v3424 = vpop.f32.mrb[0].mxu0
      %v3425 = vpop.f32.mrb[0].mxu0
      %v3426 = vadd.f32 %v2881, %v3425
      %v3427 = vpop.f32.mrb[0].mxu0
      %3428 = vmatprep.mubr.bf16.mxu0 0
      %3429 = vmatmul.mubr.bf16.gmra.mrb[0].mxu0 %v2435
      %v3430 = vpop.f32.mrb[0].mxu0
      %v3431 = vadd.f32 %v2886, %v3430
      %v3432 = vpop.f32.mrb[0].mxu0
      %v3433 = vpop.f32.mrb[0].mxu0
      %v3434 = vadd.f32 %v2889, %v3433
      %v3435 = vpop.f32.mrb[0].mxu0
      %3436 = vmatprep.mubr.bf16.mxu0 0
      %3437 = vmatmul.mubr.bf16.gmra.mrb[0].mxu0 %v2438
      %v3438 = vpop.f32.mrb[0].mxu0
      %v3439 = vadd.f32 %v2894, %v3438
      %v3440 = vpop.f32.mrb[0].mxu0
      %v3441 = vpop.f32.mrb[0].mxu0
      %v3442 = vadd.f32 %v2897, %v3441
      %v3443 = vpop.f32.mrb[0].mxu0
      %3444 = vmatprep.mubr.bf16.mxu0 0
      %3445 = vmatmul.mubr.bf16.gmra.mrb[0].mxu0 %v2441
      %v3446 = vpop.f32.mrb[0].mxu0
      %v3447 = vadd.f32 %v2902, %v3446
      %v3448 = vpop.f32.mrb[0].mxu0
      %v3449 = vpop.f32.mrb[0].mxu0
      %v3450 = vadd.f32 %v2905, %v3449
      %v3451 = vpop.f32.mrb[0].mxu0
      %3452 = vmatprep.mubr.bf16.mxu0 0
      %3453 = vmatmul.mubr.bf16.gmra.mrb[0].mxu0 %v2444
      %v3454 = vpop.f32.mrb[0].mxu0
      %v3455 = vadd.f32 %v2910, %v3454
      %v3456 = vpop.f32.mrb[0].mxu0
      %v3457 = vpop.f32.mrb[0].mxu0
      %v3458 = vadd.f32 %v2913, %v3457
      %v3459 = vpop.f32.mrb[0].mxu0
      %3460 = vmatprep.mubr.bf16.mxu0 0
      %3461 = vmatmul.mubr.bf16.gmra.mrb[0].mxu0 %v2447
      %v3462 = vpop.f32.mrb[0].mxu0
      %v3463 = vadd.f32 %v2918, %v3462
      %v3464 = vpop.f32.mrb[0].mxu0
      %v3465 = vpop.f32.mrb[0].mxu0
      %v3466 = vadd.f32 %v2921, %v3465
      %v3467 = vpop.f32.mrb[0].mxu0
      %3468 = vmatprep.mubr.bf16.mxu0 0
      %3469 = vmatmul.mubr.bf16.gmra.mrb[0].mxu0 %v2450
      %v3470 = vpop.f32.mrb[0].mxu0
      %v3471 = vadd.f32 %v2926, %v3470
      %v3472 = vpop.f32.mrb[0].mxu0
      %v3473 = vpop.f32.mrb[0].mxu0
      %v3474 = vadd.f32 %v2929, %v3473
      %v3475 = vpop.f32.mrb[0].mxu0
      %3476 = vmatprep.mubr.bf16.mxu0 0
      %3477 = vmatmul.mubr.bf16.gmra.mrb[0].mxu0 %v2453
      %v3478 = vpop.f32.mrb[0].mxu0
      %v3479 = vadd.f32 %v2934, %v3478
      %v3480 = vpop.f32.mrb[0].mxu0
      %v3481 = vpop.f32.mrb[0].mxu0
      %v3482 = vadd.f32 %v2937, %v3481
      %v3483 = vpop.f32.mrb[0].mxu0
      %3484 = vmatprep.mubr.bf16.mxu0 0
      %3485 = vmatmul.mubr.bf16.gmra.mrb[0].mxu0 %v2456
      %v3486 = vpop.f32.mrb[0].mxu0
      %v3487 = vadd.f32 %v2942, %v3486
      %v3488 = vpop.f32.mrb[0].mxu0
      %v3489 = vpop.f32.mrb[0].mxu0
      %v3490 = vadd.f32 %v2945, %v3489
      %v3491 = vpop.f32.mrb[0].mxu0
      %3492 = vmatprep.mubr.bf16.mxu0 0
      %3493 = vmatmul.mubr.bf16.gmra.mrb[0].mxu0 %v2459
      %v3494 = vpop.f32.mrb[0].mxu0
      %v3495 = vadd.f32 %v2950, %v3494
      %v3496 = vpop.f32.mrb[0].mxu0
      %v3497 = vpop.f32.mrb[0].mxu0
      %v3498 = vadd.f32 %v2953, %v3497
      %v3499 = vpop.f32.mrb[0].mxu0
      %3500 = vmatprep.mubr.bf16.mxu0 0
      %3501 = vmatmul.mubr.bf16.gmra.mrb[0].mxu0 %v2462
      %v3502 = vpop.f32.mrb[0].mxu0
      %v3503 = vadd.f32 %v2958, %v3502
      %v3504 = vpop.f32.mrb[0].mxu0
      %v3505 = vpop.f32.mrb[0].mxu0
      %v3506 = vadd.f32 %v2961, %v3505
      %v3507 = vpop.f32.mrb[0].mxu0
      %3508 = vmatprep.mubr.bf16.mxu0 0
      %3509 = vmatmul.mubr.bf16.gmra.mrb[0].mxu0 %v2465
      %v3510 = vpop.f32.mrb[0].mxu0
      %v3511 = vadd.f32 %v2966, %v3510
      %v3512 = vpop.f32.mrb[0].mxu0
      %v3513 = vpop.f32.mrb[0].mxu0
      %v3514 = vadd.f32 %v2969, %v3513
      %v3515 = vpop.f32.mrb[0].mxu0
      %3516 = vmatprep.mubr.bf16.mxu0 0
      %3517 = vmatmul.mubr.bf16.gmra.mrb[0].mxu0 %v2468
      %v3518 = vpop.f32.mrb[0].mxu0
      %v3519 = vadd.f32 %v2974, %v3518
      %v3520 = vpop.f32.mrb[0].mxu0
      %v3521 = vpop.f32.mrb[0].mxu0
      %v3522 = vadd.f32 %v2977, %v3521
      %v3523 = vpop.f32.mrb[0].mxu0
      %3524 = vmatprep.mubr.bf16.mxu0 0
      %3525 = vmatmul.mubr.bf16.gmra.mrb[0].mxu0 %v2471
      %v3526 = vpop.f32.mrb[0].mxu0
      %v3527 = vadd.f32 %v2982, %v3526
      %v3528 = vpop.f32.mrb[0].mxu0
      %v3529 = vpop.f32.mrb[0].mxu0
      %v3530 = vadd.f32 %v2985, %v3529
      %v3531 = vpop.f32.mrb[0].mxu0
      %3532 = vmatprep.mubr.bf16.mxu0 0
      %3533 = vmatmul.mubr.bf16.gmra.mrb[0].mxu0 %v2474
      %v3534 = vpop.f32.mrb[0].mxu0
      %v3535 = vadd.f32 %v2990, %v3534
      %v3536 = vpop.f32.mrb[0].mxu0
      %v3537 = vpop.f32.mrb[0].mxu0
      %v3538 = vadd.f32 %v2993, %v3537
      %v3539 = vpop.f32.mrb[0].mxu0
      %3540 = vmatprep.mubr.bf16.mxu0 0
      %3541 = vmatmul.mubr.bf16.gmra.mrb[0].mxu0 %v2477
      %v3542 = vpop.f32.mrb[0].mxu0
      %v3543 = vadd.f32 %v2998, %v3542
      %v3544 = vpop.f32.mrb[0].mxu0
      %v3545 = vpop.f32.mrb[0].mxu0
      %v3546 = vadd.f32 %v3001, %v3545
      %v3547 = vpop.f32.mrb[0].mxu0
      %3548 = vmatprep.mubr.bf16.mxu0 0
      %3549 = vmatmul.mubr.bf16.gmra.mrb[0].mxu0 %v2480
      %v3550 = vpop.f32.mrb[0].mxu0
      %v3551 = vadd.f32 %v3006, %v3550
      %v3552 = vpop.f32.mrb[0].mxu0
      %v3553 = vpop.f32.mrb[0].mxu0
      %v3554 = vadd.f32 %v3009, %v3553
      %v3555 = vpop.f32.mrb[0].mxu0
      %3556 = vmatprep.mubr.bf16.mxu0 0
      %3557 = vmatmul.mubr.bf16.gmra.mrb[0].mxu0 %v2483
      %v3558 = vpop.f32.mrb[0].mxu0
      %v3559 = vadd.f32 %v3014, %v3558
      %v3560 = vpop.f32.mrb[0].mxu0
      %v3561 = vpop.f32.mrb[0].mxu0
      %v3562 = vadd.f32 %v3017, %v3561
      %v3563 = vpop.f32.mrb[0].mxu0
      %3564 = vmatprep.mubr.bf16.mxu0 0
      %3565 = vmatmul.mubr.bf16.gmra.mrb[0].mxu0 %v2486
      %v3566 = vpop.f32.mrb[0].mxu0
      %v3567 = vadd.f32 %v3022, %v3566
      %v3568 = vpop.f32.mrb[0].mxu0
      %v3569 = vpop.f32.mrb[0].mxu0
      %v3570 = vadd.f32 %v3025, %v3569
      %v3571 = vpop.f32.mrb[0].mxu0
      %3572 = vmatprep.mubr.bf16.mxu0 0
      %3573 = vmatmul.mubr.bf16.gmra.mrb[0].mxu0 %v2489
      %v3574 = vpop.f32.mrb[0].mxu0
      %v3575 = vadd.f32 %v3030, %v3574
      %v3576 = vpop.f32.mrb[0].mxu0
      %v3577 = vpop.f32.mrb[0].mxu0
      %v3578 = vadd.f32 %v3033, %v3577
      %v3579 = vpop.f32.mrb[0].mxu0
      %3580 = vdwg.mxu0
      %v3581 = vmax.f32 %v3071, 0.0
      %v3582 = vmax.f32 %v3074, 0.0
      %v3583 = vmax.f32 %v3079, 0.0
      %v3584 = vmax.f32 %v3082, 0.0
      %v3585 = vmax.f32 %v3087, 0.0
      %v3586 = vmax.f32 %v3090, 0.0
      %v3587 = vmax.f32 %v3095, 0.0
      %v3588 = vmax.f32 %v3098, 0.0
      %v3589 = vmax.f32 %v3103, 0.0
      %v3590 = vmax.f32 %v3106, 0.0
      %v3591 = vmax.f32 %v3111, 0.0
      %v3592 = vmax.f32 %v3114, 0.0
      %v3593 = vmax.f32 %v3119, 0.0
      %v3594 = vmax.f32 %v3122, 0.0
      %v3595 = vmax.f32 %v3127, 0.0
      %v3596 = vmax.f32 %v3130, 0.0
      %v3597 = vmax.f32 %v3135, 0.0
      %v3598 = vmax.f32 %v3138, 0.0
      %v3599 = vmax.f32 %v3143, 0.0
      %v3600 = vmax.f32 %v3146, 0.0
      %v3601 = vmax.f32 %v3151, 0.0
      %v3602 = vmax.f32 %v3154, 0.0
      %v3603 = vmax.f32 %v3159, 0.0
      %v3604 = vmax.f32 %v3162, 0.0
      %v3605 = vmax.f32 %v3167, 0.0
      %v3606 = vmax.f32 %v3170, 0.0
      %v3607 = vmax.f32 %v3175, 0.0
      %v3608 = vmax.f32 %v3178, 0.0
      %v3609 = vmax.f32 %v3183, 0.0
      %v3610 = vmax.f32 %v3186, 0.0
      %v3611 = vmax.f32 %v3191, 0.0
      %v3612 = vmax.f32 %v3194, 0.0
      %v3613 = vmax.f32 %v3199, 0.0
      %v3614 = vmax.f32 %v3202, 0.0
      %v3615 = vmax.f32 %v3207, 0.0
      %v3616 = vmax.f32 %v3210, 0.0
      %v3617 = vmax.f32 %v3215, 0.0
      %v3618 = vmax.f32 %v3218, 0.0
      %v3619 = vmax.f32 %v3223, 0.0
      %v3620 = vmax.f32 %v3226, 0.0
      %v3621 = vmax.f32 %v3231, 0.0
      %v3622 = vmax.f32 %v3234, 0.0
      %v3623 = vmax.f32 %v3239, 0.0
      %v3624 = vmax.f32 %v3242, 0.0
      %v3625 = vmax.f32 %v3247, 0.0
      %v3626 = vmax.f32 %v3250, 0.0
      %v3627 = vmax.f32 %v3255, 0.0
      %v3628 = vmax.f32 %v3258, 0.0
      %v3629 = vmax.f32 %v3263, 0.0
      %v3630 = vmax.f32 %v3266, 0.0
      %v3631 = vmax.f32 %v3271, 0.0
      %v3632 = vmax.f32 %v3274, 0.0
      %v3633 = vmax.f32 %v3279, 0.0
      %v3634 = vmax.f32 %v3282, 0.0
      %v3635 = vmax.f32 %v3287, 0.0
      %v3636 = vmax.f32 %v3290, 0.0
      %v3637 = vmax.f32 %v3295, 0.0
      %v3638 = vmax.f32 %v3298, 0.0
      %v3639 = vmax.f32 %v3303, 0.0
      %v3640 = vmax.f32 %v3306, 0.0
      %v3641 = vmax.f32 %v3311, 0.0
      %v3642 = vmax.f32 %v3314, 0.0
      %v3643 = vmax.f32 %v3319, 0.0
      %v3644 = vmax.f32 %v3322, 0.0
      %v3645 = vmax.f32 %v3327, 0.0
      %v3646 = vmax.f32 %v3330, 0.0
      %v3647 = vmax.f32 %v3335, 0.0
      %v3648 = vmax.f32 %v3338, 0.0
      %v3649 = vmax.f32 %v3343, 0.0
      %v3650 = vmax.f32 %v3346, 0.0
      %v3651 = vmax.f32 %v3351, 0.0
      %v3652 = vmax.f32 %v3354, 0.0
      %v3653 = vmax.f32 %v3359, 0.0
      %v3654 = vmax.f32 %v3362, 0.0
      %v3655 = vmax.f32 %v3367, 0.0
      %v3656 = vmax.f32 %v3370, 0.0
      %v3657 = vmax.f32 %v3375, 0.0
      %v3658 = vmax.f32 %v3378, 0.0
      %v3659 = vmax.f32 %v3383, 0.0
      %v3660 = vmax.f32 %v3386, 0.0
      %v3661 = vmax.f32 %v3391, 0.0
      %v3662 = vmax.f32 %v3394, 0.0
      %v3663 = vmax.f32 %v3399, 0.0
      %v3664 = vmax.f32 %v3402, 0.0
      %v3665 = vmax.f32 %v3407, 0.0
      %v3666 = vmax.f32 %v3410, 0.0
      %v3667 = vmax.f32 %v3415, 0.0
      %v3668 = vmax.f32 %v3418, 0.0
      %v3669 = vmax.f32 %v3423, 0.0
      %v3670 = vmax.f32 %v3426, 0.0
      %v3671 = vmax.f32 %v3431, 0.0
      %v3672 = vmax.f32 %v3434, 0.0
      %v3673 = vmax.f32 %v3439, 0.0
      %v3674 = vmax.f32 %v3442, 0.0
      %v3675 = vmax.f32 %v3447, 0.0
      %v3676 = vmax.f32 %v3450, 0.0
      %v3677 = vmax.f32 %v3455, 0.0
      %v3678 = vmax.f32 %v3458, 0.0
      %v3679 = vmax.f32 %v3463, 0.0
      %v3680 = vmax.f32 %v3466, 0.0
      %v3681 = vmax.f32 %v3471, 0.0
      %v3682 = vmax.f32 %v3474, 0.0
      %v3683 = vmax.f32 %v3479, 0.0
      %v3684 = vmax.f32 %v3482, 0.0
      %v3685 = vmax.f32 %v3487, 0.0
      %v3686 = vmax.f32 %v3490, 0.0
      %v3687 = vmax.f32 %v3495, 0.0
      %v3688 = vmax.f32 %v3498, 0.0
      %v3689 = vmax.f32 %v3503, 0.0
      %v3690 = vmax.f32 %v3506, 0.0
      %v3691 = vmax.f32 %v3511, 0.0
      %v3692 = vmax.f32 %v3514, 0.0
      %v3693 = vmax.f32 %v3519, 0.0
      %v3694 = vmax.f32 %v3522, 0.0
      %v3695 = vmax.f32 %v3527, 0.0
      %v3696 = vmax.f32 %v3530, 0.0
      %v3697 = vmax.f32 %v3535, 0.0
      %v3698 = vmax.f32 %v3538, 0.0
      %v3699 = vmax.f32 %v3543, 0.0
      %v3700 = vmax.f32 %v3546, 0.0
      %v3701 = vmax.f32 %v3551, 0.0
      %v3702 = vmax.f32 %v3554, 0.0
      %v3703 = vmax.f32 %v3559, 0.0
      %v3704 = vmax.f32 %v3562, 0.0
      %v3705 = vmax.f32 %v3567, 0.0
      %v3706 = vmax.f32 %v3570, 0.0
      %v3707 = vmax.f32 %v3575, 0.0
      %v3708 = vmax.f32 %v3578, 0.0
      %vm3709 = vcmask 105472
      %3710 = vst.msk [vmem:[%s192] sm:$0xff] %vm3709, %v3581
      %3711 = vst.msk [vmem:[%s192 + $0x8] sm:$0xff] %vm3709, %v3582
      %3712 = vst.msk [vmem:[%s192 + $0x10] sm:$0xff] %vm3709, %v3583
      %3713 = vst.msk [vmem:[%s192 + $0x18] sm:$0xff] %vm3709, %v3584
      %3714 = vst.msk [vmem:[%s192 + $0x20] sm:$0xff] %vm3709, %v3585
      %3715 = vst.msk [vmem:[%s192 + $0x28] sm:$0xff] %vm3709, %v3586
      %3716 = vst.msk [vmem:[%s192 + $0x30] sm:$0xff] %vm3709, %v3587
      %3717 = vst.msk [vmem:[%s192 + $0x38] sm:$0xff] %vm3709, %v3588
      %3718 = vst.msk [vmem:[%s192 + $0x40] sm:$0xff] %vm3709, %v3589
      %3719 = vst.msk [vmem:[%s192 + $0x48] sm:$0xff] %vm3709, %v3590
      %3720 = vst.msk [vmem:[%s192 + $0x50] sm:$0xff] %vm3709, %v3591
      %3721 = vst.msk [vmem:[%s192 + $0x58] sm:$0xff] %vm3709, %v3592
      %3722 = vst.msk [vmem:[%s192 + $0x60] sm:$0xff] %vm3709, %v3593
      %3723 = vst.msk [vmem:[%s192 + $0x68] sm:$0xff] %vm3709, %v3594
      %3724 = vst.msk [vmem:[%s192 + $0x70] sm:$0xff] %vm3709, %v3595
      %3725 = vst.msk [vmem:[%s192 + $0x78] sm:$0xff] %vm3709, %v3596
      %3726 = vst.msk [vmem:[%s192 + $0x80] sm:$0xff] %vm3709, %v3597
      %3727 = vst.msk [vmem:[%s192 + $0x88] sm:$0xff] %vm3709, %v3598
      %3728 = vst.msk [vmem:[%s192 + $0x90] sm:$0xff] %vm3709, %v3599
      %3729 = vst.msk [vmem:[%s192 + $0x98] sm:$0xff] %vm3709, %v3600
      %3730 = vst.msk [vmem:[%s192 + $0xa0] sm:$0xff] %vm3709, %v3601
      %3731 = vst.msk [vmem:[%s192 + $0xa8] sm:$0xff] %vm3709, %v3602
      %3732 = vst.msk [vmem:[%s192 + $0xb0] sm:$0xff] %vm3709, %v3603
      %3733 = vst.msk [vmem:[%s192 + $0xb8] sm:$0xff] %vm3709, %v3604
      %3734 = vst.msk [vmem:[%s192 + $0xc0] sm:$0xff] %vm3709, %v3605
      %3735 = vst.msk [vmem:[%s192 + $0xc8] sm:$0xff] %vm3709, %v3606
      %3736 = vst.msk [vmem:[%s192 + $0xd0] sm:$0xff] %vm3709, %v3607
      %3737 = vst.msk [vmem:[%s192 + $0xd8] sm:$0xff] %vm3709, %v3608
      %3738 = vst.msk [vmem:[%s192 + $0xe0] sm:$0xff] %vm3709, %v3609
      %3739 = vst.msk [vmem:[%s192 + $0xe8] sm:$0xff] %vm3709, %v3610
      %3740 = vst.msk [vmem:[%s192 + $0xf0] sm:$0xff] %vm3709, %v3611
      %3741 = vst.msk [vmem:[%s192 + $0xf8] sm:$0xff] %vm3709, %v3612
      %3742 = vst.msk [vmem:[%s192 + $0x100] sm:$0xff] %vm3709, %v3613
      %3743 = vst.msk [vmem:[%s192 + $0x108] sm:$0xff] %vm3709, %v3614
      %3744 = vst.msk [vmem:[%s192 + $0x110] sm:$0xff] %vm3709, %v3615
      %3745 = vst.msk [vmem:[%s192 + $0x118] sm:$0xff] %vm3709, %v3616
      %3746 = vst.msk [vmem:[%s192 + $0x120] sm:$0xff] %vm3709, %v3617
      %3747 = vst.msk [vmem:[%s192 + $0x128] sm:$0xff] %vm3709, %v3618
      %3748 = vst.msk [vmem:[%s192 + $0x130] sm:$0xff] %vm3709, %v3619
      %3749 = vst.msk [vmem:[%s192 + $0x138] sm:$0xff] %vm3709, %v3620
      %3750 = vst.msk [vmem:[%s192 + $0x140] sm:$0xff] %vm3709, %v3621
      %3751 = vst.msk [vmem:[%s192 + $0x148] sm:$0xff] %vm3709, %v3622
      %3752 = vst.msk [vmem:[%s192 + $0x150] sm:$0xff] %vm3709, %v3623
      %3753 = vst.msk [vmem:[%s192 + $0x158] sm:$0xff] %vm3709, %v3624
      %3754 = vst.msk [vmem:[%s192 + $0x160] sm:$0xff] %vm3709, %v3625
      %3755 = vst.msk [vmem:[%s192 + $0x168] sm:$0xff] %vm3709, %v3626
      %3756 = vst.msk [vmem:[%s192 + $0x170] sm:$0xff] %vm3709, %v3627
      %3757 = vst.msk [vmem:[%s192 + $0x178] sm:$0xff] %vm3709, %v3628
      %3758 = vst.msk [vmem:[%s192 + $0x180] sm:$0xff] %vm3709, %v3629
      %3759 = vst.msk [vmem:[%s192 + $0x188] sm:$0xff] %vm3709, %v3630
      %3760 = vst.msk [vmem:[%s192 + $0x190] sm:$0xff] %vm3709, %v3631
      %3761 = vst.msk [vmem:[%s192 + $0x198] sm:$0xff] %vm3709, %v3632
      %3762 = vst.msk [vmem:[%s192 + $0x1a0] sm:$0xff] %vm3709, %v3633
      %3763 = vst.msk [vmem:[%s192 + $0x1a8] sm:$0xff] %vm3709, %v3634
      %3764 = vst.msk [vmem:[%s192 + $0x1b0] sm:$0xff] %vm3709, %v3635
      %3765 = vst.msk [vmem:[%s192 + $0x1b8] sm:$0xff] %vm3709, %v3636
      %3766 = vst.msk [vmem:[%s192 + $0x1c0] sm:$0xff] %vm3709, %v3637
      %3767 = vst.msk [vmem:[%s192 + $0x1c8] sm:$0xff] %vm3709, %v3638
      %3768 = vst.msk [vmem:[%s192 + $0x1d0] sm:$0xff] %vm3709, %v3639
      %3769 = vst.msk [vmem:[%s192 + $0x1d8] sm:$0xff] %vm3709, %v3640
      %3770 = vst.msk [vmem:[%s192 + $0x1e0] sm:$0xff] %vm3709, %v3641
      %3771 = vst.msk [vmem:[%s192 + $0x1e8] sm:$0xff] %vm3709, %v3642
      %3772 = vst.msk [vmem:[%s192 + $0x1f0] sm:$0xff] %vm3709, %v3643
      %3773 = vst.msk [vmem:[%s192 + $0x1f8] sm:$0xff] %vm3709, %v3644
      %3774 = vst.msk [vmem:[%s192 + $0x200] sm:$0xff] %vm3709, %v3645
      %3775 = vst.msk [vmem:[%s192 + $0x208] sm:$0xff] %vm3709, %v3646
      %3776 = vst.msk [vmem:[%s192 + $0x210] sm:$0xff] %vm3709, %v3647
      %3777 = vst.msk [vmem:[%s192 + $0x218] sm:$0xff] %vm3709, %v3648
      %3778 = vst.msk [vmem:[%s192 + $0x220] sm:$0xff] %vm3709, %v3649
      %3779 = vst.msk [vmem:[%s192 + $0x228] sm:$0xff] %vm3709, %v3650
      %3780 = vst.msk [vmem:[%s192 + $0x230] sm:$0xff] %vm3709, %v3651
      %3781 = vst.msk [vmem:[%s192 + $0x238] sm:$0xff] %vm3709, %v3652
      %3782 = vst.msk [vmem:[%s192 + $0x240] sm:$0xff] %vm3709, %v3653
      %3783 = vst.msk [vmem:[%s192 + $0x248] sm:$0xff] %vm3709, %v3654
      %3784 = vst.msk [vmem:[%s192 + $0x250] sm:$0xff] %vm3709, %v3655
      %3785 = vst.msk [vmem:[%s192 + $0x258] sm:$0xff] %vm3709, %v3656
      %3786 = vst.msk [vmem:[%s192 + $0x260] sm:$0xff] %vm3709, %v3657
      %3787 = vst.msk [vmem:[%s192 + $0x268] sm:$0xff] %vm3709, %v3658
      %3788 = vst.msk [vmem:[%s192 + $0x270] sm:$0xff] %vm3709, %v3659
      %3789 = vst.msk [vmem:[%s192 + $0x278] sm:$0xff] %vm3709, %v3660
      %3790 = vst.msk [vmem:[%s192 + $0x280] sm:$0xff] %vm3709, %v3661
      %3791 = vst.msk [vmem:[%s192 + $0x288] sm:$0xff] %vm3709, %v3662
      %3792 = vst.msk [vmem:[%s192 + $0x290] sm:$0xff] %vm3709, %v3663
      %3793 = vst.msk [vmem:[%s192 + $0x298] sm:$0xff] %vm3709, %v3664
      %3794 = vst.msk [vmem:[%s192 + $0x2a0] sm:$0xff] %vm3709, %v3665
      %3795 = vst.msk [vmem:[%s192 + $0x2a8] sm:$0xff] %vm3709, %v3666
      %3796 = vst.msk [vmem:[%s192 + $0x2b0] sm:$0xff] %vm3709, %v3667
      %3797 = vst.msk [vmem:[%s192 + $0x2b8] sm:$0xff] %vm3709, %v3668
      %3798 = vst.msk [vmem:[%s192 + $0x2c0] sm:$0xff] %vm3709, %v3669
      %3799 = vst.msk [vmem:[%s192 + $0x2c8] sm:$0xff] %vm3709, %v3670
      %3800 = vst.msk [vmem:[%s192 + $0x2d0] sm:$0xff] %vm3709, %v3671
      %3801 = vst.msk [vmem:[%s192 + $0x2d8] sm:$0xff] %vm3709, %v3672
      %3802 = vst.msk [vmem:[%s192 + $0x2e0] sm:$0xff] %vm3709, %v3673
      %3803 = vst.msk [vmem:[%s192 + $0x2e8] sm:$0xff] %vm3709, %v3674
      %3804 = vst.msk [vmem:[%s192 + $0x2f0] sm:$0xff] %vm3709, %v3675
      %3805 = vst.msk [vmem:[%s192 + $0x2f8] sm:$0xff] %vm3709, %v3676
      %3806 = vst.msk [vmem:[%s192 + $0x300] sm:$0xff] %vm3709, %v3677
      %3807 = vst.msk [vmem:[%s192 + $0x308] sm:$0xff] %vm3709, %v3678
      %3808 = vst.msk [vmem:[%s192 + $0x310] sm:$0xff] %vm3709, %v3679
      %3809 = vst.msk [vmem:[%s192 + $0x318] sm:$0xff] %vm3709, %v3680
      %3810 = vst.msk [vmem:[%s192 + $0x320] sm:$0xff] %vm3709, %v3681
      %3811 = vst.msk [vmem:[%s192 + $0x328] sm:$0xff] %vm3709, %v3682
      %3812 = vst.msk [vmem:[%s192 + $0x330] sm:$0xff] %vm3709, %v3683
      %3813 = vst.msk [vmem:[%s192 + $0x338] sm:$0xff] %vm3709, %v3684
      %3814 = vst.msk [vmem:[%s192 + $0x340] sm:$0xff] %vm3709, %v3685
      %3815 = vst.msk [vmem:[%s192 + $0x348] sm:$0xff] %vm3709, %v3686
      %3816 = vst.msk [vmem:[%s192 + $0x350] sm:$0xff] %vm3709, %v3687
      %3817 = vst.msk [vmem:[%s192 + $0x358] sm:$0xff] %vm3709, %v3688
      %3818 = vst.msk [vmem:[%s192 + $0x360] sm:$0xff] %vm3709, %v3689
      %3819 = vst.msk [vmem:[%s192 + $0x368] sm:$0xff] %vm3709, %v3690
      %3820 = vst.msk [vmem:[%s192 + $0x370] sm:$0xff] %vm3709, %v3691
      %3821 = vst.msk [vmem:[%s192 + $0x378] sm:$0xff] %vm3709, %v3692
      %3822 = vst.msk [vmem:[%s192 + $0x380] sm:$0xff] %vm3709, %v3693
      %3823 = vst.msk [vmem:[%s192 + $0x388] sm:$0xff] %vm3709, %v3694
      %3824 = vst.msk [vmem:[%s192 + $0x390] sm:$0xff] %vm3709, %v3695
      %3825 = vst.msk [vmem:[%s192 + $0x398] sm:$0xff] %vm3709, %v3696
      %3826 = vst.msk [vmem:[%s192 + $0x3a0] sm:$0xff] %vm3709, %v3697
      %3827 = vst.msk [vmem:[%s192 + $0x3a8] sm:$0xff] %vm3709, %v3698
      %3828 = vst.msk [vmem:[%s192 + $0x3b0] sm:$0xff] %vm3709, %v3699
      %3829 = vst.msk [vmem:[%s192 + $0x3b8] sm:$0xff] %vm3709, %v3700
      %3830 = vst.msk [vmem:[%s192 + $0x3c0] sm:$0xff] %vm3709, %v3701
      %3831 = vst.msk [vmem:[%s192 + $0x3c8] sm:$0xff] %vm3709, %v3702
      %3832 = vst.msk [vmem:[%s192 + $0x3d0] sm:$0xff] %vm3709, %v3703
      %3833 = vst.msk [vmem:[%s192 + $0x3d8] sm:$0xff] %vm3709, %v3704
      %3834 = vst.msk [vmem:[%s192 + $0x3e0] sm:$0xff] %vm3709, %v3705
      %3835 = vst.msk [vmem:[%s192 + $0x3e8] sm:$0xff] %vm3709, %v3706
      %3836 = vst.msk [vmem:[%s192 + $0x3f0] sm:$0xff] %vm3709, %v3707
      %3837 = vst.msk [vmem:[%s192 + $0x3f8] sm:$0xff] %vm3709, %v3708
      %s3838 = smul.u32 2, %s19
      %p3839 = scmp.lt.s32.totalorder %s18, 1
      %s3840 = scalar_select %p3839, %s18, 1
      %p3841 = scmp.lt.s32.totalorder %s3838, 1
      %s3842 = scalar_select %p3841, %s3838, 1
      %s3843 = smul.addr %s3840, 128
      %s3844 = sadd.s32 %s3842, %s3843
      %s3845 = smul.addr %s3844, 8
      %s3846 = scalar_lea.vmem %s3, %s3845
      // Predicated region
      $region33: #{model_forward.3} parent=31 // pred_check
        %p3847 = pneg %p114
      $region34: #{model_forward.3} parent=31 // pred_check_branch
        %3849 = sbr.rel (%p3847) target = $region36
      $region35: #{model_forward.3} parent=31 // pred_region
        %s3850 = smul.u32 2, %s19
      $region36: #{model_forward.3} parent=31 // pred_fallthru
        _
    $region32: #{model_forward.3} parent=5 // pred_fallthru
      _
    %p3851 = scmp.le.s32.totalorder 2, %s9
    // Predicated region
    $region37: #{model_forward.3} parent=5 // pred_check
      %p3852 = pneg %p3851
    $region38: #{model_forward.3} parent=5 // pred_check_branch
      %3854 = sbr.rel (%p3852) target = $region40
    $region39: #{model_forward.3} parent=5 // pred_region
      %s3855 = ssub.s32 %s9, 2
      // Predicated region
      $region41: #{model_forward.3} parent=39 // pred_check
        %p3856 = pneg %p120
      $region42: #{model_forward.3} parent=39 // pred_check_branch
        %3858 = sbr.rel (%p3856) target = $region44
      $region43: #{model_forward.3} parent=39 // pred_region
        %s3859 = smul.u32 2, %s21
        %p3860 = scmp.lt.s32.totalorder %s20, 1
        %s3861 = scalar_select %p3860, %s20, 1
        %p3862 = scmp.lt.s32.totalorder %s3859, 1
        %s3863 = scalar_select %p3862, %s3859, 1
        %s3864 = smul.addr %s3861, 128
        %s3865 = sadd.s32 %s3863, %s3864
        %s3866 = smul.addr %s3865, 8
        %s3867 = scalar_lea.vmem %s3, %s3866
      $region44: #{model_forward.3} parent=39 // pred_fallthru
        _
    $region40: #{model_forward.3} parent=5 // pred_fallthru
      _
  $region6: #{model_forward.3} parent=0 // loop_footer
    %s13 = sadd.s32 1, %s9
  $region7: #{model_forward.3} parent=0 // loop_footer_branch
    %8 = sbr.rel target = $region3
  $region8: #{model_forward.3} parent=0 // loop_exit
    _

</llo_original>
